<compile_context>
chip_gen: v7x
topology: tpu7x:2x2x1
jax: 0.10.0
libtpu: 0.0.40
codegen_flags: <defaults>
</compile_context>

<pallas_src>
import functools

import jax
import jax.numpy as jnp
from jax import lax
from jax.experimental import pallas as pl
from jax.experimental.pallas import tpu as pltpu

EPS = 1e-5
NEG_INF = -1e30   # finite mask bias: avoids exp(-inf - (-inf)) NaN hazard


def _layernorm(x, g, b):
    # x: (S, E) f32, g/b: (1, E) f32
    mu = jnp.mean(x, axis=-1, keepdims=True)
    var = jnp.mean((x - mu) ** 2, axis=-1, keepdims=True)
    return (x - mu) * lax.rsqrt(var + EPS) * g + b


def clip_layer_kernel(x_ref,
                      ln1_g_ref, ln1_b_ref,
                      wqkv_ref, bqkv_ref,
                      wo_ref, bo_ref,
                      ln2_g_ref, ln2_b_ref,
                      w1_ref, b1_ref,
                      w2_ref, b2_ref,
                      o_ref,
                      cat_ref,
                      *, n_head, d_head):
    bf16 = jnp.bfloat16
    x = x_ref[...]                                   # (S, E) f32 (batch dim squeezed)
    S, E = x.shape
    residue = x

    # ---- LayerNorm 1 (f32 elementwise) ----
    h = _layernorm(x, ln1_g_ref[...], ln1_b_ref[...])

    # ---- QKV projection: one bf16 MXU GEMM (K=E), f32 accumulation ----
    qkv = jnp.dot(h.astype(bf16), wqkv_ref[...],
                  preferred_element_type=jnp.float32) + bqkv_ref[...]

    scale = 1.0 / (float(d_head) ** 0.5)
    q = (qkv[:, 0 * E:1 * E] * scale).astype(bf16)   # 1/sqrt(d_head) folded into q
    k = qkv[:, 1 * E:2 * E].astype(bf16)
    v = qkv[:, 2 * E:3 * E].astype(bf16)

    # Head-major (n_head, S, d_head) tensors: leading batch dim so the score / PV
    # matmuls are two batched dot_generals (no per-head ks.T transposes, no per-head
    # small GEMMs in the trace).
    q3 = jnp.stack([q[:, hd * d_head:(hd + 1) * d_head] for hd in range(n_head)], axis=0)
    k3 = jnp.stack([k[:, hd * d_head:(hd + 1) * d_head] for hd in range(n_head)], axis=0)
    v3 = jnp.stack([v[:, hd * d_head:(hd + 1) * d_head] for hd in range(n_head)], axis=0)

    # ---- Causal mask as one additive bias, shared by all heads ----
    row = lax.broadcasted_iota(jnp.int32, (S, S), 0)
    col = lax.broadcasted_iota(jnp.int32, (S, S), 1)
    bias = jnp.where(col > row, jnp.float32(NEG_INF), jnp.float32(0.0))   # (S, S)

    # ---- Batched scores + softmax (statistics in f32) ----
    s = jnp.einsum("hqd,hkd->hqk", q3, k3,
                   preferred_element_type=jnp.float32)            # (H, S, S)
    s = s + bias[None, :, :]
    s = s - jnp.max(s, axis=-1, keepdims=True)
    p = jnp.exp(s)
    p = p * pl.reciprocal(jnp.sum(p, axis=-1, keepdims=True), approx=True)

    # ---- Batched PV ----
    pv = jnp.einsum("hqk,hkd->hqd", p.astype(bf16), v3,
                    preferred_element_type=jnp.float32)           # (H, S, dh) f32

    # ---- Re-concatenate heads into the bf16 (S, E) scratch, then ONE K=E GEMM ----
    for hd in range(n_head):
        cat_ref[:, pl.ds(hd * d_head, d_head)] = pv[hd].astype(bf16)
    attn = jnp.dot(cat_ref[...], wo_ref[...],
                   preferred_element_type=jnp.float32) + bo_ref[...]

    x1 = attn + residue
    residue = x1

    # ---- LayerNorm 2 + QuickGELU MLP ----
    # TODO(synk): on v6e/v7x the QuickGELU / residual adds could run in bf16 (bf16
    # VPU/EUP); kept f32 here so the same kernel is also correct/fast on v5e.
    h2 = _layernorm(x1, ln2_g_ref[...], ln2_b_ref[...])
    f = jnp.dot(h2.astype(bf16), w1_ref[...],
                preferred_element_type=jnp.float32) + b1_ref[...]
    f = f * jax.nn.sigmoid(1.702 * f)                              # QuickGELU
    f = jnp.dot(f.astype(bf16), w2_ref[...],
                preferred_element_type=jnp.float32) + b2_ref[...]

    o_ref[...] = (f + residue).astype(o_ref.dtype)


def prepare_kernel_params(params):
    """One-time f32 -> bf16 cast of the GEMM weight matrices (do NOT recast per call)."""
    out = dict(params)
    for name in ("wqkv", "wo", "w1", "w2"):
        out[name] = params[name].astype(jnp.bfloat16)
    return out


def _const_index_map(rank):
    def idx(b):
        return (0,) * rank
    return idx


def clip_layer(x, kparams, n_head, *, seq_multiple=128, single_buffer_weights=True):
    """x: (B, S, E) f32. kparams: weights pre-transposed to (in, out); GEMM weights bf16."""
    B, S, E = x.shape
    d_head = E // n_head

    # Pad S to a lane-dense multiple of 128; pad keys are killed by the causal bias,
    # pad query rows are sliced off below.
    S_pad = ((S + seq_multiple - 1) // seq_multiple) * seq_multiple
    x_p = x if S_pad == S else jnp.pad(x, ((0, 0), (0, S_pad - S), (0, 0)))

    def wspec(shape):
        idx = _const_index_map(len(shape))
        if single_buffer_weights:
            # Grid-invariant, layer-resident operands: don't double-buffer them.
            return pl.BlockSpec(shape, idx, pipeline_mode=pl.Buffered(1))
        return pl.BlockSpec(shape, idx)

    in_specs = [
        pl.BlockSpec((None, S_pad, E), lambda b: (b, 0, 0)),   # x (batch squeezed)
        wspec((1, E)), wspec((1, E)),                          # ln1 gamma / beta (f32)
        wspec((E, 3 * E)), wspec((1, 3 * E)),                  # in_proj  W^T (bf16) / b (f32)
        wspec((E, E)), wspec((1, E)),                          # out_proj W^T (bf16) / b (f32)
        wspec((1, E)), wspec((1, E)),                          # ln2 gamma / beta (f32)
        wspec((E, 4 * E)), wspec((1, 4 * E)),                  # linear_1 W^T (bf16) / b (f32)
        wspec((4 * E, E)), wspec((1, E)),                      # linear_2 W^T (bf16) / b (f32)
    ]

    kern = functools.partial(clip_layer_kernel, n_head=n_head, d_head=d_head)
    out_p = pl.pallas_call(
        kern,
        out_shape=jax.ShapeDtypeStruct((B, S_pad, E), x.dtype),
        grid_spec=pltpu.PrefetchScalarGridSpec(
            num_scalar_prefetch=0,
            grid=(B,),   # TODO(synk): add a 2nd parallel axis (query tiles) for v7x B==1
            in_specs=in_specs,
            out_specs=pl.BlockSpec((None, S_pad, E), lambda b: (b, 0, 0)),
            scratch_shapes=[pltpu.VMEM((S_pad, E), jnp.bfloat16)],   # head-concat buffer
        ),
        compiler_params=pltpu.CompilerParams(
            dimension_semantics=("parallel",),
            # 48 MiB: headroom under v7x's 64 MiB physical VMEM; raise to ~96 MiB on
            # v5e/v6e for E >= 1024 configurations.
            vmem_limit_bytes=48 * 1024 * 1024),
    )(x_p,
      kparams["ln1_g"], kparams["ln1_b"],
      kparams["wqkv"], kparams["bqkv"],
      kparams["wo"], kparams["bo"],
      kparams["ln2_g"], kparams["ln2_b"],
      kparams["w1"], kparams["b1"],
      kparams["w2"], kparams["b2"])

    return out_p[:, :S, :]


def ref_clip_layer(x, p, n_head):
    """Pure-JAX f32 reference matching the PyTorch forward exactly."""
    B, S, E = x.shape
    d_head = E // n_head

    def ln(v, g, b):
        mu = v.mean(-1, keepdims=True)
        var = ((v - mu) ** 2).mean(-1, keepdims=True)
        return (v - mu) / jnp.sqrt(var + EPS) * g + b

    residue = x
    h = ln(x, p["ln1_g"], p["ln1_b"])
    qkv = h @ p["wqkv"] + p["bqkv"]
    q, k, v = jnp.split(qkv, 3, axis=-1)
    q = q.reshape(B, S, n_head, d_head).transpose(0, 2, 1, 3)
    k = k.reshape(B, S, n_head, d_head).transpose(0, 2, 1, 3)
    v = v.reshape(B, S, n_head, d_head).transpose(0, 2, 1, 3)
    w = jnp.einsum("bhqd,bhkd->bhqk", q, k)
    mask = jnp.triu(jnp.ones((S, S), dtype=bool), 1)
    w = jnp.where(mask, -jnp.inf, w) / jnp.sqrt(d_head)
    w = jax.nn.softmax(w, axis=-1)
    o = jnp.einsum("bhqk,bhkd->bhqd", w, v).transpose(0, 2, 1, 3).reshape(B, S, E)
    o = o @ p["wo"] + p["bo"]
    x1 = o + residue

    residue = x1
    h2 = ln(x1, p["ln2_g"], p["ln2_b"])
    f = h2 @ p["w1"] + p["b1"]
    f = f * jax.nn.sigmoid(1.702 * f)
    f = f @ p["w2"] + p["b2"]
    return f + residue


def init_params(key, n_embd):
    E = n_embd
    ks = jax.random.split(key, 8)
    s = 0.02
    return {
        "ln1_g": jnp.ones((1, E), jnp.float32),
        "ln1_b": jnp.zeros((1, E), jnp.float32),
        "wqkv": s * jax.random.normal(ks[0], (E, 3 * E), jnp.float32),
        "bqkv": s * jax.random.normal(ks[1], (1, 3 * E), jnp.float32),
        "wo":   s * jax.random.normal(ks[2], (E, E), jnp.float32),
        "bo":   s * jax.random.normal(ks[3], (1, E), jnp.float32),
        "ln2_g": jnp.ones((1, E), jnp.float32),
        "ln2_b": jnp.zeros((1, E), jnp.float32),
        "w1":   s * jax.random.normal(ks[4], (E, 4 * E), jnp.float32),
        "b1":   s * jax.random.normal(ks[5], (1, 4 * E), jnp.float32),
        "w2":   s * jax.random.normal(ks[6], (4 * E, E), jnp.float32),
        "b2":   s * jax.random.normal(ks[7], (1, E), jnp.float32),
    }


if __name__ == "__main__":
    B, S, E, H = 2, 8, 128, 4   # batch, seq, n_embd, n_head  (d_head = 32)
    key = jax.random.PRNGKey(0)
    kx, kp = jax.random.split(key)
    x = jax.random.normal(kx, (B, S, E), jnp.float32)
    params = init_params(kp, E)
    # One-time bf16 cast of the GEMM weights, outside the per-layer call.
    kparams = prepare_kernel_params(params)

    try:
        out = jax.block_until_ready(clip_layer(x, kparams, n_head=H))
    except Exception:
        # If the installed JAX rejects pipeline_mode=pl.Buffered(1), fall back to the
        # default double-buffered weight BlockSpecs (correctness is unaffected).
        out = jax.block_until_ready(
            clip_layer(x, kparams, n_head=H, single_buffer_weights=False))

    ref = ref_clip_layer(x, params, n_head=H)
    assert out.shape == (B, S, E)
    # bf16 matmul operands + approx reciprocal -> loosened tolerance vs. pure-f32 ref.
    assert jnp.allclose(out, ref, atol=2e-2, rtol=2e-2), (
        float(jnp.max(jnp.abs(out - ref))))
    print("KERNEL_OK")
</pallas_src>

<mosaic_0001>
module attributes {stable_mosaic.version = 11 : i64} {
  func.func @clip_layer_kernel(%arg0: i32, %arg1: memref<1x128x128xf32, #tpu.memory_space<vmem>>, %arg2: memref<1x128xf32, #tpu.memory_space<vmem>>, %arg3: memref<1x128xf32, #tpu.memory_space<vmem>>, %arg4: memref<128x384xbf16, #tpu.memory_space<vmem>>, %arg5: memref<1x384xf32, #tpu.memory_space<vmem>>, %arg6: memref<128x128xbf16, #tpu.memory_space<vmem>>, %arg7: memref<1x128xf32, #tpu.memory_space<vmem>>, %arg8: memref<1x128xf32, #tpu.memory_space<vmem>>, %arg9: memref<1x128xf32, #tpu.memory_space<vmem>>, %arg10: memref<128x512xbf16, #tpu.memory_space<vmem>>, %arg11: memref<1x512xf32, #tpu.memory_space<vmem>>, %arg12: memref<512x128xbf16, #tpu.memory_space<vmem>>, %arg13: memref<1x128xf32, #tpu.memory_space<vmem>>, %arg14: memref<1x128x128xf32, #tpu.memory_space<vmem>>, %arg15: memref<128x128xbf16, #tpu.memory_space<vmem>>) attributes {dimension_semantics = [#tpu.dimension_semantics<parallel>], iteration_bounds = array<i64: 2>, scalar_prefetch = 0 : i64, scratch_operands = 1 : i64, tpu.core_type = #tpu.core_type<tc>, window_params = [{transform_indices = @transform_0, window_bounds = array<i64: 1, 128, 128>}, {pipeline_mode = #tpu.pipeline_mode<synchronous>, transform_indices = @transform_1, window_bounds = array<i64: 1, 128>}, {pipeline_mode = #tpu.pipeline_mode<synchronous>, transform_indices = @transform_2, window_bounds = array<i64: 1, 128>}, {pipeline_mode = #tpu.pipeline_mode<synchronous>, transform_indices = @transform_3, window_bounds = array<i64: 128, 384>}, {pipeline_mode = #tpu.pipeline_mode<synchronous>, transform_indices = @transform_4, window_bounds = array<i64: 1, 384>}, {pipeline_mode = #tpu.pipeline_mode<synchronous>, transform_indices = @transform_5, window_bounds = array<i64: 128, 128>}, {pipeline_mode = #tpu.pipeline_mode<synchronous>, transform_indices = @transform_6, window_bounds = array<i64: 1, 128>}, {pipeline_mode = #tpu.pipeline_mode<synchronous>, transform_indices = @transform_7, window_bounds = array<i64: 1, 128>}, {pipeline_mode = #tpu.pipeline_mode<synchronous>, transform_indices = @transform_8, window_bounds = array<i64: 1, 128>}, {pipeline_mode = #tpu.pipeline_mode<synchronous>, transform_indices = @transform_9, window_bounds = array<i64: 128, 512>}, {pipeline_mode = #tpu.pipeline_mode<synchronous>, transform_indices = @transform_10, window_bounds = array<i64: 1, 512>}, {pipeline_mode = #tpu.pipeline_mode<synchronous>, transform_indices = @transform_11, window_bounds = array<i64: 512, 128>}, {pipeline_mode = #tpu.pipeline_mode<synchronous>, transform_indices = @transform_12, window_bounds = array<i64: 1, 128>}, {transform_indices = @transform_13, window_bounds = array<i64: 1, 128, 128>}]} {
    %c0 = arith.constant 0 : index
    %c0_0 = arith.constant 0 : index
    %c0_1 = arith.constant 0 : index
    %0 = vector.load %arg1[%c0, %c0_0, %c0_1] : memref<1x128x128xf32, #tpu.memory_space<vmem>>, vector<1x128x128xf32>
    %1 = vector.shape_cast %0 : vector<1x128x128xf32> to vector<128x128xf32>
    %c0_2 = arith.constant 0 : index
    %c0_3 = arith.constant 0 : index
    %2 = vector.load %arg2[%c0_2, %c0_3] : memref<1x128xf32, #tpu.memory_space<vmem>>, vector<1x128xf32>
    %c0_4 = arith.constant 0 : index
    %c0_5 = arith.constant 0 : index
    %3 = vector.load %arg3[%c0_4, %c0_5] : memref<1x128xf32, #tpu.memory_space<vmem>>, vector<1x128xf32>
    %cst = arith.constant dense<0.000000e+00> : vector<128xf32>
    %4 = vector.multi_reduction <add>, %1, %cst [1] : vector<128x128xf32> to vector<128xf32>
    %5 = vector.shape_cast %4 : vector<128xf32> to vector<128x1xf32>
    %cst_6 = arith.constant 1.280000e+02 : f32
    %6 = vector.broadcast %cst_6 : f32 to vector<128x1xf32>
    %7 = arith.divf %5, %6 : vector<128x1xf32>
    %8 = vector.broadcast %7 : vector<128x1xf32> to vector<128x128xf32>
    %9 = arith.subf %1, %8 : vector<128x128xf32>
    %10 = arith.mulf %9, %9 : vector<128x128xf32>
    %cst_7 = arith.constant dense<0.000000e+00> : vector<128xf32>
    %11 = vector.multi_reduction <add>, %10, %cst_7 [1] : vector<128x128xf32> to vector<128xf32>
    %12 = vector.shape_cast %11 : vector<128xf32> to vector<128x1xf32>
    %cst_8 = arith.constant 1.280000e+02 : f32
    %13 = vector.broadcast %cst_8 : f32 to vector<128x1xf32>
    %14 = arith.divf %12, %13 : vector<128x1xf32>
    %15 = vector.broadcast %7 : vector<128x1xf32> to vector<128x128xf32>
    %16 = arith.subf %1, %15 : vector<128x128xf32>
    %cst_9 = arith.constant 9.99999974E-6 : f32
    %17 = vector.broadcast %cst_9 : f32 to vector<128x1xf32>
    %18 = arith.addf %14, %17 : vector<128x1xf32>
    %19 = math.rsqrt %18 : vector<128x1xf32>
    %20 = vector.broadcast %19 : vector<128x1xf32> to vector<128x128xf32>
    %21 = arith.mulf %16, %20 : vector<128x128xf32>
    %22 = vector.broadcast %2 : vector<1x128xf32> to vector<128x128xf32>
    %23 = arith.mulf %21, %22 : vector<128x128xf32>
    %24 = vector.broadcast %3 : vector<1x128xf32> to vector<128x128xf32>
    %25 = arith.addf %23, %24 : vector<128x128xf32>
    %26 = arith.truncf %25 : vector<128x128xf32> to vector<128x128xbf16>
    %c0_10 = arith.constant 0 : index
    %c0_11 = arith.constant 0 : index
    %27 = vector.load %arg4[%c0_10, %c0_11] : memref<128x384xbf16, #tpu.memory_space<vmem>>, vector<128x384xbf16>
    %cst_12 = arith.constant dense<0.000000e+00> : vector<128x384xf32>
    %28 = tpu.matmul %26, %27, %cst_12 {dimension_numbers = #tpu.dot_dimension_numbers<[1], [0], [0], [1], [0, 0, 1, 1], [], []>} : vector<128x128xbf16>, vector<128x384xbf16>, vector<128x384xf32> -> vector<128x384xf32>
    %c0_13 = arith.constant 0 : index
    %c0_14 = arith.constant 0 : index
    %29 = vector.load %arg5[%c0_13, %c0_14] : memref<1x384xf32, #tpu.memory_space<vmem>>, vector<1x384xf32>
    %30 = vector.broadcast %29 : vector<1x384xf32> to vector<128x384xf32>
    %31 = arith.addf %28, %30 : vector<128x384xf32>
    %32 = vector.extract_strided_slice %31 {offsets = [0, 0], sizes = [128, 128], strides = [1, 1]} : vector<128x384xf32> to vector<128x128xf32>
    %cst_15 = arith.constant 0.176776692 : f32
    %33 = vector.broadcast %cst_15 : f32 to vector<128x128xf32>
    %34 = arith.mulf %32, %33 : vector<128x128xf32>
    %35 = arith.truncf %34 : vector<128x128xf32> to vector<128x128xbf16>
    %36 = vector.extract_strided_slice %31 {offsets = [0, 128], sizes = [128, 128], strides = [1, 1]} : vector<128x384xf32> to vector<128x128xf32>
    %37 = arith.truncf %36 : vector<128x128xf32> to vector<128x128xbf16>
    %38 = vector.extract_strided_slice %31 {offsets = [0, 256], sizes = [128, 128], strides = [1, 1]} : vector<128x384xf32> to vector<128x128xf32>
    %39 = arith.truncf %38 : vector<128x128xf32> to vector<128x128xbf16>
    %40 = vector.extract_strided_slice %35 {offsets = [0, 0], sizes = [128, 32], strides = [1, 1]} : vector<128x128xbf16> to vector<128x32xbf16>
    %41 = vector.extract_strided_slice %35 {offsets = [0, 32], sizes = [128, 32], strides = [1, 1]} : vector<128x128xbf16> to vector<128x32xbf16>
    %42 = vector.extract_strided_slice %35 {offsets = [0, 64], sizes = [128, 32], strides = [1, 1]} : vector<128x128xbf16> to vector<128x32xbf16>
    %43 = vector.extract_strided_slice %35 {offsets = [0, 96], sizes = [128, 32], strides = [1, 1]} : vector<128x128xbf16> to vector<128x32xbf16>
    %44 = vector.shape_cast %40 : vector<128x32xbf16> to vector<1x128x32xbf16>
    %45 = vector.shape_cast %41 : vector<128x32xbf16> to vector<1x128x32xbf16>
    %46 = vector.shape_cast %42 : vector<128x32xbf16> to vector<1x128x32xbf16>
    %47 = vector.shape_cast %43 : vector<128x32xbf16> to vector<1x128x32xbf16>
    %48 = tpu.concatenate %44, %45, %46, %47 in 0 : vector<1x128x32xbf16>, vector<1x128x32xbf16>, vector<1x128x32xbf16>, vector<1x128x32xbf16> -> vector<4x128x32xbf16>
    %49 = vector.extract_strided_slice %37 {offsets = [0, 0], sizes = [128, 32], strides = [1, 1]} : vector<128x128xbf16> to vector<128x32xbf16>
    %50 = vector.extract_strided_slice %37 {offsets = [0, 32], sizes = [128, 32], strides = [1, 1]} : vector<128x128xbf16> to vector<128x32xbf16>
    %51 = vector.extract_strided_slice %37 {offsets = [0, 64], sizes = [128, 32], strides = [1, 1]} : vector<128x128xbf16> to vector<128x32xbf16>
    %52 = vector.extract_strided_slice %37 {offsets = [0, 96], sizes = [128, 32], strides = [1, 1]} : vector<128x128xbf16> to vector<128x32xbf16>
    %53 = vector.shape_cast %49 : vector<128x32xbf16> to vector<1x128x32xbf16>
    %54 = vector.shape_cast %50 : vector<128x32xbf16> to vector<1x128x32xbf16>
    %55 = vector.shape_cast %51 : vector<128x32xbf16> to vector<1x128x32xbf16>
    %56 = vector.shape_cast %52 : vector<128x32xbf16> to vector<1x128x32xbf16>
    %57 = tpu.concatenate %53, %54, %55, %56 in 0 : vector<1x128x32xbf16>, vector<1x128x32xbf16>, vector<1x128x32xbf16>, vector<1x128x32xbf16> -> vector<4x128x32xbf16>
    %58 = vector.extract_strided_slice %39 {offsets = [0, 0], sizes = [128, 32], strides = [1, 1]} : vector<128x128xbf16> to vector<128x32xbf16>
    %59 = vector.extract_strided_slice %39 {offsets = [0, 32], sizes = [128, 32], strides = [1, 1]} : vector<128x128xbf16> to vector<128x32xbf16>
    %60 = vector.extract_strided_slice %39 {offsets = [0, 64], sizes = [128, 32], strides = [1, 1]} : vector<128x128xbf16> to vector<128x32xbf16>
    %61 = vector.extract_strided_slice %39 {offsets = [0, 96], sizes = [128, 32], strides = [1, 1]} : vector<128x128xbf16> to vector<128x32xbf16>
    %62 = vector.shape_cast %58 : vector<128x32xbf16> to vector<1x128x32xbf16>
    %63 = vector.shape_cast %59 : vector<128x32xbf16> to vector<1x128x32xbf16>
    %64 = vector.shape_cast %60 : vector<128x32xbf16> to vector<1x128x32xbf16>
    %65 = vector.shape_cast %61 : vector<128x32xbf16> to vector<1x128x32xbf16>
    %66 = tpu.concatenate %62, %63, %64, %65 in 0 : vector<1x128x32xbf16>, vector<1x128x32xbf16>, vector<1x128x32xbf16>, vector<1x128x32xbf16> -> vector<4x128x32xbf16>
    %67 = tpu.iota {dimensions = array<i32: 0>} : vector<128x128xi32>
    %68 = tpu.iota {dimensions = array<i32: 1>} : vector<128x128xi32>
    %69 = arith.cmpi sgt, %68, %67 : vector<128x128xi32>
    %cst_16 = arith.constant -1.000000e+30 : f32
    %cst_17 = arith.constant 0.000000e+00 : f32
    %70 = vector.broadcast %cst_16 : f32 to vector<128x128xf32>
    %71 = vector.broadcast %cst_17 : f32 to vector<128x128xf32>
    %72 = arith.select %69, %70, %71 : vector<128x128xi1>, vector<128x128xf32>
    "tpu.trace_start"() <{level = 10 : i32, message = "hqd,hkd->hqk"}> : () -> ()
    %cst_18 = arith.constant dense<0.000000e+00> : vector<4x128x128xf32>
    %73 = tpu.matmul %48, %57, %cst_18 {dimension_numbers = #tpu.dot_dimension_numbers<[2], [2], [1], [1], [0, 0, 0, 1, 1, 1], [0], [0]>} : vector<4x128x32xbf16>, vector<4x128x32xbf16>, vector<4x128x128xf32> -> vector<4x128x128xf32>
    "tpu.trace_stop"() : () -> ()
    %74 = vector.shape_cast %72 : vector<128x128xf32> to vector<1x128x128xf32>
    %75 = vector.broadcast %74 : vector<1x128x128xf32> to vector<4x128x128xf32>
    %76 = arith.addf %73, %75 : vector<4x128x128xf32>
    %cst_19 = arith.constant dense<0xFF800000> : vector<4x128xf32>
    %77 = vector.multi_reduction <maximumf>, %76, %cst_19 [2] : vector<4x128x128xf32> to vector<4x128xf32>
    %78 = vector.shape_cast %77 : vector<4x128xf32> to vector<4x128x1xf32>
    %79 = vector.broadcast %78 : vector<4x128x1xf32> to vector<4x128x128xf32>
    %80 = arith.subf %76, %79 : vector<4x128x128xf32>
    %81 = math.exp %80 : vector<4x128x128xf32>
    %cst_20 = arith.constant dense<0.000000e+00> : vector<4x128xf32>
    %82 = vector.multi_reduction <add>, %81, %cst_20 [2] : vector<4x128x128xf32> to vector<4x128xf32>
    %83 = vector.shape_cast %82 : vector<4x128xf32> to vector<4x128x1xf32>
    %84 = tpu.reciprocal %83 {approx = true} : vector<4x128x1xf32> -> vector<4x128x1xf32>
    %85 = vector.broadcast %84 : vector<4x128x1xf32> to vector<4x128x128xf32>
    %86 = arith.mulf %81, %85 : vector<4x128x128xf32>
    %87 = arith.truncf %86 : vector<4x128x128xf32> to vector<4x128x128xbf16>
    "tpu.trace_start"() <{level = 10 : i32, message = "hqk,hkd->hqd"}> : () -> ()
    %cst_21 = arith.constant dense<0.000000e+00> : vector<4x128x32xf32>
    %88 = tpu.matmul %87, %66, %cst_21 {dimension_numbers = #tpu.dot_dimension_numbers<[2], [1], [1], [2], [0, 0, 0, 1, 1, 2], [0], [0]>} : vector<4x128x128xbf16>, vector<4x128x32xbf16>, vector<4x128x32xf32> -> vector<4x128x32xf32>
    "tpu.trace_stop"() : () -> ()
    %89 = vector.extract_strided_slice %88 {offsets = [0, 0, 0], sizes = [1, 128, 32], strides = [1, 1, 1]} : vector<4x128x32xf32> to vector<1x128x32xf32>
    %90 = vector.shape_cast %89 : vector<1x128x32xf32> to vector<128x32xf32>
    %91 = arith.truncf %90 : vector<128x32xf32> to vector<128x32xbf16>
    %c0_22 = arith.constant 0 : index
    %c0_23 = arith.constant 0 : index
    %92 = vector.load %arg15[%c0_22, %c0_23] : memref<128x128xbf16, #tpu.memory_space<vmem>>, vector<128x32xbf16>
    tpu.vector_store %arg15[%c0_22, %c0_23], %91 {strides = array<i32>} : memref<128x128xbf16, #tpu.memory_space<vmem>>, vector<128x32xbf16>,
    %93 = vector.extract_strided_slice %88 {offsets = [1, 0, 0], sizes = [1, 128, 32], strides = [1, 1, 1]} : vector<4x128x32xf32> to vector<1x128x32xf32>
    %94 = vector.shape_cast %93 : vector<1x128x32xf32> to vector<128x32xf32>
    %95 = arith.truncf %94 : vector<128x32xf32> to vector<128x32xbf16>
    %c0_24 = arith.constant 0 : index
    %c32 = arith.constant 32 : index
    %96 = vector.load %arg15[%c0_24, %c32] : memref<128x128xbf16, #tpu.memory_space<vmem>>, vector<128x32xbf16>
    tpu.vector_store %arg15[%c0_24, %c32], %95 {strides = array<i32>} : memref<128x128xbf16, #tpu.memory_space<vmem>>, vector<128x32xbf16>,
    %97 = vector.extract_strided_slice %88 {offsets = [2, 0, 0], sizes = [1, 128, 32], strides = [1, 1, 1]} : vector<4x128x32xf32> to vector<1x128x32xf32>
    %98 = vector.shape_cast %97 : vector<1x128x32xf32> to vector<128x32xf32>
    %99 = arith.truncf %98 : vector<128x32xf32> to vector<128x32xbf16>
    %c0_25 = arith.constant 0 : index
    %c64 = arith.constant 64 : index
    %100 = vector.load %arg15[%c0_25, %c64] : memref<128x128xbf16, #tpu.memory_space<vmem>>, vector<128x32xbf16>
    tpu.vector_store %arg15[%c0_25, %c64], %99 {strides = array<i32>} : memref<128x128xbf16, #tpu.memory_space<vmem>>, vector<128x32xbf16>,
    %101 = vector.extract_strided_slice %88 {offsets = [3, 0, 0], sizes = [1, 128, 32], strides = [1, 1, 1]} : vector<4x128x32xf32> to vector<1x128x32xf32>
    %102 = vector.shape_cast %101 : vector<1x128x32xf32> to vector<128x32xf32>
    %103 = arith.truncf %102 : vector<128x32xf32> to vector<128x32xbf16>
    %c0_26 = arith.constant 0 : index
    %c96 = arith.constant 96 : index
    %104 = vector.load %arg15[%c0_26, %c96] : memref<128x128xbf16, #tpu.memory_space<vmem>>, vector<128x32xbf16>
    tpu.vector_store %arg15[%c0_26, %c96], %103 {strides = array<i32>} : memref<128x128xbf16, #tpu.memory_space<vmem>>, vector<128x32xbf16>,
    %c0_27 = arith.constant 0 : index
    %c0_28 = arith.constant 0 : index
    %105 = vector.load %arg15[%c0_27, %c0_28] : memref<128x128xbf16, #tpu.memory_space<vmem>>, vector<128x128xbf16>
    %c0_29 = arith.constant 0 : index
    %c0_30 = arith.constant 0 : index
    %106 = vector.load %arg6[%c0_29, %c0_30] : memref<128x128xbf16, #tpu.memory_space<vmem>>, vector<128x128xbf16>
    %cst_31 = arith.constant dense<0.000000e+00> : vector<128x128xf32>
    %107 = tpu.matmul %105, %106, %cst_31 {dimension_numbers = #tpu.dot_dimension_numbers<[1], [0], [0], [1], [0, 0, 1, 1], [], []>} : vector<128x128xbf16>, vector<128x128xbf16>, vector<128x128xf32> -> vector<128x128xf32>
    %c0_32 = arith.constant 0 : index
    %c0_33 = arith.constant 0 : index
    %108 = vector.load %arg7[%c0_32, %c0_33] : memref<1x128xf32, #tpu.memory_space<vmem>>, vector<1x128xf32>
    %109 = vector.broadcast %108 : vector<1x128xf32> to vector<128x128xf32>
    %110 = arith.addf %107, %109 : vector<128x128xf32>
    %111 = arith.addf %110, %1 : vector<128x128xf32>
    %c0_34 = arith.constant 0 : index
    %c0_35 = arith.constant 0 : index
    %112 = vector.load %arg8[%c0_34, %c0_35] : memref<1x128xf32, #tpu.memory_space<vmem>>, vector<1x128xf32>
    %c0_36 = arith.constant 0 : index
    %c0_37 = arith.constant 0 : index
    %113 = vector.load %arg9[%c0_36, %c0_37] : memref<1x128xf32, #tpu.memory_space<vmem>>, vector<1x128xf32>
    %cst_38 = arith.constant dense<0.000000e+00> : vector<128xf32>
    %114 = vector.multi_reduction <add>, %111, %cst_38 [1] : vector<128x128xf32> to vector<128xf32>
    %115 = vector.shape_cast %114 : vector<128xf32> to vector<128x1xf32>
    %cst_39 = arith.constant 1.280000e+02 : f32
    %116 = vector.broadcast %cst_39 : f32 to vector<128x1xf32>
    %117 = arith.divf %115, %116 : vector<128x1xf32>
    %118 = vector.broadcast %117 : vector<128x1xf32> to vector<128x128xf32>
    %119 = arith.subf %111, %118 : vector<128x128xf32>
    %120 = arith.mulf %119, %119 : vector<128x128xf32>
    %cst_40 = arith.constant dense<0.000000e+00> : vector<128xf32>
    %121 = vector.multi_reduction <add>, %120, %cst_40 [1] : vector<128x128xf32> to vector<128xf32>
    %122 = vector.shape_cast %121 : vector<128xf32> to vector<128x1xf32>
    %cst_41 = arith.constant 1.280000e+02 : f32
    %123 = vector.broadcast %cst_41 : f32 to vector<128x1xf32>
    %124 = arith.divf %122, %123 : vector<128x1xf32>
    %125 = vector.broadcast %117 : vector<128x1xf32> to vector<128x128xf32>
    %126 = arith.subf %111, %125 : vector<128x128xf32>
    %cst_42 = arith.constant 9.99999974E-6 : f32
    %127 = vector.broadcast %cst_42 : f32 to vector<128x1xf32>
    %128 = arith.addf %124, %127 : vector<128x1xf32>
    %129 = math.rsqrt %128 : vector<128x1xf32>
    %130 = vector.broadcast %129 : vector<128x1xf32> to vector<128x128xf32>
    %131 = arith.mulf %126, %130 : vector<128x128xf32>
    %132 = vector.broadcast %112 : vector<1x128xf32> to vector<128x128xf32>
    %133 = arith.mulf %131, %132 : vector<128x128xf32>
    %134 = vector.broadcast %113 : vector<1x128xf32> to vector<128x128xf32>
    %135 = arith.addf %133, %134 : vector<128x128xf32>
    %136 = arith.truncf %135 : vector<128x128xf32> to vector<128x128xbf16>
    %c0_43 = arith.constant 0 : index
    %c0_44 = arith.constant 0 : index
    %137 = vector.load %arg10[%c0_43, %c0_44] : memref<128x512xbf16, #tpu.memory_space<vmem>>, vector<128x512xbf16>
    %cst_45 = arith.constant dense<0.000000e+00> : vector<128x512xf32>
    %138 = tpu.matmul %136, %137, %cst_45 {dimension_numbers = #tpu.dot_dimension_numbers<[1], [0], [0], [1], [0, 0, 1, 1], [], []>} : vector<128x128xbf16>, vector<128x512xbf16>, vector<128x512xf32> -> vector<128x512xf32>
    %c0_46 = arith.constant 0 : index
    %c0_47 = arith.constant 0 : index
    %139 = vector.load %arg11[%c0_46, %c0_47] : memref<1x512xf32, #tpu.memory_space<vmem>>, vector<1x512xf32>
    %140 = vector.broadcast %139 : vector<1x512xf32> to vector<128x512xf32>
    %141 = arith.addf %138, %140 : vector<128x512xf32>
    %cst_48 = arith.constant 1.702000e+00 : f32
    %142 = vector.broadcast %cst_48 : f32 to vector<128x512xf32>
    %143 = arith.mulf %142, %141 : vector<128x512xf32>
    %144 = arith.negf %143 : vector<128x512xf32>
    %145 = math.exp %144 : vector<128x512xf32>
    %cst_49 = arith.constant 1.000000e+00 : f32
    %146 = vector.broadcast %cst_49 : f32 to vector<128x512xf32>
    %147 = arith.addf %146, %145 : vector<128x512xf32>
    %148 = arith.divf %146, %147 : vector<128x512xf32>
    %149 = arith.mulf %141, %148 : vector<128x512xf32>
    %150 = arith.truncf %149 : vector<128x512xf32> to vector<128x512xbf16>
    %c0_50 = arith.constant 0 : index
    %c0_51 = arith.constant 0 : index
    %151 = vector.load %arg12[%c0_50, %c0_51] : memref<512x128xbf16, #tpu.memory_space<vmem>>, vector<512x128xbf16>
    %cst_52 = arith.constant dense<0.000000e+00> : vector<128x128xf32>
    %152 = tpu.matmul %150, %151, %cst_52 {dimension_numbers = #tpu.dot_dimension_numbers<[1], [0], [0], [1], [0, 0, 1, 1], [], []>} : vector<128x512xbf16>, vector<512x128xbf16>, vector<128x128xf32> -> vector<128x128xf32>
    %c0_53 = arith.constant 0 : index
    %c0_54 = arith.constant 0 : index
    %153 = vector.load %arg13[%c0_53, %c0_54] : memref<1x128xf32, #tpu.memory_space<vmem>>, vector<1x128xf32>
    %154 = vector.broadcast %153 : vector<1x128xf32> to vector<128x128xf32>
    %155 = arith.addf %152, %154 : vector<128x128xf32>
    %156 = arith.addf %155, %111 : vector<128x128xf32>
    %c0_55 = arith.constant 0 : index
    %c0_56 = arith.constant 0 : index
    %c0_57 = arith.constant 0 : index
    %157 = vector.load %arg14[%c0_55, %c0_56, %c0_57] : memref<1x128x128xf32, #tpu.memory_space<vmem>>, vector<1x128x128xf32>
    %158 = vector.shape_cast %157 : vector<1x128x128xf32> to vector<128x128xf32>
    %159 = vector.shape_cast %156 : vector<128x128xf32> to vector<1x128x128xf32>
    tpu.vector_store %arg14[%c0_55, %c0_56, %c0_57], %159 {strides = array<i32>} : memref<1x128x128xf32, #tpu.memory_space<vmem>>, vector<1x128x128xf32>,
    return
  }
  func.func @transform_0(%arg0: i32) -> (i32, i32, i32) {
    %c0_i32 = arith.constant 0 : i32
    %c0_i32_0 = arith.constant 0 : i32
    %c0_i32_1 = arith.constant 0 : i32
    return %arg0, %c0_i32, %c0_i32_0 : i32, i32, i32
  }
  func.func @transform_1(%arg0: i32) -> (i32, i32) {
    %c0_i32 = arith.constant 0 : i32
    %c0_i32_0 = arith.constant 0 : i32
    %c0_i32_1 = arith.constant 0 : i32
    return %c0_i32, %c0_i32_0 : i32, i32
  }
  func.func @transform_2(%arg0: i32) -> (i32, i32) {
    %c0_i32 = arith.constant 0 : i32
    %c0_i32_0 = arith.constant 0 : i32
    %c0_i32_1 = arith.constant 0 : i32
    return %c0_i32, %c0_i32_0 : i32, i32
  }
  func.func @transform_3(%arg0: i32) -> (i32, i32) {
    %c0_i32 = arith.constant 0 : i32
    %c0_i32_0 = arith.constant 0 : i32
    %c0_i32_1 = arith.constant 0 : i32
    return %c0_i32, %c0_i32_0 : i32, i32
  }
  func.func @transform_4(%arg0: i32) -> (i32, i32) {
    %c0_i32 = arith.constant 0 : i32
    %c0_i32_0 = arith.constant 0 : i32
    %c0_i32_1 = arith.constant 0 : i32
    return %c0_i32, %c0_i32_0 : i32, i32
  }
  func.func @transform_5(%arg0: i32) -> (i32, i32) {
    %c0_i32 = arith.constant 0 : i32
    %c0_i32_0 = arith.constant 0 : i32
    %c0_i32_1 = arith.constant 0 : i32
    return %c0_i32, %c0_i32_0 : i32, i32
  }
  func.func @transform_6(%arg0: i32) -> (i32, i32) {
    %c0_i32 = arith.constant 0 : i32
    %c0_i32_0 = arith.constant 0 : i32
    %c0_i32_1 = arith.constant 0 : i32
    return %c0_i32, %c0_i32_0 : i32, i32
  }
  func.func @transform_7(%arg0: i32) -> (i32, i32) {
    %c0_i32 = arith.constant 0 : i32
    %c0_i32_0 = arith.constant 0 : i32
    %c0_i32_1 = arith.constant 0 : i32
    return %c0_i32, %c0_i32_0 : i32, i32
  }
  func.func @transform_8(%arg0: i32) -> (i32, i32) {
    %c0_i32 = arith.constant 0 : i32
    %c0_i32_0 = arith.constant 0 : i32
    %c0_i32_1 = arith.constant 0 : i32
    return %c0_i32, %c0_i32_0 : i32, i32
  }
  func.func @transform_9(%arg0: i32) -> (i32, i32) {
    %c0_i32 = arith.constant 0 : i32
    %c0_i32_0 = arith.constant 0 : i32
    %c0_i32_1 = arith.constant 0 : i32
    return %c0_i32, %c0_i32_0 : i32, i32
  }
  func.func @transform_10(%arg0: i32) -> (i32, i32) {
    %c0_i32 = arith.constant 0 : i32
    %c0_i32_0 = arith.constant 0 : i32
    %c0_i32_1 = arith.constant 0 : i32
    return %c0_i32, %c0_i32_0 : i32, i32
  }
  func.func @transform_11(%arg0: i32) -> (i32, i32) {
    %c0_i32 = arith.constant 0 : i32
    %c0_i32_0 = arith.constant 0 : i32
    %c0_i32_1 = arith.constant 0 : i32
    return %c0_i32, %c0_i32_0 : i32, i32
  }
  func.func @transform_12(%arg0: i32) -> (i32, i32) {
    %c0_i32 = arith.constant 0 : i32
    %c0_i32_0 = arith.constant 0 : i32
    %c0_i32_1 = arith.constant 0 : i32
    return %c0_i32, %c0_i32_0 : i32, i32
  }
  func.func @transform_13(%arg0: i32) -> (i32, i32, i32) {
    %c0_i32 = arith.constant 0 : i32
    %c0_i32_0 = arith.constant 0 : i32
    %c0_i32_1 = arith.constant 0 : i32
    return %arg0, %c0_i32, %c0_i32_0 : i32, i32, i32
  }
}

module attributes {stable_mosaic.version = 11 : i64} {
  func.func @clip_layer_kernel(%arg0: i32, %arg1: memref<1x128x128xf32, #tpu.memory_space<vmem>>, %arg2: memref<1x128xf32, #tpu.memory_space<vmem>>, %arg3: memref<1x128xf32, #tpu.memory_space<vmem>>, %arg4: memref<128x384xbf16, #tpu.memory_space<vmem>>, %arg5: memref<1x384xf32, #tpu.memory_space<vmem>>, %arg6: memref<128x128xbf16, #tpu.memory_space<vmem>>, %arg7: memref<1x128xf32, #tpu.memory_space<vmem>>, %arg8: memref<1x128xf32, #tpu.memory_space<vmem>>, %arg9: memref<1x128xf32, #tpu.memory_space<vmem>>, %arg10: memref<128x512xbf16, #tpu.memory_space<vmem>>, %arg11: memref<1x512xf32, #tpu.memory_space<vmem>>, %arg12: memref<512x128xbf16, #tpu.memory_space<vmem>>, %arg13: memref<1x128xf32, #tpu.memory_space<vmem>>, %arg14: memref<1x128x128xf32, #tpu.memory_space<vmem>>, %arg15: memref<128x128xbf16, #tpu.memory_space<vmem>>) attributes {dimension_semantics = [#tpu.dimension_semantics<parallel>], iteration_bounds = array<i64: 2>, scalar_prefetch = 0 : i64, scratch_operands = 1 : i64, tpu.core_type = #tpu.core_type<tc>, window_params = [{transform_indices = @transform_0, window_bounds = array<i64: 1, 128, 128>}, {pipeline_mode = #tpu.pipeline_mode<synchronous>, transform_indices = @transform_1, window_bounds = array<i64: 1, 128>}, {pipeline_mode = #tpu.pipeline_mode<synchronous>, transform_indices = @transform_2, window_bounds = array<i64: 1, 128>}, {pipeline_mode = #tpu.pipeline_mode<synchronous>, transform_indices = @transform_3, window_bounds = array<i64: 128, 384>}, {pipeline_mode = #tpu.pipeline_mode<synchronous>, transform_indices = @transform_4, window_bounds = array<i64: 1, 384>}, {pipeline_mode = #tpu.pipeline_mode<synchronous>, transform_indices = @transform_5, window_bounds = array<i64: 128, 128>}, {pipeline_mode = #tpu.pipeline_mode<synchronous>, transform_indices = @transform_6, window_bounds = array<i64: 1, 128>}, {pipeline_mode = #tpu.pipeline_mode<synchronous>, transform_indices = @transform_7, window_bounds = array<i64: 1, 128>}, {pipeline_mode = #tpu.pipeline_mode<synchronous>, transform_indices = @transform_8, window_bounds = array<i64: 1, 128>}, {pipeline_mode = #tpu.pipeline_mode<synchronous>, transform_indices = @transform_9, window_bounds = array<i64: 128, 512>}, {pipeline_mode = #tpu.pipeline_mode<synchronous>, transform_indices = @transform_10, window_bounds = array<i64: 1, 512>}, {pipeline_mode = #tpu.pipeline_mode<synchronous>, transform_indices = @transform_11, window_bounds = array<i64: 512, 128>}, {pipeline_mode = #tpu.pipeline_mode<synchronous>, transform_indices = @transform_12, window_bounds = array<i64: 1, 128>}, {transform_indices = @transform_13, window_bounds = array<i64: 1, 128, 128>}]} {
    %c0 = arith.constant 0 : index
    %c0_0 = arith.constant 0 : index
    %c0_1 = arith.constant 0 : index
    %0 = vector.load %arg1[%c0, %c0_0, %c0_1] : memref<1x128x128xf32, #tpu.memory_space<vmem>>, vector<1x128x128xf32>
    %1 = vector.shape_cast %0 : vector<1x128x128xf32> to vector<128x128xf32>
    %c0_2 = arith.constant 0 : index
    %c0_3 = arith.constant 0 : index
    %2 = vector.load %arg2[%c0_2, %c0_3] : memref<1x128xf32, #tpu.memory_space<vmem>>, vector<1x128xf32>
    %c0_4 = arith.constant 0 : index
    %c0_5 = arith.constant 0 : index
    %3 = vector.load %arg3[%c0_4, %c0_5] : memref<1x128xf32, #tpu.memory_space<vmem>>, vector<1x128xf32>
    %cst = arith.constant dense<0.000000e+00> : vector<128xf32>
    %4 = vector.multi_reduction <add>, %1, %cst [1] : vector<128x128xf32> to vector<128xf32>
    %5 = vector.shape_cast %4 : vector<128xf32> to vector<128x1xf32>
    %cst_6 = arith.constant 1.280000e+02 : f32
    %6 = vector.broadcast %cst_6 : f32 to vector<128x1xf32>
    %7 = arith.divf %5, %6 : vector<128x1xf32>
    %8 = vector.broadcast %7 : vector<128x1xf32> to vector<128x128xf32>
    %9 = arith.subf %1, %8 : vector<128x128xf32>
    %10 = arith.mulf %9, %9 : vector<128x128xf32>
    %cst_7 = arith.constant dense<0.000000e+00> : vector<128xf32>
    %11 = vector.multi_reduction <add>, %10, %cst_7 [1] : vector<128x128xf32> to vector<128xf32>
    %12 = vector.shape_cast %11 : vector<128xf32> to vector<128x1xf32>
    %cst_8 = arith.constant 1.280000e+02 : f32
    %13 = vector.broadcast %cst_8 : f32 to vector<128x1xf32>
    %14 = arith.divf %12, %13 : vector<128x1xf32>
    %15 = vector.broadcast %7 : vector<128x1xf32> to vector<128x128xf32>
    %16 = arith.subf %1, %15 : vector<128x128xf32>
    %cst_9 = arith.constant 9.99999974E-6 : f32
    %17 = vector.broadcast %cst_9 : f32 to vector<128x1xf32>
    %18 = arith.addf %14, %17 : vector<128x1xf32>
    %19 = math.rsqrt %18 : vector<128x1xf32>
    %20 = vector.broadcast %19 : vector<128x1xf32> to vector<128x128xf32>
    %21 = arith.mulf %16, %20 : vector<128x128xf32>
    %22 = vector.broadcast %2 : vector<1x128xf32> to vector<128x128xf32>
    %23 = arith.mulf %21, %22 : vector<128x128xf32>
    %24 = vector.broadcast %3 : vector<1x128xf32> to vector<128x128xf32>
    %25 = arith.addf %23, %24 : vector<128x128xf32>
    %26 = arith.truncf %25 : vector<128x128xf32> to vector<128x128xbf16>
    %c0_10 = arith.constant 0 : index
    %c0_11 = arith.constant 0 : index
    %27 = vector.load %arg4[%c0_10, %c0_11] : memref<128x384xbf16, #tpu.memory_space<vmem>>, vector<128x384xbf16>
    %cst_12 = arith.constant dense<0.000000e+00> : vector<128x384xf32>
    %28 = tpu.matmul %26, %27, %cst_12 {dimension_numbers = #tpu.dot_dimension_numbers<[1], [0], [0], [1], [0, 0, 1, 1], [], []>} : vector<128x128xbf16>, vector<128x384xbf16>, vector<128x384xf32> -> vector<128x384xf32>
    %c0_13 = arith.constant 0 : index
    %c0_14 = arith.constant 0 : index
    %29 = vector.load %arg5[%c0_13, %c0_14] : memref<1x384xf32, #tpu.memory_space<vmem>>, vector<1x384xf32>
    %30 = vector.broadcast %29 : vector<1x384xf32> to vector<128x384xf32>
    %31 = arith.addf %28, %30 : vector<128x384xf32>
    %32 = vector.extract_strided_slice %31 {offsets = [0, 0], sizes = [128, 128], strides = [1, 1]} : vector<128x384xf32> to vector<128x128xf32>
    %cst_15 = arith.constant 0.176776692 : f32
    %33 = vector.broadcast %cst_15 : f32 to vector<128x128xf32>
    %34 = arith.mulf %32, %33 : vector<128x128xf32>
    %35 = arith.truncf %34 : vector<128x128xf32> to vector<128x128xbf16>
    %36 = vector.extract_strided_slice %31 {offsets = [0, 128], sizes = [128, 128], strides = [1, 1]} : vector<128x384xf32> to vector<128x128xf32>
    %37 = arith.truncf %36 : vector<128x128xf32> to vector<128x128xbf16>
    %38 = vector.extract_strided_slice %31 {offsets = [0, 256], sizes = [128, 128], strides = [1, 1]} : vector<128x384xf32> to vector<128x128xf32>
    %39 = arith.truncf %38 : vector<128x128xf32> to vector<128x128xbf16>
    %40 = vector.extract_strided_slice %35 {offsets = [0, 0], sizes = [128, 32], strides = [1, 1]} : vector<128x128xbf16> to vector<128x32xbf16>
    %41 = vector.extract_strided_slice %35 {offsets = [0, 32], sizes = [128, 32], strides = [1, 1]} : vector<128x128xbf16> to vector<128x32xbf16>
    %42 = vector.extract_strided_slice %35 {offsets = [0, 64], sizes = [128, 32], strides = [1, 1]} : vector<128x128xbf16> to vector<128x32xbf16>
    %43 = vector.extract_strided_slice %35 {offsets = [0, 96], sizes = [128, 32], strides = [1, 1]} : vector<128x128xbf16> to vector<128x32xbf16>
    %44 = vector.shape_cast %40 : vector<128x32xbf16> to vector<1x128x32xbf16>
    %45 = vector.shape_cast %41 : vector<128x32xbf16> to vector<1x128x32xbf16>
    %46 = vector.shape_cast %42 : vector<128x32xbf16> to vector<1x128x32xbf16>
    %47 = vector.shape_cast %43 : vector<128x32xbf16> to vector<1x128x32xbf16>
    %48 = tpu.concatenate %44, %45, %46, %47 in 0 : vector<1x128x32xbf16>, vector<1x128x32xbf16>, vector<1x128x32xbf16>, vector<1x128x32xbf16> -> vector<4x128x32xbf16>
    %49 = vector.extract_strided_slice %37 {offsets = [0, 0], sizes = [128, 32], strides = [1, 1]} : vector<128x128xbf16> to vector<128x32xbf16>
    %50 = vector.extract_strided_slice %37 {offsets = [0, 32], sizes = [128, 32], strides = [1, 1]} : vector<128x128xbf16> to vector<128x32xbf16>
    %51 = vector.extract_strided_slice %37 {offsets = [0, 64], sizes = [128, 32], strides = [1, 1]} : vector<128x128xbf16> to vector<128x32xbf16>
    %52 = vector.extract_strided_slice %37 {offsets = [0, 96], sizes = [128, 32], strides = [1, 1]} : vector<128x128xbf16> to vector<128x32xbf16>
    %53 = vector.shape_cast %49 : vector<128x32xbf16> to vector<1x128x32xbf16>
    %54 = vector.shape_cast %50 : vector<128x32xbf16> to vector<1x128x32xbf16>
    %55 = vector.shape_cast %51 : vector<128x32xbf16> to vector<1x128x32xbf16>
    %56 = vector.shape_cast %52 : vector<128x32xbf16> to vector<1x128x32xbf16>
    %57 = tpu.concatenate %53, %54, %55, %56 in 0 : vector<1x128x32xbf16>, vector<1x128x32xbf16>, vector<1x128x32xbf16>, vector<1x128x32xbf16> -> vector<4x128x32xbf16>
    %58 = vector.extract_strided_slice %39 {offsets = [0, 0], sizes = [128, 32], strides = [1, 1]} : vector<128x128xbf16> to vector<128x32xbf16>
    %59 = vector.extract_strided_slice %39 {offsets = [0, 32], sizes = [128, 32], strides = [1, 1]} : vector<128x128xbf16> to vector<128x32xbf16>
    %60 = vector.extract_strided_slice %39 {offsets = [0, 64], sizes = [128, 32], strides = [1, 1]} : vector<128x128xbf16> to vector<128x32xbf16>
    %61 = vector.extract_strided_slice %39 {offsets = [0, 96], sizes = [128, 32], strides = [1, 1]} : vector<128x128xbf16> to vector<128x32xbf16>
    %62 = vector.shape_cast %58 : vector<128x32xbf16> to vector<1x128x32xbf16>
    %63 = vector.shape_cast %59 : vector<128x32xbf16> to vector<1x128x32xbf16>
    %64 = vector.shape_cast %60 : vector<128x32xbf16> to vector<1x128x32xbf16>
    %65 = vector.shape_cast %61 : vector<128x32xbf16> to vector<1x128x32xbf16>
    %66 = tpu.concatenate %62, %63, %64, %65 in 0 : vector<1x128x32xbf16>, vector<1x128x32xbf16>, vector<1x128x32xbf16>, vector<1x128x32xbf16> -> vector<4x128x32xbf16>
    %67 = tpu.iota {dimensions = array<i32: 0>} : vector<128x128xi32>
    %68 = tpu.iota {dimensions = array<i32: 1>} : vector<128x128xi32>
    %69 = arith.cmpi sgt, %68, %67 : vector<128x128xi32>
    %cst_16 = arith.constant -1.000000e+30 : f32
    %cst_17 = arith.constant 0.000000e+00 : f32
    %70 = vector.broadcast %cst_16 : f32 to vector<128x128xf32>
    %71 = vector.broadcast %cst_17 : f32 to vector<128x128xf32>
    %72 = arith.select %69, %70, %71 : vector<128x128xi1>, vector<128x128xf32>
    "tpu.trace_start"() <{level = 10 : i32, message = "hqd,hkd->hqk"}> : () -> ()
    %cst_18 = arith.constant dense<0.000000e+00> : vector<4x128x128xf32>
    %73 = tpu.matmul %48, %57, %cst_18 {dimension_numbers = #tpu.dot_dimension_numbers<[2], [2], [1], [1], [0, 0, 0, 1, 1, 1], [0], [0]>} : vector<4x128x32xbf16>, vector<4x128x32xbf16>, vector<4x128x128xf32> -> vector<4x128x128xf32>
    "tpu.trace_stop"() : () -> ()
    %74 = vector.shape_cast %72 : vector<128x128xf32> to vector<1x128x128xf32>
    %75 = vector.broadcast %74 : vector<1x128x128xf32> to vector<4x128x128xf32>
    %76 = arith.addf %73, %75 : vector<4x128x128xf32>
    %cst_19 = arith.constant dense<0xFF800000> : vector<4x128xf32>
    %77 = vector.multi_reduction <maximumf>, %76, %cst_19 [2] : vector<4x128x128xf32> to vector<4x128xf32>
    %78 = vector.shape_cast %77 : vector<4x128xf32> to vector<4x128x1xf32>
    %79 = vector.broadcast %78 : vector<4x128x1xf32> to vector<4x128x128xf32>
    %80 = arith.subf %76, %79 : vector<4x128x128xf32>
    %81 = math.exp %80 : vector<4x128x128xf32>
    %cst_20 = arith.constant dense<0.000000e+00> : vector<4x128xf32>
    %82 = vector.multi_reduction <add>, %81, %cst_20 [2] : vector<4x128x128xf32> to vector<4x128xf32>
    %83 = vector.shape_cast %82 : vector<4x128xf32> to vector<4x128x1xf32>
    %84 = tpu.reciprocal %83 {approx = true} : vector<4x128x1xf32> -> vector<4x128x1xf32>
    %85 = vector.broadcast %84 : vector<4x128x1xf32> to vector<4x128x128xf32>
    %86 = arith.mulf %81, %85 : vector<4x128x128xf32>
    %87 = arith.truncf %86 : vector<4x128x128xf32> to vector<4x128x128xbf16>
    "tpu.trace_start"() <{level = 10 : i32, message = "hqk,hkd->hqd"}> : () -> ()
    %cst_21 = arith.constant dense<0.000000e+00> : vector<4x128x32xf32>
    %88 = tpu.matmul %87, %66, %cst_21 {dimension_numbers = #tpu.dot_dimension_numbers<[2], [1], [1], [2], [0, 0, 0, 1, 1, 2], [0], [0]>} : vector<4x128x128xbf16>, vector<4x128x32xbf16>, vector<4x128x32xf32> -> vector<4x128x32xf32>
    "tpu.trace_stop"() : () -> ()
    %89 = vector.extract_strided_slice %88 {offsets = [0, 0, 0], sizes = [1, 128, 32], strides = [1, 1, 1]} : vector<4x128x32xf32> to vector<1x128x32xf32>
    %90 = vector.shape_cast %89 : vector<1x128x32xf32> to vector<128x32xf32>
    %91 = arith.truncf %90 : vector<128x32xf32> to vector<128x32xbf16>
    %c0_22 = arith.constant 0 : index
    %c0_23 = arith.constant 0 : index
    %92 = vector.load %arg15[%c0_22, %c0_23] : memref<128x128xbf16, #tpu.memory_space<vmem>>, vector<128x32xbf16>
    tpu.vector_store %arg15[%c0_22, %c0_23], %91 {strides = array<i32>} : memref<128x128xbf16, #tpu.memory_space<vmem>>, vector<128x32xbf16>,
    %93 = vector.extract_strided_slice %88 {offsets = [1, 0, 0], sizes = [1, 128, 32], strides = [1, 1, 1]} : vector<4x128x32xf32> to vector<1x128x32xf32>
    %94 = vector.shape_cast %93 : vector<1x128x32xf32> to vector<128x32xf32>
    %95 = arith.truncf %94 : vector<128x32xf32> to vector<128x32xbf16>
    %c0_24 = arith.constant 0 : index
    %c32 = arith.constant 32 : index
    %96 = vector.load %arg15[%c0_24, %c32] : memref<128x128xbf16, #tpu.memory_space<vmem>>, vector<128x32xbf16>
    tpu.vector_store %arg15[%c0_24, %c32], %95 {strides = array<i32>} : memref<128x128xbf16, #tpu.memory_space<vmem>>, vector<128x32xbf16>,
    %97 = vector.extract_strided_slice %88 {offsets = [2, 0, 0], sizes = [1, 128, 32], strides = [1, 1, 1]} : vector<4x128x32xf32> to vector<1x128x32xf32>
    %98 = vector.shape_cast %97 : vector<1x128x32xf32> to vector<128x32xf32>
    %99 = arith.truncf %98 : vector<128x32xf32> to vector<128x32xbf16>
    %c0_25 = arith.constant 0 : index
    %c64 = arith.constant 64 : index
    %100 = vector.load %arg15[%c0_25, %c64] : memref<128x128xbf16, #tpu.memory_space<vmem>>, vector<128x32xbf16>
    tpu.vector_store %arg15[%c0_25, %c64], %99 {strides = array<i32>} : memref<128x128xbf16, #tpu.memory_space<vmem>>, vector<128x32xbf16>,
    %101 = vector.extract_strided_slice %88 {offsets = [3, 0, 0], sizes = [1, 128, 32], strides = [1, 1, 1]} : vector<4x128x32xf32> to vector<1x128x32xf32>
    %102 = vector.shape_cast %101 : vector<1x128x32xf32> to vector<128x32xf32>
    %103 = arith.truncf %102 : vector<128x32xf32> to vector<128x32xbf16>
    %c0_26 = arith.constant 0 : index
    %c96 = arith.constant 96 : index
    %104 = vector.load %arg15[%c0_26, %c96] : memref<128x128xbf16, #tpu.memory_space<vmem>>, vector<128x32xbf16>
    tpu.vector_store %arg15[%c0_26, %c96], %103 {strides = array<i32>} : memref<128x128xbf16, #tpu.memory_space<vmem>>, vector<128x32xbf16>,
    %c0_27 = arith.constant 0 : index
    %c0_28 = arith.constant 0 : index
    %105 = vector.load %arg15[%c0_27, %c0_28] : memref<128x128xbf16, #tpu.memory_space<vmem>>, vector<128x128xbf16>
    %c0_29 = arith.constant 0 : index
    %c0_30 = arith.constant 0 : index
    %106 = vector.load %arg6[%c0_29, %c0_30] : memref<128x128xbf16, #tpu.memory_space<vmem>>, vector<128x128xbf16>
    %cst_31 = arith.constant dense<0.000000e+00> : vector<128x128xf32>
    %107 = tpu.matmul %105, %106, %cst_31 {dimension_numbers = #tpu.dot_dimension_numbers<[1], [0], [0], [1], [0, 0, 1, 1], [], []>} : vector<128x128xbf16>, vector<128x128xbf16>, vector<128x128xf32> -> vector<128x128xf32>
    %c0_32 = arith.constant 0 : index
    %c0_33 = arith.constant 0 : index
    %108 = vector.load %arg7[%c0_32, %c0_33] : memref<1x128xf32, #tpu.memory_space<vmem>>, vector<1x128xf32>
    %109 = vector.broadcast %108 : vector<1x128xf32> to vector<128x128xf32>
    %110 = arith.addf %107, %109 : vector<128x128xf32>
    %111 = arith.addf %110, %1 : vector<128x128xf32>
    %c0_34 = arith.constant 0 : index
    %c0_35 = arith.constant 0 : index
    %112 = vector.load %arg8[%c0_34, %c0_35] : memref<1x128xf32, #tpu.memory_space<vmem>>, vector<1x128xf32>
    %c0_36 = arith.constant 0 : index
    %c0_37 = arith.constant 0 : index
    %113 = vector.load %arg9[%c0_36, %c0_37] : memref<1x128xf32, #tpu.memory_space<vmem>>, vector<1x128xf32>
    %cst_38 = arith.constant dense<0.000000e+00> : vector<128xf32>
    %114 = vector.multi_reduction <add>, %111, %cst_38 [1] : vector<128x128xf32> to vector<128xf32>
    %115 = vector.shape_cast %114 : vector<128xf32> to vector<128x1xf32>
    %cst_39 = arith.constant 1.280000e+02 : f32
    %116 = vector.broadcast %cst_39 : f32 to vector<128x1xf32>
    %117 = arith.divf %115, %116 : vector<128x1xf32>
    %118 = vector.broadcast %117 : vector<128x1xf32> to vector<128x128xf32>
    %119 = arith.subf %111, %118 : vector<128x128xf32>
    %120 = arith.mulf %119, %119 : vector<128x128xf32>
    %cst_40 = arith.constant dense<0.000000e+00> : vector<128xf32>
    %121 = vector.multi_reduction <add>, %120, %cst_40 [1] : vector<128x128xf32> to vector<128xf32>
    %122 = vector.shape_cast %121 : vector<128xf32> to vector<128x1xf32>
    %cst_41 = arith.constant 1.280000e+02 : f32
    %123 = vector.broadcast %cst_41 : f32 to vector<128x1xf32>
    %124 = arith.divf %122, %123 : vector<128x1xf32>
    %125 = vector.broadcast %117 : vector<128x1xf32> to vector<128x128xf32>
    %126 = arith.subf %111, %125 : vector<128x128xf32>
    %cst_42 = arith.constant 9.99999974E-6 : f32
    %127 = vector.broadcast %cst_42 : f32 to vector<128x1xf32>
    %128 = arith.addf %124, %127 : vector<128x1xf32>
    %129 = math.rsqrt %128 : vector<128x1xf32>
    %130 = vector.broadcast %129 : vector<128x1xf32> to vector<128x128xf32>
    %131 = arith.mulf %126, %130 : vector<128x128xf32>
    %132 = vector.broadcast %112 : vector<1x128xf32> to vector<128x128xf32>
    %133 = arith.mulf %131, %132 : vector<128x128xf32>
    %134 = vector.broadcast %113 : vector<1x128xf32> to vector<128x128xf32>
    %135 = arith.addf %133, %134 : vector<128x128xf32>
    %136 = arith.truncf %135 : vector<128x128xf32> to vector<128x128xbf16>
    %c0_43 = arith.constant 0 : index
    %c0_44 = arith.constant 0 : index
    %137 = vector.load %arg10[%c0_43, %c0_44] : memref<128x512xbf16, #tpu.memory_space<vmem>>, vector<128x512xbf16>
    %cst_45 = arith.constant dense<0.000000e+00> : vector<128x512xf32>
    %138 = tpu.matmul %136, %137, %cst_45 {dimension_numbers = #tpu.dot_dimension_numbers<[1], [0], [0], [1], [0, 0, 1, 1], [], []>} : vector<128x128xbf16>, vector<128x512xbf16>, vector<128x512xf32> -> vector<128x512xf32>
    %c0_46 = arith.constant 0 : index
    %c0_47 = arith.constant 0 : index
    %139 = vector.load %arg11[%c0_46, %c0_47] : memref<1x512xf32, #tpu.memory_space<vmem>>, vector<1x512xf32>
    %140 = vector.broadcast %139 : vector<1x512xf32> to vector<128x512xf32>
    %141 = arith.addf %138, %140 : vector<128x512xf32>
    %cst_48 = arith.constant 1.702000e+00 : f32
    %142 = vector.broadcast %cst_48 : f32 to vector<128x512xf32>
    %143 = arith.mulf %142, %141 : vector<128x512xf32>
    %144 = arith.negf %143 : vector<128x512xf32>
    %145 = math.exp %144 : vector<128x512xf32>
    %cst_49 = arith.constant 1.000000e+00 : f32
    %146 = vector.broadcast %cst_49 : f32 to vector<128x512xf32>
    %147 = arith.addf %146, %145 : vector<128x512xf32>
    %148 = arith.divf %146, %147 : vector<128x512xf32>
    %149 = arith.mulf %141, %148 : vector<128x512xf32>
    %150 = arith.truncf %149 : vector<128x512xf32> to vector<128x512xbf16>
    %c0_50 = arith.constant 0 : index
    %c0_51 = arith.constant 0 : index
    %151 = vector.load %arg12[%c0_50, %c0_51] : memref<512x128xbf16, #tpu.memory_space<vmem>>, vector<512x128xbf16>
    %cst_52 = arith.constant dense<0.000000e+00> : vector<128x128xf32>
    %152 = tpu.matmul %150, %151, %cst_52 {dimension_numbers = #tpu.dot_dimension_numbers<[1], [0], [0], [1], [0, 0, 1, 1], [], []>} : vector<128x512xbf16>, vector<512x128xbf16>, vector<128x128xf32> -> vector<128x128xf32>
    %c0_53 = arith.constant 0 : index
    %c0_54 = arith.constant 0 : index
    %153 = vector.load %arg13[%c0_53, %c0_54] : memref<1x128xf32, #tpu.memory_space<vmem>>, vector<1x128xf32>
    %154 = vector.broadcast %153 : vector<1x128xf32> to vector<128x128xf32>
    %155 = arith.addf %152, %154 : vector<128x128xf32>
    %156 = arith.addf %155, %111 : vector<128x128xf32>
    %c0_55 = arith.constant 0 : index
    %c0_56 = arith.constant 0 : index
    %c0_57 = arith.constant 0 : index
    %157 = vector.load %arg14[%c0_55, %c0_56, %c0_57] : memref<1x128x128xf32, #tpu.memory_space<vmem>>, vector<1x128x128xf32>
    %158 = vector.shape_cast %157 : vector<1x128x128xf32> to vector<128x128xf32>
    %159 = vector.shape_cast %156 : vector<128x128xf32> to vector<1x128x128xf32>
    tpu.vector_store %arg14[%c0_55, %c0_56, %c0_57], %159 {strides = array<i32>} : memref<1x128x128xf32, #tpu.memory_space<vmem>>, vector<1x128x128xf32>,
    return
  }
  func.func @transform_0(%arg0: i32) -> (i32, i32, i32) {
    %c0_i32 = arith.constant 0 : i32
    %c0_i32_0 = arith.constant 0 : i32
    %c0_i32_1 = arith.constant 0 : i32
    return %arg0, %c0_i32, %c0_i32_0 : i32, i32, i32
  }
  func.func @transform_1(%arg0: i32) -> (i32, i32) {
    %c0_i32 = arith.constant 0 : i32
    %c0_i32_0 = arith.constant 0 : i32
    %c0_i32_1 = arith.constant 0 : i32
    return %c0_i32, %c0_i32_0 : i32, i32
  }
  func.func @transform_2(%arg0: i32) -> (i32, i32) {
    %c0_i32 = arith.constant 0 : i32
    %c0_i32_0 = arith.constant 0 : i32
    %c0_i32_1 = arith.constant 0 : i32
    return %c0_i32, %c0_i32_0 : i32, i32
  }
  func.func @transform_3(%arg0: i32) -> (i32, i32) {
    %c0_i32 = arith.constant 0 : i32
    %c0_i32_0 = arith.constant 0 : i32
    %c0_i32_1 = arith.constant 0 : i32
    return %c0_i32, %c0_i32_0 : i32, i32
  }
  func.func @transform_4(%arg0: i32) -> (i32, i32) {
    %c0_i32 = arith.constant 0 : i32
    %c0_i32_0 = arith.constant 0 : i32
    %c0_i32_1 = arith.constant 0 : i32
    return %c0_i32, %c0_i32_0 : i32, i32
  }
  func.func @transform_5(%arg0: i32) -> (i32, i32) {
    %c0_i32 = arith.constant 0 : i32
    %c0_i32_0 = arith.constant 0 : i32
    %c0_i32_1 = arith.constant 0 : i32
    return %c0_i32, %c0_i32_0 : i32, i32
  }
  func.func @transform_6(%arg0: i32) -> (i32, i32) {
    %c0_i32 = arith.constant 0 : i32
    %c0_i32_0 = arith.constant 0 : i32
    %c0_i32_1 = arith.constant 0 : i32
    return %c0_i32, %c0_i32_0 : i32, i32
  }
  func.func @transform_7(%arg0: i32) -> (i32, i32) {
    %c0_i32 = arith.constant 0 : i32
    %c0_i32_0 = arith.constant 0 : i32
    %c0_i32_1 = arith.constant 0 : i32
    return %c0_i32, %c0_i32_0 : i32, i32
  }
  func.func @transform_8(%arg0: i32) -> (i32, i32) {
    %c0_i32 = arith.constant 0 : i32
    %c0_i32_0 = arith.constant 0 : i32
    %c0_i32_1 = arith.constant 0 : i32
    return %c0_i32, %c0_i32_0 : i32, i32
  }
  func.func @transform_9(%arg0: i32) -> (i32, i32) {
    %c0_i32 = arith.constant 0 : i32
    %c0_i32_0 = arith.constant 0 : i32
    %c0_i32_1 = arith.constant 0 : i32
    return %c0_i32, %c0_i32_0 : i32, i32
  }
  func.func @transform_10(%arg0: i32) -> (i32, i32) {
    %c0_i32 = arith.constant 0 : i32
    %c0_i32_0 = arith.constant 0 : i32
    %c0_i32_1 = arith.constant 0 : i32
    return %c0_i32, %c0_i32_0 : i32, i32
  }
  func.func @transform_11(%arg0: i32) -> (i32, i32) {
    %c0_i32 = arith.constant 0 : i32
    %c0_i32_0 = arith.constant 0 : i32
    %c0_i32_1 = arith.constant 0 : i32
    return %c0_i32, %c0_i32_0 : i32, i32
  }
  func.func @transform_12(%arg0: i32) -> (i32, i32) {
    %c0_i32 = arith.constant 0 : i32
    %c0_i32_0 = arith.constant 0 : i32
    %c0_i32_1 = arith.constant 0 : i32
    return %c0_i32, %c0_i32_0 : i32, i32
  }
  func.func @transform_13(%arg0: i32) -> (i32, i32, i32) {
    %c0_i32 = arith.constant 0 : i32
    %c0_i32_0 = arith.constant 0 : i32
    %c0_i32_1 = arith.constant 0 : i32
    return %arg0, %c0_i32, %c0_i32_0 : i32, i32, i32
  }
}

</mosaic_0001>

<llo_original>
// kernel: tpu_custom_call.1
$region0: #{tpu_custom_call.1}
  #allocation0 [shape = 'u32[]', space=smem, size = 0x4, offset = 0x4, fixed_abs, tag = 'smem constant byte address 0x4 - core index']
  #allocation1 [shape = 'u32[144,128]{1,0:T(1,128)}', space=vmem, size = 0x12000, scoped, tag = 'internal scratch']
  #allocation2 [shape = 'bf16[128,128]{1,0:T(16,128)(2,1)}', space=vmem, size = 0x8000, scoped, tag = 'scratch operand']
  %s0 = inlined_call_operand.hbm [shape: f32[2,128,128], index: 0, kind: input, shape index: {}]
  %s1 = inlined_call_operand.hbm [shape: f32[1,128], index: 1, kind: input, shape index: {}]
  %s2 = inlined_call_operand.hbm [shape: f32[1,128], index: 2, kind: input, shape index: {}]
  %s3 = inlined_call_operand.hbm [shape: bf16[128,384], index: 3, kind: input, shape index: {}]
  %s4 = inlined_call_operand.vmem [shape: f32[1,384], index: 4, kind: input, shape index: {}]
  %s5 = inlined_call_operand.hbm [shape: bf16[128,128], index: 5, kind: input, shape index: {}]
  %s6 = inlined_call_operand.vmem [shape: f32[1,128], index: 6, kind: input, shape index: {}]
  %s7 = inlined_call_operand.vmem [shape: f32[1,128], index: 7, kind: input, shape index: {}]
  %s8 = inlined_call_operand.vmem [shape: f32[1,128], index: 8, kind: input, shape index: {}]
  %s9 = inlined_call_operand.hbm [shape: bf16[128,512], index: 9, kind: input, shape index: {}]
  %s10 = inlined_call_operand.vmem [shape: f32[1,512], index: 10, kind: input, shape index: {}]
  %s11 = inlined_call_operand.hbm [shape: bf16[512,128], index: 11, kind: input, shape index: {}]
  %s12 = inlined_call_operand.vmem [shape: f32[1,128], index: 12, kind: input, shape index: {}]
  %s13 = inlined_call_operand.hbm [shape: f32[2,128,128], index: 13, kind: output, shape index: {}]
  %s14 = sld [smem:[#allocation0]]
  $region113: #{tpu_custom_call.1} parent=0
    _
  %s16 = ssub.s32 1, %s14
  %s17 = scalar_select 0, %s16, %s14
  $region1: #{tpu_custom_call.1} parent=0
    #allocation3 [shape = 'u8[131072]{0}', space=vmem, size = 0x20000, scoped, tag = 'input window, operand 0']
    #allocation4 [shape = 's32[2]{0}', space=sflag, size = 0x8, scoped, tag = 'scoped memory for tpu_custom_call.1']
    #allocation5 [shape = 's32[2]{0}', space=sflag, size = 0x8, scoped, tag = 'scoped memory for tpu_custom_call.1']
    #allocation6 [shape = 'u8[512]{0}', space=vmem, size = 0x400, scoped, tag = 'input window, operand 1, single buffered']
    #allocation7 [shape = 's32[1]{0}', space=sflag, size = 0x4, scoped, tag = 'scoped memory for tpu_custom_call.1']
    #allocation8 [shape = 'u8[512]{0}', space=vmem, size = 0x400, scoped, tag = 'input window, operand 2, single buffered']
    #allocation9 [shape = 'u8[98304]{0}', space=vmem, size = 0x18000, scoped, tag = 'input window, operand 3, single buffered']
    #allocation10 [shape = 's32[1]{0}', space=sflag, size = 0x4, scoped, tag = 'scoped memory for tpu_custom_call.1']
    #allocation11 [shape = 'u8[32768]{0}', space=vmem, size = 0x8000, scoped, tag = 'input window, operand 5, single buffered']
    #allocation12 [shape = 'u8[131072]{0}', space=vmem, size = 0x20000, scoped, tag = 'input window, operand 9, single buffered']
    #allocation13 [shape = 's32[1]{0}', space=sflag, size = 0x4, scoped, tag = 'scoped memory for tpu_custom_call.1']
    #allocation14 [shape = 'u8[131072]{0}', space=vmem, size = 0x20000, scoped, tag = 'input window, operand 11, single buffered']
    #allocation15 [shape = 'u8[131072]{0}', space=vmem, size = 0x20000, scoped, tag = 'output window, operand 0']
    %18 = vsyncpa [#allocation4], 0
    %s19 = scalar_lea.sflag [#allocation4], 1
    %20 = vsyncpa %s19, 0
    %21 = vsyncpa [#allocation7], 0
    %22 = vsyncpa [#allocation10], 0
    %23 = vsyncpa [#allocation13], 0
    %24 = vsyncpa [#allocation5], 0
    %s25 = scalar_lea.sflag [#allocation5], 1
    %26 = vsyncpa %s25, 0
    loop: start=0, step=1, limit=4
    $region2: #{tpu_custom_call.1} parent=1 // loop_pre_header
      _
    $region3: #{tpu_custom_call.1} parent=1 // loop_header
      %s28 = sphi 0, %s32
      %p29 = scmp.ge.s32.totalorder %s28, 4
      %s38 = sphi 0, %s40
      %s41 = sphi 0, %s38
      %s42 = sphi 0, %s41
      %s58 = sphi 0, %s42
      %s62 = sphi 0, %s62
      %s64 = sphi 0, %s62
      %s65 = sphi 0, %s64
      %s79 = sphi 0, %s65
      %s83 = sphi 0, %s83
      %s85 = sphi 0, %s83
      %s86 = sphi 0, %s85
      %s100 = sphi 0, %s86
      %s104 = sphi 0, %s104
      %s106 = sphi 0, %s104
      %s107 = sphi 0, %s106
      %s121 = sphi 0, %s107
      %s125 = sphi 0, %s125
      %s127 = sphi 0, %s125
      %s128 = sphi 0, %s127
      %s142 = sphi 0, %s128
      %s146 = sphi 0, %s146
      %s148 = sphi 0, %s146
      %s149 = sphi 0, %s148
      %s163 = sphi 0, %s149
      %s167 = sphi 0, %s167
      %s169 = sphi 0, %s167
      %s170 = sphi 0, %s169
      %s184 = sphi 0, %s170
      %s188 = sphi 0, %s188
      %s190 = sphi 0, %s188
      %s191 = sphi 0, %s190
      %s205 = sphi 0, %s191
      %s209 = sphi 0, %s209
      %s211 = sphi 0, %s209
      %s212 = sphi 0, %s211
      %s226 = sphi 0, %s212
      %s230 = sphi 0, %s230
      %s232 = sphi 0, %s230
      %s233 = sphi 0, %s232
      %s247 = sphi 0, %s233
      %s251 = sphi 0, %s251
      %s253 = sphi 0, %s251
      %s254 = sphi 0, %s253
      %s268 = sphi 0, %s254
      %s272 = sphi 0, %s272
      %s274 = sphi 0, %s272
      %s275 = sphi 0, %s274
      %s289 = sphi 0, %s275
      %s293 = sphi 0, %s293
      %s295 = sphi 0, %s293
      %s296 = sphi 0, %s295
      %s310 = sphi 0, %s296
      %s316 = sphi 0, %s318
      %s319 = sphi 0, %s316
      %s320 = sphi 0, %s319
      %s336 = sphi 0, %s320
    $region4: #{tpu_custom_call.1} parent=1 // loop_header_branch
      %31 = sbr.rel (%p29) target = $region8
    $region5: #{tpu_custom_call.1} parent=1 // loop_body
      %s33 = ssub.s32 %s28, 1
      %s34 = ssub.s32 %s28, 2
      %s35 = sadd.s32 %s28, 1
      %s36 = ssub.s32 %s28, %s35
      %p37 = scmp.eq.s32.totalorder %s36, 0
      %s39 = sadd.s32 %s38, 1
      %s40 = scalar_select %p37, %s38, %s39
      %p43 = pneg %p37
      %p44 = scmp.eq.s32.totalorder %s28, 1
      %p45 = por %p43, %p44
      %p46 = scmp.ne.s32.totalorder %s38, %s41
      %p47 = scmp.eq.s32.totalorder %s28, 0
      %p48 = por %p46, %p47
      %p49 = scmp.ne.s32.totalorder %s38, %s41
      %p50 = scmp.eq.s32.totalorder %s33, 1
      %p51 = por %p49, %p50
      %p52 = scmp.ne.s32.totalorder %s41, %s42
      %p53 = scmp.eq.s32.totalorder %s33, 0
      %p54 = por %p52, %p53
      %p55 = scmp.ne.s32.totalorder %s41, %s42
      %p56 = scmp.eq.s32.totalorder %s34, 1
      %p57 = por %p55, %p56
      %p59 = scmp.ne.s32.totalorder %s42, %s58
      %p60 = scmp.eq.s32.totalorder %s34, 0
      %p61 = por %p59, %p60
      %s63 = sadd.s32 %s62, 1
      %p66 = scmp.eq.s32.totalorder %s28, 1
      %p67 = scmp.ne.s32.totalorder %s62, %s64
      %p68 = scmp.eq.s32.totalorder %s28, 0
      %p69 = por %p67, %p68
      %p70 = scmp.ne.s32.totalorder %s62, %s64
      %p71 = scmp.eq.s32.totalorder %s33, 1
      %p72 = por %p70, %p71
      %p73 = scmp.ne.s32.totalorder %s64, %s65
      %p74 = scmp.eq.s32.totalorder %s33, 0
      %p75 = por %p73, %p74
      %p76 = scmp.ne.s32.totalorder %s64, %s65
      %p77 = scmp.eq.s32.totalorder %s34, 1
      %p78 = por %p76, %p77
      %p80 = scmp.ne.s32.totalorder %s65, %s79
      %p81 = scmp.eq.s32.totalorder %s34, 0
      %p82 = por %p80, %p81
      %s84 = sadd.s32 %s83, 1
      %p87 = scmp.eq.s32.totalorder %s28, 1
      %p88 = scmp.ne.s32.totalorder %s83, %s85
      %p89 = scmp.eq.s32.totalorder %s28, 0
      %p90 = por %p88, %p89
      %p91 = scmp.ne.s32.totalorder %s83, %s85
      %p92 = scmp.eq.s32.totalorder %s33, 1
      %p93 = por %p91, %p92
      %p94 = scmp.ne.s32.totalorder %s85, %s86
      %p95 = scmp.eq.s32.totalorder %s33, 0
      %p96 = por %p94, %p95
      %p97 = scmp.ne.s32.totalorder %s85, %s86
      %p98 = scmp.eq.s32.totalorder %s34, 1
      %p99 = por %p97, %p98
      %p101 = scmp.ne.s32.totalorder %s86, %s100
      %p102 = scmp.eq.s32.totalorder %s34, 0
      %p103 = por %p101, %p102
      %s105 = sadd.s32 %s104, 1
      %p108 = scmp.eq.s32.totalorder %s28, 1
      %p109 = scmp.ne.s32.totalorder %s104, %s106
      %p110 = scmp.eq.s32.totalorder %s28, 0
      %p111 = por %p109, %p110
      %p112 = scmp.ne.s32.totalorder %s104, %s106
      %p113 = scmp.eq.s32.totalorder %s33, 1
      %p114 = por %p112, %p113
      %p115 = scmp.ne.s32.totalorder %s106, %s107
      %p116 = scmp.eq.s32.totalorder %s33, 0
      %p117 = por %p115, %p116
      %p118 = scmp.ne.s32.totalorder %s106, %s107
      %p119 = scmp.eq.s32.totalorder %s34, 1
      %p120 = por %p118, %p119
      %p122 = scmp.ne.s32.totalorder %s107, %s121
      %p123 = scmp.eq.s32.totalorder %s34, 0
      %p124 = por %p122, %p123
      %s126 = sadd.s32 %s125, 1
      %p129 = scmp.eq.s32.totalorder %s28, 1
      %p130 = scmp.ne.s32.totalorder %s125, %s127
      %p131 = scmp.eq.s32.totalorder %s28, 0
      %p132 = por %p130, %p131
      %p133 = scmp.ne.s32.totalorder %s125, %s127
      %p134 = scmp.eq.s32.totalorder %s33, 1
      %p135 = por %p133, %p134
      %p136 = scmp.ne.s32.totalorder %s127, %s128
      %p137 = scmp.eq.s32.totalorder %s33, 0
      %p138 = por %p136, %p137
      %p139 = scmp.ne.s32.totalorder %s127, %s128
      %p140 = scmp.eq.s32.totalorder %s34, 1
      %p141 = por %p139, %p140
      %p143 = scmp.ne.s32.totalorder %s128, %s142
      %p144 = scmp.eq.s32.totalorder %s34, 0
      %p145 = por %p143, %p144
      %s147 = sadd.s32 %s146, 1
      %p150 = scmp.eq.s32.totalorder %s28, 1
      %p151 = scmp.ne.s32.totalorder %s146, %s148
      %p152 = scmp.eq.s32.totalorder %s28, 0
      %p153 = por %p151, %p152
      %p154 = scmp.ne.s32.totalorder %s146, %s148
      %p155 = scmp.eq.s32.totalorder %s33, 1
      %p156 = por %p154, %p155
      %p157 = scmp.ne.s32.totalorder %s148, %s149
      %p158 = scmp.eq.s32.totalorder %s33, 0
      %p159 = por %p157, %p158
      %p160 = scmp.ne.s32.totalorder %s148, %s149
      %p161 = scmp.eq.s32.totalorder %s34, 1
      %p162 = por %p160, %p161
      %p164 = scmp.ne.s32.totalorder %s149, %s163
      %p165 = scmp.eq.s32.totalorder %s34, 0
      %p166 = por %p164, %p165
      %s168 = sadd.s32 %s167, 1
      %p171 = scmp.eq.s32.totalorder %s28, 1
      %p172 = scmp.ne.s32.totalorder %s167, %s169
      %p173 = scmp.eq.s32.totalorder %s28, 0
      %p174 = por %p172, %p173
      %p175 = scmp.ne.s32.totalorder %s167, %s169
      %p176 = scmp.eq.s32.totalorder %s33, 1
      %p177 = por %p175, %p176
      %p178 = scmp.ne.s32.totalorder %s169, %s170
      %p179 = scmp.eq.s32.totalorder %s33, 0
      %p180 = por %p178, %p179
      %p181 = scmp.ne.s32.totalorder %s169, %s170
      %p182 = scmp.eq.s32.totalorder %s34, 1
      %p183 = por %p181, %p182
      %p185 = scmp.ne.s32.totalorder %s170, %s184
      %p186 = scmp.eq.s32.totalorder %s34, 0
      %p187 = por %p185, %p186
      %s189 = sadd.s32 %s188, 1
      %p192 = scmp.eq.s32.totalorder %s28, 1
      %p193 = scmp.ne.s32.totalorder %s188, %s190
      %p194 = scmp.eq.s32.totalorder %s28, 0
      %p195 = por %p193, %p194
      %p196 = scmp.ne.s32.totalorder %s188, %s190
      %p197 = scmp.eq.s32.totalorder %s33, 1
      %p198 = por %p196, %p197
      %p199 = scmp.ne.s32.totalorder %s190, %s191
      %p200 = scmp.eq.s32.totalorder %s33, 0
      %p201 = por %p199, %p200
      %p202 = scmp.ne.s32.totalorder %s190, %s191
      %p203 = scmp.eq.s32.totalorder %s34, 1
      %p204 = por %p202, %p203
      %p206 = scmp.ne.s32.totalorder %s191, %s205
      %p207 = scmp.eq.s32.totalorder %s34, 0
      %p208 = por %p206, %p207
      %s210 = sadd.s32 %s209, 1
      %p213 = scmp.eq.s32.totalorder %s28, 1
      %p214 = scmp.ne.s32.totalorder %s209, %s211
      %p215 = scmp.eq.s32.totalorder %s28, 0
      %p216 = por %p214, %p215
      %p217 = scmp.ne.s32.totalorder %s209, %s211
      %p218 = scmp.eq.s32.totalorder %s33, 1
      %p219 = por %p217, %p218
      %p220 = scmp.ne.s32.totalorder %s211, %s212
      %p221 = scmp.eq.s32.totalorder %s33, 0
      %p222 = por %p220, %p221
      %p223 = scmp.ne.s32.totalorder %s211, %s212
      %p224 = scmp.eq.s32.totalorder %s34, 1
      %p225 = por %p223, %p224
      %p227 = scmp.ne.s32.totalorder %s212, %s226
      %p228 = scmp.eq.s32.totalorder %s34, 0
      %p229 = por %p227, %p228
      %s231 = sadd.s32 %s230, 1
      %p234 = scmp.eq.s32.totalorder %s28, 1
      %p235 = scmp.ne.s32.totalorder %s230, %s232
      %p236 = scmp.eq.s32.totalorder %s28, 0
      %p237 = por %p235, %p236
      %p238 = scmp.ne.s32.totalorder %s230, %s232
      %p239 = scmp.eq.s32.totalorder %s33, 1
      %p240 = por %p238, %p239
      %p241 = scmp.ne.s32.totalorder %s232, %s233
      %p242 = scmp.eq.s32.totalorder %s33, 0
      %p243 = por %p241, %p242
      %p244 = scmp.ne.s32.totalorder %s232, %s233
      %p245 = scmp.eq.s32.totalorder %s34, 1
      %p246 = por %p244, %p245
      %p248 = scmp.ne.s32.totalorder %s233, %s247
      %p249 = scmp.eq.s32.totalorder %s34, 0
      %p250 = por %p248, %p249
      %s252 = sadd.s32 %s251, 1
      %p255 = scmp.eq.s32.totalorder %s28, 1
      %p256 = scmp.ne.s32.totalorder %s251, %s253
      %p257 = scmp.eq.s32.totalorder %s28, 0
      %p258 = por %p256, %p257
      %p259 = scmp.ne.s32.totalorder %s251, %s253
      %p260 = scmp.eq.s32.totalorder %s33, 1
      %p261 = por %p259, %p260
      %p262 = scmp.ne.s32.totalorder %s253, %s254
      %p263 = scmp.eq.s32.totalorder %s33, 0
      %p264 = por %p262, %p263
      %p265 = scmp.ne.s32.totalorder %s253, %s254
      %p266 = scmp.eq.s32.totalorder %s34, 1
      %p267 = por %p265, %p266
      %p269 = scmp.ne.s32.totalorder %s254, %s268
      %p270 = scmp.eq.s32.totalorder %s34, 0
      %p271 = por %p269, %p270
      %s273 = sadd.s32 %s272, 1
      %p276 = scmp.eq.s32.totalorder %s28, 1
      %p277 = scmp.ne.s32.totalorder %s272, %s274
      %p278 = scmp.eq.s32.totalorder %s28, 0
      %p279 = por %p277, %p278
      %p280 = scmp.ne.s32.totalorder %s272, %s274
      %p281 = scmp.eq.s32.totalorder %s33, 1
      %p282 = por %p280, %p281
      %p283 = scmp.ne.s32.totalorder %s274, %s275
      %p284 = scmp.eq.s32.totalorder %s33, 0
      %p285 = por %p283, %p284
      %p286 = scmp.ne.s32.totalorder %s274, %s275
      %p287 = scmp.eq.s32.totalorder %s34, 1
      %p288 = por %p286, %p287
      %p290 = scmp.ne.s32.totalorder %s275, %s289
      %p291 = scmp.eq.s32.totalorder %s34, 0
      %p292 = por %p290, %p291
      %s294 = sadd.s32 %s293, 1
      %p297 = scmp.eq.s32.totalorder %s28, 1
      %p298 = scmp.ne.s32.totalorder %s293, %s295
      %p299 = scmp.eq.s32.totalorder %s28, 0
      %p300 = por %p298, %p299
      %p301 = scmp.ne.s32.totalorder %s293, %s295
      %p302 = scmp.eq.s32.totalorder %s33, 1
      %p303 = por %p301, %p302
      %p304 = scmp.ne.s32.totalorder %s295, %s296
      %p305 = scmp.eq.s32.totalorder %s33, 0
      %p306 = por %p304, %p305
      %p307 = scmp.ne.s32.totalorder %s295, %s296
      %p308 = scmp.eq.s32.totalorder %s34, 1
      %p309 = por %p307, %p308
      %p311 = scmp.ne.s32.totalorder %s296, %s310
      %p312 = scmp.eq.s32.totalorder %s34, 0
      %p313 = por %p311, %p312
      %s314 = ssub.s32 %s28, %s35
      %p315 = scmp.eq.s32.totalorder %s314, 0
      %s317 = sadd.s32 %s316, 1
      %s318 = scalar_select %p315, %s316, %s317
      %p321 = pneg %p315
      %p322 = scmp.eq.s32.totalorder %s28, 1
      %p323 = por %p321, %p322
      %p324 = scmp.ne.s32.totalorder %s316, %s319
      %p325 = scmp.eq.s32.totalorder %s28, 0
      %p326 = por %p324, %p325
      %p327 = scmp.ne.s32.totalorder %s316, %s319
      %p328 = scmp.eq.s32.totalorder %s33, 1
      %p329 = por %p327, %p328
      %p330 = scmp.ne.s32.totalorder %s319, %s320
      %p331 = scmp.eq.s32.totalorder %s33, 0
      %p332 = por %p330, %p331
      %p333 = scmp.ne.s32.totalorder %s319, %s320
      %p334 = scmp.eq.s32.totalorder %s34, 1
      %p335 = por %p333, %p334
      %p337 = scmp.ne.s32.totalorder %s320, %s336
      %p338 = scmp.eq.s32.totalorder %s34, 0
      %p339 = por %p337, %p338
      %p340 = scmp.le.s32.totalorder 1, %s28
      %p341 = scmp.lt.s32.totalorder %s28, 3
      %p342 = pnand %p340, %p341
      %p343 = pneg %p342
      // Predicated region
      $region9: #{tpu_custom_call.1} parent=5 // pred_check
        _
      $region10: #{tpu_custom_call.1} parent=5 // pred_check_branch
        %345 = sbr.rel (%p342) target = $region12
      $region11: #{tpu_custom_call.1} parent=5 // pred_region
        %s346 = ssub.s32 %s28, 1
        // Predicated region
        $region13: #{tpu_custom_call.1} parent=11 // pred_check
          %p347 = pneg %p75
        $region14: #{tpu_custom_call.1} parent=11 // pred_check_branch
          %349 = sbr.rel (%p347) target = $region16
        $region15: #{tpu_custom_call.1} parent=11 // pred_region
          %s351 = ssub.s32 16, 16
          %352 = vsyncadd [#allocation7], %s351
          %s354 = sshll.u32 [#allocation6], 4
          %s355 = int_to_ptr.vmem [resolvable:$true] %s354
          %357 = dma.hbm_to_vmem [thread:$0]  %s1, 16, %s355, [#allocation7]
        $region16: #{tpu_custom_call.1} parent=11 // pred_fallthru
          _
        // Predicated region
        $region17: #{tpu_custom_call.1} parent=11 // pred_check
          %p358 = pneg %p96
        $region18: #{tpu_custom_call.1} parent=11 // pred_check_branch
          %360 = sbr.rel (%p358) target = $region20
        $region19: #{tpu_custom_call.1} parent=11 // pred_region
          %s362 = ssub.s32 16, 16
          %363 = vsyncadd [#allocation7], %s362
          %s365 = sshll.u32 [#allocation8], 4
          %s366 = int_to_ptr.vmem [resolvable:$true] %s365
          %368 = dma.hbm_to_vmem [thread:$0]  %s2, 16, %s366, [#allocation7]
        $region20: #{tpu_custom_call.1} parent=11 // pred_fallthru
          _
        // Predicated region
        $region21: #{tpu_custom_call.1} parent=11 // pred_check
          %p369 = pneg %p117
        $region22: #{tpu_custom_call.1} parent=11 // pred_check_branch
          %371 = sbr.rel (%p369) target = $region24
        $region23: #{tpu_custom_call.1} parent=11 // pred_region
          %s373 = ssub.s32 3072, 3072
          %374 = vsyncadd [#allocation10], %s373
          %s375 = sshll.u32 [#allocation9], 4
          %s376 = int_to_ptr.vmem [resolvable:$true] %s375
          %381 = dma.hbm_to_vmem [thread:$0]  %s3, 3072, %s376, [#allocation10], 192, 192, 12
        $region24: #{tpu_custom_call.1} parent=11 // pred_fallthru
          _
        // Predicated region
        $region25: #{tpu_custom_call.1} parent=11 // pred_check
          %p382 = pneg %p138
        $region26: #{tpu_custom_call.1} parent=11 // pred_check_branch
          %384 = sbr.rel (%p382) target = $region28
        $region27: #{tpu_custom_call.1} parent=11 // pred_region
          _
        $region28: #{tpu_custom_call.1} parent=11 // pred_fallthru
          _
        // Predicated region
        $region29: #{tpu_custom_call.1} parent=11 // pred_check
          %p385 = pneg %p159
        $region30: #{tpu_custom_call.1} parent=11 // pred_check_branch
          %387 = sbr.rel (%p385) target = $region32
        $region31: #{tpu_custom_call.1} parent=11 // pred_region
          %s389 = ssub.s32 1024, 1024
          %390 = vsyncadd [#allocation10], %s389
          %s391 = sshll.u32 [#allocation11], 4
          %s392 = int_to_ptr.vmem [resolvable:$true] %s391
          %397 = dma.hbm_to_vmem [thread:$0]  %s5, 1024, %s392, [#allocation10], 64, 64, 4
        $region32: #{tpu_custom_call.1} parent=11 // pred_fallthru
          _
        // Predicated region
        $region33: #{tpu_custom_call.1} parent=11 // pred_check
          %p398 = pneg %p180
        $region34: #{tpu_custom_call.1} parent=11 // pred_check_branch
          %400 = sbr.rel (%p398) target = $region36
        $region35: #{tpu_custom_call.1} parent=11 // pred_region
          _
        $region36: #{tpu_custom_call.1} parent=11 // pred_fallthru
          _
        // Predicated region
        $region37: #{tpu_custom_call.1} parent=11 // pred_check
          %p401 = pneg %p201
        $region38: #{tpu_custom_call.1} parent=11 // pred_check_branch
          %403 = sbr.rel (%p401) target = $region40
        $region39: #{tpu_custom_call.1} parent=11 // pred_region
          _
        $region40: #{tpu_custom_call.1} parent=11 // pred_fallthru
          _
        // Predicated region
        $region41: #{tpu_custom_call.1} parent=11 // pred_check
          %p404 = pneg %p222
        $region42: #{tpu_custom_call.1} parent=11 // pred_check_branch
          %406 = sbr.rel (%p404) target = $region44
        $region43: #{tpu_custom_call.1} parent=11 // pred_region
          _
        $region44: #{tpu_custom_call.1} parent=11 // pred_fallthru
          _
        // Predicated region
        $region45: #{tpu_custom_call.1} parent=11 // pred_check
          %p407 = pneg %p243
        $region46: #{tpu_custom_call.1} parent=11 // pred_check_branch
          %409 = sbr.rel (%p407) target = $region48
        $region47: #{tpu_custom_call.1} parent=11 // pred_region
          %s411 = ssub.s32 4096, 4096
          %412 = vsyncadd [#allocation13], %s411
          %s413 = sshll.u32 [#allocation12], 4
          %s414 = int_to_ptr.vmem [resolvable:$true] %s413
          %419 = dma.hbm_to_vmem [thread:$0]  %s9, 4096, %s414, [#allocation13], 256, 256, 16
        $region48: #{tpu_custom_call.1} parent=11 // pred_fallthru
          _
        // Predicated region
        $region49: #{tpu_custom_call.1} parent=11 // pred_check
          %p420 = pneg %p264
        $region50: #{tpu_custom_call.1} parent=11 // pred_check_branch
          %422 = sbr.rel (%p420) target = $region52
        $region51: #{tpu_custom_call.1} parent=11 // pred_region
          _
        $region52: #{tpu_custom_call.1} parent=11 // pred_fallthru
          _
        // Predicated region
        $region53: #{tpu_custom_call.1} parent=11 // pred_check
          %p423 = pneg %p285
        $region54: #{tpu_custom_call.1} parent=11 // pred_check_branch
          %425 = sbr.rel (%p423) target = $region56
        $region55: #{tpu_custom_call.1} parent=11 // pred_region
          %s427 = ssub.s32 4096, 4096
          %428 = vsyncadd [#allocation13], %s427
          %s429 = sshll.u32 [#allocation14], 4
          %s430 = int_to_ptr.vmem [resolvable:$true] %s429
          %435 = dma.hbm_to_vmem [thread:$0]  %s11, 4096, %s430, [#allocation13], 64, 64, 4
        $region56: #{tpu_custom_call.1} parent=11 // pred_fallthru
          _
        // Predicated region
        $region57: #{tpu_custom_call.1} parent=11 // pred_check
          %p436 = pneg %p306
        $region58: #{tpu_custom_call.1} parent=11 // pred_check_branch
          %438 = sbr.rel (%p436) target = $region60
        $region59: #{tpu_custom_call.1} parent=11 // pred_region
          _
        $region60: #{tpu_custom_call.1} parent=11 // pred_fallthru
          _
      $region12: #{tpu_custom_call.1} parent=5 // pred_fallthru
        _
      %p439 = scmp.lt.s32.totalorder %s28, 2
      // Predicated region
      $region61: #{tpu_custom_call.1} parent=5 // pred_check
        %p440 = pneg %p439
      $region62: #{tpu_custom_call.1} parent=5 // pred_check_branch
        %442 = sbr.rel (%p440) target = $region64
      $region63: #{tpu_custom_call.1} parent=5 // pred_region
        // Predicated region
        $region65: #{tpu_custom_call.1} parent=63 // pred_check
          %p443 = pneg %p48
        $region66: #{tpu_custom_call.1} parent=63 // pred_check_branch
          %445 = sbr.rel (%p443) target = $region68
        $region67: #{tpu_custom_call.1} parent=63 // pred_region
          %s446 = sand.u32 %s38, 1
          %s447 = scalar_lea.sflag [#allocation4], %s446
          %s448 = sand.u32 %s38, 1
          %s449 = smul.addr %s448, 128
          %s450 = scalar_lea.vmem [#allocation3], %s449
          %s452 = ssub.s32 2048, 2048
          %453 = vsyncadd %s447, %s452
          %s454 = smul.addr %s28, 16
          %s455 = smul.addr %s454, 128
          %s456 = scalar_lea.hbm %s0, %s455
          %s457 = sshll.u32 %s450, 4
          %s458 = int_to_ptr.vmem [resolvable:$true] %s457
          %463 = dma.hbm_to_vmem [thread:$0]  %s456, 2048, %s458, %s447, 128, 128, 8
        $region68: #{tpu_custom_call.1} parent=63 // pred_fallthru
          _
      $region64: #{tpu_custom_call.1} parent=5 // pred_fallthru
        _
      %p464 = scmp.le.s32.totalorder 1, %s28
      %p465 = scmp.lt.s32.totalorder %s28, 3
      %p466 = pnand %p464, %p465
      %p467 = pneg %p466
      // Predicated region
      $region69: #{tpu_custom_call.1} parent=5 // pred_check
        _
      $region70: #{tpu_custom_call.1} parent=5 // pred_check_branch
        %469 = sbr.rel (%p466) target = $region72
      $region71: #{tpu_custom_call.1} parent=5 // pred_region
        %s470 = ssub.s32 %s28, 1
        %s471 = sand.u32 %s41, 1
        %s472 = scalar_lea.sflag [#allocation4], %s471
        %s473 = sand.u32 %s41, 1
        %s474 = smul.addr %s473, 128
        %s475 = scalar_lea.vmem [#allocation3], %s474
        // Predicated region
        $region73: #{tpu_custom_call.1} parent=71 // pred_check
          %p476 = pneg %p54
        $region74: #{tpu_custom_call.1} parent=71 // pred_check_branch
          %478 = sbr.rel (%p476) target = $region76
        $region75: #{tpu_custom_call.1} parent=71 // pred_region
          %479 = dma.done %s472, 2048
        $region76: #{tpu_custom_call.1} parent=71 // pred_fallthru
          _
        // Predicated region
        $region77: #{tpu_custom_call.1} parent=71 // pred_check
          %p480 = pneg %p75
        $region78: #{tpu_custom_call.1} parent=71 // pred_check_branch
          %482 = sbr.rel (%p480) target = $region80
        $region79: #{tpu_custom_call.1} parent=71 // pred_region
          %483 = dma.done [#allocation7], 16
        $region80: #{tpu_custom_call.1} parent=71 // pred_fallthru
          _
        // Predicated region
        $region81: #{tpu_custom_call.1} parent=71 // pred_check
          %p484 = pneg %p96
        $region82: #{tpu_custom_call.1} parent=71 // pred_check_branch
          %486 = sbr.rel (%p484) target = $region84
        $region83: #{tpu_custom_call.1} parent=71 // pred_region
          %487 = dma.done [#allocation7], 16
        $region84: #{tpu_custom_call.1} parent=71 // pred_fallthru
          _
        // Predicated region
        $region85: #{tpu_custom_call.1} parent=71 // pred_check
          %p488 = pneg %p117
        $region86: #{tpu_custom_call.1} parent=71 // pred_check_branch
          %490 = sbr.rel (%p488) target = $region88
        $region87: #{tpu_custom_call.1} parent=71 // pred_region
          %491 = dma.done [#allocation10], 3072
        $region88: #{tpu_custom_call.1} parent=71 // pred_fallthru
          _
        // Predicated region
        $region89: #{tpu_custom_call.1} parent=71 // pred_check
          %p492 = pneg %p159
        $region90: #{tpu_custom_call.1} parent=71 // pred_check_branch
          %494 = sbr.rel (%p492) target = $region92
        $region91: #{tpu_custom_call.1} parent=71 // pred_region
          %495 = dma.done [#allocation10], 1024
        $region92: #{tpu_custom_call.1} parent=71 // pred_fallthru
          _
        // Predicated region
        $region93: #{tpu_custom_call.1} parent=71 // pred_check
          %p496 = pneg %p243
        $region94: #{tpu_custom_call.1} parent=71 // pred_check_branch
          %498 = sbr.rel (%p496) target = $region96
        $region95: #{tpu_custom_call.1} parent=71 // pred_region
          %499 = dma.done [#allocation13], 4096
        $region96: #{tpu_custom_call.1} parent=71 // pred_fallthru
          _
        // Predicated region
        $region97: #{tpu_custom_call.1} parent=71 // pred_check
          %p500 = pneg %p285
        $region98: #{tpu_custom_call.1} parent=71 // pred_check_branch
          %502 = sbr.rel (%p500) target = $region100
        $region99: #{tpu_custom_call.1} parent=71 // pred_region
          %503 = dma.done [#allocation13], 4096
        $region100: #{tpu_custom_call.1} parent=71 // pred_fallthru
          _
        %s504 = sand.u32 %s41, 1
        %s505 = scalar_lea.sflag [#allocation4], %s504
        %s506 = sand.u32 %s41, 1
        %s507 = smul.addr %s506, 128
        %s508 = scalar_lea.vmem [#allocation3], %s507
        %p509 = pneg %p54
        %p510 = pneg %p51
        %p511 = pneg %p75
        %p512 = pneg %p72
        %p513 = pneg %p96
        %p514 = pneg %p93
        %p515 = pneg %p117
        %p516 = pneg %p114
        %p517 = pneg %p138
        %p518 = pneg %p135
        %p519 = pneg %p159
        %p520 = pneg %p156
        %p521 = pneg %p180
        %p522 = pneg %p177
        %p523 = pneg %p201
        %p524 = pneg %p198
        %p525 = pneg %p222
        %p526 = pneg %p219
        %p527 = pneg %p243
        %p528 = pneg %p240
        %p529 = pneg %p264
        %p530 = pneg %p261
        %p531 = pneg %p285
        %p532 = pneg %p282
        %p533 = pneg %p306
        %p534 = pneg %p303
        %p535 = pneg %p332
        %p536 = pneg %p329
        %s537 = sand.u32 %s319, 1
        %s538 = scalar_lea.sflag [#allocation5], %s537
        %s539 = sand.u32 %s319, 1
        %s540 = smul.addr %s539, 128
        %s541 = scalar_lea.vmem [#allocation15], %s540
        %v543 = vld [vmem:[%s475] sm:$0xff]
        %v544 = vld [vmem:[%s475 + $0x8] sm:$0xff]
        %v545 = vld [vmem:[%s475 + $0x10] sm:$0xff]
        %v546 = vld [vmem:[%s475 + $0x18] sm:$0xff]
        %v547 = vld [vmem:[%s475 + $0x20] sm:$0xff]
        %v548 = vld [vmem:[%s475 + $0x28] sm:$0xff]
        %v549 = vld [vmem:[%s475 + $0x30] sm:$0xff]
        %v550 = vld [vmem:[%s475 + $0x38] sm:$0xff]
        %v551 = vld [vmem:[%s475 + $0x40] sm:$0xff]
        %v552 = vld [vmem:[%s475 + $0x48] sm:$0xff]
        %v553 = vld [vmem:[%s475 + $0x50] sm:$0xff]
        %v554 = vld [vmem:[%s475 + $0x58] sm:$0xff]
        %v555 = vld [vmem:[%s475 + $0x60] sm:$0xff]
        %v556 = vld [vmem:[%s475 + $0x68] sm:$0xff]
        %v557 = vld [vmem:[%s475 + $0x70] sm:$0xff]
        %v558 = vld [vmem:[%s475 + $0x78] sm:$0xff]
        %v559 = vld [vmem:[#allocation6] sm:$0x1]
        %v560 = vld [vmem:[#allocation8] sm:$0x1]
        %561 = vadd.xlane.f32.xlu0 %v543
        %v562 = vpop.xlane.xlu0 %561
        %563 = vadd.xlane.f32.xlu0 %v544
        %v564 = vpop.xlane.xlu0 %563
        %565 = vadd.xlane.f32.xlu0 %v545
        %v566 = vpop.xlane.xlu0 %565
        %567 = vadd.xlane.f32.xlu0 %v546
        %v568 = vpop.xlane.xlu0 %567
        %569 = vadd.xlane.f32.xlu0 %v547
        %v570 = vpop.xlane.xlu0 %569
        %571 = vadd.xlane.f32.xlu0 %v548
        %v572 = vpop.xlane.xlu0 %571
        %573 = vadd.xlane.f32.xlu0 %v549
        %v574 = vpop.xlane.xlu0 %573
        %575 = vadd.xlane.f32.xlu0 %v550
        %v576 = vpop.xlane.xlu0 %575
        %577 = vadd.xlane.f32.xlu0 %v551
        %v578 = vpop.xlane.xlu0 %577
        %579 = vadd.xlane.f32.xlu0 %v552
        %v580 = vpop.xlane.xlu0 %579
        %581 = vadd.xlane.f32.xlu0 %v553
        %v582 = vpop.xlane.xlu0 %581
        %583 = vadd.xlane.f32.xlu0 %v554
        %v584 = vpop.xlane.xlu0 %583
        %585 = vadd.xlane.f32.xlu0 %v555
        %v586 = vpop.xlane.xlu0 %585
        %587 = vadd.xlane.f32.xlu0 %v556
        %v588 = vpop.xlane.xlu0 %587
        %589 = vadd.xlane.f32.xlu0 %v557
        %v590 = vpop.xlane.xlu0 %589
        %591 = vadd.xlane.f32.xlu0 %v558
        %v592 = vpop.xlane.xlu0 %591
        %v593 = vrcp.pop 128.0
        %v594 = vmul.f32 %v562, %v593
        %v595 = vmul.f32 %v564, %v593
        %v596 = vmul.f32 %v566, %v593
        %v597 = vmul.f32 %v568, %v593
        %v598 = vmul.f32 %v570, %v593
        %v599 = vmul.f32 %v572, %v593
        %v600 = vmul.f32 %v574, %v593
        %v601 = vmul.f32 %v576, %v593
        %v602 = vmul.f32 %v578, %v593
        %v603 = vmul.f32 %v580, %v593
        %v604 = vmul.f32 %v582, %v593
        %v605 = vmul.f32 %v584, %v593
        %v606 = vmul.f32 %v586, %v593
        %v607 = vmul.f32 %v588, %v593
        %v608 = vmul.f32 %v590, %v593
        %v609 = vmul.f32 %v592, %v593
        %v610 = vsub.f32 %v543, %v594
        %v611 = vsub.f32 %v544, %v595
        %v612 = vsub.f32 %v545, %v596
        %v613 = vsub.f32 %v546, %v597
        %v614 = vsub.f32 %v547, %v598
        %v615 = vsub.f32 %v548, %v599
        %v616 = vsub.f32 %v549, %v600
        %v617 = vsub.f32 %v550, %v601
        %v618 = vsub.f32 %v551, %v602
        %v619 = vsub.f32 %v552, %v603
        %v620 = vsub.f32 %v553, %v604
        %v621 = vsub.f32 %v554, %v605
        %v622 = vsub.f32 %v555, %v606
        %v623 = vsub.f32 %v556, %v607
        %v624 = vsub.f32 %v557, %v608
        %v625 = vsub.f32 %v558, %v609
        %v626 = vmul.f32 %v610, %v610
        %v627 = vmul.f32 %v611, %v611
        %v628 = vmul.f32 %v612, %v612
        %v629 = vmul.f32 %v613, %v613
        %v630 = vmul.f32 %v614, %v614
        %v631 = vmul.f32 %v615, %v615
        %v632 = vmul.f32 %v616, %v616
        %v633 = vmul.f32 %v617, %v617
        %v634 = vmul.f32 %v618, %v618
        %v635 = vmul.f32 %v619, %v619
        %v636 = vmul.f32 %v620, %v620
        %v637 = vmul.f32 %v621, %v621
        %v638 = vmul.f32 %v622, %v622
        %v639 = vmul.f32 %v623, %v623
        %v640 = vmul.f32 %v624, %v624
        %v641 = vmul.f32 %v625, %v625
        %642 = vadd.xlane.f32.xlu0 %v626
        %v643 = vpop.xlane.xlu0 %642
        %644 = vadd.xlane.f32.xlu0 %v627
        %v645 = vpop.xlane.xlu0 %644
        %646 = vadd.xlane.f32.xlu0 %v628
        %v647 = vpop.xlane.xlu0 %646
        %648 = vadd.xlane.f32.xlu0 %v629
        %v649 = vpop.xlane.xlu0 %648
        %650 = vadd.xlane.f32.xlu0 %v630
        %v651 = vpop.xlane.xlu0 %650
        %652 = vadd.xlane.f32.xlu0 %v631
        %v653 = vpop.xlane.xlu0 %652
        %654 = vadd.xlane.f32.xlu0 %v632
        %v655 = vpop.xlane.xlu0 %654
        %656 = vadd.xlane.f32.xlu0 %v633
        %v657 = vpop.xlane.xlu0 %656
        %658 = vadd.xlane.f32.xlu0 %v634
        %v659 = vpop.xlane.xlu0 %658
        %660 = vadd.xlane.f32.xlu0 %v635
        %v661 = vpop.xlane.xlu0 %660
        %662 = vadd.xlane.f32.xlu0 %v636
        %v663 = vpop.xlane.xlu0 %662
        %664 = vadd.xlane.f32.xlu0 %v637
        %v665 = vpop.xlane.xlu0 %664
        %666 = vadd.xlane.f32.xlu0 %v638
        %v667 = vpop.xlane.xlu0 %666
        %668 = vadd.xlane.f32.xlu0 %v639
        %v669 = vpop.xlane.xlu0 %668
        %670 = vadd.xlane.f32.xlu0 %v640
        %v671 = vpop.xlane.xlu0 %670
        %672 = vadd.xlane.f32.xlu0 %v641
        %v673 = vpop.xlane.xlu0 %672
        %v674 = vmul.f32 %v643, %v593
        %v675 = vmul.f32 %v645, %v593
        %v676 = vmul.f32 %v647, %v593
        %v677 = vmul.f32 %v649, %v593
        %v678 = vmul.f32 %v651, %v593
        %v679 = vmul.f32 %v653, %v593
        %v680 = vmul.f32 %v655, %v593
        %v681 = vmul.f32 %v657, %v593
        %v682 = vmul.f32 %v659, %v593
        %v683 = vmul.f32 %v661, %v593
        %v684 = vmul.f32 %v663, %v593
        %v685 = vmul.f32 %v665, %v593
        %v686 = vmul.f32 %v667, %v593
        %v687 = vmul.f32 %v669, %v593
        %v688 = vmul.f32 %v671, %v593
        %v689 = vmul.f32 %v673, %v593
        %v690 = vadd.f32 %v674, 1e-05
        %v691 = vadd.f32 %v675, 1e-05
        %v692 = vadd.f32 %v676, 1e-05
        %v693 = vadd.f32 %v677, 1e-05
        %v694 = vadd.f32 %v678, 1e-05
        %v695 = vadd.f32 %v679, 1e-05
        %v696 = vadd.f32 %v680, 1e-05
        %v697 = vadd.f32 %v681, 1e-05
        %v698 = vadd.f32 %v682, 1e-05
        %v699 = vadd.f32 %v683, 1e-05
        %v700 = vadd.f32 %v684, 1e-05
        %v701 = vadd.f32 %v685, 1e-05
        %v702 = vadd.f32 %v686, 1e-05
        %v703 = vadd.f32 %v687, 1e-05
        %v704 = vadd.f32 %v688, 1e-05
        %v705 = vadd.f32 %v689, 1e-05
        %v706 = vrsqrt.pop %v690
        %v707 = vrsqrt.pop %v691
        %v708 = vrsqrt.pop %v692
        %v709 = vrsqrt.pop %v693
        %v710 = vrsqrt.pop %v694
        %v711 = vrsqrt.pop %v695
        %v712 = vrsqrt.pop %v696
        %v713 = vrsqrt.pop %v697
        %v714 = vrsqrt.pop %v698
        %v715 = vrsqrt.pop %v699
        %v716 = vrsqrt.pop %v700
        %v717 = vrsqrt.pop %v701
        %v718 = vrsqrt.pop %v702
        %v719 = vrsqrt.pop %v703
        %v720 = vrsqrt.pop %v704
        %v721 = vrsqrt.pop %v705
        %v722 = vmul.f32 %v610, %v706
        %v723 = vmul.f32 %v611, %v707
        %v724 = vmul.f32 %v612, %v708
        %v725 = vmul.f32 %v613, %v709
        %v726 = vmul.f32 %v614, %v710
        %v727 = vmul.f32 %v615, %v711
        %v728 = vmul.f32 %v616, %v712
        %v729 = vmul.f32 %v617, %v713
        %v730 = vmul.f32 %v618, %v714
        %v731 = vmul.f32 %v619, %v715
        %v732 = vmul.f32 %v620, %v716
        %v733 = vmul.f32 %v621, %v717
        %v734 = vmul.f32 %v622, %v718
        %v735 = vmul.f32 %v623, %v719
        %v736 = vmul.f32 %v624, %v720
        %v737 = vmul.f32 %v625, %v721
        %v739 = vlaneseq
        %v740 = vshrl.u32 %v739, 7
        %v741 = vsub.s32 0, %v740
        %v742 = vrot.slane %v559, %v741
        %v744 = vmul.f32 %v722, %v742
        %v745 = vmul.f32 %v723, %v742
        %v746 = vmul.f32 %v724, %v742
        %v747 = vmul.f32 %v725, %v742
        %v748 = vmul.f32 %v726, %v742
        %v749 = vmul.f32 %v727, %v742
        %v750 = vmul.f32 %v728, %v742
        %v751 = vmul.f32 %v729, %v742
        %v752 = vmul.f32 %v730, %v742
        %v753 = vmul.f32 %v731, %v742
        %v754 = vmul.f32 %v732, %v742
        %v755 = vmul.f32 %v733, %v742
        %v756 = vmul.f32 %v734, %v742
        %v757 = vmul.f32 %v735, %v742
        %v758 = vmul.f32 %v736, %v742
        %v759 = vmul.f32 %v737, %v742
        %v761 = vlaneseq
        %v762 = vshrl.u32 %v761, 7
        %v763 = vsub.s32 0, %v762
        %v764 = vrot.slane %v560, %v763
        %v766 = vadd.f32 %v744, %v764
        %v767 = vadd.f32 %v745, %v764
        %v768 = vadd.f32 %v746, %v764
        %v769 = vadd.f32 %v747, %v764
        %v770 = vadd.f32 %v748, %v764
        %v771 = vadd.f32 %v749, %v764
        %v772 = vadd.f32 %v750, %v764
        %v773 = vadd.f32 %v751, %v764
        %v774 = vadd.f32 %v752, %v764
        %v775 = vadd.f32 %v753, %v764
        %v776 = vadd.f32 %v754, %v764
        %v777 = vadd.f32 %v755, %v764
        %v778 = vadd.f32 %v756, %v764
        %v779 = vadd.f32 %v757, %v764
        %v780 = vadd.f32 %v758, %v764
        %v781 = vadd.f32 %v759, %v764
        %v782 = vpack.c.bf16 %v767, %v766
        %v783 = vpack.c.bf16 %v769, %v768
        %v784 = vpack.c.bf16 %v771, %v770
        %v785 = vpack.c.bf16 %v773, %v772
        %v786 = vpack.c.bf16 %v775, %v774
        %v787 = vpack.c.bf16 %v777, %v776
        %v788 = vpack.c.bf16 %v779, %v778
        %v789 = vpack.c.bf16 %v781, %v780
        %v790 = vld [vmem:[#allocation9] sm:$0xff]
        %v791 = vld [vmem:[#allocation9 + $0x8] sm:$0xf]
        %v792 = vld [vmem:[#allocation9 + $0xc] sm:$0xff]
        %v793 = vld [vmem:[#allocation9 + $0x14] sm:$0xf]
        %v794 = vld [vmem:[#allocation9 + $0x18] sm:$0xff]
        %v795 = vld [vmem:[#allocation9 + $0x20] sm:$0xf]
        %v796 = vld [vmem:[#allocation9 + $0x24] sm:$0xff]
        %v797 = vld [vmem:[#allocation9 + $0x2c] sm:$0xf]
        %v798 = vld [vmem:[#allocation9 + $0x30] sm:$0xff]
        %v799 = vld [vmem:[#allocation9 + $0x38] sm:$0xf]
        %v800 = vld [vmem:[#allocation9 + $0x3c] sm:$0xff]
        %v801 = vld [vmem:[#allocation9 + $0x44] sm:$0xf]
        %v802 = vld [vmem:[#allocation9 + $0x48] sm:$0xff]
        %v803 = vld [vmem:[#allocation9 + $0x50] sm:$0xf]
        %v804 = vld [vmem:[#allocation9 + $0x54] sm:$0xff]
        %v805 = vld [vmem:[#allocation9 + $0x5c] sm:$0xf]
        %v806 = vld [vmem:[#allocation9 + $0x60] sm:$0xff]
        %v807 = vld [vmem:[#allocation9 + $0x68] sm:$0xf]
        %v808 = vld [vmem:[#allocation9 + $0x6c] sm:$0xff]
        %v809 = vld [vmem:[#allocation9 + $0x74] sm:$0xf]
        %v810 = vld [vmem:[#allocation9 + $0x78] sm:$0xff]
        %v811 = vld [vmem:[#allocation9 + $0x80] sm:$0xf]
        %v812 = vld [vmem:[#allocation9 + $0x84] sm:$0xff]
        %v813 = vld [vmem:[#allocation9 + $0x8c] sm:$0xf]
        %v814 = vld [vmem:[#allocation9 + $0x90] sm:$0xff]
        %v815 = vld [vmem:[#allocation9 + $0x98] sm:$0xf]
        %v816 = vld [vmem:[#allocation9 + $0x9c] sm:$0xff]
        %v817 = vld [vmem:[#allocation9 + $0xa4] sm:$0xf]
        %v818 = vld [vmem:[#allocation9 + $0xa8] sm:$0xff]
        %v819 = vld [vmem:[#allocation9 + $0xb0] sm:$0xf]
        %v820 = vld [vmem:[#allocation9 + $0xb4] sm:$0xff]
        %v821 = vld [vmem:[#allocation9 + $0xbc] sm:$0xf]
        %v822 = vld [vmem:[%s4] sm:$0x7]
        %v824 = vlaneseq
        %v825 = vshrl.u32 %v824, 7
        %v826 = vsub.s32 0, %v825
        %v827 = vrot.slane %v822, %v826
        %v828 = vlaneseq
        %v829 = vshrl.u32 %v828, 7
        %v830 = vsub.s32 1, %v829
        %v831 = vrot.slane %v822, %v830
        %v832 = vlaneseq
        %v833 = vshrl.u32 %v832, 7
        %v834 = vsub.s32 2, %v833
        %v835 = vrot.slane %v822, %v834
        %v871 = vunpack.c.l.b16 %v790
        %v872 = vunpack.c.h.b16 %v790
        %v873 = vunpack.c.l.b16 %v791
        %v874 = vunpack.c.l.b16 %v792
        %v875 = vunpack.c.h.b16 %v792
        %v876 = vunpack.c.l.b16 %v793
        %v877 = vunpack.c.l.b16 %v794
        %v878 = vunpack.c.h.b16 %v794
        %v879 = vunpack.c.l.b16 %v795
        %v880 = vunpack.c.l.b16 %v796
        %v881 = vunpack.c.h.b16 %v796
        %v882 = vunpack.c.l.b16 %v797
        %v883 = vunpack.c.l.b16 %v798
        %v884 = vunpack.c.h.b16 %v798
        %v885 = vunpack.c.l.b16 %v799
        %v886 = vunpack.c.l.b16 %v800
        %v887 = vunpack.c.h.b16 %v800
        %v888 = vunpack.c.l.b16 %v801
        %v889 = vunpack.c.l.b16 %v802
        %v890 = vunpack.c.h.b16 %v802
        %v891 = vunpack.c.l.b16 %v803
        %v892 = vunpack.c.l.b16 %v804
        %v893 = vunpack.c.h.b16 %v804
        %v894 = vunpack.c.l.b16 %v805
        %v895 = vunpack.c.l.b16 %v806
        %v896 = vunpack.c.h.b16 %v806
        %v897 = vunpack.c.l.b16 %v807
        %v898 = vunpack.c.l.b16 %v808
        %v899 = vunpack.c.h.b16 %v808
        %v900 = vunpack.c.l.b16 %v809
        %v901 = vunpack.c.l.b16 %v810
        %v902 = vunpack.c.h.b16 %v810
        %v903 = vunpack.c.l.b16 %v811
        %v904 = vunpack.c.l.b16 %v812
        %v905 = vunpack.c.h.b16 %v812
        %v906 = vunpack.c.l.b16 %v813
        %v907 = vunpack.c.l.b16 %v814
        %v908 = vunpack.c.h.b16 %v814
        %v909 = vunpack.c.l.b16 %v815
        %v910 = vunpack.c.l.b16 %v816
        %v911 = vunpack.c.h.b16 %v816
        %v912 = vunpack.c.l.b16 %v817
        %v913 = vunpack.c.l.b16 %v818
        %v914 = vunpack.c.h.b16 %v818
        %v915 = vunpack.c.l.b16 %v819
        %v916 = vunpack.c.l.b16 %v820
        %v917 = vunpack.c.h.b16 %v820
        %v918 = vunpack.c.l.b16 %v821
        %v919 = vpack.c.b16 %v874, %v871
        %v920 = vpack.c.b16 %v875, %v872
        %v921 = vpack.c.b16 %v876, %v873
        %v922 = vpack.c.b16 %v880, %v877
        %v923 = vpack.c.b16 %v881, %v878
        %v924 = vpack.c.b16 %v882, %v879
        %v925 = vpack.c.b16 %v886, %v883
        %v926 = vpack.c.b16 %v887, %v884
        %v927 = vpack.c.b16 %v888, %v885
        %v928 = vpack.c.b16 %v892, %v889
        %v929 = vpack.c.b16 %v893, %v890
        %v930 = vpack.c.b16 %v894, %v891
        %v931 = vpack.c.b16 %v898, %v895
        %v932 = vpack.c.b16 %v899, %v896
        %v933 = vpack.c.b16 %v900, %v897
        %v934 = vpack.c.b16 %v904, %v901
        %v935 = vpack.c.b16 %v905, %v902
        %v936 = vpack.c.b16 %v906, %v903
        %v937 = vpack.c.b16 %v910, %v907
        %v938 = vpack.c.b16 %v911, %v908
        %v939 = vpack.c.b16 %v912, %v909
        %v940 = vpack.c.b16 %v916, %v913
        %v941 = vpack.c.b16 %v917, %v914
        %v942 = vpack.c.b16 %v918, %v915
        %967 = vmatprep.subr.bf16.mxu0 %v920
        %968 = vmatpush1.bf16.msra.mxu0 %v919
        %969 = vmatprep.subr.bf16.mxu0 %v923
        %970 = vmatpush1.bf16.msra.mxu0 %v922
        %971 = vmatprep.subr.bf16.mxu0 %v926
        %972 = vmatpush1.bf16.msra.mxu0 %v925
        %973 = vmatprep.subr.bf16.mxu0 %v929
        %974 = vmatpush1.bf16.msra.mxu0 %v928
        %975 = vmatprep.subr.bf16.mxu0 %v932
        %976 = vmatpush1.bf16.msra.mxu0 %v931
        %977 = vmatprep.subr.bf16.mxu0 %v935
        %978 = vmatpush1.bf16.msra.mxu0 %v934
        %979 = vmatprep.subr.bf16.mxu0 %v938
        %980 = vmatpush1.bf16.msra.mxu0 %v937
        %981 = vmatprep.subr.bf16.mxu0 %v941
        %982 = vmatpush1.bf16.msra.mxu0 %v940
        %983 = vmatprep.subr.bf16.mxu0 0
        %984 = vmatpush1.bf16.msra.mxu0 0
        %985 = vmatprep.subr.bf16.mxu0 0
        %986 = vmatpush1.bf16.msra.mxu0 0
        %987 = vmatprep.subr.bf16.mxu0 0
        %988 = vmatpush1.bf16.msra.mxu0 0
        %989 = vmatprep.subr.bf16.mxu0 0
        %990 = vmatpush1.bf16.msra.mxu0 0
        %991 = vmatprep.subr.bf16.mxu0 0
        %992 = vmatpush1.bf16.msra.mxu0 0
        %993 = vmatprep.subr.bf16.mxu0 0
        %994 = vmatpush1.bf16.msra.mxu0 0
        %995 = vmatprep.subr.bf16.mxu0 0
        %996 = vmatpush1.bf16.msra.mxu0 0
        %997 = vmatprep.subr.bf16.mxu0 0
        %998 = vmatpush1.bf16.msra.mxu0 0
        %999 = vmatprep.mubr.bf16.mxu0 0
        %1000 = vmatmul.mubr.bf16.gmra.mrb[0].mxu0 %v782
        %v1001 = vpop.f32.mrb[0].mxu0
        %v1002 = vadd.f32 %v827, %v1001
        %v1003 = vpop.f32.mrb[0].mxu0
        %v1004 = vadd.f32 %v831, %v1003
        %v1005 = vpop.f32.mrb[0].mxu0
        %v1006 = vadd.f32 %v827, %v1005
        %v1007 = vpop.f32.mrb[0].mxu0
        %v1008 = vadd.f32 %v831, %v1007
        %1009 = vmatprep.mubr.bf16.mxu0 0
        %1010 = vmatmul.mubr.bf16.gmra.mrb[0].mxu0 %v783
        %v1011 = vpop.f32.mrb[0].mxu0
        %v1012 = vadd.f32 %v827, %v1011
        %v1013 = vpop.f32.mrb[0].mxu0
        %v1014 = vadd.f32 %v831, %v1013
        %v1015 = vpop.f32.mrb[0].mxu0
        %v1016 = vadd.f32 %v827, %v1015
        %v1017 = vpop.f32.mrb[0].mxu0
        %v1018 = vadd.f32 %v831, %v1017
        %1019 = vmatprep.mubr.bf16.mxu0 0
        %1020 = vmatmul.mubr.bf16.gmra.mrb[0].mxu0 %v784
        %v1021 = vpop.f32.mrb[0].mxu0
        %v1022 = vadd.f32 %v827, %v1021
        %v1023 = vpop.f32.mrb[0].mxu0
        %v1024 = vadd.f32 %v831, %v1023
        %v1025 = vpop.f32.mrb[0].mxu0
        %v1026 = vadd.f32 %v827, %v1025
        %v1027 = vpop.f32.mrb[0].mxu0
        %v1028 = vadd.f32 %v831, %v1027
        %1029 = vmatprep.mubr.bf16.mxu0 0
        %1030 = vmatmul.mubr.bf16.gmra.mrb[0].mxu0 %v785
        %v1031 = vpop.f32.mrb[0].mxu0
        %v1032 = vadd.f32 %v827, %v1031
        %v1033 = vpop.f32.mrb[0].mxu0
        %v1034 = vadd.f32 %v831, %v1033
        %v1035 = vpop.f32.mrb[0].mxu0
        %v1036 = vadd.f32 %v827, %v1035
        %v1037 = vpop.f32.mrb[0].mxu0
        %v1038 = vadd.f32 %v831, %v1037
        %1039 = vmatprep.mubr.bf16.mxu0 0
        %1040 = vmatmul.mubr.bf16.gmra.mrb[0].mxu0 %v786
        %v1041 = vpop.f32.mrb[0].mxu0
        %v1042 = vadd.f32 %v827, %v1041
        %v1043 = vpop.f32.mrb[0].mxu0
        %v1044 = vadd.f32 %v831, %v1043
        %v1045 = vpop.f32.mrb[0].mxu0
        %v1046 = vadd.f32 %v827, %v1045
        %v1047 = vpop.f32.mrb[0].mxu0
        %v1048 = vadd.f32 %v831, %v1047
        %1049 = vmatprep.mubr.bf16.mxu0 0
        %1050 = vmatmul.mubr.bf16.gmra.mrb[0].mxu0 %v787
        %v1051 = vpop.f32.mrb[0].mxu0
        %v1052 = vadd.f32 %v827, %v1051
        %v1053 = vpop.f32.mrb[0].mxu0
        %v1054 = vadd.f32 %v831, %v1053
        %v1055 = vpop.f32.mrb[0].mxu0
        %v1056 = vadd.f32 %v827, %v1055
        %v1057 = vpop.f32.mrb[0].mxu0
        %v1058 = vadd.f32 %v831, %v1057
        %1059 = vmatprep.mubr.bf16.mxu0 0
        %1060 = vmatmul.mubr.bf16.gmra.mrb[0].mxu0 %v788
        %v1061 = vpop.f32.mrb[0].mxu0
        %v1062 = vadd.f32 %v827, %v1061
        %v1063 = vpop.f32.mrb[0].mxu0
        %v1064 = vadd.f32 %v831, %v1063
        %v1065 = vpop.f32.mrb[0].mxu0
        %v1066 = vadd.f32 %v827, %v1065
        %v1067 = vpop.f32.mrb[0].mxu0
        %v1068 = vadd.f32 %v831, %v1067
        %1069 = vmatprep.mubr.bf16.mxu0 0
        %1070 = vmatmul.mubr.bf16.gmra.mrb[0].mxu0 %v789
        %v1071 = vpop.f32.mrb[0].mxu0
        %v1072 = vadd.f32 %v827, %v1071
        %v1073 = vpop.f32.mrb[0].mxu0
        %v1074 = vadd.f32 %v831, %v1073
        %v1075 = vpop.f32.mrb[0].mxu0
        %v1076 = vadd.f32 %v827, %v1075
        %v1077 = vpop.f32.mrb[0].mxu0
        %v1078 = vadd.f32 %v831, %v1077
        %1079 = vdwg.mxu0
        %1080 = vmatprep.subr.bf16.mxu0 0
        %1081 = vmatpush1.bf16.msra.mxu0 %v921
        %1082 = vmatprep.subr.bf16.mxu0 0
        %1083 = vmatpush1.bf16.msra.mxu0 %v924
        %1084 = vmatprep.subr.bf16.mxu0 0
        %1085 = vmatpush1.bf16.msra.mxu0 %v927
        %1086 = vmatprep.subr.bf16.mxu0 0
        %1087 = vmatpush1.bf16.msra.mxu0 %v930
        %1088 = vmatprep.subr.bf16.mxu0 0
        %1089 = vmatpush1.bf16.msra.mxu0 %v933
        %1090 = vmatprep.subr.bf16.mxu0 0
        %1091 = vmatpush1.bf16.msra.mxu0 %v936
        %1092 = vmatprep.subr.bf16.mxu0 0
        %1093 = vmatpush1.bf16.msra.mxu0 %v939
        %1094 = vmatprep.subr.bf16.mxu0 0
        %1095 = vmatpush1.bf16.msra.mxu0 %v942
        %1096 = vmatprep.subr.bf16.mxu0 0
        %1097 = vmatpush1.bf16.msra.mxu0 0
        %1098 = vmatprep.subr.bf16.mxu0 0
        %1099 = vmatpush1.bf16.msra.mxu0 0
        %1100 = vmatprep.subr.bf16.mxu0 0
        %1101 = vmatpush1.bf16.msra.mxu0 0
        %1102 = vmatprep.subr.bf16.mxu0 0
        %1103 = vmatpush1.bf16.msra.mxu0 0
        %1104 = vmatprep.subr.bf16.mxu0 0
        %1105 = vmatpush1.bf16.msra.mxu0 0
        %1106 = vmatprep.subr.bf16.mxu0 0
        %1107 = vmatpush1.bf16.msra.mxu0 0
        %1108 = vmatprep.subr.bf16.mxu0 0
        %1109 = vmatpush1.bf16.msra.mxu0 0
        %1110 = vmatprep.subr.bf16.mxu0 0
        %1111 = vmatpush1.bf16.msra.mxu0 0
        %1112 = vmatprep.mubr.bf16.mxu0 0
        %1113 = vmatmul.mubr.bf16.gmra.mrb[0].mxu0 %v782
        %v1114 = vpop.f32.mrb[0].mxu0
        %v1115 = vadd.f32 %v835, %v1114
        %v1116 = vpop.f32.mrb[0].mxu0
        %v1117 = vpop.f32.mrb[0].mxu0
        %v1118 = vadd.f32 %v835, %v1117
        %v1119 = vpop.f32.mrb[0].mxu0
        %1120 = vmatprep.mubr.bf16.mxu0 0
        %1121 = vmatmul.mubr.bf16.gmra.mrb[0].mxu0 %v783
        %v1122 = vpop.f32.mrb[0].mxu0
        %v1123 = vadd.f32 %v835, %v1122
        %v1124 = vpop.f32.mrb[0].mxu0
        %v1125 = vpop.f32.mrb[0].mxu0
        %v1126 = vadd.f32 %v835, %v1125
        %v1127 = vpop.f32.mrb[0].mxu0
        %1128 = vmatprep.mubr.bf16.mxu0 0
        %1129 = vmatmul.mubr.bf16.gmra.mrb[0].mxu0 %v784
        %v1130 = vpop.f32.mrb[0].mxu0
        %v1131 = vadd.f32 %v835, %v1130
        %v1132 = vpop.f32.mrb[0].mxu0
        %v1133 = vpop.f32.mrb[0].mxu0
        %v1134 = vadd.f32 %v835, %v1133
        %v1135 = vpop.f32.mrb[0].mxu0
        %1136 = vmatprep.mubr.bf16.mxu0 0
        %1137 = vmatmul.mubr.bf16.gmra.mrb[0].mxu0 %v785
        %v1138 = vpop.f32.mrb[0].mxu0
        %v1139 = vadd.f32 %v835, %v1138
        %v1140 = vpop.f32.mrb[0].mxu0
        %v1141 = vpop.f32.mrb[0].mxu0
        %v1142 = vadd.f32 %v835, %v1141
        %v1143 = vpop.f32.mrb[0].mxu0
        %1144 = vmatprep.mubr.bf16.mxu0 0
        %1145 = vmatmul.mubr.bf16.gmra.mrb[0].mxu0 %v786
        %v1146 = vpop.f32.mrb[0].mxu0
        %v1147 = vadd.f32 %v835, %v1146
        %v1148 = vpop.f32.mrb[0].mxu0
        %v1149 = vpop.f32.mrb[0].mxu0
        %v1150 = vadd.f32 %v835, %v1149
        %v1151 = vpop.f32.mrb[0].mxu0
        %1152 = vmatprep.mubr.bf16.mxu0 0
        %1153 = vmatmul.mubr.bf16.gmra.mrb[0].mxu0 %v787
        %v1154 = vpop.f32.mrb[0].mxu0
        %v1155 = vadd.f32 %v835, %v1154
        %v1156 = vpop.f32.mrb[0].mxu0
        %v1157 = vpop.f32.mrb[0].mxu0
        %v1158 = vadd.f32 %v835, %v1157
        %v1159 = vpop.f32.mrb[0].mxu0
        %1160 = vmatprep.mubr.bf16.mxu0 0
        %1161 = vmatmul.mubr.bf16.gmra.mrb[0].mxu0 %v788
        %v1162 = vpop.f32.mrb[0].mxu0
        %v1163 = vadd.f32 %v835, %v1162
        %v1164 = vpop.f32.mrb[0].mxu0
        %v1165 = vpop.f32.mrb[0].mxu0
        %v1166 = vadd.f32 %v835, %v1165
        %v1167 = vpop.f32.mrb[0].mxu0
        %1168 = vmatprep.mubr.bf16.mxu0 0
        %1169 = vmatmul.mubr.bf16.gmra.mrb[0].mxu0 %v789
        %v1170 = vpop.f32.mrb[0].mxu0
        %v1171 = vadd.f32 %v835, %v1170
        %v1172 = vpop.f32.mrb[0].mxu0
        %v1173 = vpop.f32.mrb[0].mxu0
        %v1174 = vadd.f32 %v835, %v1173
        %v1175 = vpop.f32.mrb[0].mxu0
        %1176 = vdwg.mxu0
        %v1177 = vmul.f32 %v1002, 0.17677669
        %v1178 = vmul.f32 %v1006, 0.17677669
        %v1179 = vmul.f32 %v1012, 0.17677669
        %v1180 = vmul.f32 %v1016, 0.17677669
        %v1181 = vmul.f32 %v1022, 0.17677669
        %v1182 = vmul.f32 %v1026, 0.17677669
        %v1183 = vmul.f32 %v1032, 0.17677669
        %v1184 = vmul.f32 %v1036, 0.17677669
        %v1185 = vmul.f32 %v1042, 0.17677669
        %v1186 = vmul.f32 %v1046, 0.17677669
        %v1187 = vmul.f32 %v1052, 0.17677669
        %v1188 = vmul.f32 %v1056, 0.17677669
        %v1189 = vmul.f32 %v1062, 0.17677669
        %v1190 = vmul.f32 %v1066, 0.17677669
        %v1191 = vmul.f32 %v1072, 0.17677669
        %v1192 = vmul.f32 %v1076, 0.17677669
        %v1193 = vpack.c.bf16 %v1178, %v1177
        %v1194 = vpack.c.bf16 %v1180, %v1179
        %v1195 = vpack.c.bf16 %v1182, %v1181
        %v1196 = vpack.c.bf16 %v1184, %v1183
        %v1197 = vpack.c.bf16 %v1186, %v1185
        %v1198 = vpack.c.bf16 %v1188, %v1187
        %v1199 = vpack.c.bf16 %v1190, %v1189
        %v1200 = vpack.c.bf16 %v1192, %v1191
        %v1201 = vpack.c.bf16 %v1008, %v1004
        %v1202 = vpack.c.bf16 %v1018, %v1014
        %v1203 = vpack.c.bf16 %v1028, %v1024
        %v1204 = vpack.c.bf16 %v1038, %v1034
        %v1205 = vpack.c.bf16 %v1048, %v1044
        %v1206 = vpack.c.bf16 %v1058, %v1054
        %v1207 = vpack.c.bf16 %v1068, %v1064
        %v1208 = vpack.c.bf16 %v1078, %v1074
        %v1209 = vpack.c.bf16 %v1118, %v1115
        %v1210 = vpack.c.bf16 %v1126, %v1123
        %v1211 = vpack.c.bf16 %v1134, %v1131
        %v1212 = vpack.c.bf16 %v1142, %v1139
        %v1213 = vpack.c.bf16 %v1150, %v1147
        %v1214 = vpack.c.bf16 %v1158, %v1155
        %v1215 = vpack.c.bf16 %v1166, %v1163
        %v1216 = vpack.c.bf16 %v1174, %v1171
        %1225 = vrot.lane.b32.xlu0 %v1193, 96
        %v1226 = vpop.permute.xlu0 %1225
        %1227 = vrot.lane.b32.xlu0 %v1194, 96
        %v1228 = vpop.permute.xlu0 %1227
        %1229 = vrot.lane.b32.xlu0 %v1195, 96
        %v1230 = vpop.permute.xlu0 %1229
        %1231 = vrot.lane.b32.xlu0 %v1196, 96
        %v1232 = vpop.permute.xlu0 %1231
        %1233 = vrot.lane.b32.xlu0 %v1197, 96
        %v1234 = vpop.permute.xlu0 %1233
        %1235 = vrot.lane.b32.xlu0 %v1198, 96
        %v1236 = vpop.permute.xlu0 %1235
        %1237 = vrot.lane.b32.xlu0 %v1199, 96
        %v1238 = vpop.permute.xlu0 %1237
        %1239 = vrot.lane.b32.xlu0 %v1200, 96
        %v1240 = vpop.permute.xlu0 %1239
        %1241 = vrot.lane.b32.xlu0 %v1193, 64
        %v1242 = vpop.permute.xlu0 %1241
        %1243 = vrot.lane.b32.xlu0 %v1194, 64
        %v1244 = vpop.permute.xlu0 %1243
        %1245 = vrot.lane.b32.xlu0 %v1195, 64
        %v1246 = vpop.permute.xlu0 %1245
        %1247 = vrot.lane.b32.xlu0 %v1196, 64
        %v1248 = vpop.permute.xlu0 %1247
        %1249 = vrot.lane.b32.xlu0 %v1197, 64
        %v1250 = vpop.permute.xlu0 %1249
        %1251 = vrot.lane.b32.xlu0 %v1198, 64
        %v1252 = vpop.permute.xlu0 %1251
        %1253 = vrot.lane.b32.xlu0 %v1199, 64
        %v1254 = vpop.permute.xlu0 %1253
        %1255 = vrot.lane.b32.xlu0 %v1200, 64
        %v1256 = vpop.permute.xlu0 %1255
        %1257 = vrot.lane.b32.xlu0 %v1193, 32
        %v1258 = vpop.permute.xlu0 %1257
        %1259 = vrot.lane.b32.xlu0 %v1194, 32
        %v1260 = vpop.permute.xlu0 %1259
        %1261 = vrot.lane.b32.xlu0 %v1195, 32
        %v1262 = vpop.permute.xlu0 %1261
        %1263 = vrot.lane.b32.xlu0 %v1196, 32
        %v1264 = vpop.permute.xlu0 %1263
        %1265 = vrot.lane.b32.xlu0 %v1197, 32
        %v1266 = vpop.permute.xlu0 %1265
        %1267 = vrot.lane.b32.xlu0 %v1198, 32
        %v1268 = vpop.permute.xlu0 %1267
        %1269 = vrot.lane.b32.xlu0 %v1199, 32
        %v1270 = vpop.permute.xlu0 %1269
        %1271 = vrot.lane.b32.xlu0 %v1200, 32
        %v1272 = vpop.permute.xlu0 %1271
        %1281 = vrot.lane.b32.xlu0 %v1201, 96
        %v1282 = vpop.permute.xlu0 %1281
        %1283 = vrot.lane.b32.xlu0 %v1202, 96
        %v1284 = vpop.permute.xlu0 %1283
        %1285 = vrot.lane.b32.xlu0 %v1203, 96
        %v1286 = vpop.permute.xlu0 %1285
        %1287 = vrot.lane.b32.xlu0 %v1204, 96
        %v1288 = vpop.permute.xlu0 %1287
        %1289 = vrot.lane.b32.xlu0 %v1205, 96
        %v1290 = vpop.permute.xlu0 %1289
        %1291 = vrot.lane.b32.xlu0 %v1206, 96
        %v1292 = vpop.permute.xlu0 %1291
        %1293 = vrot.lane.b32.xlu0 %v1207, 96
        %v1294 = vpop.permute.xlu0 %1293
        %1295 = vrot.lane.b32.xlu0 %v1208, 96
        %v1296 = vpop.permute.xlu0 %1295
        %1297 = vrot.lane.b32.xlu0 %v1201, 64
        %v1298 = vpop.permute.xlu0 %1297
        %1299 = vrot.lane.b32.xlu0 %v1202, 64
        %v1300 = vpop.permute.xlu0 %1299
        %1301 = vrot.lane.b32.xlu0 %v1203, 64
        %v1302 = vpop.permute.xlu0 %1301
        %1303 = vrot.lane.b32.xlu0 %v1204, 64
        %v1304 = vpop.permute.xlu0 %1303
        %1305 = vrot.lane.b32.xlu0 %v1205, 64
        %v1306 = vpop.permute.xlu0 %1305
        %1307 = vrot.lane.b32.xlu0 %v1206, 64
        %v1308 = vpop.permute.xlu0 %1307
        %1309 = vrot.lane.b32.xlu0 %v1207, 64
        %v1310 = vpop.permute.xlu0 %1309
        %1311 = vrot.lane.b32.xlu0 %v1208, 64
        %v1312 = vpop.permute.xlu0 %1311
        %1313 = vrot.lane.b32.xlu0 %v1201, 32
        %v1314 = vpop.permute.xlu0 %1313
        %1315 = vrot.lane.b32.xlu0 %v1202, 32
        %v1316 = vpop.permute.xlu0 %1315
        %1317 = vrot.lane.b32.xlu0 %v1203, 32
        %v1318 = vpop.permute.xlu0 %1317
        %1319 = vrot.lane.b32.xlu0 %v1204, 32
        %v1320 = vpop.permute.xlu0 %1319
        %1321 = vrot.lane.b32.xlu0 %v1205, 32
        %v1322 = vpop.permute.xlu0 %1321
        %1323 = vrot.lane.b32.xlu0 %v1206, 32
        %v1324 = vpop.permute.xlu0 %1323
        %1325 = vrot.lane.b32.xlu0 %v1207, 32
        %v1326 = vpop.permute.xlu0 %1325
        %1327 = vrot.lane.b32.xlu0 %v1208, 32
        %v1328 = vpop.permute.xlu0 %1327
        %1337 = vrot.lane.b32.xlu0 %v1209, 96
        %v1338 = vpop.permute.xlu0 %1337
        %1339 = vrot.lane.b32.xlu0 %v1210, 96
        %v1340 = vpop.permute.xlu0 %1339
        %1341 = vrot.lane.b32.xlu0 %v1211, 96
        %v1342 = vpop.permute.xlu0 %1341
        %1343 = vrot.lane.b32.xlu0 %v1212, 96
        %v1344 = vpop.permute.xlu0 %1343
        %1345 = vrot.lane.b32.xlu0 %v1213, 96
        %v1346 = vpop.permute.xlu0 %1345
        %1347 = vrot.lane.b32.xlu0 %v1214, 96
        %v1348 = vpop.permute.xlu0 %1347
        %1349 = vrot.lane.b32.xlu0 %v1215, 96
        %v1350 = vpop.permute.xlu0 %1349
        %1351 = vrot.lane.b32.xlu0 %v1216, 96
        %v1352 = vpop.permute.xlu0 %1351
        %1361 = vrot.lane.b32.xlu0 %v1209, 64
        %v1362 = vpop.permute.xlu0 %1361
        %1363 = vrot.lane.b32.xlu0 %v1210, 64
        %v1364 = vpop.permute.xlu0 %1363
        %1365 = vrot.lane.b32.xlu0 %v1211, 64
        %v1366 = vpop.permute.xlu0 %1365
        %1367 = vrot.lane.b32.xlu0 %v1212, 64
        %v1368 = vpop.permute.xlu0 %1367
        %1369 = vrot.lane.b32.xlu0 %v1213, 64
        %v1370 = vpop.permute.xlu0 %1369
        %1371 = vrot.lane.b32.xlu0 %v1214, 64
        %v1372 = vpop.permute.xlu0 %1371
        %1373 = vrot.lane.b32.xlu0 %v1215, 64
        %v1374 = vpop.permute.xlu0 %1373
        %1375 = vrot.lane.b32.xlu0 %v1216, 64
        %v1376 = vpop.permute.xlu0 %1375
        %1385 = vrot.lane.b32.xlu0 %v1209, 32
        %v1386 = vpop.permute.xlu0 %1385
        %1387 = vrot.lane.b32.xlu0 %v1210, 32
        %v1388 = vpop.permute.xlu0 %1387
        %1389 = vrot.lane.b32.xlu0 %v1211, 32
        %v1390 = vpop.permute.xlu0 %1389
        %1391 = vrot.lane.b32.xlu0 %v1212, 32
        %v1392 = vpop.permute.xlu0 %1391
        %1393 = vrot.lane.b32.xlu0 %v1213, 32
        %v1394 = vpop.permute.xlu0 %1393
        %1395 = vrot.lane.b32.xlu0 %v1214, 32
        %v1396 = vpop.permute.xlu0 %1395
        %1397 = vrot.lane.b32.xlu0 %v1215, 32
        %v1398 = vpop.permute.xlu0 %1397
        %1399 = vrot.lane.b32.xlu0 %v1216, 32
        %v1400 = vpop.permute.xlu0 %1399
        %v1409 = vlaneseq
        %v1410 = vshrl.u32 %v1409, 7
        %v1411 = vadd.s32 %v1410, 8
        %v1412 = vadd.s32 %v1410, 16
        %v1413 = vadd.s32 %v1410, 24
        %v1414 = vadd.s32 %v1410, 32
        %v1415 = vadd.s32 %v1410, 40
        %v1416 = vadd.s32 %v1410, 48
        %v1417 = vadd.s32 %v1410, 56
        %v1418 = vadd.s32 %v1410, 64
        %v1419 = vadd.s32 %v1410, 72
        %v1420 = vadd.s32 %v1410, 80
        %v1421 = vadd.s32 %v1410, 88
        %v1422 = vadd.s32 %v1410, 96
        %v1423 = vadd.s32 %v1410, 104
        %v1424 = vadd.s32 %v1410, 112
        %v1425 = vadd.s32 %v1410, 120
        %v1426 = vlaneseq
        %v1427 = vand.u32 %v1426, 127
        %vm1428 = vcmp.gt.s32.totalorder %v1427, %v1410
        %vm1429 = vcmp.gt.s32.totalorder %v1427, %v1411
        %vm1430 = vcmp.gt.s32.totalorder %v1427, %v1412
        %vm1431 = vcmp.gt.s32.totalorder %v1427, %v1413
        %vm1432 = vcmp.gt.s32.totalorder %v1427, %v1414
        %vm1433 = vcmp.gt.s32.totalorder %v1427, %v1415
        %vm1434 = vcmp.gt.s32.totalorder %v1427, %v1416
        %vm1435 = vcmp.gt.s32.totalorder %v1427, %v1417
        %vm1436 = vcmp.gt.s32.totalorder %v1427, %v1418
        %vm1437 = vcmp.gt.s32.totalorder %v1427, %v1419
        %vm1438 = vcmp.gt.s32.totalorder %v1427, %v1420
        %vm1439 = vcmp.gt.s32.totalorder %v1427, %v1421
        %vm1440 = vcmp.gt.s32.totalorder %v1427, %v1422
        %vm1441 = vcmp.gt.s32.totalorder %v1427, %v1423
        %vm1442 = vcmp.gt.s32.totalorder %v1427, %v1424
        %vm1443 = vcmp.gt.s32.totalorder %v1427, %v1425
        %v1444 = vsel %vm1428, -1e+30, 0.0
        %v1445 = vsel %vm1429, -1e+30, 0.0
        %v1446 = vsel %vm1430, -1e+30, 0.0
        %v1447 = vsel %vm1431, -1e+30, 0.0
        %v1448 = vsel %vm1432, -1e+30, 0.0
        %v1449 = vsel %vm1433, -1e+30, 0.0
        %v1450 = vsel %vm1434, -1e+30, 0.0
        %v1451 = vsel %vm1435, -1e+30, 0.0
        %v1452 = vsel %vm1436, -1e+30, 0.0
        %v1453 = vsel %vm1437, -1e+30, 0.0
        %v1454 = vsel %vm1438, -1e+30, 0.0
        %v1455 = vsel %vm1439, -1e+30, 0.0
        %v1456 = vsel %vm1440, -1e+30, 0.0
        %v1457 = vsel %vm1441, -1e+30, 0.0
        %v1458 = vsel %vm1442, -1e+30, 0.0
        %v1459 = vsel %vm1443, -1e+30, 0.0
        %vm1460 = vcmask 261120
        %v1462 = vsel %vm1460, %v1193, 0
        %v1465 = vsel %vm1460, %v1194, 0
        %v1468 = vsel %vm1460, %v1195, 0
        %v1471 = vsel %vm1460, %v1196, 0
        %v1474 = vsel %vm1460, %v1197, 0
        %v1477 = vsel %vm1460, %v1198, 0
        %v1480 = vsel %vm1460, %v1199, 0
        %v1483 = vsel %vm1460, %v1200, 0
        %v1486 = vsel %vm1460, %v1201, 0
        %v1489 = vsel %vm1460, %v1202, 0
        %v1492 = vsel %vm1460, %v1203, 0
        %v1495 = vsel %vm1460, %v1204, 0
        %v1498 = vsel %vm1460, %v1205, 0
        %v1501 = vsel %vm1460, %v1206, 0
        %v1504 = vsel %vm1460, %v1207, 0
        %v1507 = vsel %vm1460, %v1208, 0
        %1509 = vmatprep.subr.bf16.mxu0 0
        %1510 = vmatpush1.bf16.xpose.msra.mxu0 %v1486
        %1511 = vmatprep.subr.bf16.mxu0 0
        %1512 = vmatpush1.bf16.xpose.msra.mxu0 %v1489
        %1513 = vmatprep.subr.bf16.mxu0 0
        %1514 = vmatpush1.bf16.xpose.msra.mxu0 %v1492
        %1515 = vmatprep.subr.bf16.mxu0 0
        %1516 = vmatpush1.bf16.xpose.msra.mxu0 %v1495
        %1517 = vmatprep.subr.bf16.mxu0 0
        %1518 = vmatpush1.bf16.xpose.msra.mxu0 %v1498
        %1519 = vmatprep.subr.bf16.mxu0 0
        %1520 = vmatpush1.bf16.xpose.msra.mxu0 %v1501
        %1521 = vmatprep.subr.bf16.mxu0 0
        %1522 = vmatpush1.bf16.xpose.msra.mxu0 %v1504
        %1523 = vmatprep.subr.bf16.mxu0 0
        %1524 = vmatpush1.bf16.xpose.msra.mxu0 %v1507
        %1525 = vmatprep.subr.bf16.mxu0 0
        %1526 = vmatpush1.bf16.xpose.msra.mxu0 0
        %1527 = vmatprep.subr.bf16.mxu0 0
        %1528 = vmatpush1.bf16.xpose.msra.mxu0 0
        %1529 = vmatprep.subr.bf16.mxu0 0
        %1530 = vmatpush1.bf16.xpose.msra.mxu0 0
        %1531 = vmatprep.subr.bf16.mxu0 0
        %1532 = vmatpush1.bf16.xpose.msra.mxu0 0
        %1533 = vmatprep.subr.bf16.mxu0 0
        %1534 = vmatpush1.bf16.xpose.msra.mxu0 0
        %1535 = vmatprep.subr.bf16.mxu0 0
        %1536 = vmatpush1.bf16.xpose.msra.mxu0 0
        %1537 = vmatprep.subr.bf16.mxu0 0
        %1538 = vmatpush1.bf16.xpose.msra.mxu0 0
        %1539 = vmatprep.subr.bf16.mxu0 0
        %1540 = vmatpush1.bf16.xpose.msra.mxu0 0
        %1541 = vmatprep.mubr.bf16.mxu0 0
        %1542 = vmatmul.mubr.bf16.gmra.mrb[0].mxu0 %v1462
        %v1543 = vpop.f32.mrb[0].mxu0
        %v1544 = vadd.f32 %v1444, %v1543
        %v1545 = vpop.f32.mrb[0].mxu0
        %v1546 = vpop.f32.mrb[0].mxu0
        %v1547 = vadd.f32 %v1445, %v1546
        %v1548 = vpop.f32.mrb[0].mxu0
        %1549 = vmatprep.mubr.bf16.mxu0 0
        %1550 = vmatmul.mubr.bf16.gmra.mrb[0].mxu0 %v1465
        %v1551 = vpop.f32.mrb[0].mxu0
        %v1552 = vadd.f32 %v1446, %v1551
        %v1553 = vpop.f32.mrb[0].mxu0
        %v1554 = vpop.f32.mrb[0].mxu0
        %v1555 = vadd.f32 %v1447, %v1554
        %v1556 = vpop.f32.mrb[0].mxu0
        %1557 = vmatprep.mubr.bf16.mxu0 0
        %1558 = vmatmul.mubr.bf16.gmra.mrb[0].mxu0 %v1468
        %v1559 = vpop.f32.mrb[0].mxu0
        %v1560 = vadd.f32 %v1448, %v1559
        %v1561 = vpop.f32.mrb[0].mxu0
        %v1562 = vpop.f32.mrb[0].mxu0
        %v1563 = vadd.f32 %v1449, %v1562
        %v1564 = vpop.f32.mrb[0].mxu0
        %1565 = vmatprep.mubr.bf16.mxu0 0
        %1566 = vmatmul.mubr.bf16.gmra.mrb[0].mxu0 %v1471
        %v1567 = vpop.f32.mrb[0].mxu0
        %v1568 = vadd.f32 %v1450, %v1567
        %v1569 = vpop.f32.mrb[0].mxu0
        %v1570 = vpop.f32.mrb[0].mxu0
        %v1571 = vadd.f32 %v1451, %v1570
        %v1572 = vpop.f32.mrb[0].mxu0
        %1573 = vmatprep.mubr.bf16.mxu0 0
        %1574 = vmatmul.mubr.bf16.gmra.mrb[0].mxu0 %v1474
        %v1575 = vpop.f32.mrb[0].mxu0
        %v1576 = vadd.f32 %v1452, %v1575
        %v1577 = vpop.f32.mrb[0].mxu0
        %v1578 = vpop.f32.mrb[0].mxu0
        %v1579 = vadd.f32 %v1453, %v1578
        %v1580 = vpop.f32.mrb[0].mxu0
        %1581 = vmatprep.mubr.bf16.mxu0 0
        %1582 = vmatmul.mubr.bf16.gmra.mrb[0].mxu0 %v1477
        %v1583 = vpop.f32.mrb[0].mxu0
        %v1584 = vadd.f32 %v1454, %v1583
        %v1585 = vpop.f32.mrb[0].mxu0
        %v1586 = vpop.f32.mrb[0].mxu0
        %v1587 = vadd.f32 %v1455, %v1586
        %v1588 = vpop.f32.mrb[0].mxu0
        %1589 = vmatprep.mubr.bf16.mxu0 0
        %1590 = vmatmul.mubr.bf16.gmra.mrb[0].mxu0 %v1480
        %v1591 = vpop.f32.mrb[0].mxu0
        %v1592 = vadd.f32 %v1456, %v1591
        %v1593 = vpop.f32.mrb[0].mxu0
        %v1594 = vpop.f32.mrb[0].mxu0
        %v1595 = vadd.f32 %v1457, %v1594
        %v1596 = vpop.f32.mrb[0].mxu0
        %1597 = vmatprep.mubr.bf16.mxu0 0
        %1598 = vmatmul.mubr.bf16.gmra.mrb[0].mxu0 %v1483
        %v1599 = vpop.f32.mrb[0].mxu0
        %v1600 = vadd.f32 %v1458, %v1599
        %v1601 = vpop.f32.mrb[0].mxu0
        %v1602 = vpop.f32.mrb[0].mxu0
        %v1603 = vadd.f32 %v1459, %v1602
        %v1604 = vpop.f32.mrb[0].mxu0
        %1605 = vdwg.mxu0
        %v1607 = vsel %vm1460, %v1226, 0
        %v1610 = vsel %vm1460, %v1228, 0
        %v1613 = vsel %vm1460, %v1230, 0
        %v1616 = vsel %vm1460, %v1232, 0
        %v1619 = vsel %vm1460, %v1234, 0
        %v1622 = vsel %vm1460, %v1236, 0
        %v1625 = vsel %vm1460, %v1238, 0
        %v1628 = vsel %vm1460, %v1240, 0
        %v1631 = vsel %vm1460, %v1282, 0
        %v1634 = vsel %vm1460, %v1284, 0
        %v1637 = vsel %vm1460, %v1286, 0
        %v1640 = vsel %vm1460, %v1288, 0
        %v1643 = vsel %vm1460, %v1290, 0
        %v1646 = vsel %vm1460, %v1292, 0
        %v1649 = vsel %vm1460, %v1294, 0
        %v1652 = vsel %vm1460, %v1296, 0
        %1654 = vmatprep.subr.bf16.mxu0 0
        %1655 = vmatpush1.bf16.xpose.msra.mxu0 %v1631
        %1656 = vmatprep.subr.bf16.mxu0 0
        %1657 = vmatpush1.bf16.xpose.msra.mxu0 %v1634
        %1658 = vmatprep.subr.bf16.mxu0 0
        %1659 = vmatpush1.bf16.xpose.msra.mxu0 %v1637
        %1660 = vmatprep.subr.bf16.mxu0 0
        %1661 = vmatpush1.bf16.xpose.msra.mxu0 %v1640
        %1662 = vmatprep.subr.bf16.mxu0 0
        %1663 = vmatpush1.bf16.xpose.msra.mxu0 %v1643
        %1664 = vmatprep.subr.bf16.mxu0 0
        %1665 = vmatpush1.bf16.xpose.msra.mxu0 %v1646
        %1666 = vmatprep.subr.bf16.mxu0 0
        %1667 = vmatpush1.bf16.xpose.msra.mxu0 %v1649
        %1668 = vmatprep.subr.bf16.mxu0 0
        %1669 = vmatpush1.bf16.xpose.msra.mxu0 %v1652
        %1670 = vmatprep.subr.bf16.mxu0 0
        %1671 = vmatpush1.bf16.xpose.msra.mxu0 0
        %1672 = vmatprep.subr.bf16.mxu0 0
        %1673 = vmatpush1.bf16.xpose.msra.mxu0 0
        %1674 = vmatprep.subr.bf16.mxu0 0
        %1675 = vmatpush1.bf16.xpose.msra.mxu0 0
        %1676 = vmatprep.subr.bf16.mxu0 0
        %1677 = vmatpush1.bf16.xpose.msra.mxu0 0
        %1678 = vmatprep.subr.bf16.mxu0 0
        %1679 = vmatpush1.bf16.xpose.msra.mxu0 0
        %1680 = vmatprep.subr.bf16.mxu0 0
        %1681 = vmatpush1.bf16.xpose.msra.mxu0 0
        %1682 = vmatprep.subr.bf16.mxu0 0
        %1683 = vmatpush1.bf16.xpose.msra.mxu0 0
        %1684 = vmatprep.subr.bf16.mxu0 0
        %1685 = vmatpush1.bf16.xpose.msra.mxu0 0
        %1686 = vmatprep.mubr.bf16.mxu0 0
        %1687 = vmatmul.mubr.bf16.gmra.mrb[0].mxu0 %v1607
        %v1688 = vpop.f32.mrb[0].mxu0
        %v1689 = vadd.f32 %v1444, %v1688
        %v1690 = vpop.f32.mrb[0].mxu0
        %v1691 = vpop.f32.mrb[0].mxu0
        %v1692 = vadd.f32 %v1445, %v1691
        %v1693 = vpop.f32.mrb[0].mxu0
        %1694 = vmatprep.mubr.bf16.mxu0 0
        %1695 = vmatmul.mubr.bf16.gmra.mrb[0].mxu0 %v1610
        %v1696 = vpop.f32.mrb[0].mxu0
        %v1697 = vadd.f32 %v1446, %v1696
        %v1698 = vpop.f32.mrb[0].mxu0
        %v1699 = vpop.f32.mrb[0].mxu0
        %v1700 = vadd.f32 %v1447, %v1699
        %v1701 = vpop.f32.mrb[0].mxu0
        %1702 = vmatprep.mubr.bf16.mxu0 0
        %1703 = vmatmul.mubr.bf16.gmra.mrb[0].mxu0 %v1613
        %v1704 = vpop.f32.mrb[0].mxu0
        %v1705 = vadd.f32 %v1448, %v1704
        %v1706 = vpop.f32.mrb[0].mxu0
        %v1707 = vpop.f32.mrb[0].mxu0
        %v1708 = vadd.f32 %v1449, %v1707
        %v1709 = vpop.f32.mrb[0].mxu0
        %1710 = vmatprep.mubr.bf16.mxu0 0
        %1711 = vmatmul.mubr.bf16.gmra.mrb[0].mxu0 %v1616
        %v1712 = vpop.f32.mrb[0].mxu0
        %v1713 = vadd.f32 %v1450, %v1712
        %v1714 = vpop.f32.mrb[0].mxu0
        %v1715 = vpop.f32.mrb[0].mxu0
        %v1716 = vadd.f32 %v1451, %v1715
        %v1717 = vpop.f32.mrb[0].mxu0
        %1718 = vmatprep.mubr.bf16.mxu0 0
        %1719 = vmatmul.mubr.bf16.gmra.mrb[0].mxu0 %v1619
        %v1720 = vpop.f32.mrb[0].mxu0
        %v1721 = vadd.f32 %v1452, %v1720
        %v1722 = vpop.f32.mrb[0].mxu0
        %v1723 = vpop.f32.mrb[0].mxu0
        %v1724 = vadd.f32 %v1453, %v1723
        %v1725 = vpop.f32.mrb[0].mxu0
        %1726 = vmatprep.mubr.bf16.mxu0 0
        %1727 = vmatmul.mubr.bf16.gmra.mrb[0].mxu0 %v1622
        %v1728 = vpop.f32.mrb[0].mxu0
        %v1729 = vadd.f32 %v1454, %v1728
        %v1730 = vpop.f32.mrb[0].mxu0
        %v1731 = vpop.f32.mrb[0].mxu0
        %v1732 = vadd.f32 %v1455, %v1731
        %v1733 = vpop.f32.mrb[0].mxu0
        %1734 = vmatprep.mubr.bf16.mxu0 0
        %1735 = vmatmul.mubr.bf16.gmra.mrb[0].mxu0 %v1625
        %v1736 = vpop.f32.mrb[0].mxu0
        %v1737 = vadd.f32 %v1456, %v1736
        %v1738 = vpop.f32.mrb[0].mxu0
        %v1739 = vpop.f32.mrb[0].mxu0
        %v1740 = vadd.f32 %v1457, %v1739
        %v1741 = vpop.f32.mrb[0].mxu0
        %1742 = vmatprep.mubr.bf16.mxu0 0
        %1743 = vmatmul.mubr.bf16.gmra.mrb[0].mxu0 %v1628
        %v1744 = vpop.f32.mrb[0].mxu0
        %v1745 = vadd.f32 %v1458, %v1744
        %v1746 = vpop.f32.mrb[0].mxu0
        %v1747 = vpop.f32.mrb[0].mxu0
        %v1748 = vadd.f32 %v1459, %v1747
        %v1749 = vpop.f32.mrb[0].mxu0
        %1750 = vdwg.mxu0
        %v1752 = vsel %vm1460, %v1242, 0
        %v1755 = vsel %vm1460, %v1244, 0
        %v1758 = vsel %vm1460, %v1246, 0
        %v1761 = vsel %vm1460, %v1248, 0
        %v1764 = vsel %vm1460, %v1250, 0
        %v1767 = vsel %vm1460, %v1252, 0
        %v1770 = vsel %vm1460, %v1254, 0
        %v1773 = vsel %vm1460, %v1256, 0
        %v1776 = vsel %vm1460, %v1298, 0
        %v1779 = vsel %vm1460, %v1300, 0
        %v1782 = vsel %vm1460, %v1302, 0
        %v1785 = vsel %vm1460, %v1304, 0
        %v1788 = vsel %vm1460, %v1306, 0
        %v1791 = vsel %vm1460, %v1308, 0
        %v1794 = vsel %vm1460, %v1310, 0
        %v1797 = vsel %vm1460, %v1312, 0
        %1799 = vmatprep.subr.bf16.mxu0 0
        %1800 = vmatpush1.bf16.xpose.msra.mxu0 %v1776
        %1801 = vmatprep.subr.bf16.mxu0 0
        %1802 = vmatpush1.bf16.xpose.msra.mxu0 %v1779
        %1803 = vmatprep.subr.bf16.mxu0 0
        %1804 = vmatpush1.bf16.xpose.msra.mxu0 %v1782
        %1805 = vmatprep.subr.bf16.mxu0 0
        %1806 = vmatpush1.bf16.xpose.msra.mxu0 %v1785
        %1807 = vmatprep.subr.bf16.mxu0 0
        %1808 = vmatpush1.bf16.xpose.msra.mxu0 %v1788
        %1809 = vmatprep.subr.bf16.mxu0 0
        %1810 = vmatpush1.bf16.xpose.msra.mxu0 %v1791
        %1811 = vmatprep.subr.bf16.mxu0 0
        %1812 = vmatpush1.bf16.xpose.msra.mxu0 %v1794
        %1813 = vmatprep.subr.bf16.mxu0 0
        %1814 = vmatpush1.bf16.xpose.msra.mxu0 %v1797
        %1815 = vmatprep.subr.bf16.mxu0 0
        %1816 = vmatpush1.bf16.xpose.msra.mxu0 0
        %1817 = vmatprep.subr.bf16.mxu0 0
        %1818 = vmatpush1.bf16.xpose.msra.mxu0 0
        %1819 = vmatprep.subr.bf16.mxu0 0
        %1820 = vmatpush1.bf16.xpose.msra.mxu0 0
        %1821 = vmatprep.subr.bf16.mxu0 0
        %1822 = vmatpush1.bf16.xpose.msra.mxu0 0
        %1823 = vmatprep.subr.bf16.mxu0 0
        %1824 = vmatpush1.bf16.xpose.msra.mxu0 0
        %1825 = vmatprep.subr.bf16.mxu0 0
        %1826 = vmatpush1.bf16.xpose.msra.mxu0 0
        %1827 = vmatprep.subr.bf16.mxu0 0
        %1828 = vmatpush1.bf16.xpose.msra.mxu0 0
        %1829 = vmatprep.subr.bf16.mxu0 0
        %1830 = vmatpush1.bf16.xpose.msra.mxu0 0
        %1831 = vmatprep.mubr.bf16.mxu0 0
        %1832 = vmatmul.mubr.bf16.gmra.mrb[0].mxu0 %v1752
        %v1833 = vpop.f32.mrb[0].mxu0
        %v1834 = vadd.f32 %v1444, %v1833
        %v1835 = vpop.f32.mrb[0].mxu0
        %v1836 = vpop.f32.mrb[0].mxu0
        %v1837 = vadd.f32 %v1445, %v1836
        %v1838 = vpop.f32.mrb[0].mxu0
        %1839 = vmatprep.mubr.bf16.mxu0 0
        %1840 = vmatmul.mubr.bf16.gmra.mrb[0].mxu0 %v1755
        %v1841 = vpop.f32.mrb[0].mxu0
        %v1842 = vadd.f32 %v1446, %v1841
        %v1843 = vpop.f32.mrb[0].mxu0
        %v1844 = vpop.f32.mrb[0].mxu0
        %v1845 = vadd.f32 %v1447, %v1844
        %v1846 = vpop.f32.mrb[0].mxu0
        %1847 = vmatprep.mubr.bf16.mxu0 0
        %1848 = vmatmul.mubr.bf16.gmra.mrb[0].mxu0 %v1758
        %v1849 = vpop.f32.mrb[0].mxu0
        %v1850 = vadd.f32 %v1448, %v1849
        %v1851 = vpop.f32.mrb[0].mxu0
        %v1852 = vpop.f32.mrb[0].mxu0
        %v1853 = vadd.f32 %v1449, %v1852
        %v1854 = vpop.f32.mrb[0].mxu0
        %1855 = vmatprep.mubr.bf16.mxu0 0
        %1856 = vmatmul.mubr.bf16.gmra.mrb[0].mxu0 %v1761
        %v1857 = vpop.f32.mrb[0].mxu0
        %v1858 = vadd.f32 %v1450, %v1857
        %v1859 = vpop.f32.mrb[0].mxu0
        %v1860 = vpop.f32.mrb[0].mxu0
        %v1861 = vadd.f32 %v1451, %v1860
        %v1862 = vpop.f32.mrb[0].mxu0
        %1863 = vmatprep.mubr.bf16.mxu0 0
        %1864 = vmatmul.mubr.bf16.gmra.mrb[0].mxu0 %v1764
        %v1865 = vpop.f32.mrb[0].mxu0
        %v1866 = vadd.f32 %v1452, %v1865
        %v1867 = vpop.f32.mrb[0].mxu0
        %v1868 = vpop.f32.mrb[0].mxu0
        %v1869 = vadd.f32 %v1453, %v1868
        %v1870 = vpop.f32.mrb[0].mxu0
        %1871 = vmatprep.mubr.bf16.mxu0 0
        %1872 = vmatmul.mubr.bf16.gmra.mrb[0].mxu0 %v1767
        %v1873 = vpop.f32.mrb[0].mxu0
        %v1874 = vadd.f32 %v1454, %v1873
        %v1875 = vpop.f32.mrb[0].mxu0
        %v1876 = vpop.f32.mrb[0].mxu0
        %v1877 = vadd.f32 %v1455, %v1876
        %v1878 = vpop.f32.mrb[0].mxu0
        %1879 = vmatprep.mubr.bf16.mxu0 0
        %1880 = vmatmul.mubr.bf16.gmra.mrb[0].mxu0 %v1770
        %v1881 = vpop.f32.mrb[0].mxu0
        %v1882 = vadd.f32 %v1456, %v1881
        %v1883 = vpop.f32.mrb[0].mxu0
        %v1884 = vpop.f32.mrb[0].mxu0
        %v1885 = vadd.f32 %v1457, %v1884
        %v1886 = vpop.f32.mrb[0].mxu0
        %1887 = vmatprep.mubr.bf16.mxu0 0
        %1888 = vmatmul.mubr.bf16.gmra.mrb[0].mxu0 %v1773
        %v1889 = vpop.f32.mrb[0].mxu0
        %v1890 = vadd.f32 %v1458, %v1889
        %v1891 = vpop.f32.mrb[0].mxu0
        %v1892 = vpop.f32.mrb[0].mxu0
        %v1893 = vadd.f32 %v1459, %v1892
        %v1894 = vpop.f32.mrb[0].mxu0
        %1895 = vdwg.mxu0
        %v1897 = vsel %vm1460, %v1258, 0
        %v1900 = vsel %vm1460, %v1260, 0
        %v1903 = vsel %vm1460, %v1262, 0
        %v1906 = vsel %vm1460, %v1264, 0
        %v1909 = vsel %vm1460, %v1266, 0
        %v1912 = vsel %vm1460, %v1268, 0
        %v1915 = vsel %vm1460, %v1270, 0
        %v1918 = vsel %vm1460, %v1272, 0
        %v1921 = vsel %vm1460, %v1314, 0
        %v1924 = vsel %vm1460, %v1316, 0
        %v1927 = vsel %vm1460, %v1318, 0
        %v1930 = vsel %vm1460, %v1320, 0
        %v1933 = vsel %vm1460, %v1322, 0
        %v1936 = vsel %vm1460, %v1324, 0
        %v1939 = vsel %vm1460, %v1326, 0
        %v1942 = vsel %vm1460, %v1328, 0
        %1944 = vmatprep.subr.bf16.mxu0 0
        %1945 = vmatpush1.bf16.xpose.msra.mxu0 %v1921
        %1946 = vmatprep.subr.bf16.mxu0 0
        %1947 = vmatpush1.bf16.xpose.msra.mxu0 %v1924
        %1948 = vmatprep.subr.bf16.mxu0 0
        %1949 = vmatpush1.bf16.xpose.msra.mxu0 %v1927
        %1950 = vmatprep.subr.bf16.mxu0 0
        %1951 = vmatpush1.bf16.xpose.msra.mxu0 %v1930
        %1952 = vmatprep.subr.bf16.mxu0 0
        %1953 = vmatpush1.bf16.xpose.msra.mxu0 %v1933
        %1954 = vmatprep.subr.bf16.mxu0 0
        %1955 = vmatpush1.bf16.xpose.msra.mxu0 %v1936
        %1956 = vmatprep.subr.bf16.mxu0 0
        %1957 = vmatpush1.bf16.xpose.msra.mxu0 %v1939
        %1958 = vmatprep.subr.bf16.mxu0 0
        %1959 = vmatpush1.bf16.xpose.msra.mxu0 %v1942
        %1960 = vmatprep.subr.bf16.mxu0 0
        %1961 = vmatpush1.bf16.xpose.msra.mxu0 0
        %1962 = vmatprep.subr.bf16.mxu0 0
        %1963 = vmatpush1.bf16.xpose.msra.mxu0 0
        %1964 = vmatprep.subr.bf16.mxu0 0
        %1965 = vmatpush1.bf16.xpose.msra.mxu0 0
        %1966 = vmatprep.subr.bf16.mxu0 0
        %1967 = vmatpush1.bf16.xpose.msra.mxu0 0
        %1968 = vmatprep.subr.bf16.mxu0 0
        %1969 = vmatpush1.bf16.xpose.msra.mxu0 0
        %1970 = vmatprep.subr.bf16.mxu0 0
        %1971 = vmatpush1.bf16.xpose.msra.mxu0 0
        %1972 = vmatprep.subr.bf16.mxu0 0
        %1973 = vmatpush1.bf16.xpose.msra.mxu0 0
        %1974 = vmatprep.subr.bf16.mxu0 0
        %1975 = vmatpush1.bf16.xpose.msra.mxu0 0
        %1976 = vmatprep.mubr.bf16.mxu0 0
        %1977 = vmatmul.mubr.bf16.gmra.mrb[0].mxu0 %v1897
        %v1978 = vpop.f32.mrb[0].mxu0
        %v1979 = vadd.f32 %v1444, %v1978
        %v1980 = vpop.f32.mrb[0].mxu0
        %v1981 = vpop.f32.mrb[0].mxu0
        %v1982 = vadd.f32 %v1445, %v1981
        %v1983 = vpop.f32.mrb[0].mxu0
        %1984 = vmatprep.mubr.bf16.mxu0 0
        %1985 = vmatmul.mubr.bf16.gmra.mrb[0].mxu0 %v1900
        %v1986 = vpop.f32.mrb[0].mxu0
        %v1987 = vadd.f32 %v1446, %v1986
        %v1988 = vpop.f32.mrb[0].mxu0
        %v1989 = vpop.f32.mrb[0].mxu0
        %v1990 = vadd.f32 %v1447, %v1989
        %v1991 = vpop.f32.mrb[0].mxu0
        %1992 = vmatprep.mubr.bf16.mxu0 0
        %1993 = vmatmul.mubr.bf16.gmra.mrb[0].mxu0 %v1903
        %v1994 = vpop.f32.mrb[0].mxu0
        %v1995 = vadd.f32 %v1448, %v1994
        %v1996 = vpop.f32.mrb[0].mxu0
        %v1997 = vpop.f32.mrb[0].mxu0
        %v1998 = vadd.f32 %v1449, %v1997
        %v1999 = vpop.f32.mrb[0].mxu0
        %2000 = vmatprep.mubr.bf16.mxu0 0
        %2001 = vmatmul.mubr.bf16.gmra.mrb[0].mxu0 %v1906
        %v2002 = vpop.f32.mrb[0].mxu0
        %v2003 = vadd.f32 %v1450, %v2002
        %v2004 = vpop.f32.mrb[0].mxu0
        %v2005 = vpop.f32.mrb[0].mxu0
        %v2006 = vadd.f32 %v1451, %v2005
        %v2007 = vpop.f32.mrb[0].mxu0
        %2008 = vmatprep.mubr.bf16.mxu0 0
        %2009 = vmatmul.mubr.bf16.gmra.mrb[0].mxu0 %v1909
        %v2010 = vpop.f32.mrb[0].mxu0
        %v2011 = vadd.f32 %v1452, %v2010
        %v2012 = vpop.f32.mrb[0].mxu0
        %v2013 = vpop.f32.mrb[0].mxu0
        %v2014 = vadd.f32 %v1453, %v2013
        %v2015 = vpop.f32.mrb[0].mxu0
        %2016 = vmatprep.mubr.bf16.mxu0 0
        %2017 = vmatmul.mubr.bf16.gmra.mrb[0].mxu0 %v1912
        %v2018 = vpop.f32.mrb[0].mxu0
        %v2019 = vadd.f32 %v1454, %v2018
        %v2020 = vpop.f32.mrb[0].mxu0
        %v2021 = vpop.f32.mrb[0].mxu0
        %v2022 = vadd.f32 %v1455, %v2021
        %v2023 = vpop.f32.mrb[0].mxu0
        %2024 = vmatprep.mubr.bf16.mxu0 0
        %2025 = vmatmul.mubr.bf16.gmra.mrb[0].mxu0 %v1915
        %v2026 = vpop.f32.mrb[0].mxu0
        %v2027 = vadd.f32 %v1456, %v2026
        %v2028 = vpop.f32.mrb[0].mxu0
        %v2029 = vpop.f32.mrb[0].mxu0
        %v2030 = vadd.f32 %v1457, %v2029
        %v2031 = vpop.f32.mrb[0].mxu0
        %2032 = vmatprep.mubr.bf16.mxu0 0
        %2033 = vmatmul.mubr.bf16.gmra.mrb[0].mxu0 %v1918
        %v2034 = vpop.f32.mrb[0].mxu0
        %v2035 = vadd.f32 %v1458, %v2034
        %v2036 = vpop.f32.mrb[0].mxu0
        %v2037 = vpop.f32.mrb[0].mxu0
        %v2038 = vadd.f32 %v1459, %v2037
        %v2039 = vpop.f32.mrb[0].mxu0
        %2040 = vdwg.mxu0
        %2041 = vmax.xlane.f32.xlu0 %v1544
        %v2042 = vpop.xlane.xlu0 %2041
        %2043 = vmax.xlane.f32.xlu0 %v1547
        %v2044 = vpop.xlane.xlu0 %2043
        %2045 = vmax.xlane.f32.xlu0 %v1552
        %v2046 = vpop.xlane.xlu0 %2045
        %2047 = vmax.xlane.f32.xlu0 %v1555
        %v2048 = vpop.xlane.xlu0 %2047
        %2049 = vmax.xlane.f32.xlu0 %v1560
        %v2050 = vpop.xlane.xlu0 %2049
        %2051 = vmax.xlane.f32.xlu0 %v1563
        %v2052 = vpop.xlane.xlu0 %2051
        %2053 = vmax.xlane.f32.xlu0 %v1568
        %v2054 = vpop.xlane.xlu0 %2053
        %2055 = vmax.xlane.f32.xlu0 %v1571
        %v2056 = vpop.xlane.xlu0 %2055
        %2057 = vmax.xlane.f32.xlu0 %v1576
        %v2058 = vpop.xlane.xlu0 %2057
        %2059 = vmax.xlane.f32.xlu0 %v1579
        %v2060 = vpop.xlane.xlu0 %2059
        %2061 = vmax.xlane.f32.xlu0 %v1584
        %v2062 = vpop.xlane.xlu0 %2061
        %2063 = vmax.xlane.f32.xlu0 %v1587
        %v2064 = vpop.xlane.xlu0 %2063
        %2065 = vmax.xlane.f32.xlu0 %v1592
        %v2066 = vpop.xlane.xlu0 %2065
        %2067 = vmax.xlane.f32.xlu0 %v1595
        %v2068 = vpop.xlane.xlu0 %2067
        %2069 = vmax.xlane.f32.xlu0 %v1600
        %v2070 = vpop.xlane.xlu0 %2069
        %2071 = vmax.xlane.f32.xlu0 %v1603
        %v2072 = vpop.xlane.xlu0 %2071
        %2073 = vmax.xlane.f32.xlu0 %v1689
        %v2074 = vpop.xlane.xlu0 %2073
        %2075 = vmax.xlane.f32.xlu0 %v1692
        %v2076 = vpop.xlane.xlu0 %2075
        %2077 = vmax.xlane.f32.xlu0 %v1697
        %v2078 = vpop.xlane.xlu0 %2077
        %2079 = vmax.xlane.f32.xlu0 %v1700
        %v2080 = vpop.xlane.xlu0 %2079
        %2081 = vmax.xlane.f32.xlu0 %v1705
        %v2082 = vpop.xlane.xlu0 %2081
        %2083 = vmax.xlane.f32.xlu0 %v1708
        %v2084 = vpop.xlane.xlu0 %2083
        %2085 = vmax.xlane.f32.xlu0 %v1713
        %v2086 = vpop.xlane.xlu0 %2085
        %2087 = vmax.xlane.f32.xlu0 %v1716
        %v2088 = vpop.xlane.xlu0 %2087
        %2089 = vmax.xlane.f32.xlu0 %v1721
        %v2090 = vpop.xlane.xlu0 %2089
        %2091 = vmax.xlane.f32.xlu0 %v1724
        %v2092 = vpop.xlane.xlu0 %2091
        %2093 = vmax.xlane.f32.xlu0 %v1729
        %v2094 = vpop.xlane.xlu0 %2093
        %2095 = vmax.xlane.f32.xlu0 %v1732
        %v2096 = vpop.xlane.xlu0 %2095
        %2097 = vmax.xlane.f32.xlu0 %v1737
        %v2098 = vpop.xlane.xlu0 %2097
        %2099 = vmax.xlane.f32.xlu0 %v1740
        %v2100 = vpop.xlane.xlu0 %2099
        %2101 = vmax.xlane.f32.xlu0 %v1745
        %v2102 = vpop.xlane.xlu0 %2101
        %2103 = vmax.xlane.f32.xlu0 %v1748
        %v2104 = vpop.xlane.xlu0 %2103
        %2105 = vmax.xlane.f32.xlu0 %v1834
        %v2106 = vpop.xlane.xlu0 %2105
        %2107 = vmax.xlane.f32.xlu0 %v1837
        %v2108 = vpop.xlane.xlu0 %2107
        %2109 = vmax.xlane.f32.xlu0 %v1842
        %v2110 = vpop.xlane.xlu0 %2109
        %2111 = vmax.xlane.f32.xlu0 %v1845
        %v2112 = vpop.xlane.xlu0 %2111
        %2113 = vmax.xlane.f32.xlu0 %v1850
        %v2114 = vpop.xlane.xlu0 %2113
        %2115 = vmax.xlane.f32.xlu0 %v1853
        %v2116 = vpop.xlane.xlu0 %2115
        %2117 = vmax.xlane.f32.xlu0 %v1858
        %v2118 = vpop.xlane.xlu0 %2117
        %2119 = vmax.xlane.f32.xlu0 %v1861
        %v2120 = vpop.xlane.xlu0 %2119
        %2121 = vmax.xlane.f32.xlu0 %v1866
        %v2122 = vpop.xlane.xlu0 %2121
        %2123 = vmax.xlane.f32.xlu0 %v1869
        %v2124 = vpop.xlane.xlu0 %2123
        %2125 = vmax.xlane.f32.xlu0 %v1874
        %v2126 = vpop.xlane.xlu0 %2125
        %2127 = vmax.xlane.f32.xlu0 %v1877
        %v2128 = vpop.xlane.xlu0 %2127
        %2129 = vmax.xlane.f32.xlu0 %v1882
        %v2130 = vpop.xlane.xlu0 %2129
        %2131 = vmax.xlane.f32.xlu0 %v1885
        %v2132 = vpop.xlane.xlu0 %2131
        %2133 = vmax.xlane.f32.xlu0 %v1890
        %v2134 = vpop.xlane.xlu0 %2133
        %2135 = vmax.xlane.f32.xlu0 %v1893
        %v2136 = vpop.xlane.xlu0 %2135
        %2137 = vmax.xlane.f32.xlu0 %v1979
        %v2138 = vpop.xlane.xlu0 %2137
        %2139 = vmax.xlane.f32.xlu0 %v1982
        %v2140 = vpop.xlane.xlu0 %2139
        %2141 = vmax.xlane.f32.xlu0 %v1987
        %v2142 = vpop.xlane.xlu0 %2141
        %2143 = vmax.xlane.f32.xlu0 %v1990
        %v2144 = vpop.xlane.xlu0 %2143
        %2145 = vmax.xlane.f32.xlu0 %v1995
        %v2146 = vpop.xlane.xlu0 %2145
        %2147 = vmax.xlane.f32.xlu0 %v1998
        %v2148 = vpop.xlane.xlu0 %2147
        %2149 = vmax.xlane.f32.xlu0 %v2003
        %v2150 = vpop.xlane.xlu0 %2149
        %2151 = vmax.xlane.f32.xlu0 %v2006
        %v2152 = vpop.xlane.xlu0 %2151
        %2153 = vmax.xlane.f32.xlu0 %v2011
        %v2154 = vpop.xlane.xlu0 %2153
        %2155 = vmax.xlane.f32.xlu0 %v2014
        %v2156 = vpop.xlane.xlu0 %2155
        %2157 = vmax.xlane.f32.xlu0 %v2019
        %v2158 = vpop.xlane.xlu0 %2157
        %2159 = vmax.xlane.f32.xlu0 %v2022
        %v2160 = vpop.xlane.xlu0 %2159
        %2161 = vmax.xlane.f32.xlu0 %v2027
        %v2162 = vpop.xlane.xlu0 %2161
        %2163 = vmax.xlane.f32.xlu0 %v2030
        %v2164 = vpop.xlane.xlu0 %2163
        %2165 = vmax.xlane.f32.xlu0 %v2035
        %v2166 = vpop.xlane.xlu0 %2165
        %2167 = vmax.xlane.f32.xlu0 %v2038
        %v2168 = vpop.xlane.xlu0 %2167
        %v2169 = vsub.f32 %v1544, %v2042
        %v2170 = vsub.f32 %v1547, %v2044
        %v2171 = vsub.f32 %v1552, %v2046
        %v2172 = vsub.f32 %v1555, %v2048
        %v2173 = vsub.f32 %v1560, %v2050
        %v2174 = vsub.f32 %v1563, %v2052
        %v2175 = vsub.f32 %v1568, %v2054
        %v2176 = vsub.f32 %v1571, %v2056
        %v2177 = vsub.f32 %v1576, %v2058
        %v2178 = vsub.f32 %v1579, %v2060
        %v2179 = vsub.f32 %v1584, %v2062
        %v2180 = vsub.f32 %v1587, %v2064
        %v2181 = vsub.f32 %v1592, %v2066
        %v2182 = vsub.f32 %v1595, %v2068
        %v2183 = vsub.f32 %v1600, %v2070
        %v2184 = vsub.f32 %v1603, %v2072
        %v2185 = vsub.f32 %v1689, %v2074
        %v2186 = vsub.f32 %v1692, %v2076
        %v2187 = vsub.f32 %v1697, %v2078
        %v2188 = vsub.f32 %v1700, %v2080
        %v2189 = vsub.f32 %v1705, %v2082
        %v2190 = vsub.f32 %v1708, %v2084
        %v2191 = vsub.f32 %v1713, %v2086
        %v2192 = vsub.f32 %v1716, %v2088
        %v2193 = vsub.f32 %v1721, %v2090
        %v2194 = vsub.f32 %v1724, %v2092
        %v2195 = vsub.f32 %v1729, %v2094
        %v2196 = vsub.f32 %v1732, %v2096
        %v2197 = vsub.f32 %v1737, %v2098
        %v2198 = vsub.f32 %v1740, %v2100
        %v2199 = vsub.f32 %v1745, %v2102
        %v2200 = vsub.f32 %v1748, %v2104
        %v2201 = vsub.f32 %v1834, %v2106
        %v2202 = vsub.f32 %v1837, %v2108
        %v2203 = vsub.f32 %v1842, %v2110
        %v2204 = vsub.f32 %v1845, %v2112
        %v2205 = vsub.f32 %v1850, %v2114
        %v2206 = vsub.f32 %v1853, %v2116
        %v2207 = vsub.f32 %v1858, %v2118
        %v2208 = vsub.f32 %v1861, %v2120
        %v2209 = vsub.f32 %v1866, %v2122
        %v2210 = vsub.f32 %v1869, %v2124
        %v2211 = vsub.f32 %v1874, %v2126
        %v2212 = vsub.f32 %v1877, %v2128
        %v2213 = vsub.f32 %v1882, %v2130
        %v2214 = vsub.f32 %v1885, %v2132
        %v2215 = vsub.f32 %v1890, %v2134
        %v2216 = vsub.f32 %v1893, %v2136
        %v2217 = vsub.f32 %v1979, %v2138
        %v2218 = vsub.f32 %v1982, %v2140
        %v2219 = vsub.f32 %v1987, %v2142
        %v2220 = vsub.f32 %v1990, %v2144
        %v2221 = vsub.f32 %v1995, %v2146
        %v2222 = vsub.f32 %v1998, %v2148
        %v2223 = vsub.f32 %v2003, %v2150
        %v2224 = vsub.f32 %v2006, %v2152
        %v2225 = vsub.f32 %v2011, %v2154
        %v2226 = vsub.f32 %v2014, %v2156
        %v2227 = vsub.f32 %v2019, %v2158
        %v2228 = vsub.f32 %v2022, %v2160
        %v2229 = vsub.f32 %v2027, %v2162
        %v2230 = vsub.f32 %v2030, %v2164
        %v2231 = vsub.f32 %v2035, %v2166
        %v2232 = vsub.f32 %v2038, %v2168
        %v2233 = vmul.f32 %v2169, 1.442695
        %v2234 = vpow.pop %v2233
        %v2235 = vmul.f32 %v2170, 1.442695
        %v2236 = vpow.pop %v2235
        %v2237 = vmul.f32 %v2171, 1.442695
        %v2238 = vpow.pop %v2237
        %v2239 = vmul.f32 %v2172, 1.442695
        %v2240 = vpow.pop %v2239
        %v2241 = vmul.f32 %v2173, 1.442695
        %v2242 = vpow.pop %v2241
        %v2243 = vmul.f32 %v2174, 1.442695
        %v2244 = vpow.pop %v2243
        %v2245 = vmul.f32 %v2175, 1.442695
        %v2246 = vpow.pop %v2245
        %v2247 = vmul.f32 %v2176, 1.442695
        %v2248 = vpow.pop %v2247
        %v2249 = vmul.f32 %v2177, 1.442695
        %v2250 = vpow.pop %v2249
        %v2251 = vmul.f32 %v2178, 1.442695
        %v2252 = vpow.pop %v2251
        %v2253 = vmul.f32 %v2179, 1.442695
        %v2254 = vpow.pop %v2253
        %v2255 = vmul.f32 %v2180, 1.442695
        %v2256 = vpow.pop %v2255
        %v2257 = vmul.f32 %v2181, 1.442695
        %v2258 = vpow.pop %v2257
        %v2259 = vmul.f32 %v2182, 1.442695
        %v2260 = vpow.pop %v2259
        %v2261 = vmul.f32 %v2183, 1.442695
        %v2262 = vpow.pop %v2261
        %v2263 = vmul.f32 %v2184, 1.442695
        %v2264 = vpow.pop %v2263
        %v2265 = vmul.f32 %v2185, 1.442695
        %v2266 = vpow.pop %v2265
        %v2267 = vmul.f32 %v2186, 1.442695
        %v2268 = vpow.pop %v2267
        %v2269 = vmul.f32 %v2187, 1.442695
        %v2270 = vpow.pop %v2269
        %v2271 = vmul.f32 %v2188, 1.442695
        %v2272 = vpow.pop %v2271
        %v2273 = vmul.f32 %v2189, 1.442695
        %v2274 = vpow.pop %v2273
        %v2275 = vmul.f32 %v2190, 1.442695
        %v2276 = vpow.pop %v2275
        %v2277 = vmul.f32 %v2191, 1.442695
        %v2278 = vpow.pop %v2277
        %v2279 = vmul.f32 %v2192, 1.442695
        %v2280 = vpow.pop %v2279
        %v2281 = vmul.f32 %v2193, 1.442695
        %v2282 = vpow.pop %v2281
        %v2283 = vmul.f32 %v2194, 1.442695
        %v2284 = vpow.pop %v2283
        %v2285 = vmul.f32 %v2195, 1.442695
        %v2286 = vpow.pop %v2285
        %v2287 = vmul.f32 %v2196, 1.442695
        %v2288 = vpow.pop %v2287
        %v2289 = vmul.f32 %v2197, 1.442695
        %v2290 = vpow.pop %v2289
        %v2291 = vmul.f32 %v2198, 1.442695
        %v2292 = vpow.pop %v2291
        %v2293 = vmul.f32 %v2199, 1.442695
        %v2294 = vpow.pop %v2293
        %v2295 = vmul.f32 %v2200, 1.442695
        %v2296 = vpow.pop %v2295
        %v2297 = vmul.f32 %v2201, 1.442695
        %v2298 = vpow.pop %v2297
        %v2299 = vmul.f32 %v2202, 1.442695
        %v2300 = vpow.pop %v2299
        %v2301 = vmul.f32 %v2203, 1.442695
        %v2302 = vpow.pop %v2301
        %v2303 = vmul.f32 %v2204, 1.442695
        %v2304 = vpow.pop %v2303
        %v2305 = vmul.f32 %v2205, 1.442695
        %v2306 = vpow.pop %v2305
        %v2307 = vmul.f32 %v2206, 1.442695
        %v2308 = vpow.pop %v2307
        %v2309 = vmul.f32 %v2207, 1.442695
        %v2310 = vpow.pop %v2309
        %v2311 = vmul.f32 %v2208, 1.442695
        %v2312 = vpow.pop %v2311
        %v2313 = vmul.f32 %v2209, 1.442695
        %v2314 = vpow.pop %v2313
        %v2315 = vmul.f32 %v2210, 1.442695
        %v2316 = vpow.pop %v2315
        %v2317 = vmul.f32 %v2211, 1.442695
        %v2318 = vpow.pop %v2317
        %v2319 = vmul.f32 %v2212, 1.442695
        %v2320 = vpow.pop %v2319
        %v2321 = vmul.f32 %v2213, 1.442695
        %v2322 = vpow.pop %v2321
        %v2323 = vmul.f32 %v2214, 1.442695
        %v2324 = vpow.pop %v2323
        %v2325 = vmul.f32 %v2215, 1.442695
        %v2326 = vpow.pop %v2325
        %v2327 = vmul.f32 %v2216, 1.442695
        %v2328 = vpow.pop %v2327
        %v2329 = vmul.f32 %v2217, 1.442695
        %v2330 = vpow.pop %v2329
        %v2331 = vmul.f32 %v2218, 1.442695
        %v2332 = vpow.pop %v2331
        %v2333 = vmul.f32 %v2219, 1.442695
        %v2334 = vpow.pop %v2333
        %v2335 = vmul.f32 %v2220, 1.442695
        %v2336 = vpow.pop %v2335
        %v2337 = vmul.f32 %v2221, 1.442695
        %v2338 = vpow.pop %v2337
        %v2339 = vmul.f32 %v2222, 1.442695
        %v2340 = vpow.pop %v2339
        %v2341 = vmul.f32 %v2223, 1.442695
        %v2342 = vpow.pop %v2341
        %v2343 = vmul.f32 %v2224, 1.442695
        %v2344 = vpow.pop %v2343
        %v2345 = vmul.f32 %v2225, 1.442695
        %v2346 = vpow.pop %v2345
        %v2347 = vmul.f32 %v2226, 1.442695
        %v2348 = vpow.pop %v2347
        %v2349 = vmul.f32 %v2227, 1.442695
        %v2350 = vpow.pop %v2349
        %v2351 = vmul.f32 %v2228, 1.442695
        %v2352 = vpow.pop %v2351
        %v2353 = vmul.f32 %v2229, 1.442695
        %v2354 = vpow.pop %v2353
        %v2355 = vmul.f32 %v2230, 1.442695
        %v2356 = vpow.pop %v2355
        %v2357 = vmul.f32 %v2231, 1.442695
        %v2358 = vpow.pop %v2357
        %v2359 = vmul.f32 %v2232, 1.442695
        %v2360 = vpow.pop %v2359
        %2361 = vadd.xlane.f32.xlu0 %v2234
        %v2362 = vpop.xlane.xlu0 %2361
        %2363 = vadd.xlane.f32.xlu0 %v2236
        %v2364 = vpop.xlane.xlu0 %2363
        %2365 = vadd.xlane.f32.xlu0 %v2238
        %v2366 = vpop.xlane.xlu0 %2365
        %2367 = vadd.xlane.f32.xlu0 %v2240
        %v2368 = vpop.xlane.xlu0 %2367
        %2369 = vadd.xlane.f32.xlu0 %v2242
        %v2370 = vpop.xlane.xlu0 %2369
        %2371 = vadd.xlane.f32.xlu0 %v2244
        %v2372 = vpop.xlane.xlu0 %2371
        %2373 = vadd.xlane.f32.xlu0 %v2246
        %v2374 = vpop.xlane.xlu0 %2373
        %2375 = vadd.xlane.f32.xlu0 %v2248
        %v2376 = vpop.xlane.xlu0 %2375
        %2377 = vadd.xlane.f32.xlu0 %v2250
        %v2378 = vpop.xlane.xlu0 %2377
        %2379 = vadd.xlane.f32.xlu0 %v2252
        %v2380 = vpop.xlane.xlu0 %2379
        %2381 = vadd.xlane.f32.xlu0 %v2254
        %v2382 = vpop.xlane.xlu0 %2381
        %2383 = vadd.xlane.f32.xlu0 %v2256
        %v2384 = vpop.xlane.xlu0 %2383
        %2385 = vadd.xlane.f32.xlu0 %v2258
        %v2386 = vpop.xlane.xlu0 %2385
        %2387 = vadd.xlane.f32.xlu0 %v2260
        %v2388 = vpop.xlane.xlu0 %2387
        %2389 = vadd.xlane.f32.xlu0 %v2262
        %v2390 = vpop.xlane.xlu0 %2389
        %2391 = vadd.xlane.f32.xlu0 %v2264
        %v2392 = vpop.xlane.xlu0 %2391
        %2393 = vadd.xlane.f32.xlu0 %v2266
        %v2394 = vpop.xlane.xlu0 %2393
        %2395 = vadd.xlane.f32.xlu0 %v2268
        %v2396 = vpop.xlane.xlu0 %2395
        %2397 = vadd.xlane.f32.xlu0 %v2270
        %v2398 = vpop.xlane.xlu0 %2397
        %2399 = vadd.xlane.f32.xlu0 %v2272
        %v2400 = vpop.xlane.xlu0 %2399
        %2401 = vadd.xlane.f32.xlu0 %v2274
        %v2402 = vpop.xlane.xlu0 %2401
        %2403 = vadd.xlane.f32.xlu0 %v2276
        %v2404 = vpop.xlane.xlu0 %2403
        %2405 = vadd.xlane.f32.xlu0 %v2278
        %v2406 = vpop.xlane.xlu0 %2405
        %2407 = vadd.xlane.f32.xlu0 %v2280
        %v2408 = vpop.xlane.xlu0 %2407
        %2409 = vadd.xlane.f32.xlu0 %v2282
        %v2410 = vpop.xlane.xlu0 %2409
        %2411 = vadd.xlane.f32.xlu0 %v2284
        %v2412 = vpop.xlane.xlu0 %2411
        %2413 = vadd.xlane.f32.xlu0 %v2286
        %v2414 = vpop.xlane.xlu0 %2413
        %2415 = vadd.xlane.f32.xlu0 %v2288
        %v2416 = vpop.xlane.xlu0 %2415
        %2417 = vadd.xlane.f32.xlu0 %v2290
        %v2418 = vpop.xlane.xlu0 %2417
        %2419 = vadd.xlane.f32.xlu0 %v2292
        %v2420 = vpop.xlane.xlu0 %2419
        %2421 = vadd.xlane.f32.xlu0 %v2294
        %v2422 = vpop.xlane.xlu0 %2421
        %2423 = vadd.xlane.f32.xlu0 %v2296
        %v2424 = vpop.xlane.xlu0 %2423
        %2425 = vadd.xlane.f32.xlu0 %v2298
        %v2426 = vpop.xlane.xlu0 %2425
        %2427 = vadd.xlane.f32.xlu0 %v2300
        %v2428 = vpop.xlane.xlu0 %2427
        %2429 = vadd.xlane.f32.xlu0 %v2302
        %v2430 = vpop.xlane.xlu0 %2429
        %2431 = vadd.xlane.f32.xlu0 %v2304
        %v2432 = vpop.xlane.xlu0 %2431
        %2433 = vadd.xlane.f32.xlu0 %v2306
        %v2434 = vpop.xlane.xlu0 %2433
        %2435 = vadd.xlane.f32.xlu0 %v2308
        %v2436 = vpop.xlane.xlu0 %2435
        %2437 = vadd.xlane.f32.xlu0 %v2310
        %v2438 = vpop.xlane.xlu0 %2437
        %2439 = vadd.xlane.f32.xlu0 %v2312
        %v2440 = vpop.xlane.xlu0 %2439
        %2441 = vadd.xlane.f32.xlu0 %v2314
        %v2442 = vpop.xlane.xlu0 %2441
        %2443 = vadd.xlane.f32.xlu0 %v2316
        %v2444 = vpop.xlane.xlu0 %2443
        %2445 = vadd.xlane.f32.xlu0 %v2318
        %v2446 = vpop.xlane.xlu0 %2445
        %2447 = vadd.xlane.f32.xlu0 %v2320
        %v2448 = vpop.xlane.xlu0 %2447
        %2449 = vadd.xlane.f32.xlu0 %v2322
        %v2450 = vpop.xlane.xlu0 %2449
        %2451 = vadd.xlane.f32.xlu0 %v2324
        %v2452 = vpop.xlane.xlu0 %2451
        %2453 = vadd.xlane.f32.xlu0 %v2326
        %v2454 = vpop.xlane.xlu0 %2453
        %2455 = vadd.xlane.f32.xlu0 %v2328
        %v2456 = vpop.xlane.xlu0 %2455
        %2457 = vadd.xlane.f32.xlu0 %v2330
        %v2458 = vpop.xlane.xlu0 %2457
        %2459 = vadd.xlane.f32.xlu0 %v2332
        %v2460 = vpop.xlane.xlu0 %2459
        %2461 = vadd.xlane.f32.xlu0 %v2334
        %v2462 = vpop.xlane.xlu0 %2461
        %2463 = vadd.xlane.f32.xlu0 %v2336
        %v2464 = vpop.xlane.xlu0 %2463
        %2465 = vadd.xlane.f32.xlu0 %v2338
        %v2466 = vpop.xlane.xlu0 %2465
        %2467 = vadd.xlane.f32.xlu0 %v2340
        %v2468 = vpop.xlane.xlu0 %2467
        %2469 = vadd.xlane.f32.xlu0 %v2342
        %v2470 = vpop.xlane.xlu0 %2469
        %2471 = vadd.xlane.f32.xlu0 %v2344
        %v2472 = vpop.xlane.xlu0 %2471
        %2473 = vadd.xlane.f32.xlu0 %v2346
        %v2474 = vpop.xlane.xlu0 %2473
        %2475 = vadd.xlane.f32.xlu0 %v2348
        %v2476 = vpop.xlane.xlu0 %2475
        %2477 = vadd.xlane.f32.xlu0 %v2350
        %v2478 = vpop.xlane.xlu0 %2477
        %2479 = vadd.xlane.f32.xlu0 %v2352
        %v2480 = vpop.xlane.xlu0 %2479
        %2481 = vadd.xlane.f32.xlu0 %v2354
        %v2482 = vpop.xlane.xlu0 %2481
        %2483 = vadd.xlane.f32.xlu0 %v2356
        %v2484 = vpop.xlane.xlu0 %2483
        %2485 = vadd.xlane.f32.xlu0 %v2358
        %v2486 = vpop.xlane.xlu0 %2485
        %2487 = vadd.xlane.f32.xlu0 %v2360
        %v2488 = vpop.xlane.xlu0 %2487
        %v2489 = vrcp.pop %v2362
        %v2490 = vrcp.pop %v2364
        %v2491 = vrcp.pop %v2366
        %v2492 = vrcp.pop %v2368
        %v2493 = vrcp.pop %v2370
        %v2494 = vrcp.pop %v2372
        %v2495 = vrcp.pop %v2374
        %v2496 = vrcp.pop %v2376
        %v2497 = vrcp.pop %v2378
        %v2498 = vrcp.pop %v2380
        %v2499 = vrcp.pop %v2382
        %v2500 = vrcp.pop %v2384
        %v2501 = vrcp.pop %v2386
        %v2502 = vrcp.pop %v2388
        %v2503 = vrcp.pop %v2390
        %v2504 = vrcp.pop %v2392
        %v2505 = vrcp.pop %v2394
        %v2506 = vrcp.pop %v2396
        %v2507 = vrcp.pop %v2398
        %v2508 = vrcp.pop %v2400
        %v2509 = vrcp.pop %v2402
        %v2510 = vrcp.pop %v2404
        %v2511 = vrcp.pop %v2406
        %v2512 = vrcp.pop %v2408
        %v2513 = vrcp.pop %v2410
        %v2514 = vrcp.pop %v2412
        %v2515 = vrcp.pop %v2414
        %v2516 = vrcp.pop %v2416
        %v2517 = vrcp.pop %v2418
        %v2518 = vrcp.pop %v2420
        %v2519 = vrcp.pop %v2422
        %v2520 = vrcp.pop %v2424
        %v2521 = vrcp.pop %v2426
        %v2522 = vrcp.pop %v2428
        %v2523 = vrcp.pop %v2430
        %v2524 = vrcp.pop %v2432
        %v2525 = vrcp.pop %v2434
        %v2526 = vrcp.pop %v2436
        %v2527 = vrcp.pop %v2438
        %v2528 = vrcp.pop %v2440
        %v2529 = vrcp.pop %v2442
        %v2530 = vrcp.pop %v2444
        %v2531 = vrcp.pop %v2446
        %v2532 = vrcp.pop %v2448
        %v2533 = vrcp.pop %v2450
        %v2534 = vrcp.pop %v2452
        %v2535 = vrcp.pop %v2454
        %v2536 = vrcp.pop %v2456
        %v2537 = vrcp.pop %v2458
        %v2538 = vrcp.pop %v2460
        %v2539 = vrcp.pop %v2462
        %v2540 = vrcp.pop %v2464
        %v2541 = vrcp.pop %v2466
        %v2542 = vrcp.pop %v2468
        %v2543 = vrcp.pop %v2470
        %v2544 = vrcp.pop %v2472
        %v2545 = vrcp.pop %v2474
        %v2546 = vrcp.pop %v2476
        %v2547 = vrcp.pop %v2478
        %v2548 = vrcp.pop %v2480
        %v2549 = vrcp.pop %v2482
        %v2550 = vrcp.pop %v2484
        %v2551 = vrcp.pop %v2486
        %v2552 = vrcp.pop %v2488
        %v2553 = vmul.f32 %v2234, %v2489
        %v2554 = vmul.f32 %v2236, %v2490
        %v2555 = vmul.f32 %v2238, %v2491
        %v2556 = vmul.f32 %v2240, %v2492
        %v2557 = vmul.f32 %v2242, %v2493
        %v2558 = vmul.f32 %v2244, %v2494
        %v2559 = vmul.f32 %v2246, %v2495
        %v2560 = vmul.f32 %v2248, %v2496
        %v2561 = vmul.f32 %v2250, %v2497
        %v2562 = vmul.f32 %v2252, %v2498
        %v2563 = vmul.f32 %v2254, %v2499
        %v2564 = vmul.f32 %v2256, %v2500
        %v2565 = vmul.f32 %v2258, %v2501
        %v2566 = vmul.f32 %v2260, %v2502
        %v2567 = vmul.f32 %v2262, %v2503
        %v2568 = vmul.f32 %v2264, %v2504
        %v2569 = vmul.f32 %v2266, %v2505
        %v2570 = vmul.f32 %v2268, %v2506
        %v2571 = vmul.f32 %v2270, %v2507
        %v2572 = vmul.f32 %v2272, %v2508
        %v2573 = vmul.f32 %v2274, %v2509
        %v2574 = vmul.f32 %v2276, %v2510
        %v2575 = vmul.f32 %v2278, %v2511
        %v2576 = vmul.f32 %v2280, %v2512
        %v2577 = vmul.f32 %v2282, %v2513
        %v2578 = vmul.f32 %v2284, %v2514
        %v2579 = vmul.f32 %v2286, %v2515
        %v2580 = vmul.f32 %v2288, %v2516
        %v2581 = vmul.f32 %v2290, %v2517
        %v2582 = vmul.f32 %v2292, %v2518
        %v2583 = vmul.f32 %v2294, %v2519
        %v2584 = vmul.f32 %v2296, %v2520
        %v2585 = vmul.f32 %v2298, %v2521
        %v2586 = vmul.f32 %v2300, %v2522
        %v2587 = vmul.f32 %v2302, %v2523
        %v2588 = vmul.f32 %v2304, %v2524
        %v2589 = vmul.f32 %v2306, %v2525
        %v2590 = vmul.f32 %v2308, %v2526
        %v2591 = vmul.f32 %v2310, %v2527
        %v2592 = vmul.f32 %v2312, %v2528
        %v2593 = vmul.f32 %v2314, %v2529
        %v2594 = vmul.f32 %v2316, %v2530
        %v2595 = vmul.f32 %v2318, %v2531
        %v2596 = vmul.f32 %v2320, %v2532
        %v2597 = vmul.f32 %v2322, %v2533
        %v2598 = vmul.f32 %v2324, %v2534
        %v2599 = vmul.f32 %v2326, %v2535
        %v2600 = vmul.f32 %v2328, %v2536
        %v2601 = vmul.f32 %v2330, %v2537
        %v2602 = vmul.f32 %v2332, %v2538
        %v2603 = vmul.f32 %v2334, %v2539
        %v2604 = vmul.f32 %v2336, %v2540
        %v2605 = vmul.f32 %v2338, %v2541
        %v2606 = vmul.f32 %v2340, %v2542
        %v2607 = vmul.f32 %v2342, %v2543
        %v2608 = vmul.f32 %v2344, %v2544
        %v2609 = vmul.f32 %v2346, %v2545
        %v2610 = vmul.f32 %v2348, %v2546
        %v2611 = vmul.f32 %v2350, %v2547
        %v2612 = vmul.f32 %v2352, %v2548
        %v2613 = vmul.f32 %v2354, %v2549
        %v2614 = vmul.f32 %v2356, %v2550
        %v2615 = vmul.f32 %v2358, %v2551
        %v2616 = vmul.f32 %v2360, %v2552
        %v2617 = vpack.c.bf16 %v2554, %v2553
        %v2618 = vpack.c.bf16 %v2556, %v2555
        %v2619 = vpack.c.bf16 %v2558, %v2557
        %v2620 = vpack.c.bf16 %v2560, %v2559
        %v2621 = vpack.c.bf16 %v2562, %v2561
        %v2622 = vpack.c.bf16 %v2564, %v2563
        %v2623 = vpack.c.bf16 %v2566, %v2565
        %v2624 = vpack.c.bf16 %v2568, %v2567
        %v2625 = vpack.c.bf16 %v2570, %v2569
        %v2626 = vpack.c.bf16 %v2572, %v2571
        %v2627 = vpack.c.bf16 %v2574, %v2573
        %v2628 = vpack.c.bf16 %v2576, %v2575
        %v2629 = vpack.c.bf16 %v2578, %v2577
        %v2630 = vpack.c.bf16 %v2580, %v2579
        %v2631 = vpack.c.bf16 %v2582, %v2581
        %v2632 = vpack.c.bf16 %v2584, %v2583
        %v2633 = vpack.c.bf16 %v2586, %v2585
        %v2634 = vpack.c.bf16 %v2588, %v2587
        %v2635 = vpack.c.bf16 %v2590, %v2589
        %v2636 = vpack.c.bf16 %v2592, %v2591
        %v2637 = vpack.c.bf16 %v2594, %v2593
        %v2638 = vpack.c.bf16 %v2596, %v2595
        %v2639 = vpack.c.bf16 %v2598, %v2597
        %v2640 = vpack.c.bf16 %v2600, %v2599
        %v2641 = vpack.c.bf16 %v2602, %v2601
        %v2642 = vpack.c.bf16 %v2604, %v2603
        %v2643 = vpack.c.bf16 %v2606, %v2605
        %v2644 = vpack.c.bf16 %v2608, %v2607
        %v2645 = vpack.c.bf16 %v2610, %v2609
        %v2646 = vpack.c.bf16 %v2612, %v2611
        %v2647 = vpack.c.bf16 %v2614, %v2613
        %v2648 = vpack.c.bf16 %v2616, %v2615
        %2649 = vmatprep.subr.bf16.mxu0 0
        %2650 = vmatpush1.bf16.msra.mxu0 %v1209
        %2651 = vmatprep.subr.bf16.mxu0 0
        %2652 = vmatpush1.bf16.msra.mxu0 %v1210
        %2653 = vmatprep.subr.bf16.mxu0 0
        %2654 = vmatpush1.bf16.msra.mxu0 %v1211
        %2655 = vmatprep.subr.bf16.mxu0 0
        %2656 = vmatpush1.bf16.msra.mxu0 %v1212
        %2657 = vmatprep.subr.bf16.mxu0 0
        %2658 = vmatpush1.bf16.msra.mxu0 %v1213
        %2659 = vmatprep.subr.bf16.mxu0 0
        %2660 = vmatpush1.bf16.msra.mxu0 %v1214
        %2661 = vmatprep.subr.bf16.mxu0 0
        %2662 = vmatpush1.bf16.msra.mxu0 %v1215
        %2663 = vmatprep.subr.bf16.mxu0 0
        %2664 = vmatpush1.bf16.msra.mxu0 %v1216
        %2665 = vmatprep.subr.bf16.mxu0 0
        %2666 = vmatpush1.bf16.msra.mxu0 0
        %2667 = vmatprep.subr.bf16.mxu0 0
        %2668 = vmatpush1.bf16.msra.mxu0 0
        %2669 = vmatprep.subr.bf16.mxu0 0
        %2670 = vmatpush1.bf16.msra.mxu0 0
        %2671 = vmatprep.subr.bf16.mxu0 0
        %2672 = vmatpush1.bf16.msra.mxu0 0
        %2673 = vmatprep.subr.bf16.mxu0 0
        %2674 = vmatpush1.bf16.msra.mxu0 0
        %2675 = vmatprep.subr.bf16.mxu0 0
        %2676 = vmatpush1.bf16.msra.mxu0 0
        %2677 = vmatprep.subr.bf16.mxu0 0
        %2678 = vmatpush1.bf16.msra.mxu0 0
        %2679 = vmatprep.subr.bf16.mxu0 0
        %2680 = vmatpush1.bf16.msra.mxu0 0
        %2681 = vmatprep.mubr.bf16.mxu0 0
        %2682 = vmatmul.mubr.bf16.gmra.mrb[0].mxu0 %v2617
        %v2683 = vpop.f32.mrb[0].mxu0
        %v2684 = vadd.f32 0.0, %v2683
        %v2685 = vpop.f32.mrb[0].mxu0
        %v2686 = vpop.f32.mrb[0].mxu0
        %v2687 = vadd.f32 0.0, %v2686
        %v2688 = vpop.f32.mrb[0].mxu0
        %2689 = vmatprep.mubr.bf16.mxu0 0
        %2690 = vmatmul.mubr.bf16.gmra.mrb[0].mxu0 %v2618
        %v2691 = vpop.f32.mrb[0].mxu0
        %v2692 = vadd.f32 0.0, %v2691
        %v2693 = vpop.f32.mrb[0].mxu0
        %v2694 = vpop.f32.mrb[0].mxu0
        %v2695 = vadd.f32 0.0, %v2694
        %v2696 = vpop.f32.mrb[0].mxu0
        %2697 = vmatprep.mubr.bf16.mxu0 0
        %2698 = vmatmul.mubr.bf16.gmra.mrb[0].mxu0 %v2619
        %v2699 = vpop.f32.mrb[0].mxu0
        %v2700 = vadd.f32 0.0, %v2699
        %v2701 = vpop.f32.mrb[0].mxu0
        %v2702 = vpop.f32.mrb[0].mxu0
        %v2703 = vadd.f32 0.0, %v2702
        %v2704 = vpop.f32.mrb[0].mxu0
        %2705 = vmatprep.mubr.bf16.mxu0 0
        %2706 = vmatmul.mubr.bf16.gmra.mrb[0].mxu0 %v2620
        %v2707 = vpop.f32.mrb[0].mxu0
        %v2708 = vadd.f32 0.0, %v2707
        %v2709 = vpop.f32.mrb[0].mxu0
        %v2710 = vpop.f32.mrb[0].mxu0
        %v2711 = vadd.f32 0.0, %v2710
        %v2712 = vpop.f32.mrb[0].mxu0
        %2713 = vmatprep.mubr.bf16.mxu0 0
        %2714 = vmatmul.mubr.bf16.gmra.mrb[0].mxu0 %v2621
        %v2715 = vpop.f32.mrb[0].mxu0
        %v2716 = vadd.f32 0.0, %v2715
        %v2717 = vpop.f32.mrb[0].mxu0
        %v2718 = vpop.f32.mrb[0].mxu0
        %v2719 = vadd.f32 0.0, %v2718
        %v2720 = vpop.f32.mrb[0].mxu0
        %2721 = vmatprep.mubr.bf16.mxu0 0
        %2722 = vmatmul.mubr.bf16.gmra.mrb[0].mxu0 %v2622
        %v2723 = vpop.f32.mrb[0].mxu0
        %v2724 = vadd.f32 0.0, %v2723
        %v2725 = vpop.f32.mrb[0].mxu0
        %v2726 = vpop.f32.mrb[0].mxu0
        %v2727 = vadd.f32 0.0, %v2726
        %v2728 = vpop.f32.mrb[0].mxu0
        %2729 = vmatprep.mubr.bf16.mxu0 0
        %2730 = vmatmul.mubr.bf16.gmra.mrb[0].mxu0 %v2623
        %v2731 = vpop.f32.mrb[0].mxu0
        %v2732 = vadd.f32 0.0, %v2731
        %v2733 = vpop.f32.mrb[0].mxu0
        %v2734 = vpop.f32.mrb[0].mxu0
        %v2735 = vadd.f32 0.0, %v2734
        %v2736 = vpop.f32.mrb[0].mxu0
        %2737 = vmatprep.mubr.bf16.mxu0 0
        %2738 = vmatmul.mubr.bf16.gmra.mrb[0].mxu0 %v2624
        %v2739 = vpop.f32.mrb[0].mxu0
        %v2740 = vadd.f32 0.0, %v2739
        %v2741 = vpop.f32.mrb[0].mxu0
        %v2742 = vpop.f32.mrb[0].mxu0
        %v2743 = vadd.f32 0.0, %v2742
        %v2744 = vpop.f32.mrb[0].mxu0
        %2745 = vdwg.mxu0
        %2746 = vmatprep.subr.bf16.mxu0 0
        %2747 = vmatpush1.bf16.msra.mxu0 %v1338
        %2748 = vmatprep.subr.bf16.mxu0 0
        %2749 = vmatpush1.bf16.msra.mxu0 %v1340
        %2750 = vmatprep.subr.bf16.mxu0 0
        %2751 = vmatpush1.bf16.msra.mxu0 %v1342
        %2752 = vmatprep.subr.bf16.mxu0 0
        %2753 = vmatpush1.bf16.msra.mxu0 %v1344
        %2754 = vmatprep.subr.bf16.mxu0 0
        %2755 = vmatpush1.bf16.msra.mxu0 %v1346
        %2756 = vmatprep.subr.bf16.mxu0 0
        %2757 = vmatpush1.bf16.msra.mxu0 %v1348
        %2758 = vmatprep.subr.bf16.mxu0 0
        %2759 = vmatpush1.bf16.msra.mxu0 %v1350
        %2760 = vmatprep.subr.bf16.mxu0 0
        %2761 = vmatpush1.bf16.msra.mxu0 %v1352
        %2762 = vmatprep.subr.bf16.mxu0 0
        %2763 = vmatpush1.bf16.msra.mxu0 0
        %2764 = vmatprep.subr.bf16.mxu0 0
        %2765 = vmatpush1.bf16.msra.mxu0 0
        %2766 = vmatprep.subr.bf16.mxu0 0
        %2767 = vmatpush1.bf16.msra.mxu0 0
        %2768 = vmatprep.subr.bf16.mxu0 0
        %2769 = vmatpush1.bf16.msra.mxu0 0
        %2770 = vmatprep.subr.bf16.mxu0 0
        %2771 = vmatpush1.bf16.msra.mxu0 0
        %2772 = vmatprep.subr.bf16.mxu0 0
        %2773 = vmatpush1.bf16.msra.mxu0 0
        %2774 = vmatprep.subr.bf16.mxu0 0
        %2775 = vmatpush1.bf16.msra.mxu0 0
        %2776 = vmatprep.subr.bf16.mxu0 0
        %2777 = vmatpush1.bf16.msra.mxu0 0
        %2778 = vmatprep.mubr.bf16.mxu0 0
        %2779 = vmatmul.mubr.bf16.gmra.mrb[0].mxu0 %v2625
        %v2780 = vpop.f32.mrb[0].mxu0
        %v2781 = vadd.f32 0.0, %v2780
        %v2782 = vpop.f32.mrb[0].mxu0
        %v2783 = vpop.f32.mrb[0].mxu0
        %v2784 = vadd.f32 0.0, %v2783
        %v2785 = vpop.f32.mrb[0].mxu0
        %2786 = vmatprep.mubr.bf16.mxu0 0
        %2787 = vmatmul.mubr.bf16.gmra.mrb[0].mxu0 %v2626
        %v2788 = vpop.f32.mrb[0].mxu0
        %v2789 = vadd.f32 0.0, %v2788
        %v2790 = vpop.f32.mrb[0].mxu0
        %v2791 = vpop.f32.mrb[0].mxu0
        %v2792 = vadd.f32 0.0, %v2791
        %v2793 = vpop.f32.mrb[0].mxu0
        %2794 = vmatprep.mubr.bf16.mxu0 0
        %2795 = vmatmul.mubr.bf16.gmra.mrb[0].mxu0 %v2627
        %v2796 = vpop.f32.mrb[0].mxu0
        %v2797 = vadd.f32 0.0, %v2796
        %v2798 = vpop.f32.mrb[0].mxu0
        %v2799 = vpop.f32.mrb[0].mxu0
        %v2800 = vadd.f32 0.0, %v2799
        %v2801 = vpop.f32.mrb[0].mxu0
        %2802 = vmatprep.mubr.bf16.mxu0 0
        %2803 = vmatmul.mubr.bf16.gmra.mrb[0].mxu0 %v2628
        %v2804 = vpop.f32.mrb[0].mxu0
        %v2805 = vadd.f32 0.0, %v2804
        %v2806 = vpop.f32.mrb[0].mxu0
        %v2807 = vpop.f32.mrb[0].mxu0
        %v2808 = vadd.f32 0.0, %v2807
        %v2809 = vpop.f32.mrb[0].mxu0
        %2810 = vmatprep.mubr.bf16.mxu0 0
        %2811 = vmatmul.mubr.bf16.gmra.mrb[0].mxu0 %v2629
        %v2812 = vpop.f32.mrb[0].mxu0
        %v2813 = vadd.f32 0.0, %v2812
        %v2814 = vpop.f32.mrb[0].mxu0
        %v2815 = vpop.f32.mrb[0].mxu0
        %v2816 = vadd.f32 0.0, %v2815
        %v2817 = vpop.f32.mrb[0].mxu0
        %2818 = vmatprep.mubr.bf16.mxu0 0
        %2819 = vmatmul.mubr.bf16.gmra.mrb[0].mxu0 %v2630
        %v2820 = vpop.f32.mrb[0].mxu0
        %v2821 = vadd.f32 0.0, %v2820
        %v2822 = vpop.f32.mrb[0].mxu0
        %v2823 = vpop.f32.mrb[0].mxu0
        %v2824 = vadd.f32 0.0, %v2823
        %v2825 = vpop.f32.mrb[0].mxu0
        %2826 = vmatprep.mubr.bf16.mxu0 0
        %2827 = vmatmul.mubr.bf16.gmra.mrb[0].mxu0 %v2631
        %v2828 = vpop.f32.mrb[0].mxu0
        %v2829 = vadd.f32 0.0, %v2828
        %v2830 = vpop.f32.mrb[0].mxu0
        %v2831 = vpop.f32.mrb[0].mxu0
        %v2832 = vadd.f32 0.0, %v2831
        %v2833 = vpop.f32.mrb[0].mxu0
        %2834 = vmatprep.mubr.bf16.mxu0 0
        %2835 = vmatmul.mubr.bf16.gmra.mrb[0].mxu0 %v2632
        %v2836 = vpop.f32.mrb[0].mxu0
        %v2837 = vadd.f32 0.0, %v2836
        %v2838 = vpop.f32.mrb[0].mxu0
        %v2839 = vpop.f32.mrb[0].mxu0
        %v2840 = vadd.f32 0.0, %v2839
        %v2841 = vpop.f32.mrb[0].mxu0
        %2842 = vdwg.mxu0
        %2843 = vmatprep.subr.bf16.mxu0 0
        %2844 = vmatpush1.bf16.msra.mxu0 %v1362
        %2845 = vmatprep.subr.bf16.mxu0 0
        %2846 = vmatpush1.bf16.msra.mxu0 %v1364
        %2847 = vmatprep.subr.bf16.mxu0 0
        %2848 = vmatpush1.bf16.msra.mxu0 %v1366
        %2849 = vmatprep.subr.bf16.mxu0 0
        %2850 = vmatpush1.bf16.msra.mxu0 %v1368
        %2851 = vmatprep.subr.bf16.mxu0 0
        %2852 = vmatpush1.bf16.msra.mxu0 %v1370
        %2853 = vmatprep.subr.bf16.mxu0 0
        %2854 = vmatpush1.bf16.msra.mxu0 %v1372
        %2855 = vmatprep.subr.bf16.mxu0 0
        %2856 = vmatpush1.bf16.msra.mxu0 %v1374
        %2857 = vmatprep.subr.bf16.mxu0 0
        %2858 = vmatpush1.bf16.msra.mxu0 %v1376
        %2859 = vmatprep.subr.bf16.mxu0 0
        %2860 = vmatpush1.bf16.msra.mxu0 0
        %2861 = vmatprep.subr.bf16.mxu0 0
        %2862 = vmatpush1.bf16.msra.mxu0 0
        %2863 = vmatprep.subr.bf16.mxu0 0
        %2864 = vmatpush1.bf16.msra.mxu0 0
        %2865 = vmatprep.subr.bf16.mxu0 0
        %2866 = vmatpush1.bf16.msra.mxu0 0
        %2867 = vmatprep.subr.bf16.mxu0 0
        %2868 = vmatpush1.bf16.msra.mxu0 0
        %2869 = vmatprep.subr.bf16.mxu0 0
        %2870 = vmatpush1.bf16.msra.mxu0 0
        %2871 = vmatprep.subr.bf16.mxu0 0
        %2872 = vmatpush1.bf16.msra.mxu0 0
        %2873 = vmatprep.subr.bf16.mxu0 0
        %2874 = vmatpush1.bf16.msra.mxu0 0
        %2875 = vmatprep.mubr.bf16.mxu0 0
        %2876 = vmatmul.mubr.bf16.gmra.mrb[0].mxu0 %v2633
        %v2877 = vpop.f32.mrb[0].mxu0
        %v2878 = vadd.f32 0.0, %v2877
        %v2879 = vpop.f32.mrb[0].mxu0
        %v2880 = vpop.f32.mrb[0].mxu0
        %v2881 = vadd.f32 0.0, %v2880
        %v2882 = vpop.f32.mrb[0].mxu0
        %2883 = vmatprep.mubr.bf16.mxu0 0
        %2884 = vmatmul.mubr.bf16.gmra.mrb[0].mxu0 %v2634
        %v2885 = vpop.f32.mrb[0].mxu0
        %v2886 = vadd.f32 0.0, %v2885
        %v2887 = vpop.f32.mrb[0].mxu0
        %v2888 = vpop.f32.mrb[0].mxu0
        %v2889 = vadd.f32 0.0, %v2888
        %v2890 = vpop.f32.mrb[0].mxu0
        %2891 = vmatprep.mubr.bf16.mxu0 0
        %2892 = vmatmul.mubr.bf16.gmra.mrb[0].mxu0 %v2635
        %v2893 = vpop.f32.mrb[0].mxu0
        %v2894 = vadd.f32 0.0, %v2893
        %v2895 = vpop.f32.mrb[0].mxu0
        %v2896 = vpop.f32.mrb[0].mxu0
        %v2897 = vadd.f32 0.0, %v2896
        %v2898 = vpop.f32.mrb[0].mxu0
        %2899 = vmatprep.mubr.bf16.mxu0 0
        %2900 = vmatmul.mubr.bf16.gmra.mrb[0].mxu0 %v2636
        %v2901 = vpop.f32.mrb[0].mxu0
        %v2902 = vadd.f32 0.0, %v2901
        %v2903 = vpop.f32.mrb[0].mxu0
        %v2904 = vpop.f32.mrb[0].mxu0
        %v2905 = vadd.f32 0.0, %v2904
        %v2906 = vpop.f32.mrb[0].mxu0
        %2907 = vmatprep.mubr.bf16.mxu0 0
        %2908 = vmatmul.mubr.bf16.gmra.mrb[0].mxu0 %v2637
        %v2909 = vpop.f32.mrb[0].mxu0
        %v2910 = vadd.f32 0.0, %v2909
        %v2911 = vpop.f32.mrb[0].mxu0
        %v2912 = vpop.f32.mrb[0].mxu0
        %v2913 = vadd.f32 0.0, %v2912
        %v2914 = vpop.f32.mrb[0].mxu0
        %2915 = vmatprep.mubr.bf16.mxu0 0
        %2916 = vmatmul.mubr.bf16.gmra.mrb[0].mxu0 %v2638
        %v2917 = vpop.f32.mrb[0].mxu0
        %v2918 = vadd.f32 0.0, %v2917
        %v2919 = vpop.f32.mrb[0].mxu0
        %v2920 = vpop.f32.mrb[0].mxu0
        %v2921 = vadd.f32 0.0, %v2920
        %v2922 = vpop.f32.mrb[0].mxu0
        %2923 = vmatprep.mubr.bf16.mxu0 0
        %2924 = vmatmul.mubr.bf16.gmra.mrb[0].mxu0 %v2639
        %v2925 = vpop.f32.mrb[0].mxu0
        %v2926 = vadd.f32 0.0, %v2925
        %v2927 = vpop.f32.mrb[0].mxu0
        %v2928 = vpop.f32.mrb[0].mxu0
        %v2929 = vadd.f32 0.0, %v2928
        %v2930 = vpop.f32.mrb[0].mxu0
        %2931 = vmatprep.mubr.bf16.mxu0 0
        %2932 = vmatmul.mubr.bf16.gmra.mrb[0].mxu0 %v2640
        %v2933 = vpop.f32.mrb[0].mxu0
        %v2934 = vadd.f32 0.0, %v2933
        %v2935 = vpop.f32.mrb[0].mxu0
        %v2936 = vpop.f32.mrb[0].mxu0
        %v2937 = vadd.f32 0.0, %v2936
        %v2938 = vpop.f32.mrb[0].mxu0
        %2939 = vdwg.mxu0
        %2940 = vmatprep.subr.bf16.mxu0 0
        %2941 = vmatpush1.bf16.msra.mxu0 %v1386
        %2942 = vmatprep.subr.bf16.mxu0 0
        %2943 = vmatpush1.bf16.msra.mxu0 %v1388
        %2944 = vmatprep.subr.bf16.mxu0 0
        %2945 = vmatpush1.bf16.msra.mxu0 %v1390
        %2946 = vmatprep.subr.bf16.mxu0 0
        %2947 = vmatpush1.bf16.msra.mxu0 %v1392
        %2948 = vmatprep.subr.bf16.mxu0 0
        %2949 = vmatpush1.bf16.msra.mxu0 %v1394
        %2950 = vmatprep.subr.bf16.mxu0 0
        %2951 = vmatpush1.bf16.msra.mxu0 %v1396
        %2952 = vmatprep.subr.bf16.mxu0 0
        %2953 = vmatpush1.bf16.msra.mxu0 %v1398
        %2954 = vmatprep.subr.bf16.mxu0 0
        %2955 = vmatpush1.bf16.msra.mxu0 %v1400
        %2956 = vmatprep.subr.bf16.mxu0 0
        %2957 = vmatpush1.bf16.msra.mxu0 0
        %2958 = vmatprep.subr.bf16.mxu0 0
        %2959 = vmatpush1.bf16.msra.mxu0 0
        %2960 = vmatprep.subr.bf16.mxu0 0
        %2961 = vmatpush1.bf16.msra.mxu0 0
        %2962 = vmatprep.subr.bf16.mxu0 0
        %2963 = vmatpush1.bf16.msra.mxu0 0
        %2964 = vmatprep.subr.bf16.mxu0 0
        %2965 = vmatpush1.bf16.msra.mxu0 0
        %2966 = vmatprep.subr.bf16.mxu0 0
        %2967 = vmatpush1.bf16.msra.mxu0 0
        %2968 = vmatprep.subr.bf16.mxu0 0
        %2969 = vmatpush1.bf16.msra.mxu0 0
        %2970 = vmatprep.subr.bf16.mxu0 0
        %2971 = vmatpush1.bf16.msra.mxu0 0
        %2972 = vmatprep.mubr.bf16.mxu0 0
        %2973 = vmatmul.mubr.bf16.gmra.mrb[0].mxu0 %v2641
        %v2974 = vpop.f32.mrb[0].mxu0
        %v2975 = vadd.f32 0.0, %v2974
        %v2976 = vpop.f32.mrb[0].mxu0
        %v2977 = vpop.f32.mrb[0].mxu0
        %v2978 = vadd.f32 0.0, %v2977
        %v2979 = vpop.f32.mrb[0].mxu0
        %2980 = vmatprep.mubr.bf16.mxu0 0
        %2981 = vmatmul.mubr.bf16.gmra.mrb[0].mxu0 %v2642
        %v2982 = vpop.f32.mrb[0].mxu0
        %v2983 = vadd.f32 0.0, %v2982
        %v2984 = vpop.f32.mrb[0].mxu0
        %v2985 = vpop.f32.mrb[0].mxu0
        %v2986 = vadd.f32 0.0, %v2985
        %v2987 = vpop.f32.mrb[0].mxu0
        %2988 = vmatprep.mubr.bf16.mxu0 0
        %2989 = vmatmul.mubr.bf16.gmra.mrb[0].mxu0 %v2643
        %v2990 = vpop.f32.mrb[0].mxu0
        %v2991 = vadd.f32 0.0, %v2990
        %v2992 = vpop.f32.mrb[0].mxu0
        %v2993 = vpop.f32.mrb[0].mxu0
        %v2994 = vadd.f32 0.0, %v2993
        %v2995 = vpop.f32.mrb[0].mxu0
        %2996 = vmatprep.mubr.bf16.mxu0 0
        %2997 = vmatmul.mubr.bf16.gmra.mrb[0].mxu0 %v2644
        %v2998 = vpop.f32.mrb[0].mxu0
        %v2999 = vadd.f32 0.0, %v2998
        %v3000 = vpop.f32.mrb[0].mxu0
        %v3001 = vpop.f32.mrb[0].mxu0
        %v3002 = vadd.f32 0.0, %v3001
        %v3003 = vpop.f32.mrb[0].mxu0
        %3004 = vmatprep.mubr.bf16.mxu0 0
        %3005 = vmatmul.mubr.bf16.gmra.mrb[0].mxu0 %v2645
        %v3006 = vpop.f32.mrb[0].mxu0
        %v3007 = vadd.f32 0.0, %v3006
        %v3008 = vpop.f32.mrb[0].mxu0
        %v3009 = vpop.f32.mrb[0].mxu0
        %v3010 = vadd.f32 0.0, %v3009
        %v3011 = vpop.f32.mrb[0].mxu0
        %3012 = vmatprep.mubr.bf16.mxu0 0
        %3013 = vmatmul.mubr.bf16.gmra.mrb[0].mxu0 %v2646
        %v3014 = vpop.f32.mrb[0].mxu0
        %v3015 = vadd.f32 0.0, %v3014
        %v3016 = vpop.f32.mrb[0].mxu0
        %v3017 = vpop.f32.mrb[0].mxu0
        %v3018 = vadd.f32 0.0, %v3017
        %v3019 = vpop.f32.mrb[0].mxu0
        %3020 = vmatprep.mubr.bf16.mxu0 0
        %3021 = vmatmul.mubr.bf16.gmra.mrb[0].mxu0 %v2647
        %v3022 = vpop.f32.mrb[0].mxu0
        %v3023 = vadd.f32 0.0, %v3022
        %v3024 = vpop.f32.mrb[0].mxu0
        %v3025 = vpop.f32.mrb[0].mxu0
        %v3026 = vadd.f32 0.0, %v3025
        %v3027 = vpop.f32.mrb[0].mxu0
        %3028 = vmatprep.mubr.bf16.mxu0 0
        %3029 = vmatmul.mubr.bf16.gmra.mrb[0].mxu0 %v2648
        %v3030 = vpop.f32.mrb[0].mxu0
        %v3031 = vadd.f32 0.0, %v3030
        %v3032 = vpop.f32.mrb[0].mxu0
        %v3033 = vpop.f32.mrb[0].mxu0
        %v3034 = vadd.f32 0.0, %v3033
        %v3035 = vpop.f32.mrb[0].mxu0
        %3036 = vdwg.mxu0
        %v3037 = vpack.c.bf16 %v2687, %v2684
        %v3038 = vpack.c.bf16 %v2695, %v2692
        %v3039 = vpack.c.bf16 %v2703, %v2700
        %v3040 = vpack.c.bf16 %v2711, %v2708
        %v3041 = vpack.c.bf16 %v2719, %v2716
        %v3042 = vpack.c.bf16 %v2727, %v2724
        %v3043 = vpack.c.bf16 %v2735, %v2732
        %v3044 = vpack.c.bf16 %v2743, %v2740
        %3045 = vst.msk [vmem:[#allocation2] sm:$0xff] %vm1460, %v3037
        %3046 = vst.msk [vmem:[#allocation2 + $0x8] sm:$0xff] %vm1460, %v3038
        %3047 = vst.msk [vmem:[#allocation2 + $0x10] sm:$0xff] %vm1460, %v3039
        %3048 = vst.msk [vmem:[#allocation2 + $0x18] sm:$0xff] %vm1460, %v3040
        %3049 = vst.msk [vmem:[#allocation2 + $0x20] sm:$0xff] %vm1460, %v3041
        %3050 = vst.msk [vmem:[#allocation2 + $0x28] sm:$0xff] %vm1460, %v3042
        %3051 = vst.msk [vmem:[#allocation2 + $0x30] sm:$0xff] %vm1460, %v3043
        %3052 = vst.msk [vmem:[#allocation2 + $0x38] sm:$0xff] %vm1460, %v3044
        %v3053 = vpack.c.bf16 %v2784, %v2781
        %v3054 = vpack.c.bf16 %v2792, %v2789
        %v3055 = vpack.c.bf16 %v2800, %v2797
        %v3056 = vpack.c.bf16 %v2808, %v2805
        %v3057 = vpack.c.bf16 %v2816, %v2813
        %v3058 = vpack.c.bf16 %v2824, %v2821
        %v3059 = vpack.c.bf16 %v2832, %v2829
        %v3060 = vpack.c.bf16 %v2840, %v2837
        %3069 = vrot.lane.b32.xlu0 %v3053, 32
        %v3070 = vpop.permute.xlu0 %3069
        %3071 = vrot.lane.b32.xlu0 %v3054, 32
        %v3072 = vpop.permute.xlu0 %3071
        %3073 = vrot.lane.b32.xlu0 %v3055, 32
        %v3074 = vpop.permute.xlu0 %3073
        %3075 = vrot.lane.b32.xlu0 %v3056, 32
        %v3076 = vpop.permute.xlu0 %3075
        %3077 = vrot.lane.b32.xlu0 %v3057, 32
        %v3078 = vpop.permute.xlu0 %3077
        %3079 = vrot.lane.b32.xlu0 %v3058, 32
        %v3080 = vpop.permute.xlu0 %3079
        %3081 = vrot.lane.b32.xlu0 %v3059, 32
        %v3082 = vpop.permute.xlu0 %3081
        %3083 = vrot.lane.b32.xlu0 %v3060, 32
        %v3084 = vpop.permute.xlu0 %3083
        %vm3093 = vcmask 523520
        %3094 = vst.msk [vmem:[#allocation2] sm:$0xff] %vm3093, %v3070
        %3095 = vst.msk [vmem:[#allocation2 + $0x8] sm:$0xff] %vm3093, %v3072
        %3096 = vst.msk [vmem:[#allocation2 + $0x10] sm:$0xff] %vm3093, %v3074
        %3097 = vst.msk [vmem:[#allocation2 + $0x18] sm:$0xff] %vm3093, %v3076
        %3098 = vst.msk [vmem:[#allocation2 + $0x20] sm:$0xff] %vm3093, %v3078
        %3099 = vst.msk [vmem:[#allocation2 + $0x28] sm:$0xff] %vm3093, %v3080
        %3100 = vst.msk [vmem:[#allocation2 + $0x30] sm:$0xff] %vm3093, %v3082
        %3101 = vst.msk [vmem:[#allocation2 + $0x38] sm:$0xff] %vm3093, %v3084
        %v3102 = vpack.c.bf16 %v2881, %v2878
        %v3103 = vpack.c.bf16 %v2889, %v2886
        %v3104 = vpack.c.bf16 %v2897, %v2894
        %v3105 = vpack.c.bf16 %v2905, %v2902
        %v3106 = vpack.c.bf16 %v2913, %v2910
        %v3107 = vpack.c.bf16 %v2921, %v2918
        %v3108 = vpack.c.bf16 %v2929, %v2926
        %v3109 = vpack.c.bf16 %v2937, %v2934
        %3118 = vrot.lane.b32.xlu0 %v3102, 64
        %v3119 = vpop.permute.xlu0 %3118
        %3120 = vrot.lane.b32.xlu0 %v3103, 64
        %v3121 = vpop.permute.xlu0 %3120
        %3122 = vrot.lane.b32.xlu0 %v3104, 64
        %v3123 = vpop.permute.xlu0 %3122
        %3124 = vrot.lane.b32.xlu0 %v3105, 64
        %v3125 = vpop.permute.xlu0 %3124
        %3126 = vrot.lane.b32.xlu0 %v3106, 64
        %v3127 = vpop.permute.xlu0 %3126
        %3128 = vrot.lane.b32.xlu0 %v3107, 64
        %v3129 = vpop.permute.xlu0 %3128
        %3130 = vrot.lane.b32.xlu0 %v3108, 64
        %v3131 = vpop.permute.xlu0 %3130
        %3132 = vrot.lane.b32.xlu0 %v3109, 64
        %v3133 = vpop.permute.xlu0 %3132
        %vm3142 = vcmask 785920
        %3143 = vst.msk [vmem:[#allocation2] sm:$0xff] %vm3142, %v3119
        %3144 = vst.msk [vmem:[#allocation2 + $0x8] sm:$0xff] %vm3142, %v3121
        %3145 = vst.msk [vmem:[#allocation2 + $0x10] sm:$0xff] %vm3142, %v3123
        %3146 = vst.msk [vmem:[#allocation2 + $0x18] sm:$0xff] %vm3142, %v3125
        %3147 = vst.msk [vmem:[#allocation2 + $0x20] sm:$0xff] %vm3142, %v3127
        %3148 = vst.msk [vmem:[#allocation2 + $0x28] sm:$0xff] %vm3142, %v3129
        %3149 = vst.msk [vmem:[#allocation2 + $0x30] sm:$0xff] %vm3142, %v3131
        %3150 = vst.msk [vmem:[#allocation2 + $0x38] sm:$0xff] %vm3142, %v3133
        %v3151 = vpack.c.bf16 %v2978, %v2975
        %v3152 = vpack.c.bf16 %v2986, %v2983
        %v3153 = vpack.c.bf16 %v2994, %v2991
        %v3154 = vpack.c.bf16 %v3002, %v2999
        %v3155 = vpack.c.bf16 %v3010, %v3007
        %v3156 = vpack.c.bf16 %v3018, %v3015
        %v3157 = vpack.c.bf16 %v3026, %v3023
        %v3158 = vpack.c.bf16 %v3034, %v3031
        %3167 = vrot.lane.b32.xlu0 %v3151, 96
        %v3168 = vpop.permute.xlu0 %3167
        %3169 = vrot.lane.b32.xlu0 %v3152, 96
        %v3170 = vpop.permute.xlu0 %3169
        %3171 = vrot.lane.b32.xlu0 %v3153, 96
        %v3172 = vpop.permute.xlu0 %3171
        %3173 = vrot.lane.b32.xlu0 %v3154, 96
        %v3174 = vpop.permute.xlu0 %3173
        %3175 = vrot.lane.b32.xlu0 %v3155, 96
        %v3176 = vpop.permute.xlu0 %3175
        %3177 = vrot.lane.b32.xlu0 %v3156, 96
        %v3178 = vpop.permute.xlu0 %3177
        %3179 = vrot.lane.b32.xlu0 %v3157, 96
        %v3180 = vpop.permute.xlu0 %3179
        %3181 = vrot.lane.b32.xlu0 %v3158, 96
        %v3182 = vpop.permute.xlu0 %3181
        %vm3191 = vcmask 1048320
        %3192 = vst.msk [vmem:[#allocation2] sm:$0xff] %vm3191, %v3168
        %3193 = vst.msk [vmem:[#allocation2 + $0x8] sm:$0xff] %vm3191, %v3170
        %3194 = vst.msk [vmem:[#allocation2 + $0x10] sm:$0xff] %vm3191, %v3172
        %3195 = vst.msk [vmem:[#allocation2 + $0x18] sm:$0xff] %vm3191, %v3174
        %3196 = vst.msk [vmem:[#allocation2 + $0x20] sm:$0xff] %vm3191, %v3176
        %3197 = vst.msk [vmem:[#allocation2 + $0x28] sm:$0xff] %vm3191, %v3178
        %3198 = vst.msk [vmem:[#allocation2 + $0x30] sm:$0xff] %vm3191, %v3180
        %3199 = vst.msk [vmem:[#allocation2 + $0x38] sm:$0xff] %vm3191, %v3182
        %v3200 = vld [vmem:[#allocation2] sm:$0xff]
        %v3201 = vld [vmem:[#allocation2 + $0x8] sm:$0xff]
        %v3202 = vld [vmem:[#allocation2 + $0x10] sm:$0xff]
        %v3203 = vld [vmem:[#allocation2 + $0x18] sm:$0xff]
        %v3204 = vld [vmem:[#allocation2 + $0x20] sm:$0xff]
        %v3205 = vld [vmem:[#allocation2 + $0x28] sm:$0xff]
        %v3206 = vld [vmem:[#allocation2 + $0x30] sm:$0xff]
        %v3207 = vld [vmem:[#allocation2 + $0x38] sm:$0xff]
        %v3208 = vld [vmem:[#allocation11] sm:$0xf]
        %v3209 = vld [vmem:[#allocation11 + $0x4] sm:$0xf]
        %v3210 = vld [vmem:[#allocation11 + $0x8] sm:$0xf]
        %v3211 = vld [vmem:[#allocation11 + $0xc] sm:$0xf]
        %v3212 = vld [vmem:[#allocation11 + $0x10] sm:$0xf]
        %v3213 = vld [vmem:[#allocation11 + $0x14] sm:$0xf]
        %v3214 = vld [vmem:[#allocation11 + $0x18] sm:$0xf]
        %v3215 = vld [vmem:[#allocation11 + $0x1c] sm:$0xf]
        %v3216 = vld [vmem:[#allocation11 + $0x20] sm:$0xf]
        %v3217 = vld [vmem:[#allocation11 + $0x24] sm:$0xf]
        %v3218 = vld [vmem:[#allocation11 + $0x28] sm:$0xf]
        %v3219 = vld [vmem:[#allocation11 + $0x2c] sm:$0xf]
        %v3220 = vld [vmem:[#allocation11 + $0x30] sm:$0xf]
        %v3221 = vld [vmem:[#allocation11 + $0x34] sm:$0xf]
        %v3222 = vld [vmem:[#allocation11 + $0x38] sm:$0xf]
        %v3223 = vld [vmem:[#allocation11 + $0x3c] sm:$0xf]
        %v3224 = vld [vmem:[%s6] sm:$0x1]
        %v3226 = vlaneseq
        %v3227 = vshrl.u32 %v3226, 7
        %v3228 = vsub.s32 0, %v3227
        %v3229 = vrot.slane %v3224, %v3228
        %v3247 = vunpack.c.l.b16 %v3208
        %v3248 = vunpack.c.l.b16 %v3209
        %v3249 = vunpack.c.l.b16 %v3210
        %v3250 = vunpack.c.l.b16 %v3211
        %v3251 = vunpack.c.l.b16 %v3212
        %v3252 = vunpack.c.l.b16 %v3213
        %v3253 = vunpack.c.l.b16 %v3214
        %v3254 = vunpack.c.l.b16 %v3215
        %v3255 = vunpack.c.l.b16 %v3216
        %v3256 = vunpack.c.l.b16 %v3217
        %v3257 = vunpack.c.l.b16 %v3218
        %v3258 = vunpack.c.l.b16 %v3219
        %v3259 = vunpack.c.l.b16 %v3220
        %v3260 = vunpack.c.l.b16 %v3221
        %v3261 = vunpack.c.l.b16 %v3222
        %v3262 = vunpack.c.l.b16 %v3223
        %v3263 = vpack.c.b16 %v3248, %v3247
        %v3264 = vpack.c.b16 %v3250, %v3249
        %v3265 = vpack.c.b16 %v3252, %v3251
        %v3266 = vpack.c.b16 %v3254, %v3253
        %v3267 = vpack.c.b16 %v3256, %v3255
        %v3268 = vpack.c.b16 %v3258, %v3257
        %v3269 = vpack.c.b16 %v3260, %v3259
        %v3270 = vpack.c.b16 %v3262, %v3261
        %3279 = vmatprep.subr.bf16.mxu0 0
        %3280 = vmatpush1.bf16.msra.mxu0 %v3263
        %3281 = vmatprep.subr.bf16.mxu0 0
        %3282 = vmatpush1.bf16.msra.mxu0 %v3264
        %3283 = vmatprep.subr.bf16.mxu0 0
        %3284 = vmatpush1.bf16.msra.mxu0 %v3265
        %3285 = vmatprep.subr.bf16.mxu0 0
        %3286 = vmatpush1.bf16.msra.mxu0 %v3266
        %3287 = vmatprep.subr.bf16.mxu0 0
        %3288 = vmatpush1.bf16.msra.mxu0 %v3267
        %3289 = vmatprep.subr.bf16.mxu0 0
        %3290 = vmatpush1.bf16.msra.mxu0 %v3268
        %3291 = vmatprep.subr.bf16.mxu0 0
        %3292 = vmatpush1.bf16.msra.mxu0 %v3269
        %3293 = vmatprep.subr.bf16.mxu0 0
        %3294 = vmatpush1.bf16.msra.mxu0 %v3270
        %3295 = vmatprep.subr.bf16.mxu0 0
        %3296 = vmatpush1.bf16.msra.mxu0 0
        %3297 = vmatprep.subr.bf16.mxu0 0
        %3298 = vmatpush1.bf16.msra.mxu0 0
        %3299 = vmatprep.subr.bf16.mxu0 0
        %3300 = vmatpush1.bf16.msra.mxu0 0
        %3301 = vmatprep.subr.bf16.mxu0 0
        %3302 = vmatpush1.bf16.msra.mxu0 0
        %3303 = vmatprep.subr.bf16.mxu0 0
        %3304 = vmatpush1.bf16.msra.mxu0 0
        %3305 = vmatprep.subr.bf16.mxu0 0
        %3306 = vmatpush1.bf16.msra.mxu0 0
        %3307 = vmatprep.subr.bf16.mxu0 0
        %3308 = vmatpush1.bf16.msra.mxu0 0
        %3309 = vmatprep.subr.bf16.mxu0 0
        %3310 = vmatpush1.bf16.msra.mxu0 0
        %3311 = vmatprep.mubr.bf16.mxu0 0
        %3312 = vmatmul.mubr.bf16.gmra.mrb[0].mxu0 %v3200
        %v3313 = vpop.f32.mrb[0].mxu0
        %v3314 = vadd.f32 %v3229, %v3313
        %v3315 = vpop.f32.mrb[0].mxu0
        %v3316 = vpop.f32.mrb[0].mxu0
        %v3317 = vadd.f32 %v3229, %v3316
        %v3318 = vpop.f32.mrb[0].mxu0
        %3319 = vmatprep.mubr.bf16.mxu0 0
        %3320 = vmatmul.mubr.bf16.gmra.mrb[0].mxu0 %v3201
        %v3321 = vpop.f32.mrb[0].mxu0
        %v3322 = vadd.f32 %v3229, %v3321
        %v3323 = vpop.f32.mrb[0].mxu0
        %v3324 = vpop.f32.mrb[0].mxu0
        %v3325 = vadd.f32 %v3229, %v3324
        %v3326 = vpop.f32.mrb[0].mxu0
        %3327 = vmatprep.mubr.bf16.mxu0 0
        %3328 = vmatmul.mubr.bf16.gmra.mrb[0].mxu0 %v3202
        %v3329 = vpop.f32.mrb[0].mxu0
        %v3330 = vadd.f32 %v3229, %v3329
        %v3331 = vpop.f32.mrb[0].mxu0
        %v3332 = vpop.f32.mrb[0].mxu0
        %v3333 = vadd.f32 %v3229, %v3332
        %v3334 = vpop.f32.mrb[0].mxu0
        %3335 = vmatprep.mubr.bf16.mxu0 0
        %3336 = vmatmul.mubr.bf16.gmra.mrb[0].mxu0 %v3203
        %v3337 = vpop.f32.mrb[0].mxu0
        %v3338 = vadd.f32 %v3229, %v3337
        %v3339 = vpop.f32.mrb[0].mxu0
        %v3340 = vpop.f32.mrb[0].mxu0
        %v3341 = vadd.f32 %v3229, %v3340
        %v3342 = vpop.f32.mrb[0].mxu0
        %3343 = vmatprep.mubr.bf16.mxu0 0
        %3344 = vmatmul.mubr.bf16.gmra.mrb[0].mxu0 %v3204
        %v3345 = vpop.f32.mrb[0].mxu0
        %v3346 = vadd.f32 %v3229, %v3345
        %v3347 = vpop.f32.mrb[0].mxu0
        %v3348 = vpop.f32.mrb[0].mxu0
        %v3349 = vadd.f32 %v3229, %v3348
        %v3350 = vpop.f32.mrb[0].mxu0
        %3351 = vmatprep.mubr.bf16.mxu0 0
        %3352 = vmatmul.mubr.bf16.gmra.mrb[0].mxu0 %v3205
        %v3353 = vpop.f32.mrb[0].mxu0
        %v3354 = vadd.f32 %v3229, %v3353
        %v3355 = vpop.f32.mrb[0].mxu0
        %v3356 = vpop.f32.mrb[0].mxu0
        %v3357 = vadd.f32 %v3229, %v3356
        %v3358 = vpop.f32.mrb[0].mxu0
        %3359 = vmatprep.mubr.bf16.mxu0 0
        %3360 = vmatmul.mubr.bf16.gmra.mrb[0].mxu0 %v3206
        %v3361 = vpop.f32.mrb[0].mxu0
        %v3362 = vadd.f32 %v3229, %v3361
        %v3363 = vpop.f32.mrb[0].mxu0
        %v3364 = vpop.f32.mrb[0].mxu0
        %v3365 = vadd.f32 %v3229, %v3364
        %v3366 = vpop.f32.mrb[0].mxu0
        %3367 = vmatprep.mubr.bf16.mxu0 0
        %3368 = vmatmul.mubr.bf16.gmra.mrb[0].mxu0 %v3207
        %v3369 = vpop.f32.mrb[0].mxu0
        %v3370 = vadd.f32 %v3229, %v3369
        %v3371 = vpop.f32.mrb[0].mxu0
        %v3372 = vpop.f32.mrb[0].mxu0
        %v3373 = vadd.f32 %v3229, %v3372
        %v3374 = vpop.f32.mrb[0].mxu0
        %3375 = vdwg.mxu0
        %v3376 = vadd.f32 %v3314, %v543
        %v3377 = vadd.f32 %v3317, %v544
        %v3378 = vadd.f32 %v3322, %v545
        %v3379 = vadd.f32 %v3325, %v546
        %v3380 = vadd.f32 %v3330, %v547
        %v3381 = vadd.f32 %v3333, %v548
        %v3382 = vadd.f32 %v3338, %v549
        %v3383 = vadd.f32 %v3341, %v550
        %v3384 = vadd.f32 %v3346, %v551
        %v3385 = vadd.f32 %v3349, %v552
        %v3386 = vadd.f32 %v3354, %v553
        %v3387 = vadd.f32 %v3357, %v554
        %v3388 = vadd.f32 %v3362, %v555
        %v3389 = vadd.f32 %v3365, %v556
        %v3390 = vadd.f32 %v3370, %v557
        %v3391 = vadd.f32 %v3373, %v558
        %v3392 = vld [vmem:[%s7] sm:$0x1]
        %v3393 = vld [vmem:[%s8] sm:$0x1]
        %3394 = vadd.xlane.f32.xlu0 %v3376
        %v3395 = vpop.xlane.xlu0 %3394
        %3396 = vadd.xlane.f32.xlu0 %v3377
        %v3397 = vpop.xlane.xlu0 %3396
        %3398 = vadd.xlane.f32.xlu0 %v3378
        %v3399 = vpop.xlane.xlu0 %3398
        %3400 = vadd.xlane.f32.xlu0 %v3379
        %v3401 = vpop.xlane.xlu0 %3400
        %3402 = vadd.xlane.f32.xlu0 %v3380
        %v3403 = vpop.xlane.xlu0 %3402
        %3404 = vadd.xlane.f32.xlu0 %v3381
        %v3405 = vpop.xlane.xlu0 %3404
        %3406 = vadd.xlane.f32.xlu0 %v3382
        %v3407 = vpop.xlane.xlu0 %3406
        %3408 = vadd.xlane.f32.xlu0 %v3383
        %v3409 = vpop.xlane.xlu0 %3408
        %3410 = vadd.xlane.f32.xlu0 %v3384
        %v3411 = vpop.xlane.xlu0 %3410
        %3412 = vadd.xlane.f32.xlu0 %v3385
        %v3413 = vpop.xlane.xlu0 %3412
        %3414 = vadd.xlane.f32.xlu0 %v3386
        %v3415 = vpop.xlane.xlu0 %3414
        %3416 = vadd.xlane.f32.xlu0 %v3387
        %v3417 = vpop.xlane.xlu0 %3416
        %3418 = vadd.xlane.f32.xlu0 %v3388
        %v3419 = vpop.xlane.xlu0 %3418
        %3420 = vadd.xlane.f32.xlu0 %v3389
        %v3421 = vpop.xlane.xlu0 %3420
        %3422 = vadd.xlane.f32.xlu0 %v3390
        %v3423 = vpop.xlane.xlu0 %3422
        %3424 = vadd.xlane.f32.xlu0 %v3391
        %v3425 = vpop.xlane.xlu0 %3424
        %v3426 = vmul.f32 %v3395, %v593
        %v3427 = vmul.f32 %v3397, %v593
        %v3428 = vmul.f32 %v3399, %v593
        %v3429 = vmul.f32 %v3401, %v593
        %v3430 = vmul.f32 %v3403, %v593
        %v3431 = vmul.f32 %v3405, %v593
        %v3432 = vmul.f32 %v3407, %v593
        %v3433 = vmul.f32 %v3409, %v593
        %v3434 = vmul.f32 %v3411, %v593
        %v3435 = vmul.f32 %v3413, %v593
        %v3436 = vmul.f32 %v3415, %v593
        %v3437 = vmul.f32 %v3417, %v593
        %v3438 = vmul.f32 %v3419, %v593
        %v3439 = vmul.f32 %v3421, %v593
        %v3440 = vmul.f32 %v3423, %v593
        %v3441 = vmul.f32 %v3425, %v593
        %v3442 = vsub.f32 %v3376, %v3426
        %v3443 = vsub.f32 %v3377, %v3427
        %v3444 = vsub.f32 %v3378, %v3428
        %v3445 = vsub.f32 %v3379, %v3429
        %v3446 = vsub.f32 %v3380, %v3430
        %v3447 = vsub.f32 %v3381, %v3431
        %v3448 = vsub.f32 %v3382, %v3432
        %v3449 = vsub.f32 %v3383, %v3433
        %v3450 = vsub.f32 %v3384, %v3434
        %v3451 = vsub.f32 %v3385, %v3435
        %v3452 = vsub.f32 %v3386, %v3436
        %v3453 = vsub.f32 %v3387, %v3437
        %v3454 = vsub.f32 %v3388, %v3438
        %v3455 = vsub.f32 %v3389, %v3439
        %v3456 = vsub.f32 %v3390, %v3440
        %v3457 = vsub.f32 %v3391, %v3441
        %v3458 = vmul.f32 %v3442, %v3442
        %v3459 = vmul.f32 %v3443, %v3443
        %v3460 = vmul.f32 %v3444, %v3444
        %v3461 = vmul.f32 %v3445, %v3445
        %v3462 = vmul.f32 %v3446, %v3446
        %v3463 = vmul.f32 %v3447, %v3447
        %v3464 = vmul.f32 %v3448, %v3448
        %v3465 = vmul.f32 %v3449, %v3449
        %v3466 = vmul.f32 %v3450, %v3450
        %v3467 = vmul.f32 %v3451, %v3451
        %v3468 = vmul.f32 %v3452, %v3452
        %v3469 = vmul.f32 %v3453, %v3453
        %v3470 = vmul.f32 %v3454, %v3454
        %v3471 = vmul.f32 %v3455, %v3455
        %v3472 = vmul.f32 %v3456, %v3456
        %v3473 = vmul.f32 %v3457, %v3457
        %3474 = vadd.xlane.f32.xlu0 %v3458
        %v3475 = vpop.xlane.xlu0 %3474
        %3476 = vadd.xlane.f32.xlu0 %v3459
        %v3477 = vpop.xlane.xlu0 %3476
        %3478 = vadd.xlane.f32.xlu0 %v3460
        %v3479 = vpop.xlane.xlu0 %3478
        %3480 = vadd.xlane.f32.xlu0 %v3461
        %v3481 = vpop.xlane.xlu0 %3480
        %3482 = vadd.xlane.f32.xlu0 %v3462
        %v3483 = vpop.xlane.xlu0 %3482
        %3484 = vadd.xlane.f32.xlu0 %v3463
        %v3485 = vpop.xlane.xlu0 %3484
        %3486 = vadd.xlane.f32.xlu0 %v3464
        %v3487 = vpop.xlane.xlu0 %3486
        %3488 = vadd.xlane.f32.xlu0 %v3465
        %v3489 = vpop.xlane.xlu0 %3488
        %3490 = vadd.xlane.f32.xlu0 %v3466
        %v3491 = vpop.xlane.xlu0 %3490
        %3492 = vadd.xlane.f32.xlu0 %v3467
        %v3493 = vpop.xlane.xlu0 %3492
        %3494 = vadd.xlane.f32.xlu0 %v3468
        %v3495 = vpop.xlane.xlu0 %3494
        %3496 = vadd.xlane.f32.xlu0 %v3469
        %v3497 = vpop.xlane.xlu0 %3496
        %3498 = vadd.xlane.f32.xlu0 %v3470
        %v3499 = vpop.xlane.xlu0 %3498
        %3500 = vadd.xlane.f32.xlu0 %v3471
        %v3501 = vpop.xlane.xlu0 %3500
        %3502 = vadd.xlane.f32.xlu0 %v3472
        %v3503 = vpop.xlane.xlu0 %3502
        %3504 = vadd.xlane.f32.xlu0 %v3473
        %v3505 = vpop.xlane.xlu0 %3504
        %v3506 = vmul.f32 %v3475, %v593
        %v3507 = vmul.f32 %v3477, %v593
        %v3508 = vmul.f32 %v3479, %v593
        %v3509 = vmul.f32 %v3481, %v593
        %v3510 = vmul.f32 %v3483, %v593
        %v3511 = vmul.f32 %v3485, %v593
        %v3512 = vmul.f32 %v3487, %v593
        %v3513 = vmul.f32 %v3489, %v593
        %v3514 = vmul.f32 %v3491, %v593
        %v3515 = vmul.f32 %v3493, %v593
        %v3516 = vmul.f32 %v3495, %v593
        %v3517 = vmul.f32 %v3497, %v593
        %v3518 = vmul.f32 %v3499, %v593
        %v3519 = vmul.f32 %v3501, %v593
        %v3520 = vmul.f32 %v3503, %v593
        %v3521 = vmul.f32 %v3505, %v593
        %v3522 = vadd.f32 %v3506, 1e-05
        %v3523 = vadd.f32 %v3507, 1e-05
        %v3524 = vadd.f32 %v3508, 1e-05
        %v3525 = vadd.f32 %v3509, 1e-05
        %v3526 = vadd.f32 %v3510, 1e-05
        %v3527 = vadd.f32 %v3511, 1e-05
        %v3528 = vadd.f32 %v3512, 1e-05
        %v3529 = vadd.f32 %v3513, 1e-05
        %v3530 = vadd.f32 %v3514, 1e-05
        %v3531 = vadd.f32 %v3515, 1e-05
        %v3532 = vadd.f32 %v3516, 1e-05
        %v3533 = vadd.f32 %v3517, 1e-05
        %v3534 = vadd.f32 %v3518, 1e-05
        %v3535 = vadd.f32 %v3519, 1e-05
        %v3536 = vadd.f32 %v3520, 1e-05
        %v3537 = vadd.f32 %v3521, 1e-05
        %v3538 = vrsqrt.pop %v3522
        %v3539 = vrsqrt.pop %v3523
        %v3540 = vrsqrt.pop %v3524
        %v3541 = vrsqrt.pop %v3525
        %v3542 = vrsqrt.pop %v3526
        %v3543 = vrsqrt.pop %v3527
        %v3544 = vrsqrt.pop %v3528
        %v3545 = vrsqrt.pop %v3529
        %v3546 = vrsqrt.pop %v3530
        %v3547 = vrsqrt.pop %v3531
        %v3548 = vrsqrt.pop %v3532
        %v3549 = vrsqrt.pop %v3533
        %v3550 = vrsqrt.pop %v3534
        %v3551 = vrsqrt.pop %v3535
        %v3552 = vrsqrt.pop %v3536
        %v3553 = vrsqrt.pop %v3537
        %v3554 = vmul.f32 %v3442, %v3538
        %v3555 = vmul.f32 %v3443, %v3539
        %v3556 = vmul.f32 %v3444, %v3540
        %v3557 = vmul.f32 %v3445, %v3541
        %v3558 = vmul.f32 %v3446, %v3542
        %v3559 = vmul.f32 %v3447, %v3543
        %v3560 = vmul.f32 %v3448, %v3544
        %v3561 = vmul.f32 %v3449, %v3545
        %v3562 = vmul.f32 %v3450, %v3546
        %v3563 = vmul.f32 %v3451, %v3547
        %v3564 = vmul.f32 %v3452, %v3548
        %v3565 = vmul.f32 %v3453, %v3549
        %v3566 = vmul.f32 %v3454, %v3550
        %v3567 = vmul.f32 %v3455, %v3551
        %v3568 = vmul.f32 %v3456, %v3552
        %v3569 = vmul.f32 %v3457, %v3553
        %v3571 = vlaneseq
        %v3572 = vshrl.u32 %v3571, 7
        %v3573 = vsub.s32 0, %v3572
        %v3574 = vrot.slane %v3392, %v3573
        %v3576 = vmul.f32 %v3554, %v3574
        %v3577 = vmul.f32 %v3555, %v3574
        %v3578 = vmul.f32 %v3556, %v3574
        %v3579 = vmul.f32 %v3557, %v3574
        %v3580 = vmul.f32 %v3558, %v3574
        %v3581 = vmul.f32 %v3559, %v3574
        %v3582 = vmul.f32 %v3560, %v3574
        %v3583 = vmul.f32 %v3561, %v3574
        %v3584 = vmul.f32 %v3562, %v3574
        %v3585 = vmul.f32 %v3563, %v3574
        %v3586 = vmul.f32 %v3564, %v3574
        %v3587 = vmul.f32 %v3565, %v3574
        %v3588 = vmul.f32 %v3566, %v3574
        %v3589 = vmul.f32 %v3567, %v3574
        %v3590 = vmul.f32 %v3568, %v3574
        %v3591 = vmul.f32 %v3569, %v3574
        %v3593 = vlaneseq
        %v3594 = vshrl.u32 %v3593, 7
        %v3595 = vsub.s32 0, %v3594
        %v3596 = vrot.slane %v3393, %v3595
        %v3598 = vadd.f32 %v3576, %v3596
        %v3599 = vadd.f32 %v3577, %v3596
        %v3600 = vadd.f32 %v3578, %v3596
        %v3601 = vadd.f32 %v3579, %v3596
        %v3602 = vadd.f32 %v3580, %v3596
        %v3603 = vadd.f32 %v3581, %v3596
        %v3604 = vadd.f32 %v3582, %v3596
        %v3605 = vadd.f32 %v3583, %v3596
        %v3606 = vadd.f32 %v3584, %v3596
        %v3607 = vadd.f32 %v3585, %v3596
        %v3608 = vadd.f32 %v3586, %v3596
        %v3609 = vadd.f32 %v3587, %v3596
        %v3610 = vadd.f32 %v3588, %v3596
        %v3611 = vadd.f32 %v3589, %v3596
        %v3612 = vadd.f32 %v3590, %v3596
        %v3613 = vadd.f32 %v3591, %v3596
        %v3614 = vpack.c.bf16 %v3599, %v3598
        %v3615 = vpack.c.bf16 %v3601, %v3600
        %v3616 = vpack.c.bf16 %v3603, %v3602
        %v3617 = vpack.c.bf16 %v3605, %v3604
        %v3618 = vpack.c.bf16 %v3607, %v3606
        %v3619 = vpack.c.bf16 %v3609, %v3608
        %v3620 = vpack.c.bf16 %v3611, %v3610
        %v3621 = vpack.c.bf16 %v3613, %v3612
        %v3622 = vld [vmem:[#allocation12] sm:$0xff]
        %v3623 = vld [vmem:[#allocation12 + $0x8] sm:$0xff]
        %v3624 = vld [vmem:[#allocation12 + $0x10] sm:$0xff]
        %v3625 = vld [vmem:[#allocation12 + $0x18] sm:$0xff]
        %v3626 = vld [vmem:[#allocation12 + $0x20] sm:$0xff]
        %v3627 = vld [vmem:[#allocation12 + $0x28] sm:$0xff]
        %v3628 = vld [vmem:[#allocation12 + $0x30] sm:$0xff]
        %v3629 = vld [vmem:[#allocation12 + $0x38] sm:$0xff]
        %v3630 = vld [vmem:[#allocation12 + $0x40] sm:$0xff]
        %v3631 = vld [vmem:[#allocation12 + $0x48] sm:$0xff]
        %v3632 = vld [vmem:[#allocation12 + $0x50] sm:$0xff]
        %v3633 = vld [vmem:[#allocation12 + $0x58] sm:$0xff]
        %v3634 = vld [vmem:[#allocation12 + $0x60] sm:$0xff]
        %v3635 = vld [vmem:[#allocation12 + $0x68] sm:$0xff]
        %v3636 = vld [vmem:[#allocation12 + $0x70] sm:$0xff]
        %v3637 = vld [vmem:[#allocation12 + $0x78] sm:$0xff]
        %v3638 = vld [vmem:[#allocation12 + $0x80] sm:$0xff]
        %v3639 = vld [vmem:[#allocation12 + $0x88] sm:$0xff]
        %v3640 = vld [vmem:[#allocation12 + $0x90] sm:$0xff]
        %v3641 = vld [vmem:[#allocation12 + $0x98] sm:$0xff]
        %v3642 = vld [vmem:[#allocation12 + $0xa0] sm:$0xff]
        %v3643 = vld [vmem:[#allocation12 + $0xa8] sm:$0xff]
        %v3644 = vld [vmem:[#allocation12 + $0xb0] sm:$0xff]
        %v3645 = vld [vmem:[#allocation12 + $0xb8] sm:$0xff]
        %v3646 = vld [vmem:[#allocation12 + $0xc0] sm:$0xff]
        %v3647 = vld [vmem:[#allocation12 + $0xc8] sm:$0xff]
        %v3648 = vld [vmem:[#allocation12 + $0xd0] sm:$0xff]
        %v3649 = vld [vmem:[#allocation12 + $0xd8] sm:$0xff]
        %v3650 = vld [vmem:[#allocation12 + $0xe0] sm:$0xff]
        %v3651 = vld [vmem:[#allocation12 + $0xe8] sm:$0xff]
        %v3652 = vld [vmem:[#allocation12 + $0xf0] sm:$0xff]
        %v3653 = vld [vmem:[#allocation12 + $0xf8] sm:$0xff]
        %v3654 = vld [vmem:[%s10] sm:$0xf]
        %v3656 = vlaneseq
        %v3657 = vshrl.u32 %v3656, 7
        %v3658 = vsub.s32 0, %v3657
        %v3659 = vrot.slane %v3654, %v3658
        %v3660 = vlaneseq
        %v3661 = vshrl.u32 %v3660, 7
        %v3662 = vsub.s32 1, %v3661
        %v3663 = vrot.slane %v3654, %v3662
        %v3664 = vlaneseq
        %v3665 = vshrl.u32 %v3664, 7
        %v3666 = vsub.s32 2, %v3665
        %v3667 = vrot.slane %v3654, %v3666
        %v3668 = vlaneseq
        %v3669 = vshrl.u32 %v3668, 7
        %v3670 = vsub.s32 3, %v3669
        %v3671 = vrot.slane %v3654, %v3670
        %v3708 = vunpack.c.l.b16 %v3622
        %v3709 = vunpack.c.h.b16 %v3622
        %v3710 = vunpack.c.l.b16 %v3623
        %v3711 = vunpack.c.h.b16 %v3623
        %v3712 = vunpack.c.l.b16 %v3624
        %v3713 = vunpack.c.h.b16 %v3624
        %v3714 = vunpack.c.l.b16 %v3625
        %v3715 = vunpack.c.h.b16 %v3625
        %v3716 = vunpack.c.l.b16 %v3626
        %v3717 = vunpack.c.h.b16 %v3626
        %v3718 = vunpack.c.l.b16 %v3627
        %v3719 = vunpack.c.h.b16 %v3627
        %v3720 = vunpack.c.l.b16 %v3628
        %v3721 = vunpack.c.h.b16 %v3628
        %v3722 = vunpack.c.l.b16 %v3629
        %v3723 = vunpack.c.h.b16 %v3629
        %v3724 = vunpack.c.l.b16 %v3630
        %v3725 = vunpack.c.h.b16 %v3630
        %v3726 = vunpack.c.l.b16 %v3631
        %v3727 = vunpack.c.h.b16 %v3631
        %v3728 = vunpack.c.l.b16 %v3632
        %v3729 = vunpack.c.h.b16 %v3632
        %v3730 = vunpack.c.l.b16 %v3633
        %v3731 = vunpack.c.h.b16 %v3633
        %v3732 = vunpack.c.l.b16 %v3634
        %v3733 = vunpack.c.h.b16 %v3634
        %v3734 = vunpack.c.l.b16 %v3635
        %v3735 = vunpack.c.h.b16 %v3635
        %v3736 = vunpack.c.l.b16 %v3636
        %v3737 = vunpack.c.h.b16 %v3636
        %v3738 = vunpack.c.l.b16 %v3637
        %v3739 = vunpack.c.h.b16 %v3637
        %v3740 = vunpack.c.l.b16 %v3638
        %v3741 = vunpack.c.h.b16 %v3638
        %v3742 = vunpack.c.l.b16 %v3639
        %v3743 = vunpack.c.h.b16 %v3639
        %v3744 = vunpack.c.l.b16 %v3640
        %v3745 = vunpack.c.h.b16 %v3640
        %v3746 = vunpack.c.l.b16 %v3641
        %v3747 = vunpack.c.h.b16 %v3641
        %v3748 = vunpack.c.l.b16 %v3642
        %v3749 = vunpack.c.h.b16 %v3642
        %v3750 = vunpack.c.l.b16 %v3643
        %v3751 = vunpack.c.h.b16 %v3643
        %v3752 = vunpack.c.l.b16 %v3644
        %v3753 = vunpack.c.h.b16 %v3644
        %v3754 = vunpack.c.l.b16 %v3645
        %v3755 = vunpack.c.h.b16 %v3645
        %v3756 = vunpack.c.l.b16 %v3646
        %v3757 = vunpack.c.h.b16 %v3646
        %v3758 = vunpack.c.l.b16 %v3647
        %v3759 = vunpack.c.h.b16 %v3647
        %v3760 = vunpack.c.l.b16 %v3648
        %v3761 = vunpack.c.h.b16 %v3648
        %v3762 = vunpack.c.l.b16 %v3649
        %v3763 = vunpack.c.h.b16 %v3649
        %v3764 = vunpack.c.l.b16 %v3650
        %v3765 = vunpack.c.h.b16 %v3650
        %v3766 = vunpack.c.l.b16 %v3651
        %v3767 = vunpack.c.h.b16 %v3651
        %v3768 = vunpack.c.l.b16 %v3652
        %v3769 = vunpack.c.h.b16 %v3652
        %v3770 = vunpack.c.l.b16 %v3653
        %v3771 = vunpack.c.h.b16 %v3653
        %v3772 = vpack.c.b16 %v3712, %v3708
        %v3773 = vpack.c.b16 %v3713, %v3709
        %v3774 = vpack.c.b16 %v3714, %v3710
        %v3775 = vpack.c.b16 %v3715, %v3711
        %v3776 = vpack.c.b16 %v3720, %v3716
        %v3777 = vpack.c.b16 %v3721, %v3717
        %v3778 = vpack.c.b16 %v3722, %v3718
        %v3779 = vpack.c.b16 %v3723, %v3719
        %v3780 = vpack.c.b16 %v3728, %v3724
        %v3781 = vpack.c.b16 %v3729, %v3725
        %v3782 = vpack.c.b16 %v3730, %v3726
        %v3783 = vpack.c.b16 %v3731, %v3727
        %v3784 = vpack.c.b16 %v3736, %v3732
        %v3785 = vpack.c.b16 %v3737, %v3733
        %v3786 = vpack.c.b16 %v3738, %v3734
        %v3787 = vpack.c.b16 %v3739, %v3735
        %v3788 = vpack.c.b16 %v3744, %v3740
        %v3789 = vpack.c.b16 %v3745, %v3741
        %v3790 = vpack.c.b16 %v3746, %v3742
        %v3791 = vpack.c.b16 %v3747, %v3743
        %v3792 = vpack.c.b16 %v3752, %v3748
        %v3793 = vpack.c.b16 %v3753, %v3749
        %v3794 = vpack.c.b16 %v3754, %v3750
        %v3795 = vpack.c.b16 %v3755, %v3751
        %v3796 = vpack.c.b16 %v3760, %v3756
        %v3797 = vpack.c.b16 %v3761, %v3757
        %v3798 = vpack.c.b16 %v3762, %v3758
        %v3799 = vpack.c.b16 %v3763, %v3759
        %v3800 = vpack.c.b16 %v3768, %v3764
        %v3801 = vpack.c.b16 %v3769, %v3765
        %v3802 = vpack.c.b16 %v3770, %v3766
        %v3803 = vpack.c.b16 %v3771, %v3767
        %3836 = vmatprep.subr.bf16.mxu0 %v3773
        %3837 = vmatpush1.bf16.msra.mxu0 %v3772
        %3838 = vmatprep.subr.bf16.mxu0 %v3777
        %3839 = vmatpush1.bf16.msra.mxu0 %v3776
        %3840 = vmatprep.subr.bf16.mxu0 %v3781
        %3841 = vmatpush1.bf16.msra.mxu0 %v3780
        %3842 = vmatprep.subr.bf16.mxu0 %v3785
        %3843 = vmatpush1.bf16.msra.mxu0 %v3784
        %3844 = vmatprep.subr.bf16.mxu0 %v3789
        %3845 = vmatpush1.bf16.msra.mxu0 %v3788
        %3846 = vmatprep.subr.bf16.mxu0 %v3793
        %3847 = vmatpush1.bf16.msra.mxu0 %v3792
        %3848 = vmatprep.subr.bf16.mxu0 %v3797
        %3849 = vmatpush1.bf16.msra.mxu0 %v3796
        %3850 = vmatprep.subr.bf16.mxu0 %v3801
        %3851 = vmatpush1.bf16.msra.mxu0 %v3800
        %3852 = vmatprep.subr.bf16.mxu0 0
        %3853 = vmatpush1.bf16.msra.mxu0 0
        %3854 = vmatprep.subr.bf16.mxu0 0
        %3855 = vmatpush1.bf16.msra.mxu0 0
        %3856 = vmatprep.subr.bf16.mxu0 0
        %3857 = vmatpush1.bf16.msra.mxu0 0
        %3858 = vmatprep.subr.bf16.mxu0 0
        %3859 = vmatpush1.bf16.msra.mxu0 0
        %3860 = vmatprep.subr.bf16.mxu0 0
        %3861 = vmatpush1.bf16.msra.mxu0 0
        %3862 = vmatprep.subr.bf16.mxu0 0
        %3863 = vmatpush1.bf16.msra.mxu0 0
        %3864 = vmatprep.subr.bf16.mxu0 0
        %3865 = vmatpush1.bf16.msra.mxu0 0
        %3866 = vmatprep.subr.bf16.mxu0 0
        %3867 = vmatpush1.bf16.msra.mxu0 0
        %3868 = vmatprep.mubr.bf16.mxu0 0
        %3869 = vmatmul.mubr.bf16.gmra.mrb[0].mxu0 %v3614
        %v3870 = vpop.f32.mrb[0].mxu0
        %v3871 = vadd.f32 %v3659, %v3870
        %v3872 = vpop.f32.mrb[0].mxu0
        %v3873 = vadd.f32 %v3663, %v3872
        %v3874 = vpop.f32.mrb[0].mxu0
        %v3875 = vadd.f32 %v3659, %v3874
        %v3876 = vpop.f32.mrb[0].mxu0
        %v3877 = vadd.f32 %v3663, %v3876
        %3878 = vmatprep.mubr.bf16.mxu0 0
        %3879 = vmatmul.mubr.bf16.gmra.mrb[0].mxu0 %v3615
        %v3880 = vpop.f32.mrb[0].mxu0
        %v3881 = vadd.f32 %v3659, %v3880
        %v3882 = vpop.f32.mrb[0].mxu0
        %v3883 = vadd.f32 %v3663, %v3882
        %v3884 = vpop.f32.mrb[0].mxu0
        %v3885 = vadd.f32 %v3659, %v3884
        %v3886 = vpop.f32.mrb[0].mxu0
        %v3887 = vadd.f32 %v3663, %v3886
        %3888 = vmatprep.mubr.bf16.mxu0 0
        %3889 = vmatmul.mubr.bf16.gmra.mrb[0].mxu0 %v3616
        %v3890 = vpop.f32.mrb[0].mxu0
        %v3891 = vadd.f32 %v3659, %v3890
        %v3892 = vpop.f32.mrb[0].mxu0
        %v3893 = vadd.f32 %v3663, %v3892
        %v3894 = vpop.f32.mrb[0].mxu0
        %v3895 = vadd.f32 %v3659, %v3894
        %v3896 = vpop.f32.mrb[0].mxu0
        %v3897 = vadd.f32 %v3663, %v3896
        %3898 = vmatprep.mubr.bf16.mxu0 0
        %3899 = vmatmul.mubr.bf16.gmra.mrb[0].mxu0 %v3617
        %v3900 = vpop.f32.mrb[0].mxu0
        %v3901 = vadd.f32 %v3659, %v3900
        %v3902 = vpop.f32.mrb[0].mxu0
        %v3903 = vadd.f32 %v3663, %v3902
        %v3904 = vpop.f32.mrb[0].mxu0
        %v3905 = vadd.f32 %v3659, %v3904
        %v3906 = vpop.f32.mrb[0].mxu0
        %v3907 = vadd.f32 %v3663, %v3906
        %3908 = vmatprep.mubr.bf16.mxu0 0
        %3909 = vmatmul.mubr.bf16.gmra.mrb[0].mxu0 %v3618
        %v3910 = vpop.f32.mrb[0].mxu0
        %v3911 = vadd.f32 %v3659, %v3910
        %v3912 = vpop.f32.mrb[0].mxu0
        %v3913 = vadd.f32 %v3663, %v3912
        %v3914 = vpop.f32.mrb[0].mxu0
        %v3915 = vadd.f32 %v3659, %v3914
        %v3916 = vpop.f32.mrb[0].mxu0
        %v3917 = vadd.f32 %v3663, %v3916
        %3918 = vmatprep.mubr.bf16.mxu0 0
        %3919 = vmatmul.mubr.bf16.gmra.mrb[0].mxu0 %v3619
        %v3920 = vpop.f32.mrb[0].mxu0
        %v3921 = vadd.f32 %v3659, %v3920
        %v3922 = vpop.f32.mrb[0].mxu0
        %v3923 = vadd.f32 %v3663, %v3922
        %v3924 = vpop.f32.mrb[0].mxu0
        %v3925 = vadd.f32 %v3659, %v3924
        %v3926 = vpop.f32.mrb[0].mxu0
        %v3927 = vadd.f32 %v3663, %v3926
        %3928 = vmatprep.mubr.bf16.mxu0 0
        %3929 = vmatmul.mubr.bf16.gmra.mrb[0].mxu0 %v3620
        %v3930 = vpop.f32.mrb[0].mxu0
        %v3931 = vadd.f32 %v3659, %v3930
        %v3932 = vpop.f32.mrb[0].mxu0
        %v3933 = vadd.f32 %v3663, %v3932
        %v3934 = vpop.f32.mrb[0].mxu0
        %v3935 = vadd.f32 %v3659, %v3934
        %v3936 = vpop.f32.mrb[0].mxu0
        %v3937 = vadd.f32 %v3663, %v3936
        %3938 = vmatprep.mubr.bf16.mxu0 0
        %3939 = vmatmul.mubr.bf16.gmra.mrb[0].mxu0 %v3621
        %v3940 = vpop.f32.mrb[0].mxu0
        %v3941 = vadd.f32 %v3659, %v3940
        %v3942 = vpop.f32.mrb[0].mxu0
        %v3943 = vadd.f32 %v3663, %v3942
        %v3944 = vpop.f32.mrb[0].mxu0
        %v3945 = vadd.f32 %v3659, %v3944
        %v3946 = vpop.f32.mrb[0].mxu0
        %v3947 = vadd.f32 %v3663, %v3946
        %3948 = vdwg.mxu0
        %3949 = vmatprep.subr.bf16.mxu0 %v3775
        %3950 = vmatpush1.bf16.msra.mxu0 %v3774
        %3951 = vmatprep.subr.bf16.mxu0 %v3779
        %3952 = vmatpush1.bf16.msra.mxu0 %v3778
        %3953 = vmatprep.subr.bf16.mxu0 %v3783
        %3954 = vmatpush1.bf16.msra.mxu0 %v3782
        %3955 = vmatprep.subr.bf16.mxu0 %v3787
        %3956 = vmatpush1.bf16.msra.mxu0 %v3786
        %3957 = vmatprep.subr.bf16.mxu0 %v3791
        %3958 = vmatpush1.bf16.msra.mxu0 %v3790
        %3959 = vmatprep.subr.bf16.mxu0 %v3795
        %3960 = vmatpush1.bf16.msra.mxu0 %v3794
        %3961 = vmatprep.subr.bf16.mxu0 %v3799
        %3962 = vmatpush1.bf16.msra.mxu0 %v3798
        %3963 = vmatprep.subr.bf16.mxu0 %v3803
        %3964 = vmatpush1.bf16.msra.mxu0 %v3802
        %3965 = vmatprep.subr.bf16.mxu0 0
        %3966 = vmatpush1.bf16.msra.mxu0 0
        %3967 = vmatprep.subr.bf16.mxu0 0
        %3968 = vmatpush1.bf16.msra.mxu0 0
        %3969 = vmatprep.subr.bf16.mxu0 0
        %3970 = vmatpush1.bf16.msra.mxu0 0
        %3971 = vmatprep.subr.bf16.mxu0 0
        %3972 = vmatpush1.bf16.msra.mxu0 0
        %3973 = vmatprep.subr.bf16.mxu0 0
        %3974 = vmatpush1.bf16.msra.mxu0 0
        %3975 = vmatprep.subr.bf16.mxu0 0
        %3976 = vmatpush1.bf16.msra.mxu0 0
        %3977 = vmatprep.subr.bf16.mxu0 0
        %3978 = vmatpush1.bf16.msra.mxu0 0
        %3979 = vmatprep.subr.bf16.mxu0 0
        %3980 = vmatpush1.bf16.msra.mxu0 0
        %3981 = vmatprep.mubr.bf16.mxu0 0
        %3982 = vmatmul.mubr.bf16.gmra.mrb[0].mxu0 %v3614
        %v3983 = vpop.f32.mrb[0].mxu0
        %v3984 = vadd.f32 %v3667, %v3983
        %v3985 = vpop.f32.mrb[0].mxu0
        %v3986 = vadd.f32 %v3671, %v3985
        %v3987 = vpop.f32.mrb[0].mxu0
        %v3988 = vadd.f32 %v3667, %v3987
        %v3989 = vpop.f32.mrb[0].mxu0
        %v3990 = vadd.f32 %v3671, %v3989
        %3991 = vmatprep.mubr.bf16.mxu0 0
        %3992 = vmatmul.mubr.bf16.gmra.mrb[0].mxu0 %v3615
        %v3993 = vpop.f32.mrb[0].mxu0
        %v3994 = vadd.f32 %v3667, %v3993
        %v3995 = vpop.f32.mrb[0].mxu0
        %v3996 = vadd.f32 %v3671, %v3995
        %v3997 = vpop.f32.mrb[0].mxu0
        %v3998 = vadd.f32 %v3667, %v3997
        %v3999 = vpop.f32.mrb[0].mxu0
        %v4000 = vadd.f32 %v3671, %v3999
        %4001 = vmatprep.mubr.bf16.mxu0 0
        %4002 = vmatmul.mubr.bf16.gmra.mrb[0].mxu0 %v3616
        %v4003 = vpop.f32.mrb[0].mxu0
        %v4004 = vadd.f32 %v3667, %v4003
        %v4005 = vpop.f32.mrb[0].mxu0
        %v4006 = vadd.f32 %v3671, %v4005
        %v4007 = vpop.f32.mrb[0].mxu0
        %v4008 = vadd.f32 %v3667, %v4007
        %v4009 = vpop.f32.mrb[0].mxu0
        %v4010 = vadd.f32 %v3671, %v4009
        %4011 = vmatprep.mubr.bf16.mxu0 0
        %4012 = vmatmul.mubr.bf16.gmra.mrb[0].mxu0 %v3617
        %v4013 = vpop.f32.mrb[0].mxu0
        %v4014 = vadd.f32 %v3667, %v4013
        %v4015 = vpop.f32.mrb[0].mxu0
        %v4016 = vadd.f32 %v3671, %v4015
        %v4017 = vpop.f32.mrb[0].mxu0
        %v4018 = vadd.f32 %v3667, %v4017
        %v4019 = vpop.f32.mrb[0].mxu0
        %v4020 = vadd.f32 %v3671, %v4019
        %4021 = vmatprep.mubr.bf16.mxu0 0
        %4022 = vmatmul.mubr.bf16.gmra.mrb[0].mxu0 %v3618
        %v4023 = vpop.f32.mrb[0].mxu0
        %v4024 = vadd.f32 %v3667, %v4023
        %v4025 = vpop.f32.mrb[0].mxu0
        %v4026 = vadd.f32 %v3671, %v4025
        %v4027 = vpop.f32.mrb[0].mxu0
        %v4028 = vadd.f32 %v3667, %v4027
        %v4029 = vpop.f32.mrb[0].mxu0
        %v4030 = vadd.f32 %v3671, %v4029
        %4031 = vmatprep.mubr.bf16.mxu0 0
        %4032 = vmatmul.mubr.bf16.gmra.mrb[0].mxu0 %v3619
        %v4033 = vpop.f32.mrb[0].mxu0
        %v4034 = vadd.f32 %v3667, %v4033
        %v4035 = vpop.f32.mrb[0].mxu0
        %v4036 = vadd.f32 %v3671, %v4035
        %v4037 = vpop.f32.mrb[0].mxu0
        %v4038 = vadd.f32 %v3667, %v4037
        %v4039 = vpop.f32.mrb[0].mxu0
        %v4040 = vadd.f32 %v3671, %v4039
        %4041 = vmatprep.mubr.bf16.mxu0 0
        %4042 = vmatmul.mubr.bf16.gmra.mrb[0].mxu0 %v3620
        %v4043 = vpop.f32.mrb[0].mxu0
        %v4044 = vadd.f32 %v3667, %v4043
        %v4045 = vpop.f32.mrb[0].mxu0
        %v4046 = vadd.f32 %v3671, %v4045
        %v4047 = vpop.f32.mrb[0].mxu0
        %v4048 = vadd.f32 %v3667, %v4047
        %v4049 = vpop.f32.mrb[0].mxu0
        %v4050 = vadd.f32 %v3671, %v4049
        %4051 = vmatprep.mubr.bf16.mxu0 0
        %4052 = vmatmul.mubr.bf16.gmra.mrb[0].mxu0 %v3621
        %v4053 = vpop.f32.mrb[0].mxu0
        %v4054 = vadd.f32 %v3667, %v4053
        %v4055 = vpop.f32.mrb[0].mxu0
        %v4056 = vadd.f32 %v3671, %v4055
        %v4057 = vpop.f32.mrb[0].mxu0
        %v4058 = vadd.f32 %v3667, %v4057
        %v4059 = vpop.f32.mrb[0].mxu0
        %v4060 = vadd.f32 %v3671, %v4059
        %4061 = vdwg.mxu0
        %v4062 = vmul.f32 %v3871, 1.702
        %v4063 = vmul.f32 %v3873, 1.702
        %v4064 = vmul.f32 %v3984, 1.702
        %v4065 = vmul.f32 %v3986, 1.702
        %v4066 = vmul.f32 %v3875, 1.702
        %v4067 = vmul.f32 %v3877, 1.702
        %v4068 = vmul.f32 %v3988, 1.702
        %v4069 = vmul.f32 %v3990, 1.702
        %v4070 = vmul.f32 %v3881, 1.702
        %v4071 = vmul.f32 %v3883, 1.702
        %v4072 = vmul.f32 %v3994, 1.702
        %v4073 = vmul.f32 %v3996, 1.702
        %v4074 = vmul.f32 %v3885, 1.702
        %v4075 = vmul.f32 %v3887, 1.702
        %v4076 = vmul.f32 %v3998, 1.702
        %v4077 = vmul.f32 %v4000, 1.702
        %v4078 = vmul.f32 %v3891, 1.702
        %v4079 = vmul.f32 %v3893, 1.702
        %v4080 = vmul.f32 %v4004, 1.702
        %v4081 = vmul.f32 %v4006, 1.702
        %v4082 = vmul.f32 %v3895, 1.702
        %v4083 = vmul.f32 %v3897, 1.702
        %v4084 = vmul.f32 %v4008, 1.702
        %v4085 = vmul.f32 %v4010, 1.702
        %v4086 = vmul.f32 %v3901, 1.702
        %v4087 = vmul.f32 %v3903, 1.702
        %v4088 = vmul.f32 %v4014, 1.702
        %v4089 = vmul.f32 %v4016, 1.702
        %v4090 = vmul.f32 %v3905, 1.702
        %v4091 = vmul.f32 %v3907, 1.702
        %v4092 = vmul.f32 %v4018, 1.702
        %v4093 = vmul.f32 %v4020, 1.702
        %v4094 = vmul.f32 %v3911, 1.702
        %v4095 = vmul.f32 %v3913, 1.702
        %v4096 = vmul.f32 %v4024, 1.702
        %v4097 = vmul.f32 %v4026, 1.702
        %v4098 = vmul.f32 %v3915, 1.702
        %v4099 = vmul.f32 %v3917, 1.702
        %v4100 = vmul.f32 %v4028, 1.702
        %v4101 = vmul.f32 %v4030, 1.702
        %v4102 = vmul.f32 %v3921, 1.702
        %v4103 = vmul.f32 %v3923, 1.702
        %v4104 = vmul.f32 %v4034, 1.702
        %v4105 = vmul.f32 %v4036, 1.702
        %v4106 = vmul.f32 %v3925, 1.702
        %v4107 = vmul.f32 %v3927, 1.702
        %v4108 = vmul.f32 %v4038, 1.702
        %v4109 = vmul.f32 %v4040, 1.702
        %v4110 = vmul.f32 %v3931, 1.702
        %v4111 = vmul.f32 %v3933, 1.702
        %v4112 = vmul.f32 %v4044, 1.702
        %v4113 = vmul.f32 %v4046, 1.702
        %v4114 = vmul.f32 %v3935, 1.702
        %v4115 = vmul.f32 %v3937, 1.702
        %v4116 = vmul.f32 %v4048, 1.702
        %v4117 = vmul.f32 %v4050, 1.702
        %v4118 = vmul.f32 %v3941, 1.702
        %v4119 = vmul.f32 %v3943, 1.702
        %v4120 = vmul.f32 %v4054, 1.702
        %v4121 = vmul.f32 %v4056, 1.702
        %v4122 = vmul.f32 %v3945, 1.702
        %v4123 = vmul.f32 %v3947, 1.702
        %v4124 = vmul.f32 %v4058, 1.702
        %v4125 = vmul.f32 %v4060, 1.702
        %v4126 = vxor.u32 %v4062, 2147483648
        %v4127 = vxor.u32 %v4063, 2147483648
        %v4128 = vxor.u32 %v4064, 2147483648
        %v4129 = vxor.u32 %v4065, 2147483648
        %v4130 = vxor.u32 %v4066, 2147483648
        %v4131 = vxor.u32 %v4067, 2147483648
        %v4132 = vxor.u32 %v4068, 2147483648
        %v4133 = vxor.u32 %v4069, 2147483648
        %v4134 = vxor.u32 %v4070, 2147483648
        %v4135 = vxor.u32 %v4071, 2147483648
        %v4136 = vxor.u32 %v4072, 2147483648
        %v4137 = vxor.u32 %v4073, 2147483648
        %v4138 = vxor.u32 %v4074, 2147483648
        %v4139 = vxor.u32 %v4075, 2147483648
        %v4140 = vxor.u32 %v4076, 2147483648
        %v4141 = vxor.u32 %v4077, 2147483648
        %v4142 = vxor.u32 %v4078, 2147483648
        %v4143 = vxor.u32 %v4079, 2147483648
        %v4144 = vxor.u32 %v4080, 2147483648
        %v4145 = vxor.u32 %v4081, 2147483648
        %v4146 = vxor.u32 %v4082, 2147483648
        %v4147 = vxor.u32 %v4083, 2147483648
        %v4148 = vxor.u32 %v4084, 2147483648
        %v4149 = vxor.u32 %v4085, 2147483648
        %v4150 = vxor.u32 %v4086, 2147483648
        %v4151 = vxor.u32 %v4087, 2147483648
        %v4152 = vxor.u32 %v4088, 2147483648
        %v4153 = vxor.u32 %v4089, 2147483648
        %v4154 = vxor.u32 %v4090, 2147483648
        %v4155 = vxor.u32 %v4091, 2147483648
        %v4156 = vxor.u32 %v4092, 2147483648
        %v4157 = vxor.u32 %v4093, 2147483648
        %v4158 = vxor.u32 %v4094, 2147483648
        %v4159 = vxor.u32 %v4095, 2147483648
        %v4160 = vxor.u32 %v4096, 2147483648
        %v4161 = vxor.u32 %v4097, 2147483648
        %v4162 = vxor.u32 %v4098, 2147483648
        %v4163 = vxor.u32 %v4099, 2147483648
        %v4164 = vxor.u32 %v4100, 2147483648
        %v4165 = vxor.u32 %v4101, 2147483648
        %v4166 = vxor.u32 %v4102, 2147483648
        %v4167 = vxor.u32 %v4103, 2147483648
        %v4168 = vxor.u32 %v4104, 2147483648
        %v4169 = vxor.u32 %v4105, 2147483648
        %v4170 = vxor.u32 %v4106, 2147483648
        %v4171 = vxor.u32 %v4107, 2147483648
        %v4172 = vxor.u32 %v4108, 2147483648
        %v4173 = vxor.u32 %v4109, 2147483648
        %v4174 = vxor.u32 %v4110, 2147483648
        %v4175 = vxor.u32 %v4111, 2147483648
        %v4176 = vxor.u32 %v4112, 2147483648
        %v4177 = vxor.u32 %v4113, 2147483648
        %v4178 = vxor.u32 %v4114, 2147483648
        %v4179 = vxor.u32 %v4115, 2147483648
        %v4180 = vxor.u32 %v4116, 2147483648
        %v4181 = vxor.u32 %v4117, 2147483648
        %v4182 = vxor.u32 %v4118, 2147483648
        %v4183 = vxor.u32 %v4119, 2147483648
        %v4184 = vxor.u32 %v4120, 2147483648
        %v4185 = vxor.u32 %v4121, 2147483648
        %v4186 = vxor.u32 %v4122, 2147483648
        %v4187 = vxor.u32 %v4123, 2147483648
        %v4188 = vxor.u32 %v4124, 2147483648
        %v4189 = vxor.u32 %v4125, 2147483648
        %v4190 = vmul.f32 %v4126, 1.442695
        %v4191 = vpow.pop %v4190
        %v4192 = vmul.f32 %v4127, 1.442695
        %v4193 = vpow.pop %v4192
        %v4194 = vmul.f32 %v4128, 1.442695
        %v4195 = vpow.pop %v4194
        %v4196 = vmul.f32 %v4129, 1.442695
        %v4197 = vpow.pop %v4196
        %v4198 = vmul.f32 %v4130, 1.442695
        %v4199 = vpow.pop %v4198
        %v4200 = vmul.f32 %v4131, 1.442695
        %v4201 = vpow.pop %v4200
        %v4202 = vmul.f32 %v4132, 1.442695
        %v4203 = vpow.pop %v4202
        %v4204 = vmul.f32 %v4133, 1.442695
        %v4205 = vpow.pop %v4204
        %v4206 = vmul.f32 %v4134, 1.442695
        %v4207 = vpow.pop %v4206
        %v4208 = vmul.f32 %v4135, 1.442695
        %v4209 = vpow.pop %v4208
        %v4210 = vmul.f32 %v4136, 1.442695
        %v4211 = vpow.pop %v4210
        %v4212 = vmul.f32 %v4137, 1.442695
        %v4213 = vpow.pop %v4212
        %v4214 = vmul.f32 %v4138, 1.442695
        %v4215 = vpow.pop %v4214
        %v4216 = vmul.f32 %v4139, 1.442695
        %v4217 = vpow.pop %v4216
        %v4218 = vmul.f32 %v4140, 1.442695
        %v4219 = vpow.pop %v4218
        %v4220 = vmul.f32 %v4141, 1.442695
        %v4221 = vpow.pop %v4220
        %v4222 = vmul.f32 %v4142, 1.442695
        %v4223 = vpow.pop %v4222
        %v4224 = vmul.f32 %v4143, 1.442695
        %v4225 = vpow.pop %v4224
        %v4226 = vmul.f32 %v4144, 1.442695
        %v4227 = vpow.pop %v4226
        %v4228 = vmul.f32 %v4145, 1.442695
        %v4229 = vpow.pop %v4228
        %v4230 = vmul.f32 %v4146, 1.442695
        %v4231 = vpow.pop %v4230
        %v4232 = vmul.f32 %v4147, 1.442695
        %v4233 = vpow.pop %v4232
        %v4234 = vmul.f32 %v4148, 1.442695
        %v4235 = vpow.pop %v4234
        %v4236 = vmul.f32 %v4149, 1.442695
        %v4237 = vpow.pop %v4236
        %v4238 = vmul.f32 %v4150, 1.442695
        %v4239 = vpow.pop %v4238
        %v4240 = vmul.f32 %v4151, 1.442695
        %v4241 = vpow.pop %v4240
        %v4242 = vmul.f32 %v4152, 1.442695
        %v4243 = vpow.pop %v4242
        %v4244 = vmul.f32 %v4153, 1.442695
        %v4245 = vpow.pop %v4244
        %v4246 = vmul.f32 %v4154, 1.442695
        %v4247 = vpow.pop %v4246
        %v4248 = vmul.f32 %v4155, 1.442695
        %v4249 = vpow.pop %v4248
        %v4250 = vmul.f32 %v4156, 1.442695
        %v4251 = vpow.pop %v4250
        %v4252 = vmul.f32 %v4157, 1.442695
        %v4253 = vpow.pop %v4252
        %v4254 = vmul.f32 %v4158, 1.442695
        %v4255 = vpow.pop %v4254
        %v4256 = vmul.f32 %v4159, 1.442695
        %v4257 = vpow.pop %v4256
        %v4258 = vmul.f32 %v4160, 1.442695
        %v4259 = vpow.pop %v4258
        %v4260 = vmul.f32 %v4161, 1.442695
        %v4261 = vpow.pop %v4260
        %v4262 = vmul.f32 %v4162, 1.442695
        %v4263 = vpow.pop %v4262
        %v4264 = vmul.f32 %v4163, 1.442695
        %v4265 = vpow.pop %v4264
        %v4266 = vmul.f32 %v4164, 1.442695
        %v4267 = vpow.pop %v4266
        %v4268 = vmul.f32 %v4165, 1.442695
        %v4269 = vpow.pop %v4268
        %v4270 = vmul.f32 %v4166, 1.442695
        %v4271 = vpow.pop %v4270
        %v4272 = vmul.f32 %v4167, 1.442695
        %v4273 = vpow.pop %v4272
        %v4274 = vmul.f32 %v4168, 1.442695
        %v4275 = vpow.pop %v4274
        %v4276 = vmul.f32 %v4169, 1.442695
        %v4277 = vpow.pop %v4276
        %v4278 = vmul.f32 %v4170, 1.442695
        %v4279 = vpow.pop %v4278
        %v4280 = vmul.f32 %v4171, 1.442695
        %v4281 = vpow.pop %v4280
        %v4282 = vmul.f32 %v4172, 1.442695
        %v4283 = vpow.pop %v4282
        %v4284 = vmul.f32 %v4173, 1.442695
        %v4285 = vpow.pop %v4284
        %v4286 = vmul.f32 %v4174, 1.442695
        %v4287 = vpow.pop %v4286
        %v4288 = vmul.f32 %v4175, 1.442695
        %v4289 = vpow.pop %v4288
        %v4290 = vmul.f32 %v4176, 1.442695
        %v4291 = vpow.pop %v4290
        %v4292 = vmul.f32 %v4177, 1.442695
        %v4293 = vpow.pop %v4292
        %v4294 = vmul.f32 %v4178, 1.442695
        %v4295 = vpow.pop %v4294
        %v4296 = vmul.f32 %v4179, 1.442695
        %v4297 = vpow.pop %v4296
        %v4298 = vmul.f32 %v4180, 1.442695
        %v4299 = vpow.pop %v4298
        %v4300 = vmul.f32 %v4181, 1.442695
        %v4301 = vpow.pop %v4300
        %v4302 = vmul.f32 %v4182, 1.442695
        %v4303 = vpow.pop %v4302
        %v4304 = vmul.f32 %v4183, 1.442695
        %v4305 = vpow.pop %v4304
        %v4306 = vmul.f32 %v4184, 1.442695
        %v4307 = vpow.pop %v4306
        %v4308 = vmul.f32 %v4185, 1.442695
        %v4309 = vpow.pop %v4308
        %v4310 = vmul.f32 %v4186, 1.442695
        %v4311 = vpow.pop %v4310
        %v4312 = vmul.f32 %v4187, 1.442695
        %v4313 = vpow.pop %v4312
        %v4314 = vmul.f32 %v4188, 1.442695
        %v4315 = vpow.pop %v4314
        %v4316 = vmul.f32 %v4189, 1.442695
        %v4317 = vpow.pop %v4316
        %v4318 = vadd.f32 %v4191, 1.0
        %v4319 = vadd.f32 %v4193, 1.0
        %v4320 = vadd.f32 %v4195, 1.0
        %v4321 = vadd.f32 %v4197, 1.0
        %v4322 = vadd.f32 %v4199, 1.0
        %v4323 = vadd.f32 %v4201, 1.0
        %v4324 = vadd.f32 %v4203, 1.0
        %v4325 = vadd.f32 %v4205, 1.0
        %v4326 = vadd.f32 %v4207, 1.0
        %v4327 = vadd.f32 %v4209, 1.0
        %v4328 = vadd.f32 %v4211, 1.0
        %v4329 = vadd.f32 %v4213, 1.0
        %v4330 = vadd.f32 %v4215, 1.0
        %v4331 = vadd.f32 %v4217, 1.0
        %v4332 = vadd.f32 %v4219, 1.0
        %v4333 = vadd.f32 %v4221, 1.0
        %v4334 = vadd.f32 %v4223, 1.0
        %v4335 = vadd.f32 %v4225, 1.0
        %v4336 = vadd.f32 %v4227, 1.0
        %v4337 = vadd.f32 %v4229, 1.0
        %v4338 = vadd.f32 %v4231, 1.0
        %v4339 = vadd.f32 %v4233, 1.0
        %v4340 = vadd.f32 %v4235, 1.0
        %v4341 = vadd.f32 %v4237, 1.0
        %v4342 = vadd.f32 %v4239, 1.0
        %v4343 = vadd.f32 %v4241, 1.0
        %v4344 = vadd.f32 %v4243, 1.0
        %v4345 = vadd.f32 %v4245, 1.0
        %v4346 = vadd.f32 %v4247, 1.0
        %v4347 = vadd.f32 %v4249, 1.0
        %v4348 = vadd.f32 %v4251, 1.0
        %v4349 = vadd.f32 %v4253, 1.0
        %v4350 = vadd.f32 %v4255, 1.0
        %v4351 = vadd.f32 %v4257, 1.0
        %v4352 = vadd.f32 %v4259, 1.0
        %v4353 = vadd.f32 %v4261, 1.0
        %v4354 = vadd.f32 %v4263, 1.0
        %v4355 = vadd.f32 %v4265, 1.0
        %v4356 = vadd.f32 %v4267, 1.0
        %v4357 = vadd.f32 %v4269, 1.0
        %v4358 = vadd.f32 %v4271, 1.0
        %v4359 = vadd.f32 %v4273, 1.0
        %v4360 = vadd.f32 %v4275, 1.0
        %v4361 = vadd.f32 %v4277, 1.0
        %v4362 = vadd.f32 %v4279, 1.0
        %v4363 = vadd.f32 %v4281, 1.0
        %v4364 = vadd.f32 %v4283, 1.0
        %v4365 = vadd.f32 %v4285, 1.0
        %v4366 = vadd.f32 %v4287, 1.0
        %v4367 = vadd.f32 %v4289, 1.0
        %v4368 = vadd.f32 %v4291, 1.0
        %v4369 = vadd.f32 %v4293, 1.0
        %v4370 = vadd.f32 %v4295, 1.0
        %v4371 = vadd.f32 %v4297, 1.0
        %v4372 = vadd.f32 %v4299, 1.0
        %v4373 = vadd.f32 %v4301, 1.0
        %v4374 = vadd.f32 %v4303, 1.0
        %v4375 = vadd.f32 %v4305, 1.0
        %v4376 = vadd.f32 %v4307, 1.0
        %v4377 = vadd.f32 %v4309, 1.0
        %v4378 = vadd.f32 %v4311, 1.0
        %v4379 = vadd.f32 %v4313, 1.0
        %v4380 = vadd.f32 %v4315, 1.0
        %v4381 = vadd.f32 %v4317, 1.0
        %v4382 = vrcp.pop %v4318
        %v4383 = vmul.f32 1.0, %v4382
        %v4384 = vrcp.pop %v4319
        %v4385 = vmul.f32 1.0, %v4384
        %v4386 = vrcp.pop %v4320
        %v4387 = vmul.f32 1.0, %v4386
        %v4388 = vrcp.pop %v4321
        %v4389 = vmul.f32 1.0, %v4388
        %v4390 = vrcp.pop %v4322
        %v4391 = vmul.f32 1.0, %v4390
        %v4392 = vrcp.pop %v4323
        %v4393 = vmul.f32 1.0, %v4392
        %v4394 = vrcp.pop %v4324
        %v4395 = vmul.f32 1.0, %v4394
        %v4396 = vrcp.pop %v4325
        %v4397 = vmul.f32 1.0, %v4396
        %v4398 = vrcp.pop %v4326
        %v4399 = vmul.f32 1.0, %v4398
        %v4400 = vrcp.pop %v4327
        %v4401 = vmul.f32 1.0, %v4400
        %v4402 = vrcp.pop %v4328
        %v4403 = vmul.f32 1.0, %v4402
        %v4404 = vrcp.pop %v4329
        %v4405 = vmul.f32 1.0, %v4404
        %v4406 = vrcp.pop %v4330
        %v4407 = vmul.f32 1.0, %v4406
        %v4408 = vrcp.pop %v4331
        %v4409 = vmul.f32 1.0, %v4408
        %v4410 = vrcp.pop %v4332
        %v4411 = vmul.f32 1.0, %v4410
        %v4412 = vrcp.pop %v4333
        %v4413 = vmul.f32 1.0, %v4412
        %v4414 = vrcp.pop %v4334
        %v4415 = vmul.f32 1.0, %v4414
        %v4416 = vrcp.pop %v4335
        %v4417 = vmul.f32 1.0, %v4416
        %v4418 = vrcp.pop %v4336
        %v4419 = vmul.f32 1.0, %v4418
        %v4420 = vrcp.pop %v4337
        %v4421 = vmul.f32 1.0, %v4420
        %v4422 = vrcp.pop %v4338
        %v4423 = vmul.f32 1.0, %v4422
        %v4424 = vrcp.pop %v4339
        %v4425 = vmul.f32 1.0, %v4424
        %v4426 = vrcp.pop %v4340
        %v4427 = vmul.f32 1.0, %v4426
        %v4428 = vrcp.pop %v4341
        %v4429 = vmul.f32 1.0, %v4428
        %v4430 = vrcp.pop %v4342
        %v4431 = vmul.f32 1.0, %v4430
        %v4432 = vrcp.pop %v4343
        %v4433 = vmul.f32 1.0, %v4432
        %v4434 = vrcp.pop %v4344
        %v4435 = vmul.f32 1.0, %v4434
        %v4436 = vrcp.pop %v4345
        %v4437 = vmul.f32 1.0, %v4436
        %v4438 = vrcp.pop %v4346
        %v4439 = vmul.f32 1.0, %v4438
        %v4440 = vrcp.pop %v4347
        %v4441 = vmul.f32 1.0, %v4440
        %v4442 = vrcp.pop %v4348
        %v4443 = vmul.f32 1.0, %v4442
        %v4444 = vrcp.pop %v4349
        %v4445 = vmul.f32 1.0, %v4444
        %v4446 = vrcp.pop %v4350
        %v4447 = vmul.f32 1.0, %v4446
        %v4448 = vrcp.pop %v4351
        %v4449 = vmul.f32 1.0, %v4448
        %v4450 = vrcp.pop %v4352
        %v4451 = vmul.f32 1.0, %v4450
        %v4452 = vrcp.pop %v4353
        %v4453 = vmul.f32 1.0, %v4452
        %v4454 = vrcp.pop %v4354
        %v4455 = vmul.f32 1.0, %v4454
        %v4456 = vrcp.pop %v4355
        %v4457 = vmul.f32 1.0, %v4456
        %v4458 = vrcp.pop %v4356
        %v4459 = vmul.f32 1.0, %v4458
        %v4460 = vrcp.pop %v4357
        %v4461 = vmul.f32 1.0, %v4460
        %v4462 = vrcp.pop %v4358
        %v4463 = vmul.f32 1.0, %v4462
        %v4464 = vrcp.pop %v4359
        %v4465 = vmul.f32 1.0, %v4464
        %v4466 = vrcp.pop %v4360
        %v4467 = vmul.f32 1.0, %v4466
        %v4468 = vrcp.pop %v4361
        %v4469 = vmul.f32 1.0, %v4468
        %v4470 = vrcp.pop %v4362
        %v4471 = vmul.f32 1.0, %v4470
        %v4472 = vrcp.pop %v4363
        %v4473 = vmul.f32 1.0, %v4472
        %v4474 = vrcp.pop %v4364
        %v4475 = vmul.f32 1.0, %v4474
        %v4476 = vrcp.pop %v4365
        %v4477 = vmul.f32 1.0, %v4476
        %v4478 = vrcp.pop %v4366
        %v4479 = vmul.f32 1.0, %v4478
        %v4480 = vrcp.pop %v4367
        %v4481 = vmul.f32 1.0, %v4480
        %v4482 = vrcp.pop %v4368
        %v4483 = vmul.f32 1.0, %v4482
        %v4484 = vrcp.pop %v4369
        %v4485 = vmul.f32 1.0, %v4484
        %v4486 = vrcp.pop %v4370
        %v4487 = vmul.f32 1.0, %v4486
        %v4488 = vrcp.pop %v4371
        %v4489 = vmul.f32 1.0, %v4488
        %v4490 = vrcp.pop %v4372
        %v4491 = vmul.f32 1.0, %v4490
        %v4492 = vrcp.pop %v4373
        %v4493 = vmul.f32 1.0, %v4492
        %v4494 = vrcp.pop %v4374
        %v4495 = vmul.f32 1.0, %v4494
        %v4496 = vrcp.pop %v4375
        %v4497 = vmul.f32 1.0, %v4496
        %v4498 = vrcp.pop %v4376
        %v4499 = vmul.f32 1.0, %v4498
        %v4500 = vrcp.pop %v4377
        %v4501 = vmul.f32 1.0, %v4500
        %v4502 = vrcp.pop %v4378
        %v4503 = vmul.f32 1.0, %v4502
        %v4504 = vrcp.pop %v4379
        %v4505 = vmul.f32 1.0, %v4504
        %v4506 = vrcp.pop %v4380
        %v4507 = vmul.f32 1.0, %v4506
        %v4508 = vrcp.pop %v4381
        %v4509 = vmul.f32 1.0, %v4508
        %v4510 = vmul.f32 %v3871, %v4383
        %v4511 = vmul.f32 %v3873, %v4385
        %v4512 = vmul.f32 %v3984, %v4387
        %v4513 = vmul.f32 %v3986, %v4389
        %v4514 = vmul.f32 %v3875, %v4391
        %v4515 = vmul.f32 %v3877, %v4393
        %v4516 = vmul.f32 %v3988, %v4395
        %v4517 = vmul.f32 %v3990, %v4397
        %v4518 = vmul.f32 %v3881, %v4399
        %v4519 = vmul.f32 %v3883, %v4401
        %v4520 = vmul.f32 %v3994, %v4403
        %v4521 = vmul.f32 %v3996, %v4405
        %v4522 = vmul.f32 %v3885, %v4407
        %v4523 = vmul.f32 %v3887, %v4409
        %v4524 = vmul.f32 %v3998, %v4411
        %v4525 = vmul.f32 %v4000, %v4413
        %v4526 = vmul.f32 %v3891, %v4415
        %v4527 = vmul.f32 %v3893, %v4417
        %v4528 = vmul.f32 %v4004, %v4419
        %v4529 = vmul.f32 %v4006, %v4421
        %v4530 = vmul.f32 %v3895, %v4423
        %v4531 = vmul.f32 %v3897, %v4425
        %v4532 = vmul.f32 %v4008, %v4427
        %v4533 = vmul.f32 %v4010, %v4429
        %v4534 = vmul.f32 %v3901, %v4431
        %v4535 = vmul.f32 %v3903, %v4433
        %v4536 = vmul.f32 %v4014, %v4435
        %v4537 = vmul.f32 %v4016, %v4437
        %v4538 = vmul.f32 %v3905, %v4439
        %v4539 = vmul.f32 %v3907, %v4441
        %v4540 = vmul.f32 %v4018, %v4443
        %v4541 = vmul.f32 %v4020, %v4445
        %v4542 = vmul.f32 %v3911, %v4447
        %v4543 = vmul.f32 %v3913, %v4449
        %v4544 = vmul.f32 %v4024, %v4451
        %v4545 = vmul.f32 %v4026, %v4453
        %v4546 = vmul.f32 %v3915, %v4455
        %v4547 = vmul.f32 %v3917, %v4457
        %v4548 = vmul.f32 %v4028, %v4459
        %v4549 = vmul.f32 %v4030, %v4461
        %v4550 = vmul.f32 %v3921, %v4463
        %v4551 = vmul.f32 %v3923, %v4465
        %v4552 = vmul.f32 %v4034, %v4467
        %v4553 = vmul.f32 %v4036, %v4469
        %v4554 = vmul.f32 %v3925, %v4471
        %v4555 = vmul.f32 %v3927, %v4473
        %v4556 = vmul.f32 %v4038, %v4475
        %v4557 = vmul.f32 %v4040, %v4477
        %v4558 = vmul.f32 %v3931, %v4479
        %v4559 = vmul.f32 %v3933, %v4481
        %v4560 = vmul.f32 %v4044, %v4483
        %v4561 = vmul.f32 %v4046, %v4485
        %v4562 = vmul.f32 %v3935, %v4487
        %v4563 = vmul.f32 %v3937, %v4489
        %v4564 = vmul.f32 %v4048, %v4491
        %v4565 = vmul.f32 %v4050, %v4493
        %v4566 = vmul.f32 %v3941, %v4495
        %v4567 = vmul.f32 %v3943, %v4497
        %v4568 = vmul.f32 %v4054, %v4499
        %v4569 = vmul.f32 %v4056, %v4501
        %v4570 = vmul.f32 %v3945, %v4503
        %v4571 = vmul.f32 %v3947, %v4505
        %v4572 = vmul.f32 %v4058, %v4507
        %v4573 = vmul.f32 %v4060, %v4509
        %v4574 = vpack.c.bf16 %v4514, %v4510
        %v4575 = vpack.c.bf16 %v4515, %v4511
        %v4576 = vpack.c.bf16 %v4516, %v4512
        %v4577 = vpack.c.bf16 %v4517, %v4513
        %v4578 = vpack.c.bf16 %v4522, %v4518
        %v4579 = vpack.c.bf16 %v4523, %v4519
        %v4580 = vpack.c.bf16 %v4524, %v4520
        %v4581 = vpack.c.bf16 %v4525, %v4521
        %v4582 = vpack.c.bf16 %v4530, %v4526
        %v4583 = vpack.c.bf16 %v4531, %v4527
        %v4584 = vpack.c.bf16 %v4532, %v4528
        %v4585 = vpack.c.bf16 %v4533, %v4529
        %v4586 = vpack.c.bf16 %v4538, %v4534
        %v4587 = vpack.c.bf16 %v4539, %v4535
        %v4588 = vpack.c.bf16 %v4540, %v4536
        %v4589 = vpack.c.bf16 %v4541, %v4537
        %v4590 = vpack.c.bf16 %v4546, %v4542
        %v4591 = vpack.c.bf16 %v4547, %v4543
        %v4592 = vpack.c.bf16 %v4548, %v4544
        %v4593 = vpack.c.bf16 %v4549, %v4545
        %v4594 = vpack.c.bf16 %v4554, %v4550
        %v4595 = vpack.c.bf16 %v4555, %v4551
        %v4596 = vpack.c.bf16 %v4556, %v4552
        %v4597 = vpack.c.bf16 %v4557, %v4553
        %v4598 = vpack.c.bf16 %v4562, %v4558
        %v4599 = vpack.c.bf16 %v4563, %v4559
        %v4600 = vpack.c.bf16 %v4564, %v4560
        %v4601 = vpack.c.bf16 %v4565, %v4561
        %v4602 = vpack.c.bf16 %v4570, %v4566
        %v4603 = vpack.c.bf16 %v4571, %v4567
        %v4604 = vpack.c.bf16 %v4572, %v4568
        %v4605 = vpack.c.bf16 %v4573, %v4569
        %v4606 = vld [vmem:[#allocation14] sm:$0xf]
        %v4607 = vld [vmem:[#allocation14 + $0x4] sm:$0xf]
        %v4608 = vld [vmem:[#allocation14 + $0x8] sm:$0xf]
        %v4609 = vld [vmem:[#allocation14 + $0xc] sm:$0xf]
        %v4610 = vld [vmem:[#allocation14 + $0x10] sm:$0xf]
        %v4611 = vld [vmem:[#allocation14 + $0x14] sm:$0xf]
        %v4612 = vld [vmem:[#allocation14 + $0x18] sm:$0xf]
        %v4613 = vld [vmem:[#allocation14 + $0x1c] sm:$0xf]
        %v4614 = vld [vmem:[#allocation14 + $0x20] sm:$0xf]
        %v4615 = vld [vmem:[#allocation14 + $0x24] sm:$0xf]
        %v4616 = vld [vmem:[#allocation14 + $0x28] sm:$0xf]
        %v4617 = vld [vmem:[#allocation14 + $0x2c] sm:$0xf]
        %v4618 = vld [vmem:[#allocation14 + $0x30] sm:$0xf]
        %v4619 = vld [vmem:[#allocation14 + $0x34] sm:$0xf]
        %v4620 = vld [vmem:[#allocation14 + $0x38] sm:$0xf]
        %v4621 = vld [vmem:[#allocation14 + $0x3c] sm:$0xf]
        %v4622 = vld [vmem:[#allocation14 + $0x40] sm:$0xf]
        %v4623 = vld [vmem:[#allocation14 + $0x44] sm:$0xf]
        %v4624 = vld [vmem:[#allocation14 + $0x48] sm:$0xf]
        %v4625 = vld [vmem:[#allocation14 + $0x4c] sm:$0xf]
        %v4626 = vld [vmem:[#allocation14 + $0x50] sm:$0xf]
        %v4627 = vld [vmem:[#allocation14 + $0x54] sm:$0xf]
        %v4628 = vld [vmem:[#allocation14 + $0x58] sm:$0xf]
        %v4629 = vld [vmem:[#allocation14 + $0x5c] sm:$0xf]
        %v4630 = vld [vmem:[#allocation14 + $0x60] sm:$0xf]
        %v4631 = vld [vmem:[#allocation14 + $0x64] sm:$0xf]
        %v4632 = vld [vmem:[#allocation14 + $0x68] sm:$0xf]
        %v4633 = vld [vmem:[#allocation14 + $0x6c] sm:$0xf]
        %v4634 = vld [vmem:[#allocation14 + $0x70] sm:$0xf]
        %v4635 = vld [vmem:[#allocation14 + $0x74] sm:$0xf]
        %v4636 = vld [vmem:[#allocation14 + $0x78] sm:$0xf]
        %v4637 = vld [vmem:[#allocation14 + $0x7c] sm:$0xf]
        %v4638 = vld [vmem:[#allocation14 + $0x80] sm:$0xf]
        %v4639 = vld [vmem:[#allocation14 + $0x84] sm:$0xf]
        %v4640 = vld [vmem:[#allocation14 + $0x88] sm:$0xf]
        %v4641 = vld [vmem:[#allocation14 + $0x8c] sm:$0xf]
        %v4642 = vld [vmem:[#allocation14 + $0x90] sm:$0xf]
        %v4643 = vld [vmem:[#allocation14 + $0x94] sm:$0xf]
        %v4644 = vld [vmem:[#allocation14 + $0x98] sm:$0xf]
        %v4645 = vld [vmem:[#allocation14 + $0x9c] sm:$0xf]
        %v4646 = vld [vmem:[#allocation14 + $0xa0] sm:$0xf]
        %v4647 = vld [vmem:[#allocation14 + $0xa4] sm:$0xf]
        %v4648 = vld [vmem:[#allocation14 + $0xa8] sm:$0xf]
        %v4649 = vld [vmem:[#allocation14 + $0xac] sm:$0xf]
        %v4650 = vld [vmem:[#allocation14 + $0xb0] sm:$0xf]
        %v4651 = vld [vmem:[#allocation14 + $0xb4] sm:$0xf]
        %v4652 = vld [vmem:[#allocation14 + $0xb8] sm:$0xf]
        %v4653 = vld [vmem:[#allocation14 + $0xbc] sm:$0xf]
        %v4654 = vld [vmem:[#allocation14 + $0xc0] sm:$0xf]
        %v4655 = vld [vmem:[#allocation14 + $0xc4] sm:$0xf]
        %v4656 = vld [vmem:[#allocation14 + $0xc8] sm:$0xf]
        %v4657 = vld [vmem:[#allocation14 + $0xcc] sm:$0xf]
        %v4658 = vld [vmem:[#allocation14 + $0xd0] sm:$0xf]
        %v4659 = vld [vmem:[#allocation14 + $0xd4] sm:$0xf]
        %v4660 = vld [vmem:[#allocation14 + $0xd8] sm:$0xf]
        %v4661 = vld [vmem:[#allocation14 + $0xdc] sm:$0xf]
        %v4662 = vld [vmem:[#allocation14 + $0xe0] sm:$0xf]
        %v4663 = vld [vmem:[#allocation14 + $0xe4] sm:$0xf]
        %v4664 = vld [vmem:[#allocation14 + $0xe8] sm:$0xf]
        %v4665 = vld [vmem:[#allocation14 + $0xec] sm:$0xf]
        %v4666 = vld [vmem:[#allocation14 + $0xf0] sm:$0xf]
        %v4667 = vld [vmem:[#allocation14 + $0xf4] sm:$0xf]
        %v4668 = vld [vmem:[#allocation14 + $0xf8] sm:$0xf]
        %v4669 = vld [vmem:[#allocation14 + $0xfc] sm:$0xf]
        %v4670 = vld [vmem:[%s12] sm:$0x1]
        %v4672 = vlaneseq
        %v4673 = vshrl.u32 %v4672, 7
        %v4674 = vsub.s32 0, %v4673
        %v4675 = vrot.slane %v4670, %v4674
        %v4741 = vunpack.c.l.b16 %v4606
        %v4742 = vunpack.c.l.b16 %v4607
        %v4743 = vunpack.c.l.b16 %v4608
        %v4744 = vunpack.c.l.b16 %v4609
        %v4745 = vunpack.c.l.b16 %v4610
        %v4746 = vunpack.c.l.b16 %v4611
        %v4747 = vunpack.c.l.b16 %v4612
        %v4748 = vunpack.c.l.b16 %v4613
        %v4749 = vunpack.c.l.b16 %v4614
        %v4750 = vunpack.c.l.b16 %v4615
        %v4751 = vunpack.c.l.b16 %v4616
        %v4752 = vunpack.c.l.b16 %v4617
        %v4753 = vunpack.c.l.b16 %v4618
        %v4754 = vunpack.c.l.b16 %v4619
        %v4755 = vunpack.c.l.b16 %v4620
        %v4756 = vunpack.c.l.b16 %v4621
        %v4757 = vunpack.c.l.b16 %v4622
        %v4758 = vunpack.c.l.b16 %v4623
        %v4759 = vunpack.c.l.b16 %v4624
        %v4760 = vunpack.c.l.b16 %v4625
        %v4761 = vunpack.c.l.b16 %v4626
        %v4762 = vunpack.c.l.b16 %v4627
        %v4763 = vunpack.c.l.b16 %v4628
        %v4764 = vunpack.c.l.b16 %v4629
        %v4765 = vunpack.c.l.b16 %v4630
        %v4766 = vunpack.c.l.b16 %v4631
        %v4767 = vunpack.c.l.b16 %v4632
        %v4768 = vunpack.c.l.b16 %v4633
        %v4769 = vunpack.c.l.b16 %v4634
        %v4770 = vunpack.c.l.b16 %v4635
        %v4771 = vunpack.c.l.b16 %v4636
        %v4772 = vunpack.c.l.b16 %v4637
        %v4773 = vunpack.c.l.b16 %v4638
        %v4774 = vunpack.c.l.b16 %v4639
        %v4775 = vunpack.c.l.b16 %v4640
        %v4776 = vunpack.c.l.b16 %v4641
        %v4777 = vunpack.c.l.b16 %v4642
        %v4778 = vunpack.c.l.b16 %v4643
        %v4779 = vunpack.c.l.b16 %v4644
        %v4780 = vunpack.c.l.b16 %v4645
        %v4781 = vunpack.c.l.b16 %v4646
        %v4782 = vunpack.c.l.b16 %v4647
        %v4783 = vunpack.c.l.b16 %v4648
        %v4784 = vunpack.c.l.b16 %v4649
        %v4785 = vunpack.c.l.b16 %v4650
        %v4786 = vunpack.c.l.b16 %v4651
        %v4787 = vunpack.c.l.b16 %v4652
        %v4788 = vunpack.c.l.b16 %v4653
        %v4789 = vunpack.c.l.b16 %v4654
        %v4790 = vunpack.c.l.b16 %v4655
        %v4791 = vunpack.c.l.b16 %v4656
        %v4792 = vunpack.c.l.b16 %v4657
        %v4793 = vunpack.c.l.b16 %v4658
        %v4794 = vunpack.c.l.b16 %v4659
        %v4795 = vunpack.c.l.b16 %v4660
        %v4796 = vunpack.c.l.b16 %v4661
        %v4797 = vunpack.c.l.b16 %v4662
        %v4798 = vunpack.c.l.b16 %v4663
        %v4799 = vunpack.c.l.b16 %v4664
        %v4800 = vunpack.c.l.b16 %v4665
        %v4801 = vunpack.c.l.b16 %v4666
        %v4802 = vunpack.c.l.b16 %v4667
        %v4803 = vunpack.c.l.b16 %v4668
        %v4804 = vunpack.c.l.b16 %v4669
        %v4805 = vpack.c.b16 %v4742, %v4741
        %v4806 = vpack.c.b16 %v4744, %v4743
        %v4807 = vpack.c.b16 %v4746, %v4745
        %v4808 = vpack.c.b16 %v4748, %v4747
        %v4809 = vpack.c.b16 %v4750, %v4749
        %v4810 = vpack.c.b16 %v4752, %v4751
        %v4811 = vpack.c.b16 %v4754, %v4753
        %v4812 = vpack.c.b16 %v4756, %v4755
        %v4813 = vpack.c.b16 %v4758, %v4757
        %v4814 = vpack.c.b16 %v4760, %v4759
        %v4815 = vpack.c.b16 %v4762, %v4761
        %v4816 = vpack.c.b16 %v4764, %v4763
        %v4817 = vpack.c.b16 %v4766, %v4765
        %v4818 = vpack.c.b16 %v4768, %v4767
        %v4819 = vpack.c.b16 %v4770, %v4769
        %v4820 = vpack.c.b16 %v4772, %v4771
        %v4821 = vpack.c.b16 %v4774, %v4773
        %v4822 = vpack.c.b16 %v4776, %v4775
        %v4823 = vpack.c.b16 %v4778, %v4777
        %v4824 = vpack.c.b16 %v4780, %v4779
        %v4825 = vpack.c.b16 %v4782, %v4781
        %v4826 = vpack.c.b16 %v4784, %v4783
        %v4827 = vpack.c.b16 %v4786, %v4785
        %v4828 = vpack.c.b16 %v4788, %v4787
        %v4829 = vpack.c.b16 %v4790, %v4789
        %v4830 = vpack.c.b16 %v4792, %v4791
        %v4831 = vpack.c.b16 %v4794, %v4793
        %v4832 = vpack.c.b16 %v4796, %v4795
        %v4833 = vpack.c.b16 %v4798, %v4797
        %v4834 = vpack.c.b16 %v4800, %v4799
        %v4835 = vpack.c.b16 %v4802, %v4801
        %v4836 = vpack.c.b16 %v4804, %v4803
        %4869 = vmatprep.subr.bf16.mxu0 0
        %4870 = vmatpush1.bf16.msra.mxu0 %v4805
        %4871 = vmatprep.subr.bf16.mxu0 0
        %4872 = vmatpush1.bf16.msra.mxu0 %v4806
        %4873 = vmatprep.subr.bf16.mxu0 0
        %4874 = vmatpush1.bf16.msra.mxu0 %v4807
        %4875 = vmatprep.subr.bf16.mxu0 0
        %4876 = vmatpush1.bf16.msra.mxu0 %v4808
        %4877 = vmatprep.subr.bf16.mxu0 0
        %4878 = vmatpush1.bf16.msra.mxu0 %v4809
        %4879 = vmatprep.subr.bf16.mxu0 0
        %4880 = vmatpush1.bf16.msra.mxu0 %v4810
        %4881 = vmatprep.subr.bf16.mxu0 0
        %4882 = vmatpush1.bf16.msra.mxu0 %v4811
        %4883 = vmatprep.subr.bf16.mxu0 0
        %4884 = vmatpush1.bf16.msra.mxu0 %v4812
        %4885 = vmatprep.subr.bf16.mxu0 0
        %4886 = vmatpush1.bf16.msra.mxu0 %v4813
        %4887 = vmatprep.subr.bf16.mxu0 0
        %4888 = vmatpush1.bf16.msra.mxu0 %v4814
        %4889 = vmatprep.subr.bf16.mxu0 0
        %4890 = vmatpush1.bf16.msra.mxu0 %v4815
        %4891 = vmatprep.subr.bf16.mxu0 0
        %4892 = vmatpush1.bf16.msra.mxu0 %v4816
        %4893 = vmatprep.subr.bf16.mxu0 0
        %4894 = vmatpush1.bf16.msra.mxu0 %v4817
        %4895 = vmatprep.subr.bf16.mxu0 0
        %4896 = vmatpush1.bf16.msra.mxu0 %v4818
        %4897 = vmatprep.subr.bf16.mxu0 0
        %4898 = vmatpush1.bf16.msra.mxu0 %v4819
        %4899 = vmatprep.subr.bf16.mxu0 0
        %4900 = vmatpush1.bf16.msra.mxu0 %v4820
        %4901 = vmatprep.mubr.bf16.mxu0 %v4575
        %4902 = vmatmul.mubr.bf16.gmra.mrb[0].mxu0 %v4574
        %v4903 = vpop.f32.mrb[0].mxu0
        %v4904 = vadd.f32 %v4675, %v4903
        %v4905 = vpop.f32.mrb[0].mxu0
        %v4906 = vpop.f32.mrb[0].mxu0
        %v4907 = vadd.f32 %v4675, %v4906
        %v4908 = vpop.f32.mrb[0].mxu0
        %4909 = vmatprep.mubr.bf16.mxu0 %v4579
        %4910 = vmatmul.mubr.bf16.gmra.mrb[0].mxu0 %v4578
        %v4911 = vpop.f32.mrb[0].mxu0
        %v4912 = vadd.f32 %v4675, %v4911
        %v4913 = vpop.f32.mrb[0].mxu0
        %v4914 = vpop.f32.mrb[0].mxu0
        %v4915 = vadd.f32 %v4675, %v4914
        %v4916 = vpop.f32.mrb[0].mxu0
        %4917 = vmatprep.mubr.bf16.mxu0 %v4583
        %4918 = vmatmul.mubr.bf16.gmra.mrb[0].mxu0 %v4582
        %v4919 = vpop.f32.mrb[0].mxu0
        %v4920 = vadd.f32 %v4675, %v4919
        %v4921 = vpop.f32.mrb[0].mxu0
        %v4922 = vpop.f32.mrb[0].mxu0
        %v4923 = vadd.f32 %v4675, %v4922
        %v4924 = vpop.f32.mrb[0].mxu0
        %4925 = vmatprep.mubr.bf16.mxu0 %v4587
        %4926 = vmatmul.mubr.bf16.gmra.mrb[0].mxu0 %v4586
        %v4927 = vpop.f32.mrb[0].mxu0
        %v4928 = vadd.f32 %v4675, %v4927
        %v4929 = vpop.f32.mrb[0].mxu0
        %v4930 = vpop.f32.mrb[0].mxu0
        %v4931 = vadd.f32 %v4675, %v4930
        %v4932 = vpop.f32.mrb[0].mxu0
        %4933 = vmatprep.mubr.bf16.mxu0 %v4591
        %4934 = vmatmul.mubr.bf16.gmra.mrb[0].mxu0 %v4590
        %v4935 = vpop.f32.mrb[0].mxu0
        %v4936 = vadd.f32 %v4675, %v4935
        %v4937 = vpop.f32.mrb[0].mxu0
        %v4938 = vpop.f32.mrb[0].mxu0
        %v4939 = vadd.f32 %v4675, %v4938
        %v4940 = vpop.f32.mrb[0].mxu0
        %4941 = vmatprep.mubr.bf16.mxu0 %v4595
        %4942 = vmatmul.mubr.bf16.gmra.mrb[0].mxu0 %v4594
        %v4943 = vpop.f32.mrb[0].mxu0
        %v4944 = vadd.f32 %v4675, %v4943
        %v4945 = vpop.f32.mrb[0].mxu0
        %v4946 = vpop.f32.mrb[0].mxu0
        %v4947 = vadd.f32 %v4675, %v4946
        %v4948 = vpop.f32.mrb[0].mxu0
        %4949 = vmatprep.mubr.bf16.mxu0 %v4599
        %4950 = vmatmul.mubr.bf16.gmra.mrb[0].mxu0 %v4598
        %v4951 = vpop.f32.mrb[0].mxu0
        %v4952 = vadd.f32 %v4675, %v4951
        %v4953 = vpop.f32.mrb[0].mxu0
        %v4954 = vpop.f32.mrb[0].mxu0
        %v4955 = vadd.f32 %v4675, %v4954
        %v4956 = vpop.f32.mrb[0].mxu0
        %4957 = vmatprep.mubr.bf16.mxu0 %v4603
        %4958 = vmatmul.mubr.bf16.gmra.mrb[0].mxu0 %v4602
        %v4959 = vpop.f32.mrb[0].mxu0
        %v4960 = vadd.f32 %v4675, %v4959
        %v4961 = vpop.f32.mrb[0].mxu0
        %v4962 = vpop.f32.mrb[0].mxu0
        %v4963 = vadd.f32 %v4675, %v4962
        %v4964 = vpop.f32.mrb[0].mxu0
        %4965 = vdwg.mxu0
        %4966 = vmatprep.subr.bf16.mxu0 0
        %4967 = vmatpush1.bf16.msra.mxu0 %v4821
        %4968 = vmatprep.subr.bf16.mxu0 0
        %4969 = vmatpush1.bf16.msra.mxu0 %v4822
        %4970 = vmatprep.subr.bf16.mxu0 0
        %4971 = vmatpush1.bf16.msra.mxu0 %v4823
        %4972 = vmatprep.subr.bf16.mxu0 0
        %4973 = vmatpush1.bf16.msra.mxu0 %v4824
        %4974 = vmatprep.subr.bf16.mxu0 0
        %4975 = vmatpush1.bf16.msra.mxu0 %v4825
        %4976 = vmatprep.subr.bf16.mxu0 0
        %4977 = vmatpush1.bf16.msra.mxu0 %v4826
        %4978 = vmatprep.subr.bf16.mxu0 0
        %4979 = vmatpush1.bf16.msra.mxu0 %v4827
        %4980 = vmatprep.subr.bf16.mxu0 0
        %4981 = vmatpush1.bf16.msra.mxu0 %v4828
        %4982 = vmatprep.subr.bf16.mxu0 0
        %4983 = vmatpush1.bf16.msra.mxu0 %v4829
        %4984 = vmatprep.subr.bf16.mxu0 0
        %4985 = vmatpush1.bf16.msra.mxu0 %v4830
        %4986 = vmatprep.subr.bf16.mxu0 0
        %4987 = vmatpush1.bf16.msra.mxu0 %v4831
        %4988 = vmatprep.subr.bf16.mxu0 0
        %4989 = vmatpush1.bf16.msra.mxu0 %v4832
        %4990 = vmatprep.subr.bf16.mxu0 0
        %4991 = vmatpush1.bf16.msra.mxu0 %v4833
        %4992 = vmatprep.subr.bf16.mxu0 0
        %4993 = vmatpush1.bf16.msra.mxu0 %v4834
        %4994 = vmatprep.subr.bf16.mxu0 0
        %4995 = vmatpush1.bf16.msra.mxu0 %v4835
        %4996 = vmatprep.subr.bf16.mxu0 0
        %4997 = vmatpush1.bf16.msra.mxu0 %v4836
        %4998 = vmatprep.mubr.bf16.mxu0 %v4577
        %4999 = vmatmul.mubr.bf16.gmra.mrb[0].mxu0 %v4576
        %v5000 = vpop.f32.mrb[0].mxu0
        %v5001 = vadd.f32 %v4904, %v5000
        %v5002 = vpop.f32.mrb[0].mxu0
        %v5003 = vpop.f32.mrb[0].mxu0
        %v5004 = vadd.f32 %v4907, %v5003
        %v5005 = vpop.f32.mrb[0].mxu0
        %5006 = vmatprep.mubr.bf16.mxu0 %v4581
        %5007 = vmatmul.mubr.bf16.gmra.mrb[0].mxu0 %v4580
        %v5008 = vpop.f32.mrb[0].mxu0
        %v5009 = vadd.f32 %v4912, %v5008
        %v5010 = vpop.f32.mrb[0].mxu0
        %v5011 = vpop.f32.mrb[0].mxu0
        %v5012 = vadd.f32 %v4915, %v5011
        %v5013 = vpop.f32.mrb[0].mxu0
        %5014 = vmatprep.mubr.bf16.mxu0 %v4585
        %5015 = vmatmul.mubr.bf16.gmra.mrb[0].mxu0 %v4584
        %v5016 = vpop.f32.mrb[0].mxu0
        %v5017 = vadd.f32 %v4920, %v5016
        %v5018 = vpop.f32.mrb[0].mxu0
        %v5019 = vpop.f32.mrb[0].mxu0
        %v5020 = vadd.f32 %v4923, %v5019
        %v5021 = vpop.f32.mrb[0].mxu0
        %5022 = vmatprep.mubr.bf16.mxu0 %v4589
        %5023 = vmatmul.mubr.bf16.gmra.mrb[0].mxu0 %v4588
        %v5024 = vpop.f32.mrb[0].mxu0
        %v5025 = vadd.f32 %v4928, %v5024
        %v5026 = vpop.f32.mrb[0].mxu0
        %v5027 = vpop.f32.mrb[0].mxu0
        %v5028 = vadd.f32 %v4931, %v5027
        %v5029 = vpop.f32.mrb[0].mxu0
        %5030 = vmatprep.mubr.bf16.mxu0 %v4593
        %5031 = vmatmul.mubr.bf16.gmra.mrb[0].mxu0 %v4592
        %v5032 = vpop.f32.mrb[0].mxu0
        %v5033 = vadd.f32 %v4936, %v5032
        %v5034 = vpop.f32.mrb[0].mxu0
        %v5035 = vpop.f32.mrb[0].mxu0
        %v5036 = vadd.f32 %v4939, %v5035
        %v5037 = vpop.f32.mrb[0].mxu0
        %5038 = vmatprep.mubr.bf16.mxu0 %v4597
        %5039 = vmatmul.mubr.bf16.gmra.mrb[0].mxu0 %v4596
        %v5040 = vpop.f32.mrb[0].mxu0
        %v5041 = vadd.f32 %v4944, %v5040
        %v5042 = vpop.f32.mrb[0].mxu0
        %v5043 = vpop.f32.mrb[0].mxu0
        %v5044 = vadd.f32 %v4947, %v5043
        %v5045 = vpop.f32.mrb[0].mxu0
        %5046 = vmatprep.mubr.bf16.mxu0 %v4601
        %5047 = vmatmul.mubr.bf16.gmra.mrb[0].mxu0 %v4600
        %v5048 = vpop.f32.mrb[0].mxu0
        %v5049 = vadd.f32 %v4952, %v5048
        %v5050 = vpop.f32.mrb[0].mxu0
        %v5051 = vpop.f32.mrb[0].mxu0
        %v5052 = vadd.f32 %v4955, %v5051
        %v5053 = vpop.f32.mrb[0].mxu0
        %5054 = vmatprep.mubr.bf16.mxu0 %v4605
        %5055 = vmatmul.mubr.bf16.gmra.mrb[0].mxu0 %v4604
        %v5056 = vpop.f32.mrb[0].mxu0
        %v5057 = vadd.f32 %v4960, %v5056
        %v5058 = vpop.f32.mrb[0].mxu0
        %v5059 = vpop.f32.mrb[0].mxu0
        %v5060 = vadd.f32 %v4963, %v5059
        %v5061 = vpop.f32.mrb[0].mxu0
        %5062 = vdwg.mxu0
        %v5063 = vadd.f32 %v5001, %v3376
        %v5064 = vadd.f32 %v5004, %v3377
        %v5065 = vadd.f32 %v5009, %v3378
        %v5066 = vadd.f32 %v5012, %v3379
        %v5067 = vadd.f32 %v5017, %v3380
        %v5068 = vadd.f32 %v5020, %v3381
        %v5069 = vadd.f32 %v5025, %v3382
        %v5070 = vadd.f32 %v5028, %v3383
        %v5071 = vadd.f32 %v5033, %v3384
        %v5072 = vadd.f32 %v5036, %v3385
        %v5073 = vadd.f32 %v5041, %v3386
        %v5074 = vadd.f32 %v5044, %v3387
        %v5075 = vadd.f32 %v5049, %v3388
        %v5076 = vadd.f32 %v5052, %v3389
        %v5077 = vadd.f32 %v5057, %v3390
        %v5078 = vadd.f32 %v5060, %v3391
        %5079 = vst [vmem:[%s541] sm:$0xff] %v5063
        %5080 = vst [vmem:[%s541 + $0x8] sm:$0xff] %v5064
        %5081 = vst [vmem:[%s541 + $0x10] sm:$0xff] %v5065
        %5082 = vst [vmem:[%s541 + $0x18] sm:$0xff] %v5066
        %5083 = vst [vmem:[%s541 + $0x20] sm:$0xff] %v5067
        %5084 = vst [vmem:[%s541 + $0x28] sm:$0xff] %v5068
        %5085 = vst [vmem:[%s541 + $0x30] sm:$0xff] %v5069
        %5086 = vst [vmem:[%s541 + $0x38] sm:$0xff] %v5070
        %5087 = vst [vmem:[%s541 + $0x40] sm:$0xff] %v5071
        %5088 = vst [vmem:[%s541 + $0x48] sm:$0xff] %v5072
        %5089 = vst [vmem:[%s541 + $0x50] sm:$0xff] %v5073
        %5090 = vst [vmem:[%s541 + $0x58] sm:$0xff] %v5074
        %5091 = vst [vmem:[%s541 + $0x60] sm:$0xff] %v5075
        %5092 = vst [vmem:[%s541 + $0x68] sm:$0xff] %v5076
        %5093 = vst [vmem:[%s541 + $0x70] sm:$0xff] %v5077
        %5094 = vst [vmem:[%s541 + $0x78] sm:$0xff] %v5078
        %s5095 = sand.u32 %s319, 1
        %s5096 = scalar_lea.sflag [#allocation5], %s5095
        %s5097 = sand.u32 %s319, 1
        %s5098 = smul.addr %s5097, 128
        %s5099 = scalar_lea.vmem [#allocation15], %s5098
        // Predicated region
        $region101: #{tpu_custom_call.1} parent=71 // pred_check
          %p5100 = pneg %p329
        $region102: #{tpu_custom_call.1} parent=71 // pred_check_branch
          %5102 = sbr.rel (%p5100) target = $region104
        $region103: #{tpu_custom_call.1} parent=71 // pred_region
          %s5104 = ssub.s32 2048, 2048
          %5105 = vsyncadd %s5096, %s5104
          %s5106 = smul.addr %s33, 16
          %s5107 = smul.addr %s5106, 128
          %s5108 = scalar_lea.hbm %s13, %s5107
          %s5109 = sshll.u32 %s5099, 4
          %s5110 = int_to_ptr.vmem [resolvable:$true] %s5109
          %5115 = dma.vmem_to_hbm [thread:$0]  %s5110, 2048, %s5108, %s5096, 128, 128, 8
        $region104: #{tpu_custom_call.1} parent=71 // pred_fallthru
          _
      $region72: #{tpu_custom_call.1} parent=5 // pred_fallthru
        _
      %p5116 = scmp.le.s32.totalorder 2, %s28
      // Predicated region
      $region105: #{tpu_custom_call.1} parent=5 // pred_check
        %p5117 = pneg %p5116
      $region106: #{tpu_custom_call.1} parent=5 // pred_check_branch
        %5119 = sbr.rel (%p5117) target = $region108
      $region107: #{tpu_custom_call.1} parent=5 // pred_region
        %s5120 = ssub.s32 %s28, 2
        // Predicated region
        $region109: #{tpu_custom_call.1} parent=107 // pred_check
          %p5121 = pneg %p335
        $region110: #{tpu_custom_call.1} parent=107 // pred_check_branch
          %5123 = sbr.rel (%p5121) target = $region112
        $region111: #{tpu_custom_call.1} parent=107 // pred_region
          %s5124 = sand.u32 %s320, 1
          %s5125 = scalar_lea.sflag [#allocation5], %s5124
          %s5126 = sand.u32 %s320, 1
          %s5127 = smul.addr %s5126, 128
          %s5128 = scalar_lea.vmem [#allocation15], %s5127
          %5129 = dma.done %s5125, 2048
        $region112: #{tpu_custom_call.1} parent=107 // pred_fallthru
          _
      $region108: #{tpu_custom_call.1} parent=5 // pred_fallthru
        _
    $region6: #{tpu_custom_call.1} parent=1 // loop_footer
      %s32 = sadd.s32 1, %s28
    $region7: #{tpu_custom_call.1} parent=1 // loop_footer_branch
      %27 = sbr.rel target = $region3
    $region8: #{tpu_custom_call.1} parent=1 // loop_exit
      _
    %5130 = vsyncpa [#allocation4], 1
    %s5131 = scalar_lea.sflag [#allocation4], 1
    %5132 = vsyncpa %s5131, 1
    %5133 = vsyncpa [#allocation7], 1
    %5134 = vsyncpa [#allocation10], 1
    %5135 = vsyncpa [#allocation13], 1
    %5136 = vsyncpa [#allocation5], 1
    %s5137 = scalar_lea.sflag [#allocation5], 1
    %5138 = vsyncpa %s5137, 1

// kernel: tpu_custom_call.1
$region0: #{tpu_custom_call.1}
  #allocation0 [shape = 'u32[]', space=smem, size = 0x4, offset = 0x4, fixed_abs, tag = 'smem constant byte address 0x4 - core index']
  #allocation1 [shape = 'u32[144,128]{1,0:T(1,128)}', space=vmem, size = 0x12000, scoped, tag = 'internal scratch']
  #allocation2 [shape = 'bf16[128,128]{1,0:T(16,128)(2,1)}', space=vmem, size = 0x8000, scoped, tag = 'scratch operand']
  %s0 = inlined_call_operand.hbm [shape: f32[2,128,128], index: 0, kind: input, shape index: {}]
  %s1 = inlined_call_operand.hbm [shape: f32[1,128], index: 1, kind: input, shape index: {}]
  %s2 = inlined_call_operand.hbm [shape: f32[1,128], index: 2, kind: input, shape index: {}]
  %s3 = inlined_call_operand.hbm [shape: bf16[128,384], index: 3, kind: input, shape index: {}]
  %s4 = inlined_call_operand.vmem [shape: f32[1,384], index: 4, kind: input, shape index: {}]
  %s5 = inlined_call_operand.hbm [shape: bf16[128,128], index: 5, kind: input, shape index: {}]
  %s6 = inlined_call_operand.vmem [shape: f32[1,128], index: 6, kind: input, shape index: {}]
  %s7 = inlined_call_operand.vmem [shape: f32[1,128], index: 7, kind: input, shape index: {}]
  %s8 = inlined_call_operand.vmem [shape: f32[1,128], index: 8, kind: input, shape index: {}]
  %s9 = inlined_call_operand.hbm [shape: bf16[128,512], index: 9, kind: input, shape index: {}]
  %s10 = inlined_call_operand.vmem [shape: f32[1,512], index: 10, kind: input, shape index: {}]
  %s11 = inlined_call_operand.hbm [shape: bf16[512,128], index: 11, kind: input, shape index: {}]
  %s12 = inlined_call_operand.vmem [shape: f32[1,128], index: 12, kind: input, shape index: {}]
  %s13 = inlined_call_operand.hbm [shape: f32[2,128,128], index: 13, kind: output, shape index: {}]
  %s14 = sld [smem:[#allocation0]]
  $region113: #{tpu_custom_call.1} parent=0
    _
  %s16 = ssub.s32 1, %s14
  %s17 = scalar_select 0, %s16, %s14
  $region1: #{tpu_custom_call.1} parent=0
    #allocation3 [shape = 'u8[131072]{0}', space=vmem, size = 0x20000, scoped, tag = 'input window, operand 0']
    #allocation4 [shape = 's32[2]{0}', space=sflag, size = 0x8, scoped, tag = 'scoped memory for tpu_custom_call.1']
    #allocation5 [shape = 's32[2]{0}', space=sflag, size = 0x8, scoped, tag = 'scoped memory for tpu_custom_call.1']
    #allocation6 [shape = 'u8[512]{0}', space=vmem, size = 0x400, scoped, tag = 'input window, operand 1, single buffered']
    #allocation7 [shape = 's32[1]{0}', space=sflag, size = 0x4, scoped, tag = 'scoped memory for tpu_custom_call.1']
    #allocation8 [shape = 'u8[512]{0}', space=vmem, size = 0x400, scoped, tag = 'input window, operand 2, single buffered']
    #allocation9 [shape = 'u8[98304]{0}', space=vmem, size = 0x18000, scoped, tag = 'input window, operand 3, single buffered']
    #allocation10 [shape = 's32[1]{0}', space=sflag, size = 0x4, scoped, tag = 'scoped memory for tpu_custom_call.1']
    #allocation11 [shape = 'u8[32768]{0}', space=vmem, size = 0x8000, scoped, tag = 'input window, operand 5, single buffered']
    #allocation12 [shape = 'u8[131072]{0}', space=vmem, size = 0x20000, scoped, tag = 'input window, operand 9, single buffered']
    #allocation13 [shape = 's32[1]{0}', space=sflag, size = 0x4, scoped, tag = 'scoped memory for tpu_custom_call.1']
    #allocation14 [shape = 'u8[131072]{0}', space=vmem, size = 0x20000, scoped, tag = 'input window, operand 11, single buffered']
    #allocation15 [shape = 'u8[131072]{0}', space=vmem, size = 0x20000, scoped, tag = 'output window, operand 0']
    %18 = vsyncpa [#allocation4], 0
    %s19 = scalar_lea.sflag [#allocation4], 1
    %20 = vsyncpa %s19, 0
    %21 = vsyncpa [#allocation7], 0
    %22 = vsyncpa [#allocation10], 0
    %23 = vsyncpa [#allocation13], 0
    %24 = vsyncpa [#allocation5], 0
    %s25 = scalar_lea.sflag [#allocation5], 1
    %26 = vsyncpa %s25, 0
    loop: start=0, step=1, limit=4
    $region2: #{tpu_custom_call.1} parent=1 // loop_pre_header
      _
    $region3: #{tpu_custom_call.1} parent=1 // loop_header
      %s28 = sphi 0, %s32
      %p29 = scmp.ge.s32.totalorder %s28, 4
      %s38 = sphi 0, %s40
      %s41 = sphi 0, %s38
      %s42 = sphi 0, %s41
      %s58 = sphi 0, %s42
      %s62 = sphi 0, %s62
      %s64 = sphi 0, %s62
      %s65 = sphi 0, %s64
      %s79 = sphi 0, %s65
      %s83 = sphi 0, %s83
      %s85 = sphi 0, %s83
      %s86 = sphi 0, %s85
      %s100 = sphi 0, %s86
      %s104 = sphi 0, %s104
      %s106 = sphi 0, %s104
      %s107 = sphi 0, %s106
      %s121 = sphi 0, %s107
      %s125 = sphi 0, %s125
      %s127 = sphi 0, %s125
      %s128 = sphi 0, %s127
      %s142 = sphi 0, %s128
      %s146 = sphi 0, %s146
      %s148 = sphi 0, %s146
      %s149 = sphi 0, %s148
      %s163 = sphi 0, %s149
      %s167 = sphi 0, %s167
      %s169 = sphi 0, %s167
      %s170 = sphi 0, %s169
      %s184 = sphi 0, %s170
      %s188 = sphi 0, %s188
      %s190 = sphi 0, %s188
      %s191 = sphi 0, %s190
      %s205 = sphi 0, %s191
      %s209 = sphi 0, %s209
      %s211 = sphi 0, %s209
      %s212 = sphi 0, %s211
      %s226 = sphi 0, %s212
      %s230 = sphi 0, %s230
      %s232 = sphi 0, %s230
      %s233 = sphi 0, %s232
      %s247 = sphi 0, %s233
      %s251 = sphi 0, %s251
      %s253 = sphi 0, %s251
      %s254 = sphi 0, %s253
      %s268 = sphi 0, %s254
      %s272 = sphi 0, %s272
      %s274 = sphi 0, %s272
      %s275 = sphi 0, %s274
      %s289 = sphi 0, %s275
      %s293 = sphi 0, %s293
      %s295 = sphi 0, %s293
      %s296 = sphi 0, %s295
      %s310 = sphi 0, %s296
      %s316 = sphi 0, %s318
      %s319 = sphi 0, %s316
      %s320 = sphi 0, %s319
      %s336 = sphi 0, %s320
    $region4: #{tpu_custom_call.1} parent=1 // loop_header_branch
      %31 = sbr.rel (%p29) target = $region8
    $region5: #{tpu_custom_call.1} parent=1 // loop_body
      %s33 = ssub.s32 %s28, 1
      %s34 = ssub.s32 %s28, 2
      %s35 = sadd.s32 %s28, 1
      %s36 = ssub.s32 %s28, %s35
      %p37 = scmp.eq.s32.totalorder %s36, 0
      %s39 = sadd.s32 %s38, 1
      %s40 = scalar_select %p37, %s38, %s39
      %p43 = pneg %p37
      %p44 = scmp.eq.s32.totalorder %s28, 1
      %p45 = por %p43, %p44
      %p46 = scmp.ne.s32.totalorder %s38, %s41
      %p47 = scmp.eq.s32.totalorder %s28, 0
      %p48 = por %p46, %p47
      %p49 = scmp.ne.s32.totalorder %s38, %s41
      %p50 = scmp.eq.s32.totalorder %s33, 1
      %p51 = por %p49, %p50
      %p52 = scmp.ne.s32.totalorder %s41, %s42
      %p53 = scmp.eq.s32.totalorder %s33, 0
      %p54 = por %p52, %p53
      %p55 = scmp.ne.s32.totalorder %s41, %s42
      %p56 = scmp.eq.s32.totalorder %s34, 1
      %p57 = por %p55, %p56
      %p59 = scmp.ne.s32.totalorder %s42, %s58
      %p60 = scmp.eq.s32.totalorder %s34, 0
      %p61 = por %p59, %p60
      %s63 = sadd.s32 %s62, 1
      %p66 = scmp.eq.s32.totalorder %s28, 1
      %p67 = scmp.ne.s32.totalorder %s62, %s64
      %p68 = scmp.eq.s32.totalorder %s28, 0
      %p69 = por %p67, %p68
      %p70 = scmp.ne.s32.totalorder %s62, %s64
      %p71 = scmp.eq.s32.totalorder %s33, 1
      %p72 = por %p70, %p71
      %p73 = scmp.ne.s32.totalorder %s64, %s65
      %p74 = scmp.eq.s32.totalorder %s33, 0
      %p75 = por %p73, %p74
      %p76 = scmp.ne.s32.totalorder %s64, %s65
      %p77 = scmp.eq.s32.totalorder %s34, 1
      %p78 = por %p76, %p77
      %p80 = scmp.ne.s32.totalorder %s65, %s79
      %p81 = scmp.eq.s32.totalorder %s34, 0
      %p82 = por %p80, %p81
      %s84 = sadd.s32 %s83, 1
      %p87 = scmp.eq.s32.totalorder %s28, 1
      %p88 = scmp.ne.s32.totalorder %s83, %s85
      %p89 = scmp.eq.s32.totalorder %s28, 0
      %p90 = por %p88, %p89
      %p91 = scmp.ne.s32.totalorder %s83, %s85
      %p92 = scmp.eq.s32.totalorder %s33, 1
      %p93 = por %p91, %p92
      %p94 = scmp.ne.s32.totalorder %s85, %s86
      %p95 = scmp.eq.s32.totalorder %s33, 0
      %p96 = por %p94, %p95
      %p97 = scmp.ne.s32.totalorder %s85, %s86
      %p98 = scmp.eq.s32.totalorder %s34, 1
      %p99 = por %p97, %p98
      %p101 = scmp.ne.s32.totalorder %s86, %s100
      %p102 = scmp.eq.s32.totalorder %s34, 0
      %p103 = por %p101, %p102
      %s105 = sadd.s32 %s104, 1
      %p108 = scmp.eq.s32.totalorder %s28, 1
      %p109 = scmp.ne.s32.totalorder %s104, %s106
      %p110 = scmp.eq.s32.totalorder %s28, 0
      %p111 = por %p109, %p110
      %p112 = scmp.ne.s32.totalorder %s104, %s106
      %p113 = scmp.eq.s32.totalorder %s33, 1
      %p114 = por %p112, %p113
      %p115 = scmp.ne.s32.totalorder %s106, %s107
      %p116 = scmp.eq.s32.totalorder %s33, 0
      %p117 = por %p115, %p116
      %p118 = scmp.ne.s32.totalorder %s106, %s107
      %p119 = scmp.eq.s32.totalorder %s34, 1
      %p120 = por %p118, %p119
      %p122 = scmp.ne.s32.totalorder %s107, %s121
      %p123 = scmp.eq.s32.totalorder %s34, 0
      %p124 = por %p122, %p123
      %s126 = sadd.s32 %s125, 1
      %p129 = scmp.eq.s32.totalorder %s28, 1
      %p130 = scmp.ne.s32.totalorder %s125, %s127
      %p131 = scmp.eq.s32.totalorder %s28, 0
      %p132 = por %p130, %p131
      %p133 = scmp.ne.s32.totalorder %s125, %s127
      %p134 = scmp.eq.s32.totalorder %s33, 1
      %p135 = por %p133, %p134
      %p136 = scmp.ne.s32.totalorder %s127, %s128
      %p137 = scmp.eq.s32.totalorder %s33, 0
      %p138 = por %p136, %p137
      %p139 = scmp.ne.s32.totalorder %s127, %s128
      %p140 = scmp.eq.s32.totalorder %s34, 1
      %p141 = por %p139, %p140
      %p143 = scmp.ne.s32.totalorder %s128, %s142
      %p144 = scmp.eq.s32.totalorder %s34, 0
      %p145 = por %p143, %p144
      %s147 = sadd.s32 %s146, 1
      %p150 = scmp.eq.s32.totalorder %s28, 1
      %p151 = scmp.ne.s32.totalorder %s146, %s148
      %p152 = scmp.eq.s32.totalorder %s28, 0
      %p153 = por %p151, %p152
      %p154 = scmp.ne.s32.totalorder %s146, %s148
      %p155 = scmp.eq.s32.totalorder %s33, 1
      %p156 = por %p154, %p155
      %p157 = scmp.ne.s32.totalorder %s148, %s149
      %p158 = scmp.eq.s32.totalorder %s33, 0
      %p159 = por %p157, %p158
      %p160 = scmp.ne.s32.totalorder %s148, %s149
      %p161 = scmp.eq.s32.totalorder %s34, 1
      %p162 = por %p160, %p161
      %p164 = scmp.ne.s32.totalorder %s149, %s163
      %p165 = scmp.eq.s32.totalorder %s34, 0
      %p166 = por %p164, %p165
      %s168 = sadd.s32 %s167, 1
      %p171 = scmp.eq.s32.totalorder %s28, 1
      %p172 = scmp.ne.s32.totalorder %s167, %s169
      %p173 = scmp.eq.s32.totalorder %s28, 0
      %p174 = por %p172, %p173
      %p175 = scmp.ne.s32.totalorder %s167, %s169
      %p176 = scmp.eq.s32.totalorder %s33, 1
      %p177 = por %p175, %p176
      %p178 = scmp.ne.s32.totalorder %s169, %s170
      %p179 = scmp.eq.s32.totalorder %s33, 0
      %p180 = por %p178, %p179
      %p181 = scmp.ne.s32.totalorder %s169, %s170
      %p182 = scmp.eq.s32.totalorder %s34, 1
      %p183 = por %p181, %p182
      %p185 = scmp.ne.s32.totalorder %s170, %s184
      %p186 = scmp.eq.s32.totalorder %s34, 0
      %p187 = por %p185, %p186
      %s189 = sadd.s32 %s188, 1
      %p192 = scmp.eq.s32.totalorder %s28, 1
      %p193 = scmp.ne.s32.totalorder %s188, %s190
      %p194 = scmp.eq.s32.totalorder %s28, 0
      %p195 = por %p193, %p194
      %p196 = scmp.ne.s32.totalorder %s188, %s190
      %p197 = scmp.eq.s32.totalorder %s33, 1
      %p198 = por %p196, %p197
      %p199 = scmp.ne.s32.totalorder %s190, %s191
      %p200 = scmp.eq.s32.totalorder %s33, 0
      %p201 = por %p199, %p200
      %p202 = scmp.ne.s32.totalorder %s190, %s191
      %p203 = scmp.eq.s32.totalorder %s34, 1
      %p204 = por %p202, %p203
      %p206 = scmp.ne.s32.totalorder %s191, %s205
      %p207 = scmp.eq.s32.totalorder %s34, 0
      %p208 = por %p206, %p207
      %s210 = sadd.s32 %s209, 1
      %p213 = scmp.eq.s32.totalorder %s28, 1
      %p214 = scmp.ne.s32.totalorder %s209, %s211
      %p215 = scmp.eq.s32.totalorder %s28, 0
      %p216 = por %p214, %p215
      %p217 = scmp.ne.s32.totalorder %s209, %s211
      %p218 = scmp.eq.s32.totalorder %s33, 1
      %p219 = por %p217, %p218
      %p220 = scmp.ne.s32.totalorder %s211, %s212
      %p221 = scmp.eq.s32.totalorder %s33, 0
      %p222 = por %p220, %p221
      %p223 = scmp.ne.s32.totalorder %s211, %s212
      %p224 = scmp.eq.s32.totalorder %s34, 1
      %p225 = por %p223, %p224
      %p227 = scmp.ne.s32.totalorder %s212, %s226
      %p228 = scmp.eq.s32.totalorder %s34, 0
      %p229 = por %p227, %p228
      %s231 = sadd.s32 %s230, 1
      %p234 = scmp.eq.s32.totalorder %s28, 1
      %p235 = scmp.ne.s32.totalorder %s230, %s232
      %p236 = scmp.eq.s32.totalorder %s28, 0
      %p237 = por %p235, %p236
      %p238 = scmp.ne.s32.totalorder %s230, %s232
      %p239 = scmp.eq.s32.totalorder %s33, 1
      %p240 = por %p238, %p239
      %p241 = scmp.ne.s32.totalorder %s232, %s233
      %p242 = scmp.eq.s32.totalorder %s33, 0
      %p243 = por %p241, %p242
      %p244 = scmp.ne.s32.totalorder %s232, %s233
      %p245 = scmp.eq.s32.totalorder %s34, 1
      %p246 = por %p244, %p245
      %p248 = scmp.ne.s32.totalorder %s233, %s247
      %p249 = scmp.eq.s32.totalorder %s34, 0
      %p250 = por %p248, %p249
      %s252 = sadd.s32 %s251, 1
      %p255 = scmp.eq.s32.totalorder %s28, 1
      %p256 = scmp.ne.s32.totalorder %s251, %s253
      %p257 = scmp.eq.s32.totalorder %s28, 0
      %p258 = por %p256, %p257
      %p259 = scmp.ne.s32.totalorder %s251, %s253
      %p260 = scmp.eq.s32.totalorder %s33, 1
      %p261 = por %p259, %p260
      %p262 = scmp.ne.s32.totalorder %s253, %s254
      %p263 = scmp.eq.s32.totalorder %s33, 0
      %p264 = por %p262, %p263
      %p265 = scmp.ne.s32.totalorder %s253, %s254
      %p266 = scmp.eq.s32.totalorder %s34, 1
      %p267 = por %p265, %p266
      %p269 = scmp.ne.s32.totalorder %s254, %s268
      %p270 = scmp.eq.s32.totalorder %s34, 0
      %p271 = por %p269, %p270
      %s273 = sadd.s32 %s272, 1
      %p276 = scmp.eq.s32.totalorder %s28, 1
      %p277 = scmp.ne.s32.totalorder %s272, %s274
      %p278 = scmp.eq.s32.totalorder %s28, 0
      %p279 = por %p277, %p278
      %p280 = scmp.ne.s32.totalorder %s272, %s274
      %p281 = scmp.eq.s32.totalorder %s33, 1
      %p282 = por %p280, %p281
      %p283 = scmp.ne.s32.totalorder %s274, %s275
      %p284 = scmp.eq.s32.totalorder %s33, 0
      %p285 = por %p283, %p284
      %p286 = scmp.ne.s32.totalorder %s274, %s275
      %p287 = scmp.eq.s32.totalorder %s34, 1
      %p288 = por %p286, %p287
      %p290 = scmp.ne.s32.totalorder %s275, %s289
      %p291 = scmp.eq.s32.totalorder %s34, 0
      %p292 = por %p290, %p291
      %s294 = sadd.s32 %s293, 1
      %p297 = scmp.eq.s32.totalorder %s28, 1
      %p298 = scmp.ne.s32.totalorder %s293, %s295
      %p299 = scmp.eq.s32.totalorder %s28, 0
      %p300 = por %p298, %p299
      %p301 = scmp.ne.s32.totalorder %s293, %s295
      %p302 = scmp.eq.s32.totalorder %s33, 1
      %p303 = por %p301, %p302
      %p304 = scmp.ne.s32.totalorder %s295, %s296
      %p305 = scmp.eq.s32.totalorder %s33, 0
      %p306 = por %p304, %p305
      %p307 = scmp.ne.s32.totalorder %s295, %s296
      %p308 = scmp.eq.s32.totalorder %s34, 1
      %p309 = por %p307, %p308
      %p311 = scmp.ne.s32.totalorder %s296, %s310
      %p312 = scmp.eq.s32.totalorder %s34, 0
      %p313 = por %p311, %p312
      %s314 = ssub.s32 %s28, %s35
      %p315 = scmp.eq.s32.totalorder %s314, 0
      %s317 = sadd.s32 %s316, 1
      %s318 = scalar_select %p315, %s316, %s317
      %p321 = pneg %p315
      %p322 = scmp.eq.s32.totalorder %s28, 1
      %p323 = por %p321, %p322
      %p324 = scmp.ne.s32.totalorder %s316, %s319
      %p325 = scmp.eq.s32.totalorder %s28, 0
      %p326 = por %p324, %p325
      %p327 = scmp.ne.s32.totalorder %s316, %s319
      %p328 = scmp.eq.s32.totalorder %s33, 1
      %p329 = por %p327, %p328
      %p330 = scmp.ne.s32.totalorder %s319, %s320
      %p331 = scmp.eq.s32.totalorder %s33, 0
      %p332 = por %p330, %p331
      %p333 = scmp.ne.s32.totalorder %s319, %s320
      %p334 = scmp.eq.s32.totalorder %s34, 1
      %p335 = por %p333, %p334
      %p337 = scmp.ne.s32.totalorder %s320, %s336
      %p338 = scmp.eq.s32.totalorder %s34, 0
      %p339 = por %p337, %p338
      %p340 = scmp.le.s32.totalorder 1, %s28
      %p341 = scmp.lt.s32.totalorder %s28, 3
      %p342 = pnand %p340, %p341
      %p343 = pneg %p342
      // Predicated region
      $region9: #{tpu_custom_call.1} parent=5 // pred_check
        _
      $region10: #{tpu_custom_call.1} parent=5 // pred_check_branch
        %345 = sbr.rel (%p342) target = $region12
      $region11: #{tpu_custom_call.1} parent=5 // pred_region
        %s346 = ssub.s32 %s28, 1
        // Predicated region
        $region13: #{tpu_custom_call.1} parent=11 // pred_check
          %p347 = pneg %p75
        $region14: #{tpu_custom_call.1} parent=11 // pred_check_branch
          %349 = sbr.rel (%p347) target = $region16
        $region15: #{tpu_custom_call.1} parent=11 // pred_region
          %s351 = ssub.s32 16, 16
          %352 = vsyncadd [#allocation7], %s351
          %s354 = sshll.u32 [#allocation6], 4
          %s355 = int_to_ptr.vmem [resolvable:$true] %s354
          %357 = dma.hbm_to_vmem [thread:$0]  %s1, 16, %s355, [#allocation7]
        $region16: #{tpu_custom_call.1} parent=11 // pred_fallthru
          _
        // Predicated region
        $region17: #{tpu_custom_call.1} parent=11 // pred_check
          %p358 = pneg %p96
        $region18: #{tpu_custom_call.1} parent=11 // pred_check_branch
          %360 = sbr.rel (%p358) target = $region20
        $region19: #{tpu_custom_call.1} parent=11 // pred_region
          %s362 = ssub.s32 16, 16
          %363 = vsyncadd [#allocation7], %s362
          %s365 = sshll.u32 [#allocation8], 4
          %s366 = int_to_ptr.vmem [resolvable:$true] %s365
          %368 = dma.hbm_to_vmem [thread:$0]  %s2, 16, %s366, [#allocation7]
        $region20: #{tpu_custom_call.1} parent=11 // pred_fallthru
          _
        // Predicated region
        $region21: #{tpu_custom_call.1} parent=11 // pred_check
          %p369 = pneg %p117
        $region22: #{tpu_custom_call.1} parent=11 // pred_check_branch
          %371 = sbr.rel (%p369) target = $region24
        $region23: #{tpu_custom_call.1} parent=11 // pred_region
          %s373 = ssub.s32 3072, 3072
          %374 = vsyncadd [#allocation10], %s373
          %s375 = sshll.u32 [#allocation9], 4
          %s376 = int_to_ptr.vmem [resolvable:$true] %s375
          %381 = dma.hbm_to_vmem [thread:$0]  %s3, 3072, %s376, [#allocation10], 192, 192, 12
        $region24: #{tpu_custom_call.1} parent=11 // pred_fallthru
          _
        // Predicated region
        $region25: #{tpu_custom_call.1} parent=11 // pred_check
          %p382 = pneg %p138
        $region26: #{tpu_custom_call.1} parent=11 // pred_check_branch
          %384 = sbr.rel (%p382) target = $region28
        $region27: #{tpu_custom_call.1} parent=11 // pred_region
          _
        $region28: #{tpu_custom_call.1} parent=11 // pred_fallthru
          _
        // Predicated region
        $region29: #{tpu_custom_call.1} parent=11 // pred_check
          %p385 = pneg %p159
        $region30: #{tpu_custom_call.1} parent=11 // pred_check_branch
          %387 = sbr.rel (%p385) target = $region32
        $region31: #{tpu_custom_call.1} parent=11 // pred_region
          %s389 = ssub.s32 1024, 1024
          %390 = vsyncadd [#allocation10], %s389
          %s391 = sshll.u32 [#allocation11], 4
          %s392 = int_to_ptr.vmem [resolvable:$true] %s391
          %397 = dma.hbm_to_vmem [thread:$0]  %s5, 1024, %s392, [#allocation10], 64, 64, 4
        $region32: #{tpu_custom_call.1} parent=11 // pred_fallthru
          _
        // Predicated region
        $region33: #{tpu_custom_call.1} parent=11 // pred_check
          %p398 = pneg %p180
        $region34: #{tpu_custom_call.1} parent=11 // pred_check_branch
          %400 = sbr.rel (%p398) target = $region36
        $region35: #{tpu_custom_call.1} parent=11 // pred_region
          _
        $region36: #{tpu_custom_call.1} parent=11 // pred_fallthru
          _
        // Predicated region
        $region37: #{tpu_custom_call.1} parent=11 // pred_check
          %p401 = pneg %p201
        $region38: #{tpu_custom_call.1} parent=11 // pred_check_branch
          %403 = sbr.rel (%p401) target = $region40
        $region39: #{tpu_custom_call.1} parent=11 // pred_region
          _
        $region40: #{tpu_custom_call.1} parent=11 // pred_fallthru
          _
        // Predicated region
        $region41: #{tpu_custom_call.1} parent=11 // pred_check
          %p404 = pneg %p222
        $region42: #{tpu_custom_call.1} parent=11 // pred_check_branch
          %406 = sbr.rel (%p404) target = $region44
        $region43: #{tpu_custom_call.1} parent=11 // pred_region
          _
        $region44: #{tpu_custom_call.1} parent=11 // pred_fallthru
          _
        // Predicated region
        $region45: #{tpu_custom_call.1} parent=11 // pred_check
          %p407 = pneg %p243
        $region46: #{tpu_custom_call.1} parent=11 // pred_check_branch
          %409 = sbr.rel (%p407) target = $region48
        $region47: #{tpu_custom_call.1} parent=11 // pred_region
          %s411 = ssub.s32 4096, 4096
          %412 = vsyncadd [#allocation13], %s411
          %s413 = sshll.u32 [#allocation12], 4
          %s414 = int_to_ptr.vmem [resolvable:$true] %s413
          %419 = dma.hbm_to_vmem [thread:$0]  %s9, 4096, %s414, [#allocation13], 256, 256, 16
        $region48: #{tpu_custom_call.1} parent=11 // pred_fallthru
          _
        // Predicated region
        $region49: #{tpu_custom_call.1} parent=11 // pred_check
          %p420 = pneg %p264
        $region50: #{tpu_custom_call.1} parent=11 // pred_check_branch
          %422 = sbr.rel (%p420) target = $region52
        $region51: #{tpu_custom_call.1} parent=11 // pred_region
          _
        $region52: #{tpu_custom_call.1} parent=11 // pred_fallthru
          _
        // Predicated region
        $region53: #{tpu_custom_call.1} parent=11 // pred_check
          %p423 = pneg %p285
        $region54: #{tpu_custom_call.1} parent=11 // pred_check_branch
          %425 = sbr.rel (%p423) target = $region56
        $region55: #{tpu_custom_call.1} parent=11 // pred_region
          %s427 = ssub.s32 4096, 4096
          %428 = vsyncadd [#allocation13], %s427
          %s429 = sshll.u32 [#allocation14], 4
          %s430 = int_to_ptr.vmem [resolvable:$true] %s429
          %435 = dma.hbm_to_vmem [thread:$0]  %s11, 4096, %s430, [#allocation13], 64, 64, 4
        $region56: #{tpu_custom_call.1} parent=11 // pred_fallthru
          _
        // Predicated region
        $region57: #{tpu_custom_call.1} parent=11 // pred_check
          %p436 = pneg %p306
        $region58: #{tpu_custom_call.1} parent=11 // pred_check_branch
          %438 = sbr.rel (%p436) target = $region60
        $region59: #{tpu_custom_call.1} parent=11 // pred_region
          _
        $region60: #{tpu_custom_call.1} parent=11 // pred_fallthru
          _
      $region12: #{tpu_custom_call.1} parent=5 // pred_fallthru
        _
      %p439 = scmp.lt.s32.totalorder %s28, 2
      // Predicated region
      $region61: #{tpu_custom_call.1} parent=5 // pred_check
        %p440 = pneg %p439
      $region62: #{tpu_custom_call.1} parent=5 // pred_check_branch
        %442 = sbr.rel (%p440) target = $region64
      $region63: #{tpu_custom_call.1} parent=5 // pred_region
        // Predicated region
        $region65: #{tpu_custom_call.1} parent=63 // pred_check
          %p443 = pneg %p48
        $region66: #{tpu_custom_call.1} parent=63 // pred_check_branch
          %445 = sbr.rel (%p443) target = $region68
        $region67: #{tpu_custom_call.1} parent=63 // pred_region
          %s446 = sand.u32 %s38, 1
          %s447 = scalar_lea.sflag [#allocation4], %s446
          %s448 = sand.u32 %s38, 1
          %s449 = smul.addr %s448, 128
          %s450 = scalar_lea.vmem [#allocation3], %s449
          %s452 = ssub.s32 2048, 2048
          %453 = vsyncadd %s447, %s452
          %s454 = smul.addr %s28, 16
          %s455 = smul.addr %s454, 128
          %s456 = scalar_lea.hbm %s0, %s455
          %s457 = sshll.u32 %s450, 4
          %s458 = int_to_ptr.vmem [resolvable:$true] %s457
          %463 = dma.hbm_to_vmem [thread:$0]  %s456, 2048, %s458, %s447, 128, 128, 8
        $region68: #{tpu_custom_call.1} parent=63 // pred_fallthru
          _
      $region64: #{tpu_custom_call.1} parent=5 // pred_fallthru
        _
      %p464 = scmp.le.s32.totalorder 1, %s28
      %p465 = scmp.lt.s32.totalorder %s28, 3
      %p466 = pnand %p464, %p465
      %p467 = pneg %p466
      // Predicated region
      $region69: #{tpu_custom_call.1} parent=5 // pred_check
        _
      $region70: #{tpu_custom_call.1} parent=5 // pred_check_branch
        %469 = sbr.rel (%p466) target = $region72
      $region71: #{tpu_custom_call.1} parent=5 // pred_region
        %s470 = ssub.s32 %s28, 1
        %s471 = sand.u32 %s41, 1
        %s472 = scalar_lea.sflag [#allocation4], %s471
        %s473 = sand.u32 %s41, 1
        %s474 = smul.addr %s473, 128
        %s475 = scalar_lea.vmem [#allocation3], %s474
        // Predicated region
        $region73: #{tpu_custom_call.1} parent=71 // pred_check
          %p476 = pneg %p54
        $region74: #{tpu_custom_call.1} parent=71 // pred_check_branch
          %478 = sbr.rel (%p476) target = $region76
        $region75: #{tpu_custom_call.1} parent=71 // pred_region
          %479 = dma.done %s472, 2048
        $region76: #{tpu_custom_call.1} parent=71 // pred_fallthru
          _
        // Predicated region
        $region77: #{tpu_custom_call.1} parent=71 // pred_check
          %p480 = pneg %p75
        $region78: #{tpu_custom_call.1} parent=71 // pred_check_branch
          %482 = sbr.rel (%p480) target = $region80
        $region79: #{tpu_custom_call.1} parent=71 // pred_region
          %483 = dma.done [#allocation7], 16
        $region80: #{tpu_custom_call.1} parent=71 // pred_fallthru
          _
        // Predicated region
        $region81: #{tpu_custom_call.1} parent=71 // pred_check
          %p484 = pneg %p96
        $region82: #{tpu_custom_call.1} parent=71 // pred_check_branch
          %486 = sbr.rel (%p484) target = $region84
        $region83: #{tpu_custom_call.1} parent=71 // pred_region
          %487 = dma.done [#allocation7], 16
        $region84: #{tpu_custom_call.1} parent=71 // pred_fallthru
          _
        // Predicated region
        $region85: #{tpu_custom_call.1} parent=71 // pred_check
          %p488 = pneg %p117
        $region86: #{tpu_custom_call.1} parent=71 // pred_check_branch
          %490 = sbr.rel (%p488) target = $region88
        $region87: #{tpu_custom_call.1} parent=71 // pred_region
          %491 = dma.done [#allocation10], 3072
        $region88: #{tpu_custom_call.1} parent=71 // pred_fallthru
          _
        // Predicated region
        $region89: #{tpu_custom_call.1} parent=71 // pred_check
          %p492 = pneg %p159
        $region90: #{tpu_custom_call.1} parent=71 // pred_check_branch
          %494 = sbr.rel (%p492) target = $region92
        $region91: #{tpu_custom_call.1} parent=71 // pred_region
          %495 = dma.done [#allocation10], 1024
        $region92: #{tpu_custom_call.1} parent=71 // pred_fallthru
          _
        // Predicated region
        $region93: #{tpu_custom_call.1} parent=71 // pred_check
          %p496 = pneg %p243
        $region94: #{tpu_custom_call.1} parent=71 // pred_check_branch
          %498 = sbr.rel (%p496) target = $region96
        $region95: #{tpu_custom_call.1} parent=71 // pred_region
          %499 = dma.done [#allocation13], 4096
        $region96: #{tpu_custom_call.1} parent=71 // pred_fallthru
          _
        // Predicated region
        $region97: #{tpu_custom_call.1} parent=71 // pred_check
          %p500 = pneg %p285
        $region98: #{tpu_custom_call.1} parent=71 // pred_check_branch
          %502 = sbr.rel (%p500) target = $region100
        $region99: #{tpu_custom_call.1} parent=71 // pred_region
          %503 = dma.done [#allocation13], 4096
        $region100: #{tpu_custom_call.1} parent=71 // pred_fallthru
          _
        %s504 = sand.u32 %s41, 1
        %s505 = scalar_lea.sflag [#allocation4], %s504
        %s506 = sand.u32 %s41, 1
        %s507 = smul.addr %s506, 128
        %s508 = scalar_lea.vmem [#allocation3], %s507
        %p509 = pneg %p54
        %p510 = pneg %p51
        %p511 = pneg %p75
        %p512 = pneg %p72
        %p513 = pneg %p96
        %p514 = pneg %p93
        %p515 = pneg %p117
        %p516 = pneg %p114
        %p517 = pneg %p138
        %p518 = pneg %p135
        %p519 = pneg %p159
        %p520 = pneg %p156
        %p521 = pneg %p180
        %p522 = pneg %p177
        %p523 = pneg %p201
        %p524 = pneg %p198
        %p525 = pneg %p222
        %p526 = pneg %p219
        %p527 = pneg %p243
        %p528 = pneg %p240
        %p529 = pneg %p264
        %p530 = pneg %p261
        %p531 = pneg %p285
        %p532 = pneg %p282
        %p533 = pneg %p306
        %p534 = pneg %p303
        %p535 = pneg %p332
        %p536 = pneg %p329
        %s537 = sand.u32 %s319, 1
        %s538 = scalar_lea.sflag [#allocation5], %s537
        %s539 = sand.u32 %s319, 1
        %s540 = smul.addr %s539, 128
        %s541 = scalar_lea.vmem [#allocation15], %s540
        %v543 = vld [vmem:[%s475] sm:$0xff]
        %v544 = vld [vmem:[%s475 + $0x8] sm:$0xff]
        %v545 = vld [vmem:[%s475 + $0x10] sm:$0xff]
        %v546 = vld [vmem:[%s475 + $0x18] sm:$0xff]
        %v547 = vld [vmem:[%s475 + $0x20] sm:$0xff]
        %v548 = vld [vmem:[%s475 + $0x28] sm:$0xff]
        %v549 = vld [vmem:[%s475 + $0x30] sm:$0xff]
        %v550 = vld [vmem:[%s475 + $0x38] sm:$0xff]
        %v551 = vld [vmem:[%s475 + $0x40] sm:$0xff]
        %v552 = vld [vmem:[%s475 + $0x48] sm:$0xff]
        %v553 = vld [vmem:[%s475 + $0x50] sm:$0xff]
        %v554 = vld [vmem:[%s475 + $0x58] sm:$0xff]
        %v555 = vld [vmem:[%s475 + $0x60] sm:$0xff]
        %v556 = vld [vmem:[%s475 + $0x68] sm:$0xff]
        %v557 = vld [vmem:[%s475 + $0x70] sm:$0xff]
        %v558 = vld [vmem:[%s475 + $0x78] sm:$0xff]
        %v559 = vld [vmem:[#allocation6] sm:$0x1]
        %v560 = vld [vmem:[#allocation8] sm:$0x1]
        %561 = vadd.xlane.f32.xlu0 %v543
        %v562 = vpop.xlane.xlu0 %561
        %563 = vadd.xlane.f32.xlu0 %v544
        %v564 = vpop.xlane.xlu0 %563
        %565 = vadd.xlane.f32.xlu0 %v545
        %v566 = vpop.xlane.xlu0 %565
        %567 = vadd.xlane.f32.xlu0 %v546
        %v568 = vpop.xlane.xlu0 %567
        %569 = vadd.xlane.f32.xlu0 %v547
        %v570 = vpop.xlane.xlu0 %569
        %571 = vadd.xlane.f32.xlu0 %v548
        %v572 = vpop.xlane.xlu0 %571
        %573 = vadd.xlane.f32.xlu0 %v549
        %v574 = vpop.xlane.xlu0 %573
        %575 = vadd.xlane.f32.xlu0 %v550
        %v576 = vpop.xlane.xlu0 %575
        %577 = vadd.xlane.f32.xlu0 %v551
        %v578 = vpop.xlane.xlu0 %577
        %579 = vadd.xlane.f32.xlu0 %v552
        %v580 = vpop.xlane.xlu0 %579
        %581 = vadd.xlane.f32.xlu0 %v553
        %v582 = vpop.xlane.xlu0 %581
        %583 = vadd.xlane.f32.xlu0 %v554
        %v584 = vpop.xlane.xlu0 %583
        %585 = vadd.xlane.f32.xlu0 %v555
        %v586 = vpop.xlane.xlu0 %585
        %587 = vadd.xlane.f32.xlu0 %v556
        %v588 = vpop.xlane.xlu0 %587
        %589 = vadd.xlane.f32.xlu0 %v557
        %v590 = vpop.xlane.xlu0 %589
        %591 = vadd.xlane.f32.xlu0 %v558
        %v592 = vpop.xlane.xlu0 %591
        %v593 = vrcp.pop 128.0
        %v594 = vmul.f32 %v562, %v593
        %v595 = vmul.f32 %v564, %v593
        %v596 = vmul.f32 %v566, %v593
        %v597 = vmul.f32 %v568, %v593
        %v598 = vmul.f32 %v570, %v593
        %v599 = vmul.f32 %v572, %v593
        %v600 = vmul.f32 %v574, %v593
        %v601 = vmul.f32 %v576, %v593
        %v602 = vmul.f32 %v578, %v593
        %v603 = vmul.f32 %v580, %v593
        %v604 = vmul.f32 %v582, %v593
        %v605 = vmul.f32 %v584, %v593
        %v606 = vmul.f32 %v586, %v593
        %v607 = vmul.f32 %v588, %v593
        %v608 = vmul.f32 %v590, %v593
        %v609 = vmul.f32 %v592, %v593
        %v610 = vsub.f32 %v543, %v594
        %v611 = vsub.f32 %v544, %v595
        %v612 = vsub.f32 %v545, %v596
        %v613 = vsub.f32 %v546, %v597
        %v614 = vsub.f32 %v547, %v598
        %v615 = vsub.f32 %v548, %v599
        %v616 = vsub.f32 %v549, %v600
        %v617 = vsub.f32 %v550, %v601
        %v618 = vsub.f32 %v551, %v602
        %v619 = vsub.f32 %v552, %v603
        %v620 = vsub.f32 %v553, %v604
        %v621 = vsub.f32 %v554, %v605
        %v622 = vsub.f32 %v555, %v606
        %v623 = vsub.f32 %v556, %v607
        %v624 = vsub.f32 %v557, %v608
        %v625 = vsub.f32 %v558, %v609
        %v626 = vmul.f32 %v610, %v610
        %v627 = vmul.f32 %v611, %v611
        %v628 = vmul.f32 %v612, %v612
        %v629 = vmul.f32 %v613, %v613
        %v630 = vmul.f32 %v614, %v614
        %v631 = vmul.f32 %v615, %v615
        %v632 = vmul.f32 %v616, %v616
        %v633 = vmul.f32 %v617, %v617
        %v634 = vmul.f32 %v618, %v618
        %v635 = vmul.f32 %v619, %v619
        %v636 = vmul.f32 %v620, %v620
        %v637 = vmul.f32 %v621, %v621
        %v638 = vmul.f32 %v622, %v622
        %v639 = vmul.f32 %v623, %v623
        %v640 = vmul.f32 %v624, %v624
        %v641 = vmul.f32 %v625, %v625
        %642 = vadd.xlane.f32.xlu0 %v626
        %v643 = vpop.xlane.xlu0 %642
        %644 = vadd.xlane.f32.xlu0 %v627
        %v645 = vpop.xlane.xlu0 %644
        %646 = vadd.xlane.f32.xlu0 %v628
        %v647 = vpop.xlane.xlu0 %646
        %648 = vadd.xlane.f32.xlu0 %v629
        %v649 = vpop.xlane.xlu0 %648
        %650 = vadd.xlane.f32.xlu0 %v630
        %v651 = vpop.xlane.xlu0 %650
        %652 = vadd.xlane.f32.xlu0 %v631
        %v653 = vpop.xlane.xlu0 %652
        %654 = vadd.xlane.f32.xlu0 %v632
        %v655 = vpop.xlane.xlu0 %654
        %656 = vadd.xlane.f32.xlu0 %v633
        %v657 = vpop.xlane.xlu0 %656
        %658 = vadd.xlane.f32.xlu0 %v634
        %v659 = vpop.xlane.xlu0 %658
        %660 = vadd.xlane.f32.xlu0 %v635
        %v661 = vpop.xlane.xlu0 %660
        %662 = vadd.xlane.f32.xlu0 %v636
        %v663 = vpop.xlane.xlu0 %662
        %664 = vadd.xlane.f32.xlu0 %v637
        %v665 = vpop.xlane.xlu0 %664
        %666 = vadd.xlane.f32.xlu0 %v638
        %v667 = vpop.xlane.xlu0 %666
        %668 = vadd.xlane.f32.xlu0 %v639
        %v669 = vpop.xlane.xlu0 %668
        %670 = vadd.xlane.f32.xlu0 %v640
        %v671 = vpop.xlane.xlu0 %670
        %672 = vadd.xlane.f32.xlu0 %v641
        %v673 = vpop.xlane.xlu0 %672
        %v674 = vmul.f32 %v643, %v593
        %v675 = vmul.f32 %v645, %v593
        %v676 = vmul.f32 %v647, %v593
        %v677 = vmul.f32 %v649, %v593
        %v678 = vmul.f32 %v651, %v593
        %v679 = vmul.f32 %v653, %v593
        %v680 = vmul.f32 %v655, %v593
        %v681 = vmul.f32 %v657, %v593
        %v682 = vmul.f32 %v659, %v593
        %v683 = vmul.f32 %v661, %v593
        %v684 = vmul.f32 %v663, %v593
        %v685 = vmul.f32 %v665, %v593
        %v686 = vmul.f32 %v667, %v593
        %v687 = vmul.f32 %v669, %v593
        %v688 = vmul.f32 %v671, %v593
        %v689 = vmul.f32 %v673, %v593
        %v690 = vadd.f32 %v674, 1e-05
        %v691 = vadd.f32 %v675, 1e-05
        %v692 = vadd.f32 %v676, 1e-05
        %v693 = vadd.f32 %v677, 1e-05
        %v694 = vadd.f32 %v678, 1e-05
        %v695 = vadd.f32 %v679, 1e-05
        %v696 = vadd.f32 %v680, 1e-05
        %v697 = vadd.f32 %v681, 1e-05
        %v698 = vadd.f32 %v682, 1e-05
        %v699 = vadd.f32 %v683, 1e-05
        %v700 = vadd.f32 %v684, 1e-05
        %v701 = vadd.f32 %v685, 1e-05
        %v702 = vadd.f32 %v686, 1e-05
        %v703 = vadd.f32 %v687, 1e-05
        %v704 = vadd.f32 %v688, 1e-05
        %v705 = vadd.f32 %v689, 1e-05
        %v706 = vrsqrt.pop %v690
        %v707 = vrsqrt.pop %v691
        %v708 = vrsqrt.pop %v692
        %v709 = vrsqrt.pop %v693
        %v710 = vrsqrt.pop %v694
        %v711 = vrsqrt.pop %v695
        %v712 = vrsqrt.pop %v696
        %v713 = vrsqrt.pop %v697
        %v714 = vrsqrt.pop %v698
        %v715 = vrsqrt.pop %v699
        %v716 = vrsqrt.pop %v700
        %v717 = vrsqrt.pop %v701
        %v718 = vrsqrt.pop %v702
        %v719 = vrsqrt.pop %v703
        %v720 = vrsqrt.pop %v704
        %v721 = vrsqrt.pop %v705
        %v722 = vmul.f32 %v610, %v706
        %v723 = vmul.f32 %v611, %v707
        %v724 = vmul.f32 %v612, %v708
        %v725 = vmul.f32 %v613, %v709
        %v726 = vmul.f32 %v614, %v710
        %v727 = vmul.f32 %v615, %v711
        %v728 = vmul.f32 %v616, %v712
        %v729 = vmul.f32 %v617, %v713
        %v730 = vmul.f32 %v618, %v714
        %v731 = vmul.f32 %v619, %v715
        %v732 = vmul.f32 %v620, %v716
        %v733 = vmul.f32 %v621, %v717
        %v734 = vmul.f32 %v622, %v718
        %v735 = vmul.f32 %v623, %v719
        %v736 = vmul.f32 %v624, %v720
        %v737 = vmul.f32 %v625, %v721
        %v739 = vlaneseq
        %v740 = vshrl.u32 %v739, 7
        %v741 = vsub.s32 0, %v740
        %v742 = vrot.slane %v559, %v741
        %v744 = vmul.f32 %v722, %v742
        %v745 = vmul.f32 %v723, %v742
        %v746 = vmul.f32 %v724, %v742
        %v747 = vmul.f32 %v725, %v742
        %v748 = vmul.f32 %v726, %v742
        %v749 = vmul.f32 %v727, %v742
        %v750 = vmul.f32 %v728, %v742
        %v751 = vmul.f32 %v729, %v742
        %v752 = vmul.f32 %v730, %v742
        %v753 = vmul.f32 %v731, %v742
        %v754 = vmul.f32 %v732, %v742
        %v755 = vmul.f32 %v733, %v742
        %v756 = vmul.f32 %v734, %v742
        %v757 = vmul.f32 %v735, %v742
        %v758 = vmul.f32 %v736, %v742
        %v759 = vmul.f32 %v737, %v742
        %v761 = vlaneseq
        %v762 = vshrl.u32 %v761, 7
        %v763 = vsub.s32 0, %v762
        %v764 = vrot.slane %v560, %v763
        %v766 = vadd.f32 %v744, %v764
        %v767 = vadd.f32 %v745, %v764
        %v768 = vadd.f32 %v746, %v764
        %v769 = vadd.f32 %v747, %v764
        %v770 = vadd.f32 %v748, %v764
        %v771 = vadd.f32 %v749, %v764
        %v772 = vadd.f32 %v750, %v764
        %v773 = vadd.f32 %v751, %v764
        %v774 = vadd.f32 %v752, %v764
        %v775 = vadd.f32 %v753, %v764
        %v776 = vadd.f32 %v754, %v764
        %v777 = vadd.f32 %v755, %v764
        %v778 = vadd.f32 %v756, %v764
        %v779 = vadd.f32 %v757, %v764
        %v780 = vadd.f32 %v758, %v764
        %v781 = vadd.f32 %v759, %v764
        %v782 = vpack.c.bf16 %v767, %v766
        %v783 = vpack.c.bf16 %v769, %v768
        %v784 = vpack.c.bf16 %v771, %v770
        %v785 = vpack.c.bf16 %v773, %v772
        %v786 = vpack.c.bf16 %v775, %v774
        %v787 = vpack.c.bf16 %v777, %v776
        %v788 = vpack.c.bf16 %v779, %v778
        %v789 = vpack.c.bf16 %v781, %v780
        %v790 = vld [vmem:[#allocation9] sm:$0xff]
        %v791 = vld [vmem:[#allocation9 + $0x8] sm:$0xf]
        %v792 = vld [vmem:[#allocation9 + $0xc] sm:$0xff]
        %v793 = vld [vmem:[#allocation9 + $0x14] sm:$0xf]
        %v794 = vld [vmem:[#allocation9 + $0x18] sm:$0xff]
        %v795 = vld [vmem:[#allocation9 + $0x20] sm:$0xf]
        %v796 = vld [vmem:[#allocation9 + $0x24] sm:$0xff]
        %v797 = vld [vmem:[#allocation9 + $0x2c] sm:$0xf]
        %v798 = vld [vmem:[#allocation9 + $0x30] sm:$0xff]
        %v799 = vld [vmem:[#allocation9 + $0x38] sm:$0xf]
        %v800 = vld [vmem:[#allocation9 + $0x3c] sm:$0xff]
        %v801 = vld [vmem:[#allocation9 + $0x44] sm:$0xf]
        %v802 = vld [vmem:[#allocation9 + $0x48] sm:$0xff]
        %v803 = vld [vmem:[#allocation9 + $0x50] sm:$0xf]
        %v804 = vld [vmem:[#allocation9 + $0x54] sm:$0xff]
        %v805 = vld [vmem:[#allocation9 + $0x5c] sm:$0xf]
        %v806 = vld [vmem:[#allocation9 + $0x60] sm:$0xff]
        %v807 = vld [vmem:[#allocation9 + $0x68] sm:$0xf]
        %v808 = vld [vmem:[#allocation9 + $0x6c] sm:$0xff]
        %v809 = vld [vmem:[#allocation9 + $0x74] sm:$0xf]
        %v810 = vld [vmem:[#allocation9 + $0x78] sm:$0xff]
        %v811 = vld [vmem:[#allocation9 + $0x80] sm:$0xf]
        %v812 = vld [vmem:[#allocation9 + $0x84] sm:$0xff]
        %v813 = vld [vmem:[#allocation9 + $0x8c] sm:$0xf]
        %v814 = vld [vmem:[#allocation9 + $0x90] sm:$0xff]
        %v815 = vld [vmem:[#allocation9 + $0x98] sm:$0xf]
        %v816 = vld [vmem:[#allocation9 + $0x9c] sm:$0xff]
        %v817 = vld [vmem:[#allocation9 + $0xa4] sm:$0xf]
        %v818 = vld [vmem:[#allocation9 + $0xa8] sm:$0xff]
        %v819 = vld [vmem:[#allocation9 + $0xb0] sm:$0xf]
        %v820 = vld [vmem:[#allocation9 + $0xb4] sm:$0xff]
        %v821 = vld [vmem:[#allocation9 + $0xbc] sm:$0xf]
        %v822 = vld [vmem:[%s4] sm:$0x7]
        %v824 = vlaneseq
        %v825 = vshrl.u32 %v824, 7
        %v826 = vsub.s32 0, %v825
        %v827 = vrot.slane %v822, %v826
        %v828 = vlaneseq
        %v829 = vshrl.u32 %v828, 7
        %v830 = vsub.s32 1, %v829
        %v831 = vrot.slane %v822, %v830
        %v832 = vlaneseq
        %v833 = vshrl.u32 %v832, 7
        %v834 = vsub.s32 2, %v833
        %v835 = vrot.slane %v822, %v834
        %v871 = vunpack.c.l.b16 %v790
        %v872 = vunpack.c.h.b16 %v790
        %v873 = vunpack.c.l.b16 %v791
        %v874 = vunpack.c.l.b16 %v792
        %v875 = vunpack.c.h.b16 %v792
        %v876 = vunpack.c.l.b16 %v793
        %v877 = vunpack.c.l.b16 %v794
        %v878 = vunpack.c.h.b16 %v794
        %v879 = vunpack.c.l.b16 %v795
        %v880 = vunpack.c.l.b16 %v796
        %v881 = vunpack.c.h.b16 %v796
        %v882 = vunpack.c.l.b16 %v797
        %v883 = vunpack.c.l.b16 %v798
        %v884 = vunpack.c.h.b16 %v798
        %v885 = vunpack.c.l.b16 %v799
        %v886 = vunpack.c.l.b16 %v800
        %v887 = vunpack.c.h.b16 %v800
        %v888 = vunpack.c.l.b16 %v801
        %v889 = vunpack.c.l.b16 %v802
        %v890 = vunpack.c.h.b16 %v802
        %v891 = vunpack.c.l.b16 %v803
        %v892 = vunpack.c.l.b16 %v804
        %v893 = vunpack.c.h.b16 %v804
        %v894 = vunpack.c.l.b16 %v805
        %v895 = vunpack.c.l.b16 %v806
        %v896 = vunpack.c.h.b16 %v806
        %v897 = vunpack.c.l.b16 %v807
        %v898 = vunpack.c.l.b16 %v808
        %v899 = vunpack.c.h.b16 %v808
        %v900 = vunpack.c.l.b16 %v809
        %v901 = vunpack.c.l.b16 %v810
        %v902 = vunpack.c.h.b16 %v810
        %v903 = vunpack.c.l.b16 %v811
        %v904 = vunpack.c.l.b16 %v812
        %v905 = vunpack.c.h.b16 %v812
        %v906 = vunpack.c.l.b16 %v813
        %v907 = vunpack.c.l.b16 %v814
        %v908 = vunpack.c.h.b16 %v814
        %v909 = vunpack.c.l.b16 %v815
        %v910 = vunpack.c.l.b16 %v816
        %v911 = vunpack.c.h.b16 %v816
        %v912 = vunpack.c.l.b16 %v817
        %v913 = vunpack.c.l.b16 %v818
        %v914 = vunpack.c.h.b16 %v818
        %v915 = vunpack.c.l.b16 %v819
        %v916 = vunpack.c.l.b16 %v820
        %v917 = vunpack.c.h.b16 %v820
        %v918 = vunpack.c.l.b16 %v821
        %v919 = vpack.c.b16 %v874, %v871
        %v920 = vpack.c.b16 %v875, %v872
        %v921 = vpack.c.b16 %v876, %v873
        %v922 = vpack.c.b16 %v880, %v877
        %v923 = vpack.c.b16 %v881, %v878
        %v924 = vpack.c.b16 %v882, %v879
        %v925 = vpack.c.b16 %v886, %v883
        %v926 = vpack.c.b16 %v887, %v884
        %v927 = vpack.c.b16 %v888, %v885
        %v928 = vpack.c.b16 %v892, %v889
        %v929 = vpack.c.b16 %v893, %v890
        %v930 = vpack.c.b16 %v894, %v891
        %v931 = vpack.c.b16 %v898, %v895
        %v932 = vpack.c.b16 %v899, %v896
        %v933 = vpack.c.b16 %v900, %v897
        %v934 = vpack.c.b16 %v904, %v901
        %v935 = vpack.c.b16 %v905, %v902
        %v936 = vpack.c.b16 %v906, %v903
        %v937 = vpack.c.b16 %v910, %v907
        %v938 = vpack.c.b16 %v911, %v908
        %v939 = vpack.c.b16 %v912, %v909
        %v940 = vpack.c.b16 %v916, %v913
        %v941 = vpack.c.b16 %v917, %v914
        %v942 = vpack.c.b16 %v918, %v915
        %967 = vmatprep.subr.bf16.mxu0 %v920
        %968 = vmatpush1.bf16.msra.mxu0 %v919
        %969 = vmatprep.subr.bf16.mxu0 %v923
        %970 = vmatpush1.bf16.msra.mxu0 %v922
        %971 = vmatprep.subr.bf16.mxu0 %v926
        %972 = vmatpush1.bf16.msra.mxu0 %v925
        %973 = vmatprep.subr.bf16.mxu0 %v929
        %974 = vmatpush1.bf16.msra.mxu0 %v928
        %975 = vmatprep.subr.bf16.mxu0 %v932
        %976 = vmatpush1.bf16.msra.mxu0 %v931
        %977 = vmatprep.subr.bf16.mxu0 %v935
        %978 = vmatpush1.bf16.msra.mxu0 %v934
        %979 = vmatprep.subr.bf16.mxu0 %v938
        %980 = vmatpush1.bf16.msra.mxu0 %v937
        %981 = vmatprep.subr.bf16.mxu0 %v941
        %982 = vmatpush1.bf16.msra.mxu0 %v940
        %983 = vmatprep.subr.bf16.mxu0 0
        %984 = vmatpush1.bf16.msra.mxu0 0
        %985 = vmatprep.subr.bf16.mxu0 0
        %986 = vmatpush1.bf16.msra.mxu0 0
        %987 = vmatprep.subr.bf16.mxu0 0
        %988 = vmatpush1.bf16.msra.mxu0 0
        %989 = vmatprep.subr.bf16.mxu0 0
        %990 = vmatpush1.bf16.msra.mxu0 0
        %991 = vmatprep.subr.bf16.mxu0 0
        %992 = vmatpush1.bf16.msra.mxu0 0
        %993 = vmatprep.subr.bf16.mxu0 0
        %994 = vmatpush1.bf16.msra.mxu0 0
        %995 = vmatprep.subr.bf16.mxu0 0
        %996 = vmatpush1.bf16.msra.mxu0 0
        %997 = vmatprep.subr.bf16.mxu0 0
        %998 = vmatpush1.bf16.msra.mxu0 0
        %999 = vmatprep.mubr.bf16.mxu0 0
        %1000 = vmatmul.mubr.bf16.gmra.mrb[0].mxu0 %v782
        %v1001 = vpop.f32.mrb[0].mxu0
        %v1002 = vadd.f32 %v827, %v1001
        %v1003 = vpop.f32.mrb[0].mxu0
        %v1004 = vadd.f32 %v831, %v1003
        %v1005 = vpop.f32.mrb[0].mxu0
        %v1006 = vadd.f32 %v827, %v1005
        %v1007 = vpop.f32.mrb[0].mxu0
        %v1008 = vadd.f32 %v831, %v1007
        %1009 = vmatprep.mubr.bf16.mxu0 0
        %1010 = vmatmul.mubr.bf16.gmra.mrb[0].mxu0 %v783
        %v1011 = vpop.f32.mrb[0].mxu0
        %v1012 = vadd.f32 %v827, %v1011
        %v1013 = vpop.f32.mrb[0].mxu0
        %v1014 = vadd.f32 %v831, %v1013
        %v1015 = vpop.f32.mrb[0].mxu0
        %v1016 = vadd.f32 %v827, %v1015
        %v1017 = vpop.f32.mrb[0].mxu0
        %v1018 = vadd.f32 %v831, %v1017
        %1019 = vmatprep.mubr.bf16.mxu0 0
        %1020 = vmatmul.mubr.bf16.gmra.mrb[0].mxu0 %v784
        %v1021 = vpop.f32.mrb[0].mxu0
        %v1022 = vadd.f32 %v827, %v1021
        %v1023 = vpop.f32.mrb[0].mxu0
        %v1024 = vadd.f32 %v831, %v1023
        %v1025 = vpop.f32.mrb[0].mxu0
        %v1026 = vadd.f32 %v827, %v1025
        %v1027 = vpop.f32.mrb[0].mxu0
        %v1028 = vadd.f32 %v831, %v1027
        %1029 = vmatprep.mubr.bf16.mxu0 0
        %1030 = vmatmul.mubr.bf16.gmra.mrb[0].mxu0 %v785
        %v1031 = vpop.f32.mrb[0].mxu0
        %v1032 = vadd.f32 %v827, %v1031
        %v1033 = vpop.f32.mrb[0].mxu0
        %v1034 = vadd.f32 %v831, %v1033
        %v1035 = vpop.f32.mrb[0].mxu0
        %v1036 = vadd.f32 %v827, %v1035
        %v1037 = vpop.f32.mrb[0].mxu0
        %v1038 = vadd.f32 %v831, %v1037
        %1039 = vmatprep.mubr.bf16.mxu0 0
        %1040 = vmatmul.mubr.bf16.gmra.mrb[0].mxu0 %v786
        %v1041 = vpop.f32.mrb[0].mxu0
        %v1042 = vadd.f32 %v827, %v1041
        %v1043 = vpop.f32.mrb[0].mxu0
        %v1044 = vadd.f32 %v831, %v1043
        %v1045 = vpop.f32.mrb[0].mxu0
        %v1046 = vadd.f32 %v827, %v1045
        %v1047 = vpop.f32.mrb[0].mxu0
        %v1048 = vadd.f32 %v831, %v1047
        %1049 = vmatprep.mubr.bf16.mxu0 0
        %1050 = vmatmul.mubr.bf16.gmra.mrb[0].mxu0 %v787
        %v1051 = vpop.f32.mrb[0].mxu0
        %v1052 = vadd.f32 %v827, %v1051
        %v1053 = vpop.f32.mrb[0].mxu0
        %v1054 = vadd.f32 %v831, %v1053
        %v1055 = vpop.f32.mrb[0].mxu0
        %v1056 = vadd.f32 %v827, %v1055
        %v1057 = vpop.f32.mrb[0].mxu0
        %v1058 = vadd.f32 %v831, %v1057
        %1059 = vmatprep.mubr.bf16.mxu0 0
        %1060 = vmatmul.mubr.bf16.gmra.mrb[0].mxu0 %v788
        %v1061 = vpop.f32.mrb[0].mxu0
        %v1062 = vadd.f32 %v827, %v1061
        %v1063 = vpop.f32.mrb[0].mxu0
        %v1064 = vadd.f32 %v831, %v1063
        %v1065 = vpop.f32.mrb[0].mxu0
        %v1066 = vadd.f32 %v827, %v1065
        %v1067 = vpop.f32.mrb[0].mxu0
        %v1068 = vadd.f32 %v831, %v1067
        %1069 = vmatprep.mubr.bf16.mxu0 0
        %1070 = vmatmul.mubr.bf16.gmra.mrb[0].mxu0 %v789
        %v1071 = vpop.f32.mrb[0].mxu0
        %v1072 = vadd.f32 %v827, %v1071
        %v1073 = vpop.f32.mrb[0].mxu0
        %v1074 = vadd.f32 %v831, %v1073
        %v1075 = vpop.f32.mrb[0].mxu0
        %v1076 = vadd.f32 %v827, %v1075
        %v1077 = vpop.f32.mrb[0].mxu0
        %v1078 = vadd.f32 %v831, %v1077
        %1079 = vdwg.mxu0
        %1080 = vmatprep.subr.bf16.mxu0 0
        %1081 = vmatpush1.bf16.msra.mxu0 %v921
        %1082 = vmatprep.subr.bf16.mxu0 0
        %1083 = vmatpush1.bf16.msra.mxu0 %v924
        %1084 = vmatprep.subr.bf16.mxu0 0
        %1085 = vmatpush1.bf16.msra.mxu0 %v927
        %1086 = vmatprep.subr.bf16.mxu0 0
        %1087 = vmatpush1.bf16.msra.mxu0 %v930
        %1088 = vmatprep.subr.bf16.mxu0 0
        %1089 = vmatpush1.bf16.msra.mxu0 %v933
        %1090 = vmatprep.subr.bf16.mxu0 0
        %1091 = vmatpush1.bf16.msra.mxu0 %v936
        %1092 = vmatprep.subr.bf16.mxu0 0
        %1093 = vmatpush1.bf16.msra.mxu0 %v939
        %1094 = vmatprep.subr.bf16.mxu0 0
        %1095 = vmatpush1.bf16.msra.mxu0 %v942
        %1096 = vmatprep.subr.bf16.mxu0 0
        %1097 = vmatpush1.bf16.msra.mxu0 0
        %1098 = vmatprep.subr.bf16.mxu0 0
        %1099 = vmatpush1.bf16.msra.mxu0 0
        %1100 = vmatprep.subr.bf16.mxu0 0
        %1101 = vmatpush1.bf16.msra.mxu0 0
        %1102 = vmatprep.subr.bf16.mxu0 0
        %1103 = vmatpush1.bf16.msra.mxu0 0
        %1104 = vmatprep.subr.bf16.mxu0 0
        %1105 = vmatpush1.bf16.msra.mxu0 0
        %1106 = vmatprep.subr.bf16.mxu0 0
        %1107 = vmatpush1.bf16.msra.mxu0 0
        %1108 = vmatprep.subr.bf16.mxu0 0
        %1109 = vmatpush1.bf16.msra.mxu0 0
        %1110 = vmatprep.subr.bf16.mxu0 0
        %1111 = vmatpush1.bf16.msra.mxu0 0
        %1112 = vmatprep.mubr.bf16.mxu0 0
        %1113 = vmatmul.mubr.bf16.gmra.mrb[0].mxu0 %v782
        %v1114 = vpop.f32.mrb[0].mxu0
        %v1115 = vadd.f32 %v835, %v1114
        %v1116 = vpop.f32.mrb[0].mxu0
        %v1117 = vpop.f32.mrb[0].mxu0
        %v1118 = vadd.f32 %v835, %v1117
        %v1119 = vpop.f32.mrb[0].mxu0
        %1120 = vmatprep.mubr.bf16.mxu0 0
        %1121 = vmatmul.mubr.bf16.gmra.mrb[0].mxu0 %v783
        %v1122 = vpop.f32.mrb[0].mxu0
        %v1123 = vadd.f32 %v835, %v1122
        %v1124 = vpop.f32.mrb[0].mxu0
        %v1125 = vpop.f32.mrb[0].mxu0
        %v1126 = vadd.f32 %v835, %v1125
        %v1127 = vpop.f32.mrb[0].mxu0
        %1128 = vmatprep.mubr.bf16.mxu0 0
        %1129 = vmatmul.mubr.bf16.gmra.mrb[0].mxu0 %v784
        %v1130 = vpop.f32.mrb[0].mxu0
        %v1131 = vadd.f32 %v835, %v1130
        %v1132 = vpop.f32.mrb[0].mxu0
        %v1133 = vpop.f32.mrb[0].mxu0
        %v1134 = vadd.f32 %v835, %v1133
        %v1135 = vpop.f32.mrb[0].mxu0
        %1136 = vmatprep.mubr.bf16.mxu0 0
        %1137 = vmatmul.mubr.bf16.gmra.mrb[0].mxu0 %v785
        %v1138 = vpop.f32.mrb[0].mxu0
        %v1139 = vadd.f32 %v835, %v1138
        %v1140 = vpop.f32.mrb[0].mxu0
        %v1141 = vpop.f32.mrb[0].mxu0
        %v1142 = vadd.f32 %v835, %v1141
        %v1143 = vpop.f32.mrb[0].mxu0
        %1144 = vmatprep.mubr.bf16.mxu0 0
        %1145 = vmatmul.mubr.bf16.gmra.mrb[0].mxu0 %v786
        %v1146 = vpop.f32.mrb[0].mxu0
        %v1147 = vadd.f32 %v835, %v1146
        %v1148 = vpop.f32.mrb[0].mxu0
        %v1149 = vpop.f32.mrb[0].mxu0
        %v1150 = vadd.f32 %v835, %v1149
        %v1151 = vpop.f32.mrb[0].mxu0
        %1152 = vmatprep.mubr.bf16.mxu0 0
        %1153 = vmatmul.mubr.bf16.gmra.mrb[0].mxu0 %v787
        %v1154 = vpop.f32.mrb[0].mxu0
        %v1155 = vadd.f32 %v835, %v1154
        %v1156 = vpop.f32.mrb[0].mxu0
        %v1157 = vpop.f32.mrb[0].mxu0
        %v1158 = vadd.f32 %v835, %v1157
        %v1159 = vpop.f32.mrb[0].mxu0
        %1160 = vmatprep.mubr.bf16.mxu0 0
        %1161 = vmatmul.mubr.bf16.gmra.mrb[0].mxu0 %v788
        %v1162 = vpop.f32.mrb[0].mxu0
        %v1163 = vadd.f32 %v835, %v1162
        %v1164 = vpop.f32.mrb[0].mxu0
        %v1165 = vpop.f32.mrb[0].mxu0
        %v1166 = vadd.f32 %v835, %v1165
        %v1167 = vpop.f32.mrb[0].mxu0
        %1168 = vmatprep.mubr.bf16.mxu0 0
        %1169 = vmatmul.mubr.bf16.gmra.mrb[0].mxu0 %v789
        %v1170 = vpop.f32.mrb[0].mxu0
        %v1171 = vadd.f32 %v835, %v1170
        %v1172 = vpop.f32.mrb[0].mxu0
        %v1173 = vpop.f32.mrb[0].mxu0
        %v1174 = vadd.f32 %v835, %v1173
        %v1175 = vpop.f32.mrb[0].mxu0
        %1176 = vdwg.mxu0
        %v1177 = vmul.f32 %v1002, 0.17677669
        %v1178 = vmul.f32 %v1006, 0.17677669
        %v1179 = vmul.f32 %v1012, 0.17677669
        %v1180 = vmul.f32 %v1016, 0.17677669
        %v1181 = vmul.f32 %v1022, 0.17677669
        %v1182 = vmul.f32 %v1026, 0.17677669
        %v1183 = vmul.f32 %v1032, 0.17677669
        %v1184 = vmul.f32 %v1036, 0.17677669
        %v1185 = vmul.f32 %v1042, 0.17677669
        %v1186 = vmul.f32 %v1046, 0.17677669
        %v1187 = vmul.f32 %v1052, 0.17677669
        %v1188 = vmul.f32 %v1056, 0.17677669
        %v1189 = vmul.f32 %v1062, 0.17677669
        %v1190 = vmul.f32 %v1066, 0.17677669
        %v1191 = vmul.f32 %v1072, 0.17677669
        %v1192 = vmul.f32 %v1076, 0.17677669
        %v1193 = vpack.c.bf16 %v1178, %v1177
        %v1194 = vpack.c.bf16 %v1180, %v1179
        %v1195 = vpack.c.bf16 %v1182, %v1181
        %v1196 = vpack.c.bf16 %v1184, %v1183
        %v1197 = vpack.c.bf16 %v1186, %v1185
        %v1198 = vpack.c.bf16 %v1188, %v1187
        %v1199 = vpack.c.bf16 %v1190, %v1189
        %v1200 = vpack.c.bf16 %v1192, %v1191
        %v1201 = vpack.c.bf16 %v1008, %v1004
        %v1202 = vpack.c.bf16 %v1018, %v1014
        %v1203 = vpack.c.bf16 %v1028, %v1024
        %v1204 = vpack.c.bf16 %v1038, %v1034
        %v1205 = vpack.c.bf16 %v1048, %v1044
        %v1206 = vpack.c.bf16 %v1058, %v1054
        %v1207 = vpack.c.bf16 %v1068, %v1064
        %v1208 = vpack.c.bf16 %v1078, %v1074
        %v1209 = vpack.c.bf16 %v1118, %v1115
        %v1210 = vpack.c.bf16 %v1126, %v1123
        %v1211 = vpack.c.bf16 %v1134, %v1131
        %v1212 = vpack.c.bf16 %v1142, %v1139
        %v1213 = vpack.c.bf16 %v1150, %v1147
        %v1214 = vpack.c.bf16 %v1158, %v1155
        %v1215 = vpack.c.bf16 %v1166, %v1163
        %v1216 = vpack.c.bf16 %v1174, %v1171
        %1225 = vrot.lane.b32.xlu0 %v1193, 96
        %v1226 = vpop.permute.xlu0 %1225
        %1227 = vrot.lane.b32.xlu0 %v1194, 96
        %v1228 = vpop.permute.xlu0 %1227
        %1229 = vrot.lane.b32.xlu0 %v1195, 96
        %v1230 = vpop.permute.xlu0 %1229
        %1231 = vrot.lane.b32.xlu0 %v1196, 96
        %v1232 = vpop.permute.xlu0 %1231
        %1233 = vrot.lane.b32.xlu0 %v1197, 96
        %v1234 = vpop.permute.xlu0 %1233
        %1235 = vrot.lane.b32.xlu0 %v1198, 96
        %v1236 = vpop.permute.xlu0 %1235
        %1237 = vrot.lane.b32.xlu0 %v1199, 96
        %v1238 = vpop.permute.xlu0 %1237
        %1239 = vrot.lane.b32.xlu0 %v1200, 96
        %v1240 = vpop.permute.xlu0 %1239
        %1241 = vrot.lane.b32.xlu0 %v1193, 64
        %v1242 = vpop.permute.xlu0 %1241
        %1243 = vrot.lane.b32.xlu0 %v1194, 64
        %v1244 = vpop.permute.xlu0 %1243
        %1245 = vrot.lane.b32.xlu0 %v1195, 64
        %v1246 = vpop.permute.xlu0 %1245
        %1247 = vrot.lane.b32.xlu0 %v1196, 64
        %v1248 = vpop.permute.xlu0 %1247
        %1249 = vrot.lane.b32.xlu0 %v1197, 64
        %v1250 = vpop.permute.xlu0 %1249
        %1251 = vrot.lane.b32.xlu0 %v1198, 64
        %v1252 = vpop.permute.xlu0 %1251
        %1253 = vrot.lane.b32.xlu0 %v1199, 64
        %v1254 = vpop.permute.xlu0 %1253
        %1255 = vrot.lane.b32.xlu0 %v1200, 64
        %v1256 = vpop.permute.xlu0 %1255
        %1257 = vrot.lane.b32.xlu0 %v1193, 32
        %v1258 = vpop.permute.xlu0 %1257
        %1259 = vrot.lane.b32.xlu0 %v1194, 32
        %v1260 = vpop.permute.xlu0 %1259
        %1261 = vrot.lane.b32.xlu0 %v1195, 32
        %v1262 = vpop.permute.xlu0 %1261
        %1263 = vrot.lane.b32.xlu0 %v1196, 32
        %v1264 = vpop.permute.xlu0 %1263
        %1265 = vrot.lane.b32.xlu0 %v1197, 32
        %v1266 = vpop.permute.xlu0 %1265
        %1267 = vrot.lane.b32.xlu0 %v1198, 32
        %v1268 = vpop.permute.xlu0 %1267
        %1269 = vrot.lane.b32.xlu0 %v1199, 32
        %v1270 = vpop.permute.xlu0 %1269
        %1271 = vrot.lane.b32.xlu0 %v1200, 32
        %v1272 = vpop.permute.xlu0 %1271
        %1281 = vrot.lane.b32.xlu0 %v1201, 96
        %v1282 = vpop.permute.xlu0 %1281
        %1283 = vrot.lane.b32.xlu0 %v1202, 96
        %v1284 = vpop.permute.xlu0 %1283
        %1285 = vrot.lane.b32.xlu0 %v1203, 96
        %v1286 = vpop.permute.xlu0 %1285
        %1287 = vrot.lane.b32.xlu0 %v1204, 96
        %v1288 = vpop.permute.xlu0 %1287
        %1289 = vrot.lane.b32.xlu0 %v1205, 96
        %v1290 = vpop.permute.xlu0 %1289
        %1291 = vrot.lane.b32.xlu0 %v1206, 96
        %v1292 = vpop.permute.xlu0 %1291
        %1293 = vrot.lane.b32.xlu0 %v1207, 96
        %v1294 = vpop.permute.xlu0 %1293
        %1295 = vrot.lane.b32.xlu0 %v1208, 96
        %v1296 = vpop.permute.xlu0 %1295
        %1297 = vrot.lane.b32.xlu0 %v1201, 64
        %v1298 = vpop.permute.xlu0 %1297
        %1299 = vrot.lane.b32.xlu0 %v1202, 64
        %v1300 = vpop.permute.xlu0 %1299
        %1301 = vrot.lane.b32.xlu0 %v1203, 64
        %v1302 = vpop.permute.xlu0 %1301
        %1303 = vrot.lane.b32.xlu0 %v1204, 64
        %v1304 = vpop.permute.xlu0 %1303
        %1305 = vrot.lane.b32.xlu0 %v1205, 64
        %v1306 = vpop.permute.xlu0 %1305
        %1307 = vrot.lane.b32.xlu0 %v1206, 64
        %v1308 = vpop.permute.xlu0 %1307
        %1309 = vrot.lane.b32.xlu0 %v1207, 64
        %v1310 = vpop.permute.xlu0 %1309
        %1311 = vrot.lane.b32.xlu0 %v1208, 64
        %v1312 = vpop.permute.xlu0 %1311
        %1313 = vrot.lane.b32.xlu0 %v1201, 32
        %v1314 = vpop.permute.xlu0 %1313
        %1315 = vrot.lane.b32.xlu0 %v1202, 32
        %v1316 = vpop.permute.xlu0 %1315
        %1317 = vrot.lane.b32.xlu0 %v1203, 32
        %v1318 = vpop.permute.xlu0 %1317
        %1319 = vrot.lane.b32.xlu0 %v1204, 32
        %v1320 = vpop.permute.xlu0 %1319
        %1321 = vrot.lane.b32.xlu0 %v1205, 32
        %v1322 = vpop.permute.xlu0 %1321
        %1323 = vrot.lane.b32.xlu0 %v1206, 32
        %v1324 = vpop.permute.xlu0 %1323
        %1325 = vrot.lane.b32.xlu0 %v1207, 32
        %v1326 = vpop.permute.xlu0 %1325
        %1327 = vrot.lane.b32.xlu0 %v1208, 32
        %v1328 = vpop.permute.xlu0 %1327
        %1337 = vrot.lane.b32.xlu0 %v1209, 96
        %v1338 = vpop.permute.xlu0 %1337
        %1339 = vrot.lane.b32.xlu0 %v1210, 96
        %v1340 = vpop.permute.xlu0 %1339
        %1341 = vrot.lane.b32.xlu0 %v1211, 96
        %v1342 = vpop.permute.xlu0 %1341
        %1343 = vrot.lane.b32.xlu0 %v1212, 96
        %v1344 = vpop.permute.xlu0 %1343
        %1345 = vrot.lane.b32.xlu0 %v1213, 96
        %v1346 = vpop.permute.xlu0 %1345
        %1347 = vrot.lane.b32.xlu0 %v1214, 96
        %v1348 = vpop.permute.xlu0 %1347
        %1349 = vrot.lane.b32.xlu0 %v1215, 96
        %v1350 = vpop.permute.xlu0 %1349
        %1351 = vrot.lane.b32.xlu0 %v1216, 96
        %v1352 = vpop.permute.xlu0 %1351
        %1361 = vrot.lane.b32.xlu0 %v1209, 64
        %v1362 = vpop.permute.xlu0 %1361
        %1363 = vrot.lane.b32.xlu0 %v1210, 64
        %v1364 = vpop.permute.xlu0 %1363
        %1365 = vrot.lane.b32.xlu0 %v1211, 64
        %v1366 = vpop.permute.xlu0 %1365
        %1367 = vrot.lane.b32.xlu0 %v1212, 64
        %v1368 = vpop.permute.xlu0 %1367
        %1369 = vrot.lane.b32.xlu0 %v1213, 64
        %v1370 = vpop.permute.xlu0 %1369
        %1371 = vrot.lane.b32.xlu0 %v1214, 64
        %v1372 = vpop.permute.xlu0 %1371
        %1373 = vrot.lane.b32.xlu0 %v1215, 64
        %v1374 = vpop.permute.xlu0 %1373
        %1375 = vrot.lane.b32.xlu0 %v1216, 64
        %v1376 = vpop.permute.xlu0 %1375
        %1385 = vrot.lane.b32.xlu0 %v1209, 32
        %v1386 = vpop.permute.xlu0 %1385
        %1387 = vrot.lane.b32.xlu0 %v1210, 32
        %v1388 = vpop.permute.xlu0 %1387
        %1389 = vrot.lane.b32.xlu0 %v1211, 32
        %v1390 = vpop.permute.xlu0 %1389
        %1391 = vrot.lane.b32.xlu0 %v1212, 32
        %v1392 = vpop.permute.xlu0 %1391
        %1393 = vrot.lane.b32.xlu0 %v1213, 32
        %v1394 = vpop.permute.xlu0 %1393
        %1395 = vrot.lane.b32.xlu0 %v1214, 32
        %v1396 = vpop.permute.xlu0 %1395
        %1397 = vrot.lane.b32.xlu0 %v1215, 32
        %v1398 = vpop.permute.xlu0 %1397
        %1399 = vrot.lane.b32.xlu0 %v1216, 32
        %v1400 = vpop.permute.xlu0 %1399
        %v1409 = vlaneseq
        %v1410 = vshrl.u32 %v1409, 7
        %v1411 = vadd.s32 %v1410, 8
        %v1412 = vadd.s32 %v1410, 16
        %v1413 = vadd.s32 %v1410, 24
        %v1414 = vadd.s32 %v1410, 32
        %v1415 = vadd.s32 %v1410, 40
        %v1416 = vadd.s32 %v1410, 48
        %v1417 = vadd.s32 %v1410, 56
        %v1418 = vadd.s32 %v1410, 64
        %v1419 = vadd.s32 %v1410, 72
        %v1420 = vadd.s32 %v1410, 80
        %v1421 = vadd.s32 %v1410, 88
        %v1422 = vadd.s32 %v1410, 96
        %v1423 = vadd.s32 %v1410, 104
        %v1424 = vadd.s32 %v1410, 112
        %v1425 = vadd.s32 %v1410, 120
        %v1426 = vlaneseq
        %v1427 = vand.u32 %v1426, 127
        %vm1428 = vcmp.gt.s32.totalorder %v1427, %v1410
        %vm1429 = vcmp.gt.s32.totalorder %v1427, %v1411
        %vm1430 = vcmp.gt.s32.totalorder %v1427, %v1412
        %vm1431 = vcmp.gt.s32.totalorder %v1427, %v1413
        %vm1432 = vcmp.gt.s32.totalorder %v1427, %v1414
        %vm1433 = vcmp.gt.s32.totalorder %v1427, %v1415
        %vm1434 = vcmp.gt.s32.totalorder %v1427, %v1416
        %vm1435 = vcmp.gt.s32.totalorder %v1427, %v1417
        %vm1436 = vcmp.gt.s32.totalorder %v1427, %v1418
        %vm1437 = vcmp.gt.s32.totalorder %v1427, %v1419
        %vm1438 = vcmp.gt.s32.totalorder %v1427, %v1420
        %vm1439 = vcmp.gt.s32.totalorder %v1427, %v1421
        %vm1440 = vcmp.gt.s32.totalorder %v1427, %v1422
        %vm1441 = vcmp.gt.s32.totalorder %v1427, %v1423
        %vm1442 = vcmp.gt.s32.totalorder %v1427, %v1424
        %vm1443 = vcmp.gt.s32.totalorder %v1427, %v1425
        %v1444 = vsel %vm1428, -1e+30, 0.0
        %v1445 = vsel %vm1429, -1e+30, 0.0
        %v1446 = vsel %vm1430, -1e+30, 0.0
        %v1447 = vsel %vm1431, -1e+30, 0.0
        %v1448 = vsel %vm1432, -1e+30, 0.0
        %v1449 = vsel %vm1433, -1e+30, 0.0
        %v1450 = vsel %vm1434, -1e+30, 0.0
        %v1451 = vsel %vm1435, -1e+30, 0.0
        %v1452 = vsel %vm1436, -1e+30, 0.0
        %v1453 = vsel %vm1437, -1e+30, 0.0
        %v1454 = vsel %vm1438, -1e+30, 0.0
        %v1455 = vsel %vm1439, -1e+30, 0.0
        %v1456 = vsel %vm1440, -1e+30, 0.0
        %v1457 = vsel %vm1441, -1e+30, 0.0
        %v1458 = vsel %vm1442, -1e+30, 0.0
        %v1459 = vsel %vm1443, -1e+30, 0.0
        %vm1460 = vcmask 261120
        %v1462 = vsel %vm1460, %v1193, 0
        %v1465 = vsel %vm1460, %v1194, 0
        %v1468 = vsel %vm1460, %v1195, 0
        %v1471 = vsel %vm1460, %v1196, 0
        %v1474 = vsel %vm1460, %v1197, 0
        %v1477 = vsel %vm1460, %v1198, 0
        %v1480 = vsel %vm1460, %v1199, 0
        %v1483 = vsel %vm1460, %v1200, 0
        %v1486 = vsel %vm1460, %v1201, 0
        %v1489 = vsel %vm1460, %v1202, 0
        %v1492 = vsel %vm1460, %v1203, 0
        %v1495 = vsel %vm1460, %v1204, 0
        %v1498 = vsel %vm1460, %v1205, 0
        %v1501 = vsel %vm1460, %v1206, 0
        %v1504 = vsel %vm1460, %v1207, 0
        %v1507 = vsel %vm1460, %v1208, 0
        %1509 = vmatprep.subr.bf16.mxu0 0
        %1510 = vmatpush1.bf16.xpose.msra.mxu0 %v1486
        %1511 = vmatprep.subr.bf16.mxu0 0
        %1512 = vmatpush1.bf16.xpose.msra.mxu0 %v1489
        %1513 = vmatprep.subr.bf16.mxu0 0
        %1514 = vmatpush1.bf16.xpose.msra.mxu0 %v1492
        %1515 = vmatprep.subr.bf16.mxu0 0
        %1516 = vmatpush1.bf16.xpose.msra.mxu0 %v1495
        %1517 = vmatprep.subr.bf16.mxu0 0
        %1518 = vmatpush1.bf16.xpose.msra.mxu0 %v1498
        %1519 = vmatprep.subr.bf16.mxu0 0
        %1520 = vmatpush1.bf16.xpose.msra.mxu0 %v1501
        %1521 = vmatprep.subr.bf16.mxu0 0
        %1522 = vmatpush1.bf16.xpose.msra.mxu0 %v1504
        %1523 = vmatprep.subr.bf16.mxu0 0
        %1524 = vmatpush1.bf16.xpose.msra.mxu0 %v1507
        %1525 = vmatprep.subr.bf16.mxu0 0
        %1526 = vmatpush1.bf16.xpose.msra.mxu0 0
        %1527 = vmatprep.subr.bf16.mxu0 0
        %1528 = vmatpush1.bf16.xpose.msra.mxu0 0
        %1529 = vmatprep.subr.bf16.mxu0 0
        %1530 = vmatpush1.bf16.xpose.msra.mxu0 0
        %1531 = vmatprep.subr.bf16.mxu0 0
        %1532 = vmatpush1.bf16.xpose.msra.mxu0 0
        %1533 = vmatprep.subr.bf16.mxu0 0
        %1534 = vmatpush1.bf16.xpose.msra.mxu0 0
        %1535 = vmatprep.subr.bf16.mxu0 0
        %1536 = vmatpush1.bf16.xpose.msra.mxu0 0
        %1537 = vmatprep.subr.bf16.mxu0 0
        %1538 = vmatpush1.bf16.xpose.msra.mxu0 0
        %1539 = vmatprep.subr.bf16.mxu0 0
        %1540 = vmatpush1.bf16.xpose.msra.mxu0 0
        %1541 = vmatprep.mubr.bf16.mxu0 0
        %1542 = vmatmul.mubr.bf16.gmra.mrb[0].mxu0 %v1462
        %v1543 = vpop.f32.mrb[0].mxu0
        %v1544 = vadd.f32 %v1444, %v1543
        %v1545 = vpop.f32.mrb[0].mxu0
        %v1546 = vpop.f32.mrb[0].mxu0
        %v1547 = vadd.f32 %v1445, %v1546
        %v1548 = vpop.f32.mrb[0].mxu0
        %1549 = vmatprep.mubr.bf16.mxu0 0
        %1550 = vmatmul.mubr.bf16.gmra.mrb[0].mxu0 %v1465
        %v1551 = vpop.f32.mrb[0].mxu0
        %v1552 = vadd.f32 %v1446, %v1551
        %v1553 = vpop.f32.mrb[0].mxu0
        %v1554 = vpop.f32.mrb[0].mxu0
        %v1555 = vadd.f32 %v1447, %v1554
        %v1556 = vpop.f32.mrb[0].mxu0
        %1557 = vmatprep.mubr.bf16.mxu0 0
        %1558 = vmatmul.mubr.bf16.gmra.mrb[0].mxu0 %v1468
        %v1559 = vpop.f32.mrb[0].mxu0
        %v1560 = vadd.f32 %v1448, %v1559
        %v1561 = vpop.f32.mrb[0].mxu0
        %v1562 = vpop.f32.mrb[0].mxu0
        %v1563 = vadd.f32 %v1449, %v1562
        %v1564 = vpop.f32.mrb[0].mxu0
        %1565 = vmatprep.mubr.bf16.mxu0 0
        %1566 = vmatmul.mubr.bf16.gmra.mrb[0].mxu0 %v1471
        %v1567 = vpop.f32.mrb[0].mxu0
        %v1568 = vadd.f32 %v1450, %v1567
        %v1569 = vpop.f32.mrb[0].mxu0
        %v1570 = vpop.f32.mrb[0].mxu0
        %v1571 = vadd.f32 %v1451, %v1570
        %v1572 = vpop.f32.mrb[0].mxu0
        %1573 = vmatprep.mubr.bf16.mxu0 0
        %1574 = vmatmul.mubr.bf16.gmra.mrb[0].mxu0 %v1474
        %v1575 = vpop.f32.mrb[0].mxu0
        %v1576 = vadd.f32 %v1452, %v1575
        %v1577 = vpop.f32.mrb[0].mxu0
        %v1578 = vpop.f32.mrb[0].mxu0
        %v1579 = vadd.f32 %v1453, %v1578
        %v1580 = vpop.f32.mrb[0].mxu0
        %1581 = vmatprep.mubr.bf16.mxu0 0
        %1582 = vmatmul.mubr.bf16.gmra.mrb[0].mxu0 %v1477
        %v1583 = vpop.f32.mrb[0].mxu0
        %v1584 = vadd.f32 %v1454, %v1583
        %v1585 = vpop.f32.mrb[0].mxu0
        %v1586 = vpop.f32.mrb[0].mxu0
        %v1587 = vadd.f32 %v1455, %v1586
        %v1588 = vpop.f32.mrb[0].mxu0
        %1589 = vmatprep.mubr.bf16.mxu0 0
        %1590 = vmatmul.mubr.bf16.gmra.mrb[0].mxu0 %v1480
        %v1591 = vpop.f32.mrb[0].mxu0
        %v1592 = vadd.f32 %v1456, %v1591
        %v1593 = vpop.f32.mrb[0].mxu0
        %v1594 = vpop.f32.mrb[0].mxu0
        %v1595 = vadd.f32 %v1457, %v1594
        %v1596 = vpop.f32.mrb[0].mxu0
        %1597 = vmatprep.mubr.bf16.mxu0 0
        %1598 = vmatmul.mubr.bf16.gmra.mrb[0].mxu0 %v1483
        %v1599 = vpop.f32.mrb[0].mxu0
        %v1600 = vadd.f32 %v1458, %v1599
        %v1601 = vpop.f32.mrb[0].mxu0
        %v1602 = vpop.f32.mrb[0].mxu0
        %v1603 = vadd.f32 %v1459, %v1602
        %v1604 = vpop.f32.mrb[0].mxu0
        %1605 = vdwg.mxu0
        %v1607 = vsel %vm1460, %v1226, 0
        %v1610 = vsel %vm1460, %v1228, 0
        %v1613 = vsel %vm1460, %v1230, 0
        %v1616 = vsel %vm1460, %v1232, 0
        %v1619 = vsel %vm1460, %v1234, 0
        %v1622 = vsel %vm1460, %v1236, 0
        %v1625 = vsel %vm1460, %v1238, 0
        %v1628 = vsel %vm1460, %v1240, 0
        %v1631 = vsel %vm1460, %v1282, 0
        %v1634 = vsel %vm1460, %v1284, 0
        %v1637 = vsel %vm1460, %v1286, 0
        %v1640 = vsel %vm1460, %v1288, 0
        %v1643 = vsel %vm1460, %v1290, 0
        %v1646 = vsel %vm1460, %v1292, 0
        %v1649 = vsel %vm1460, %v1294, 0
        %v1652 = vsel %vm1460, %v1296, 0
        %1654 = vmatprep.subr.bf16.mxu0 0
        %1655 = vmatpush1.bf16.xpose.msra.mxu0 %v1631
        %1656 = vmatprep.subr.bf16.mxu0 0
        %1657 = vmatpush1.bf16.xpose.msra.mxu0 %v1634
        %1658 = vmatprep.subr.bf16.mxu0 0
        %1659 = vmatpush1.bf16.xpose.msra.mxu0 %v1637
        %1660 = vmatprep.subr.bf16.mxu0 0
        %1661 = vmatpush1.bf16.xpose.msra.mxu0 %v1640
        %1662 = vmatprep.subr.bf16.mxu0 0
        %1663 = vmatpush1.bf16.xpose.msra.mxu0 %v1643
        %1664 = vmatprep.subr.bf16.mxu0 0
        %1665 = vmatpush1.bf16.xpose.msra.mxu0 %v1646
        %1666 = vmatprep.subr.bf16.mxu0 0
        %1667 = vmatpush1.bf16.xpose.msra.mxu0 %v1649
        %1668 = vmatprep.subr.bf16.mxu0 0
        %1669 = vmatpush1.bf16.xpose.msra.mxu0 %v1652
        %1670 = vmatprep.subr.bf16.mxu0 0
        %1671 = vmatpush1.bf16.xpose.msra.mxu0 0
        %1672 = vmatprep.subr.bf16.mxu0 0
        %1673 = vmatpush1.bf16.xpose.msra.mxu0 0
        %1674 = vmatprep.subr.bf16.mxu0 0
        %1675 = vmatpush1.bf16.xpose.msra.mxu0 0
        %1676 = vmatprep.subr.bf16.mxu0 0
        %1677 = vmatpush1.bf16.xpose.msra.mxu0 0
        %1678 = vmatprep.subr.bf16.mxu0 0
        %1679 = vmatpush1.bf16.xpose.msra.mxu0 0
        %1680 = vmatprep.subr.bf16.mxu0 0
        %1681 = vmatpush1.bf16.xpose.msra.mxu0 0
        %1682 = vmatprep.subr.bf16.mxu0 0
        %1683 = vmatpush1.bf16.xpose.msra.mxu0 0
        %1684 = vmatprep.subr.bf16.mxu0 0
        %1685 = vmatpush1.bf16.xpose.msra.mxu0 0
        %1686 = vmatprep.mubr.bf16.mxu0 0
        %1687 = vmatmul.mubr.bf16.gmra.mrb[0].mxu0 %v1607
        %v1688 = vpop.f32.mrb[0].mxu0
        %v1689 = vadd.f32 %v1444, %v1688
        %v1690 = vpop.f32.mrb[0].mxu0
        %v1691 = vpop.f32.mrb[0].mxu0
        %v1692 = vadd.f32 %v1445, %v1691
        %v1693 = vpop.f32.mrb[0].mxu0
        %1694 = vmatprep.mubr.bf16.mxu0 0
        %1695 = vmatmul.mubr.bf16.gmra.mrb[0].mxu0 %v1610
        %v1696 = vpop.f32.mrb[0].mxu0
        %v1697 = vadd.f32 %v1446, %v1696
        %v1698 = vpop.f32.mrb[0].mxu0
        %v1699 = vpop.f32.mrb[0].mxu0
        %v1700 = vadd.f32 %v1447, %v1699
        %v1701 = vpop.f32.mrb[0].mxu0
        %1702 = vmatprep.mubr.bf16.mxu0 0
        %1703 = vmatmul.mubr.bf16.gmra.mrb[0].mxu0 %v1613
        %v1704 = vpop.f32.mrb[0].mxu0
        %v1705 = vadd.f32 %v1448, %v1704
        %v1706 = vpop.f32.mrb[0].mxu0
        %v1707 = vpop.f32.mrb[0].mxu0
        %v1708 = vadd.f32 %v1449, %v1707
        %v1709 = vpop.f32.mrb[0].mxu0
        %1710 = vmatprep.mubr.bf16.mxu0 0
        %1711 = vmatmul.mubr.bf16.gmra.mrb[0].mxu0 %v1616
        %v1712 = vpop.f32.mrb[0].mxu0
        %v1713 = vadd.f32 %v1450, %v1712
        %v1714 = vpop.f32.mrb[0].mxu0
        %v1715 = vpop.f32.mrb[0].mxu0
        %v1716 = vadd.f32 %v1451, %v1715
        %v1717 = vpop.f32.mrb[0].mxu0
        %1718 = vmatprep.mubr.bf16.mxu0 0
        %1719 = vmatmul.mubr.bf16.gmra.mrb[0].mxu0 %v1619
        %v1720 = vpop.f32.mrb[0].mxu0
        %v1721 = vadd.f32 %v1452, %v1720
        %v1722 = vpop.f32.mrb[0].mxu0
        %v1723 = vpop.f32.mrb[0].mxu0
        %v1724 = vadd.f32 %v1453, %v1723
        %v1725 = vpop.f32.mrb[0].mxu0
        %1726 = vmatprep.mubr.bf16.mxu0 0
        %1727 = vmatmul.mubr.bf16.gmra.mrb[0].mxu0 %v1622
        %v1728 = vpop.f32.mrb[0].mxu0
        %v1729 = vadd.f32 %v1454, %v1728
        %v1730 = vpop.f32.mrb[0].mxu0
        %v1731 = vpop.f32.mrb[0].mxu0
        %v1732 = vadd.f32 %v1455, %v1731
        %v1733 = vpop.f32.mrb[0].mxu0
        %1734 = vmatprep.mubr.bf16.mxu0 0
        %1735 = vmatmul.mubr.bf16.gmra.mrb[0].mxu0 %v1625
        %v1736 = vpop.f32.mrb[0].mxu0
        %v1737 = vadd.f32 %v1456, %v1736
        %v1738 = vpop.f32.mrb[0].mxu0
        %v1739 = vpop.f32.mrb[0].mxu0
        %v1740 = vadd.f32 %v1457, %v1739
        %v1741 = vpop.f32.mrb[0].mxu0
        %1742 = vmatprep.mubr.bf16.mxu0 0
        %1743 = vmatmul.mubr.bf16.gmra.mrb[0].mxu0 %v1628
        %v1744 = vpop.f32.mrb[0].mxu0
        %v1745 = vadd.f32 %v1458, %v1744
        %v1746 = vpop.f32.mrb[0].mxu0
        %v1747 = vpop.f32.mrb[0].mxu0
        %v1748 = vadd.f32 %v1459, %v1747
        %v1749 = vpop.f32.mrb[0].mxu0
        %1750 = vdwg.mxu0
        %v1752 = vsel %vm1460, %v1242, 0
        %v1755 = vsel %vm1460, %v1244, 0
        %v1758 = vsel %vm1460, %v1246, 0
        %v1761 = vsel %vm1460, %v1248, 0
        %v1764 = vsel %vm1460, %v1250, 0
        %v1767 = vsel %vm1460, %v1252, 0
        %v1770 = vsel %vm1460, %v1254, 0
        %v1773 = vsel %vm1460, %v1256, 0
        %v1776 = vsel %vm1460, %v1298, 0
        %v1779 = vsel %vm1460, %v1300, 0
        %v1782 = vsel %vm1460, %v1302, 0
        %v1785 = vsel %vm1460, %v1304, 0
        %v1788 = vsel %vm1460, %v1306, 0
        %v1791 = vsel %vm1460, %v1308, 0
        %v1794 = vsel %vm1460, %v1310, 0
        %v1797 = vsel %vm1460, %v1312, 0
        %1799 = vmatprep.subr.bf16.mxu0 0
        %1800 = vmatpush1.bf16.xpose.msra.mxu0 %v1776
        %1801 = vmatprep.subr.bf16.mxu0 0
        %1802 = vmatpush1.bf16.xpose.msra.mxu0 %v1779
        %1803 = vmatprep.subr.bf16.mxu0 0
        %1804 = vmatpush1.bf16.xpose.msra.mxu0 %v1782
        %1805 = vmatprep.subr.bf16.mxu0 0
        %1806 = vmatpush1.bf16.xpose.msra.mxu0 %v1785
        %1807 = vmatprep.subr.bf16.mxu0 0
        %1808 = vmatpush1.bf16.xpose.msra.mxu0 %v1788
        %1809 = vmatprep.subr.bf16.mxu0 0
        %1810 = vmatpush1.bf16.xpose.msra.mxu0 %v1791
        %1811 = vmatprep.subr.bf16.mxu0 0
        %1812 = vmatpush1.bf16.xpose.msra.mxu0 %v1794
        %1813 = vmatprep.subr.bf16.mxu0 0
        %1814 = vmatpush1.bf16.xpose.msra.mxu0 %v1797
        %1815 = vmatprep.subr.bf16.mxu0 0
        %1816 = vmatpush1.bf16.xpose.msra.mxu0 0
        %1817 = vmatprep.subr.bf16.mxu0 0
        %1818 = vmatpush1.bf16.xpose.msra.mxu0 0
        %1819 = vmatprep.subr.bf16.mxu0 0
        %1820 = vmatpush1.bf16.xpose.msra.mxu0 0
        %1821 = vmatprep.subr.bf16.mxu0 0
        %1822 = vmatpush1.bf16.xpose.msra.mxu0 0
        %1823 = vmatprep.subr.bf16.mxu0 0
        %1824 = vmatpush1.bf16.xpose.msra.mxu0 0
        %1825 = vmatprep.subr.bf16.mxu0 0
        %1826 = vmatpush1.bf16.xpose.msra.mxu0 0
        %1827 = vmatprep.subr.bf16.mxu0 0
        %1828 = vmatpush1.bf16.xpose.msra.mxu0 0
        %1829 = vmatprep.subr.bf16.mxu0 0
        %1830 = vmatpush1.bf16.xpose.msra.mxu0 0
        %1831 = vmatprep.mubr.bf16.mxu0 0
        %1832 = vmatmul.mubr.bf16.gmra.mrb[0].mxu0 %v1752
        %v1833 = vpop.f32.mrb[0].mxu0
        %v1834 = vadd.f32 %v1444, %v1833
        %v1835 = vpop.f32.mrb[0].mxu0
        %v1836 = vpop.f32.mrb[0].mxu0
        %v1837 = vadd.f32 %v1445, %v1836
        %v1838 = vpop.f32.mrb[0].mxu0
        %1839 = vmatprep.mubr.bf16.mxu0 0
        %1840 = vmatmul.mubr.bf16.gmra.mrb[0].mxu0 %v1755
        %v1841 = vpop.f32.mrb[0].mxu0
        %v1842 = vadd.f32 %v1446, %v1841
        %v1843 = vpop.f32.mrb[0].mxu0
        %v1844 = vpop.f32.mrb[0].mxu0
        %v1845 = vadd.f32 %v1447, %v1844
        %v1846 = vpop.f32.mrb[0].mxu0
        %1847 = vmatprep.mubr.bf16.mxu0 0
        %1848 = vmatmul.mubr.bf16.gmra.mrb[0].mxu0 %v1758
        %v1849 = vpop.f32.mrb[0].mxu0
        %v1850 = vadd.f32 %v1448, %v1849
        %v1851 = vpop.f32.mrb[0].mxu0
        %v1852 = vpop.f32.mrb[0].mxu0
        %v1853 = vadd.f32 %v1449, %v1852
        %v1854 = vpop.f32.mrb[0].mxu0
        %1855 = vmatprep.mubr.bf16.mxu0 0
        %1856 = vmatmul.mubr.bf16.gmra.mrb[0].mxu0 %v1761
        %v1857 = vpop.f32.mrb[0].mxu0
        %v1858 = vadd.f32 %v1450, %v1857
        %v1859 = vpop.f32.mrb[0].mxu0
        %v1860 = vpop.f32.mrb[0].mxu0
        %v1861 = vadd.f32 %v1451, %v1860
        %v1862 = vpop.f32.mrb[0].mxu0
        %1863 = vmatprep.mubr.bf16.mxu0 0
        %1864 = vmatmul.mubr.bf16.gmra.mrb[0].mxu0 %v1764
        %v1865 = vpop.f32.mrb[0].mxu0
        %v1866 = vadd.f32 %v1452, %v1865
        %v1867 = vpop.f32.mrb[0].mxu0
        %v1868 = vpop.f32.mrb[0].mxu0
        %v1869 = vadd.f32 %v1453, %v1868
        %v1870 = vpop.f32.mrb[0].mxu0
        %1871 = vmatprep.mubr.bf16.mxu0 0
        %1872 = vmatmul.mubr.bf16.gmra.mrb[0].mxu0 %v1767
        %v1873 = vpop.f32.mrb[0].mxu0
        %v1874 = vadd.f32 %v1454, %v1873
        %v1875 = vpop.f32.mrb[0].mxu0
        %v1876 = vpop.f32.mrb[0].mxu0
        %v1877 = vadd.f32 %v1455, %v1876
        %v1878 = vpop.f32.mrb[0].mxu0
        %1879 = vmatprep.mubr.bf16.mxu0 0
        %1880 = vmatmul.mubr.bf16.gmra.mrb[0].mxu0 %v1770
        %v1881 = vpop.f32.mrb[0].mxu0
        %v1882 = vadd.f32 %v1456, %v1881
        %v1883 = vpop.f32.mrb[0].mxu0
        %v1884 = vpop.f32.mrb[0].mxu0
        %v1885 = vadd.f32 %v1457, %v1884
        %v1886 = vpop.f32.mrb[0].mxu0
        %1887 = vmatprep.mubr.bf16.mxu0 0
        %1888 = vmatmul.mubr.bf16.gmra.mrb[0].mxu0 %v1773
        %v1889 = vpop.f32.mrb[0].mxu0
        %v1890 = vadd.f32 %v1458, %v1889
        %v1891 = vpop.f32.mrb[0].mxu0
        %v1892 = vpop.f32.mrb[0].mxu0
        %v1893 = vadd.f32 %v1459, %v1892
        %v1894 = vpop.f32.mrb[0].mxu0
        %1895 = vdwg.mxu0
        %v1897 = vsel %vm1460, %v1258, 0
        %v1900 = vsel %vm1460, %v1260, 0
        %v1903 = vsel %vm1460, %v1262, 0
        %v1906 = vsel %vm1460, %v1264, 0
        %v1909 = vsel %vm1460, %v1266, 0
        %v1912 = vsel %vm1460, %v1268, 0
        %v1915 = vsel %vm1460, %v1270, 0
        %v1918 = vsel %vm1460, %v1272, 0
        %v1921 = vsel %vm1460, %v1314, 0
        %v1924 = vsel %vm1460, %v1316, 0
        %v1927 = vsel %vm1460, %v1318, 0
        %v1930 = vsel %vm1460, %v1320, 0
        %v1933 = vsel %vm1460, %v1322, 0
        %v1936 = vsel %vm1460, %v1324, 0
        %v1939 = vsel %vm1460, %v1326, 0
        %v1942 = vsel %vm1460, %v1328, 0
        %1944 = vmatprep.subr.bf16.mxu0 0
        %1945 = vmatpush1.bf16.xpose.msra.mxu0 %v1921
        %1946 = vmatprep.subr.bf16.mxu0 0
        %1947 = vmatpush1.bf16.xpose.msra.mxu0 %v1924
        %1948 = vmatprep.subr.bf16.mxu0 0
        %1949 = vmatpush1.bf16.xpose.msra.mxu0 %v1927
        %1950 = vmatprep.subr.bf16.mxu0 0
        %1951 = vmatpush1.bf16.xpose.msra.mxu0 %v1930
        %1952 = vmatprep.subr.bf16.mxu0 0
        %1953 = vmatpush1.bf16.xpose.msra.mxu0 %v1933
        %1954 = vmatprep.subr.bf16.mxu0 0
        %1955 = vmatpush1.bf16.xpose.msra.mxu0 %v1936
        %1956 = vmatprep.subr.bf16.mxu0 0
        %1957 = vmatpush1.bf16.xpose.msra.mxu0 %v1939
        %1958 = vmatprep.subr.bf16.mxu0 0
        %1959 = vmatpush1.bf16.xpose.msra.mxu0 %v1942
        %1960 = vmatprep.subr.bf16.mxu0 0
        %1961 = vmatpush1.bf16.xpose.msra.mxu0 0
        %1962 = vmatprep.subr.bf16.mxu0 0
        %1963 = vmatpush1.bf16.xpose.msra.mxu0 0
        %1964 = vmatprep.subr.bf16.mxu0 0
        %1965 = vmatpush1.bf16.xpose.msra.mxu0 0
        %1966 = vmatprep.subr.bf16.mxu0 0
        %1967 = vmatpush1.bf16.xpose.msra.mxu0 0
        %1968 = vmatprep.subr.bf16.mxu0 0
        %1969 = vmatpush1.bf16.xpose.msra.mxu0 0
        %1970 = vmatprep.subr.bf16.mxu0 0
        %1971 = vmatpush1.bf16.xpose.msra.mxu0 0
        %1972 = vmatprep.subr.bf16.mxu0 0
        %1973 = vmatpush1.bf16.xpose.msra.mxu0 0
        %1974 = vmatprep.subr.bf16.mxu0 0
        %1975 = vmatpush1.bf16.xpose.msra.mxu0 0
        %1976 = vmatprep.mubr.bf16.mxu0 0
        %1977 = vmatmul.mubr.bf16.gmra.mrb[0].mxu0 %v1897
        %v1978 = vpop.f32.mrb[0].mxu0
        %v1979 = vadd.f32 %v1444, %v1978
        %v1980 = vpop.f32.mrb[0].mxu0
        %v1981 = vpop.f32.mrb[0].mxu0
        %v1982 = vadd.f32 %v1445, %v1981
        %v1983 = vpop.f32.mrb[0].mxu0
        %1984 = vmatprep.mubr.bf16.mxu0 0
        %1985 = vmatmul.mubr.bf16.gmra.mrb[0].mxu0 %v1900
        %v1986 = vpop.f32.mrb[0].mxu0
        %v1987 = vadd.f32 %v1446, %v1986
        %v1988 = vpop.f32.mrb[0].mxu0
        %v1989 = vpop.f32.mrb[0].mxu0
        %v1990 = vadd.f32 %v1447, %v1989
        %v1991 = vpop.f32.mrb[0].mxu0
        %1992 = vmatprep.mubr.bf16.mxu0 0
        %1993 = vmatmul.mubr.bf16.gmra.mrb[0].mxu0 %v1903
        %v1994 = vpop.f32.mrb[0].mxu0
        %v1995 = vadd.f32 %v1448, %v1994
        %v1996 = vpop.f32.mrb[0].mxu0
        %v1997 = vpop.f32.mrb[0].mxu0
        %v1998 = vadd.f32 %v1449, %v1997
        %v1999 = vpop.f32.mrb[0].mxu0
        %2000 = vmatprep.mubr.bf16.mxu0 0
        %2001 = vmatmul.mubr.bf16.gmra.mrb[0].mxu0 %v1906
        %v2002 = vpop.f32.mrb[0].mxu0
        %v2003 = vadd.f32 %v1450, %v2002
        %v2004 = vpop.f32.mrb[0].mxu0
        %v2005 = vpop.f32.mrb[0].mxu0
        %v2006 = vadd.f32 %v1451, %v2005
        %v2007 = vpop.f32.mrb[0].mxu0
        %2008 = vmatprep.mubr.bf16.mxu0 0
        %2009 = vmatmul.mubr.bf16.gmra.mrb[0].mxu0 %v1909
        %v2010 = vpop.f32.mrb[0].mxu0
        %v2011 = vadd.f32 %v1452, %v2010
        %v2012 = vpop.f32.mrb[0].mxu0
        %v2013 = vpop.f32.mrb[0].mxu0
        %v2014 = vadd.f32 %v1453, %v2013
        %v2015 = vpop.f32.mrb[0].mxu0
        %2016 = vmatprep.mubr.bf16.mxu0 0
        %2017 = vmatmul.mubr.bf16.gmra.mrb[0].mxu0 %v1912
        %v2018 = vpop.f32.mrb[0].mxu0
        %v2019 = vadd.f32 %v1454, %v2018
        %v2020 = vpop.f32.mrb[0].mxu0
        %v2021 = vpop.f32.mrb[0].mxu0
        %v2022 = vadd.f32 %v1455, %v2021
        %v2023 = vpop.f32.mrb[0].mxu0
        %2024 = vmatprep.mubr.bf16.mxu0 0
        %2025 = vmatmul.mubr.bf16.gmra.mrb[0].mxu0 %v1915
        %v2026 = vpop.f32.mrb[0].mxu0
        %v2027 = vadd.f32 %v1456, %v2026
        %v2028 = vpop.f32.mrb[0].mxu0
        %v2029 = vpop.f32.mrb[0].mxu0
        %v2030 = vadd.f32 %v1457, %v2029
        %v2031 = vpop.f32.mrb[0].mxu0
        %2032 = vmatprep.mubr.bf16.mxu0 0
        %2033 = vmatmul.mubr.bf16.gmra.mrb[0].mxu0 %v1918
        %v2034 = vpop.f32.mrb[0].mxu0
        %v2035 = vadd.f32 %v1458, %v2034
        %v2036 = vpop.f32.mrb[0].mxu0
        %v2037 = vpop.f32.mrb[0].mxu0
        %v2038 = vadd.f32 %v1459, %v2037
        %v2039 = vpop.f32.mrb[0].mxu0
        %2040 = vdwg.mxu0
        %2041 = vmax.xlane.f32.xlu0 %v1544
        %v2042 = vpop.xlane.xlu0 %2041
        %2043 = vmax.xlane.f32.xlu0 %v1547
        %v2044 = vpop.xlane.xlu0 %2043
        %2045 = vmax.xlane.f32.xlu0 %v1552
        %v2046 = vpop.xlane.xlu0 %2045
        %2047 = vmax.xlane.f32.xlu0 %v1555
        %v2048 = vpop.xlane.xlu0 %2047
        %2049 = vmax.xlane.f32.xlu0 %v1560
        %v2050 = vpop.xlane.xlu0 %2049
        %2051 = vmax.xlane.f32.xlu0 %v1563
        %v2052 = vpop.xlane.xlu0 %2051
        %2053 = vmax.xlane.f32.xlu0 %v1568
        %v2054 = vpop.xlane.xlu0 %2053
        %2055 = vmax.xlane.f32.xlu0 %v1571
        %v2056 = vpop.xlane.xlu0 %2055
        %2057 = vmax.xlane.f32.xlu0 %v1576
        %v2058 = vpop.xlane.xlu0 %2057
        %2059 = vmax.xlane.f32.xlu0 %v1579
        %v2060 = vpop.xlane.xlu0 %2059
        %2061 = vmax.xlane.f32.xlu0 %v1584
        %v2062 = vpop.xlane.xlu0 %2061
        %2063 = vmax.xlane.f32.xlu0 %v1587
        %v2064 = vpop.xlane.xlu0 %2063
        %2065 = vmax.xlane.f32.xlu0 %v1592
        %v2066 = vpop.xlane.xlu0 %2065
        %2067 = vmax.xlane.f32.xlu0 %v1595
        %v2068 = vpop.xlane.xlu0 %2067
        %2069 = vmax.xlane.f32.xlu0 %v1600
        %v2070 = vpop.xlane.xlu0 %2069
        %2071 = vmax.xlane.f32.xlu0 %v1603
        %v2072 = vpop.xlane.xlu0 %2071
        %2073 = vmax.xlane.f32.xlu0 %v1689
        %v2074 = vpop.xlane.xlu0 %2073
        %2075 = vmax.xlane.f32.xlu0 %v1692
        %v2076 = vpop.xlane.xlu0 %2075
        %2077 = vmax.xlane.f32.xlu0 %v1697
        %v2078 = vpop.xlane.xlu0 %2077
        %2079 = vmax.xlane.f32.xlu0 %v1700
        %v2080 = vpop.xlane.xlu0 %2079
        %2081 = vmax.xlane.f32.xlu0 %v1705
        %v2082 = vpop.xlane.xlu0 %2081
        %2083 = vmax.xlane.f32.xlu0 %v1708
        %v2084 = vpop.xlane.xlu0 %2083
        %2085 = vmax.xlane.f32.xlu0 %v1713
        %v2086 = vpop.xlane.xlu0 %2085
        %2087 = vmax.xlane.f32.xlu0 %v1716
        %v2088 = vpop.xlane.xlu0 %2087
        %2089 = vmax.xlane.f32.xlu0 %v1721
        %v2090 = vpop.xlane.xlu0 %2089
        %2091 = vmax.xlane.f32.xlu0 %v1724
        %v2092 = vpop.xlane.xlu0 %2091
        %2093 = vmax.xlane.f32.xlu0 %v1729
        %v2094 = vpop.xlane.xlu0 %2093
        %2095 = vmax.xlane.f32.xlu0 %v1732
        %v2096 = vpop.xlane.xlu0 %2095
        %2097 = vmax.xlane.f32.xlu0 %v1737
        %v2098 = vpop.xlane.xlu0 %2097
        %2099 = vmax.xlane.f32.xlu0 %v1740
        %v2100 = vpop.xlane.xlu0 %2099
        %2101 = vmax.xlane.f32.xlu0 %v1745
        %v2102 = vpop.xlane.xlu0 %2101
        %2103 = vmax.xlane.f32.xlu0 %v1748
        %v2104 = vpop.xlane.xlu0 %2103
        %2105 = vmax.xlane.f32.xlu0 %v1834
        %v2106 = vpop.xlane.xlu0 %2105
        %2107 = vmax.xlane.f32.xlu0 %v1837
        %v2108 = vpop.xlane.xlu0 %2107
        %2109 = vmax.xlane.f32.xlu0 %v1842
        %v2110 = vpop.xlane.xlu0 %2109
        %2111 = vmax.xlane.f32.xlu0 %v1845
        %v2112 = vpop.xlane.xlu0 %2111
        %2113 = vmax.xlane.f32.xlu0 %v1850
        %v2114 = vpop.xlane.xlu0 %2113
        %2115 = vmax.xlane.f32.xlu0 %v1853
        %v2116 = vpop.xlane.xlu0 %2115
        %2117 = vmax.xlane.f32.xlu0 %v1858
        %v2118 = vpop.xlane.xlu0 %2117
        %2119 = vmax.xlane.f32.xlu0 %v1861
        %v2120 = vpop.xlane.xlu0 %2119
        %2121 = vmax.xlane.f32.xlu0 %v1866
        %v2122 = vpop.xlane.xlu0 %2121
        %2123 = vmax.xlane.f32.xlu0 %v1869
        %v2124 = vpop.xlane.xlu0 %2123
        %2125 = vmax.xlane.f32.xlu0 %v1874
        %v2126 = vpop.xlane.xlu0 %2125
        %2127 = vmax.xlane.f32.xlu0 %v1877
        %v2128 = vpop.xlane.xlu0 %2127
        %2129 = vmax.xlane.f32.xlu0 %v1882
        %v2130 = vpop.xlane.xlu0 %2129
        %2131 = vmax.xlane.f32.xlu0 %v1885
        %v2132 = vpop.xlane.xlu0 %2131
        %2133 = vmax.xlane.f32.xlu0 %v1890
        %v2134 = vpop.xlane.xlu0 %2133
        %2135 = vmax.xlane.f32.xlu0 %v1893
        %v2136 = vpop.xlane.xlu0 %2135
        %2137 = vmax.xlane.f32.xlu0 %v1979
        %v2138 = vpop.xlane.xlu0 %2137
        %2139 = vmax.xlane.f32.xlu0 %v1982
        %v2140 = vpop.xlane.xlu0 %2139
        %2141 = vmax.xlane.f32.xlu0 %v1987
        %v2142 = vpop.xlane.xlu0 %2141
        %2143 = vmax.xlane.f32.xlu0 %v1990
        %v2144 = vpop.xlane.xlu0 %2143
        %2145 = vmax.xlane.f32.xlu0 %v1995
        %v2146 = vpop.xlane.xlu0 %2145
        %2147 = vmax.xlane.f32.xlu0 %v1998
        %v2148 = vpop.xlane.xlu0 %2147
        %2149 = vmax.xlane.f32.xlu0 %v2003
        %v2150 = vpop.xlane.xlu0 %2149
        %2151 = vmax.xlane.f32.xlu0 %v2006
        %v2152 = vpop.xlane.xlu0 %2151
        %2153 = vmax.xlane.f32.xlu0 %v2011
        %v2154 = vpop.xlane.xlu0 %2153
        %2155 = vmax.xlane.f32.xlu0 %v2014
        %v2156 = vpop.xlane.xlu0 %2155
        %2157 = vmax.xlane.f32.xlu0 %v2019
        %v2158 = vpop.xlane.xlu0 %2157
        %2159 = vmax.xlane.f32.xlu0 %v2022
        %v2160 = vpop.xlane.xlu0 %2159
        %2161 = vmax.xlane.f32.xlu0 %v2027
        %v2162 = vpop.xlane.xlu0 %2161
        %2163 = vmax.xlane.f32.xlu0 %v2030
        %v2164 = vpop.xlane.xlu0 %2163
        %2165 = vmax.xlane.f32.xlu0 %v2035
        %v2166 = vpop.xlane.xlu0 %2165
        %2167 = vmax.xlane.f32.xlu0 %v2038
        %v2168 = vpop.xlane.xlu0 %2167
        %v2169 = vsub.f32 %v1544, %v2042
        %v2170 = vsub.f32 %v1547, %v2044
        %v2171 = vsub.f32 %v1552, %v2046
        %v2172 = vsub.f32 %v1555, %v2048
        %v2173 = vsub.f32 %v1560, %v2050
        %v2174 = vsub.f32 %v1563, %v2052
        %v2175 = vsub.f32 %v1568, %v2054
        %v2176 = vsub.f32 %v1571, %v2056
        %v2177 = vsub.f32 %v1576, %v2058
        %v2178 = vsub.f32 %v1579, %v2060
        %v2179 = vsub.f32 %v1584, %v2062
        %v2180 = vsub.f32 %v1587, %v2064
        %v2181 = vsub.f32 %v1592, %v2066
        %v2182 = vsub.f32 %v1595, %v2068
        %v2183 = vsub.f32 %v1600, %v2070
        %v2184 = vsub.f32 %v1603, %v2072
        %v2185 = vsub.f32 %v1689, %v2074
        %v2186 = vsub.f32 %v1692, %v2076
        %v2187 = vsub.f32 %v1697, %v2078
        %v2188 = vsub.f32 %v1700, %v2080
        %v2189 = vsub.f32 %v1705, %v2082
        %v2190 = vsub.f32 %v1708, %v2084
        %v2191 = vsub.f32 %v1713, %v2086
        %v2192 = vsub.f32 %v1716, %v2088
        %v2193 = vsub.f32 %v1721, %v2090
        %v2194 = vsub.f32 %v1724, %v2092
        %v2195 = vsub.f32 %v1729, %v2094
        %v2196 = vsub.f32 %v1732, %v2096
        %v2197 = vsub.f32 %v1737, %v2098
        %v2198 = vsub.f32 %v1740, %v2100
        %v2199 = vsub.f32 %v1745, %v2102
        %v2200 = vsub.f32 %v1748, %v2104
        %v2201 = vsub.f32 %v1834, %v2106
        %v2202 = vsub.f32 %v1837, %v2108
        %v2203 = vsub.f32 %v1842, %v2110
        %v2204 = vsub.f32 %v1845, %v2112
        %v2205 = vsub.f32 %v1850, %v2114
        %v2206 = vsub.f32 %v1853, %v2116
        %v2207 = vsub.f32 %v1858, %v2118
        %v2208 = vsub.f32 %v1861, %v2120
        %v2209 = vsub.f32 %v1866, %v2122
        %v2210 = vsub.f32 %v1869, %v2124
        %v2211 = vsub.f32 %v1874, %v2126
        %v2212 = vsub.f32 %v1877, %v2128
        %v2213 = vsub.f32 %v1882, %v2130
        %v2214 = vsub.f32 %v1885, %v2132
        %v2215 = vsub.f32 %v1890, %v2134
        %v2216 = vsub.f32 %v1893, %v2136
        %v2217 = vsub.f32 %v1979, %v2138
        %v2218 = vsub.f32 %v1982, %v2140
        %v2219 = vsub.f32 %v1987, %v2142
        %v2220 = vsub.f32 %v1990, %v2144
        %v2221 = vsub.f32 %v1995, %v2146
        %v2222 = vsub.f32 %v1998, %v2148
        %v2223 = vsub.f32 %v2003, %v2150
        %v2224 = vsub.f32 %v2006, %v2152
        %v2225 = vsub.f32 %v2011, %v2154
        %v2226 = vsub.f32 %v2014, %v2156
        %v2227 = vsub.f32 %v2019, %v2158
        %v2228 = vsub.f32 %v2022, %v2160
        %v2229 = vsub.f32 %v2027, %v2162
        %v2230 = vsub.f32 %v2030, %v2164
        %v2231 = vsub.f32 %v2035, %v2166
        %v2232 = vsub.f32 %v2038, %v2168
        %v2233 = vmul.f32 %v2169, 1.442695
        %v2234 = vpow.pop %v2233
        %v2235 = vmul.f32 %v2170, 1.442695
        %v2236 = vpow.pop %v2235
        %v2237 = vmul.f32 %v2171, 1.442695
        %v2238 = vpow.pop %v2237
        %v2239 = vmul.f32 %v2172, 1.442695
        %v2240 = vpow.pop %v2239
        %v2241 = vmul.f32 %v2173, 1.442695
        %v2242 = vpow.pop %v2241
        %v2243 = vmul.f32 %v2174, 1.442695
        %v2244 = vpow.pop %v2243
        %v2245 = vmul.f32 %v2175, 1.442695
        %v2246 = vpow.pop %v2245
        %v2247 = vmul.f32 %v2176, 1.442695
        %v2248 = vpow.pop %v2247
        %v2249 = vmul.f32 %v2177, 1.442695
        %v2250 = vpow.pop %v2249
        %v2251 = vmul.f32 %v2178, 1.442695
        %v2252 = vpow.pop %v2251
        %v2253 = vmul.f32 %v2179, 1.442695
        %v2254 = vpow.pop %v2253
        %v2255 = vmul.f32 %v2180, 1.442695
        %v2256 = vpow.pop %v2255
        %v2257 = vmul.f32 %v2181, 1.442695
        %v2258 = vpow.pop %v2257
        %v2259 = vmul.f32 %v2182, 1.442695
        %v2260 = vpow.pop %v2259
        %v2261 = vmul.f32 %v2183, 1.442695
        %v2262 = vpow.pop %v2261
        %v2263 = vmul.f32 %v2184, 1.442695
        %v2264 = vpow.pop %v2263
        %v2265 = vmul.f32 %v2185, 1.442695
        %v2266 = vpow.pop %v2265
        %v2267 = vmul.f32 %v2186, 1.442695
        %v2268 = vpow.pop %v2267
        %v2269 = vmul.f32 %v2187, 1.442695
        %v2270 = vpow.pop %v2269
        %v2271 = vmul.f32 %v2188, 1.442695
        %v2272 = vpow.pop %v2271
        %v2273 = vmul.f32 %v2189, 1.442695
        %v2274 = vpow.pop %v2273
        %v2275 = vmul.f32 %v2190, 1.442695
        %v2276 = vpow.pop %v2275
        %v2277 = vmul.f32 %v2191, 1.442695
        %v2278 = vpow.pop %v2277
        %v2279 = vmul.f32 %v2192, 1.442695
        %v2280 = vpow.pop %v2279
        %v2281 = vmul.f32 %v2193, 1.442695
        %v2282 = vpow.pop %v2281
        %v2283 = vmul.f32 %v2194, 1.442695
        %v2284 = vpow.pop %v2283
        %v2285 = vmul.f32 %v2195, 1.442695
        %v2286 = vpow.pop %v2285
        %v2287 = vmul.f32 %v2196, 1.442695
        %v2288 = vpow.pop %v2287
        %v2289 = vmul.f32 %v2197, 1.442695
        %v2290 = vpow.pop %v2289
        %v2291 = vmul.f32 %v2198, 1.442695
        %v2292 = vpow.pop %v2291
        %v2293 = vmul.f32 %v2199, 1.442695
        %v2294 = vpow.pop %v2293
        %v2295 = vmul.f32 %v2200, 1.442695
        %v2296 = vpow.pop %v2295
        %v2297 = vmul.f32 %v2201, 1.442695
        %v2298 = vpow.pop %v2297
        %v2299 = vmul.f32 %v2202, 1.442695
        %v2300 = vpow.pop %v2299
        %v2301 = vmul.f32 %v2203, 1.442695
        %v2302 = vpow.pop %v2301
        %v2303 = vmul.f32 %v2204, 1.442695
        %v2304 = vpow.pop %v2303
        %v2305 = vmul.f32 %v2205, 1.442695
        %v2306 = vpow.pop %v2305
        %v2307 = vmul.f32 %v2206, 1.442695
        %v2308 = vpow.pop %v2307
        %v2309 = vmul.f32 %v2207, 1.442695
        %v2310 = vpow.pop %v2309
        %v2311 = vmul.f32 %v2208, 1.442695
        %v2312 = vpow.pop %v2311
        %v2313 = vmul.f32 %v2209, 1.442695
        %v2314 = vpow.pop %v2313
        %v2315 = vmul.f32 %v2210, 1.442695
        %v2316 = vpow.pop %v2315
        %v2317 = vmul.f32 %v2211, 1.442695
        %v2318 = vpow.pop %v2317
        %v2319 = vmul.f32 %v2212, 1.442695
        %v2320 = vpow.pop %v2319
        %v2321 = vmul.f32 %v2213, 1.442695
        %v2322 = vpow.pop %v2321
        %v2323 = vmul.f32 %v2214, 1.442695
        %v2324 = vpow.pop %v2323
        %v2325 = vmul.f32 %v2215, 1.442695
        %v2326 = vpow.pop %v2325
        %v2327 = vmul.f32 %v2216, 1.442695
        %v2328 = vpow.pop %v2327
        %v2329 = vmul.f32 %v2217, 1.442695
        %v2330 = vpow.pop %v2329
        %v2331 = vmul.f32 %v2218, 1.442695
        %v2332 = vpow.pop %v2331
        %v2333 = vmul.f32 %v2219, 1.442695
        %v2334 = vpow.pop %v2333
        %v2335 = vmul.f32 %v2220, 1.442695
        %v2336 = vpow.pop %v2335
        %v2337 = vmul.f32 %v2221, 1.442695
        %v2338 = vpow.pop %v2337
        %v2339 = vmul.f32 %v2222, 1.442695
        %v2340 = vpow.pop %v2339
        %v2341 = vmul.f32 %v2223, 1.442695
        %v2342 = vpow.pop %v2341
        %v2343 = vmul.f32 %v2224, 1.442695
        %v2344 = vpow.pop %v2343
        %v2345 = vmul.f32 %v2225, 1.442695
        %v2346 = vpow.pop %v2345
        %v2347 = vmul.f32 %v2226, 1.442695
        %v2348 = vpow.pop %v2347
        %v2349 = vmul.f32 %v2227, 1.442695
        %v2350 = vpow.pop %v2349
        %v2351 = vmul.f32 %v2228, 1.442695
        %v2352 = vpow.pop %v2351
        %v2353 = vmul.f32 %v2229, 1.442695
        %v2354 = vpow.pop %v2353
        %v2355 = vmul.f32 %v2230, 1.442695
        %v2356 = vpow.pop %v2355
        %v2357 = vmul.f32 %v2231, 1.442695
        %v2358 = vpow.pop %v2357
        %v2359 = vmul.f32 %v2232, 1.442695
        %v2360 = vpow.pop %v2359
        %2361 = vadd.xlane.f32.xlu0 %v2234
        %v2362 = vpop.xlane.xlu0 %2361
        %2363 = vadd.xlane.f32.xlu0 %v2236
        %v2364 = vpop.xlane.xlu0 %2363
        %2365 = vadd.xlane.f32.xlu0 %v2238
        %v2366 = vpop.xlane.xlu0 %2365
        %2367 = vadd.xlane.f32.xlu0 %v2240
        %v2368 = vpop.xlane.xlu0 %2367
        %2369 = vadd.xlane.f32.xlu0 %v2242
        %v2370 = vpop.xlane.xlu0 %2369
        %2371 = vadd.xlane.f32.xlu0 %v2244
        %v2372 = vpop.xlane.xlu0 %2371
        %2373 = vadd.xlane.f32.xlu0 %v2246
        %v2374 = vpop.xlane.xlu0 %2373
        %2375 = vadd.xlane.f32.xlu0 %v2248
        %v2376 = vpop.xlane.xlu0 %2375
        %2377 = vadd.xlane.f32.xlu0 %v2250
        %v2378 = vpop.xlane.xlu0 %2377
        %2379 = vadd.xlane.f32.xlu0 %v2252
        %v2380 = vpop.xlane.xlu0 %2379
        %2381 = vadd.xlane.f32.xlu0 %v2254
        %v2382 = vpop.xlane.xlu0 %2381
        %2383 = vadd.xlane.f32.xlu0 %v2256
        %v2384 = vpop.xlane.xlu0 %2383
        %2385 = vadd.xlane.f32.xlu0 %v2258
        %v2386 = vpop.xlane.xlu0 %2385
        %2387 = vadd.xlane.f32.xlu0 %v2260
        %v2388 = vpop.xlane.xlu0 %2387
        %2389 = vadd.xlane.f32.xlu0 %v2262
        %v2390 = vpop.xlane.xlu0 %2389
        %2391 = vadd.xlane.f32.xlu0 %v2264
        %v2392 = vpop.xlane.xlu0 %2391
        %2393 = vadd.xlane.f32.xlu0 %v2266
        %v2394 = vpop.xlane.xlu0 %2393
        %2395 = vadd.xlane.f32.xlu0 %v2268
        %v2396 = vpop.xlane.xlu0 %2395
        %2397 = vadd.xlane.f32.xlu0 %v2270
        %v2398 = vpop.xlane.xlu0 %2397
        %2399 = vadd.xlane.f32.xlu0 %v2272
        %v2400 = vpop.xlane.xlu0 %2399
        %2401 = vadd.xlane.f32.xlu0 %v2274
        %v2402 = vpop.xlane.xlu0 %2401
        %2403 = vadd.xlane.f32.xlu0 %v2276
        %v2404 = vpop.xlane.xlu0 %2403
        %2405 = vadd.xlane.f32.xlu0 %v2278
        %v2406 = vpop.xlane.xlu0 %2405
        %2407 = vadd.xlane.f32.xlu0 %v2280
        %v2408 = vpop.xlane.xlu0 %2407
        %2409 = vadd.xlane.f32.xlu0 %v2282
        %v2410 = vpop.xlane.xlu0 %2409
        %2411 = vadd.xlane.f32.xlu0 %v2284
        %v2412 = vpop.xlane.xlu0 %2411
        %2413 = vadd.xlane.f32.xlu0 %v2286
        %v2414 = vpop.xlane.xlu0 %2413
        %2415 = vadd.xlane.f32.xlu0 %v2288
        %v2416 = vpop.xlane.xlu0 %2415
        %2417 = vadd.xlane.f32.xlu0 %v2290
        %v2418 = vpop.xlane.xlu0 %2417
        %2419 = vadd.xlane.f32.xlu0 %v2292
        %v2420 = vpop.xlane.xlu0 %2419
        %2421 = vadd.xlane.f32.xlu0 %v2294
        %v2422 = vpop.xlane.xlu0 %2421
        %2423 = vadd.xlane.f32.xlu0 %v2296
        %v2424 = vpop.xlane.xlu0 %2423
        %2425 = vadd.xlane.f32.xlu0 %v2298
        %v2426 = vpop.xlane.xlu0 %2425
        %2427 = vadd.xlane.f32.xlu0 %v2300
        %v2428 = vpop.xlane.xlu0 %2427
        %2429 = vadd.xlane.f32.xlu0 %v2302
        %v2430 = vpop.xlane.xlu0 %2429
        %2431 = vadd.xlane.f32.xlu0 %v2304
        %v2432 = vpop.xlane.xlu0 %2431
        %2433 = vadd.xlane.f32.xlu0 %v2306
        %v2434 = vpop.xlane.xlu0 %2433
        %2435 = vadd.xlane.f32.xlu0 %v2308
        %v2436 = vpop.xlane.xlu0 %2435
        %2437 = vadd.xlane.f32.xlu0 %v2310
        %v2438 = vpop.xlane.xlu0 %2437
        %2439 = vadd.xlane.f32.xlu0 %v2312
        %v2440 = vpop.xlane.xlu0 %2439
        %2441 = vadd.xlane.f32.xlu0 %v2314
        %v2442 = vpop.xlane.xlu0 %2441
        %2443 = vadd.xlane.f32.xlu0 %v2316
        %v2444 = vpop.xlane.xlu0 %2443
        %2445 = vadd.xlane.f32.xlu0 %v2318
        %v2446 = vpop.xlane.xlu0 %2445
        %2447 = vadd.xlane.f32.xlu0 %v2320
        %v2448 = vpop.xlane.xlu0 %2447
        %2449 = vadd.xlane.f32.xlu0 %v2322
        %v2450 = vpop.xlane.xlu0 %2449
        %2451 = vadd.xlane.f32.xlu0 %v2324
        %v2452 = vpop.xlane.xlu0 %2451
        %2453 = vadd.xlane.f32.xlu0 %v2326
        %v2454 = vpop.xlane.xlu0 %2453
        %2455 = vadd.xlane.f32.xlu0 %v2328
        %v2456 = vpop.xlane.xlu0 %2455
        %2457 = vadd.xlane.f32.xlu0 %v2330
        %v2458 = vpop.xlane.xlu0 %2457
        %2459 = vadd.xlane.f32.xlu0 %v2332
        %v2460 = vpop.xlane.xlu0 %2459
        %2461 = vadd.xlane.f32.xlu0 %v2334
        %v2462 = vpop.xlane.xlu0 %2461
        %2463 = vadd.xlane.f32.xlu0 %v2336
        %v2464 = vpop.xlane.xlu0 %2463
        %2465 = vadd.xlane.f32.xlu0 %v2338
        %v2466 = vpop.xlane.xlu0 %2465
        %2467 = vadd.xlane.f32.xlu0 %v2340
        %v2468 = vpop.xlane.xlu0 %2467
        %2469 = vadd.xlane.f32.xlu0 %v2342
        %v2470 = vpop.xlane.xlu0 %2469
        %2471 = vadd.xlane.f32.xlu0 %v2344
        %v2472 = vpop.xlane.xlu0 %2471
        %2473 = vadd.xlane.f32.xlu0 %v2346
        %v2474 = vpop.xlane.xlu0 %2473
        %2475 = vadd.xlane.f32.xlu0 %v2348
        %v2476 = vpop.xlane.xlu0 %2475
        %2477 = vadd.xlane.f32.xlu0 %v2350
        %v2478 = vpop.xlane.xlu0 %2477
        %2479 = vadd.xlane.f32.xlu0 %v2352
        %v2480 = vpop.xlane.xlu0 %2479
        %2481 = vadd.xlane.f32.xlu0 %v2354
        %v2482 = vpop.xlane.xlu0 %2481
        %2483 = vadd.xlane.f32.xlu0 %v2356
        %v2484 = vpop.xlane.xlu0 %2483
        %2485 = vadd.xlane.f32.xlu0 %v2358
        %v2486 = vpop.xlane.xlu0 %2485
        %2487 = vadd.xlane.f32.xlu0 %v2360
        %v2488 = vpop.xlane.xlu0 %2487
        %v2489 = vrcp.pop %v2362
        %v2490 = vrcp.pop %v2364
        %v2491 = vrcp.pop %v2366
        %v2492 = vrcp.pop %v2368
        %v2493 = vrcp.pop %v2370
        %v2494 = vrcp.pop %v2372
        %v2495 = vrcp.pop %v2374
        %v2496 = vrcp.pop %v2376
        %v2497 = vrcp.pop %v2378
        %v2498 = vrcp.pop %v2380
        %v2499 = vrcp.pop %v2382
        %v2500 = vrcp.pop %v2384
        %v2501 = vrcp.pop %v2386
        %v2502 = vrcp.pop %v2388
        %v2503 = vrcp.pop %v2390
        %v2504 = vrcp.pop %v2392
        %v2505 = vrcp.pop %v2394
        %v2506 = vrcp.pop %v2396
        %v2507 = vrcp.pop %v2398
        %v2508 = vrcp.pop %v2400
        %v2509 = vrcp.pop %v2402
        %v2510 = vrcp.pop %v2404
        %v2511 = vrcp.pop %v2406
        %v2512 = vrcp.pop %v2408
        %v2513 = vrcp.pop %v2410
        %v2514 = vrcp.pop %v2412
        %v2515 = vrcp.pop %v2414
        %v2516 = vrcp.pop %v2416
        %v2517 = vrcp.pop %v2418
        %v2518 = vrcp.pop %v2420
        %v2519 = vrcp.pop %v2422
        %v2520 = vrcp.pop %v2424
        %v2521 = vrcp.pop %v2426
        %v2522 = vrcp.pop %v2428
        %v2523 = vrcp.pop %v2430
        %v2524 = vrcp.pop %v2432
        %v2525 = vrcp.pop %v2434
        %v2526 = vrcp.pop %v2436
        %v2527 = vrcp.pop %v2438
        %v2528 = vrcp.pop %v2440
        %v2529 = vrcp.pop %v2442
        %v2530 = vrcp.pop %v2444
        %v2531 = vrcp.pop %v2446
        %v2532 = vrcp.pop %v2448
        %v2533 = vrcp.pop %v2450
        %v2534 = vrcp.pop %v2452
        %v2535 = vrcp.pop %v2454
        %v2536 = vrcp.pop %v2456
        %v2537 = vrcp.pop %v2458
        %v2538 = vrcp.pop %v2460
        %v2539 = vrcp.pop %v2462
        %v2540 = vrcp.pop %v2464
        %v2541 = vrcp.pop %v2466
        %v2542 = vrcp.pop %v2468
        %v2543 = vrcp.pop %v2470
        %v2544 = vrcp.pop %v2472
        %v2545 = vrcp.pop %v2474
        %v2546 = vrcp.pop %v2476
        %v2547 = vrcp.pop %v2478
        %v2548 = vrcp.pop %v2480
        %v2549 = vrcp.pop %v2482
        %v2550 = vrcp.pop %v2484
        %v2551 = vrcp.pop %v2486
        %v2552 = vrcp.pop %v2488
        %v2553 = vmul.f32 %v2234, %v2489
        %v2554 = vmul.f32 %v2236, %v2490
        %v2555 = vmul.f32 %v2238, %v2491
        %v2556 = vmul.f32 %v2240, %v2492
        %v2557 = vmul.f32 %v2242, %v2493
        %v2558 = vmul.f32 %v2244, %v2494
        %v2559 = vmul.f32 %v2246, %v2495
        %v2560 = vmul.f32 %v2248, %v2496
        %v2561 = vmul.f32 %v2250, %v2497
        %v2562 = vmul.f32 %v2252, %v2498
        %v2563 = vmul.f32 %v2254, %v2499
        %v2564 = vmul.f32 %v2256, %v2500
        %v2565 = vmul.f32 %v2258, %v2501
        %v2566 = vmul.f32 %v2260, %v2502
        %v2567 = vmul.f32 %v2262, %v2503
        %v2568 = vmul.f32 %v2264, %v2504
        %v2569 = vmul.f32 %v2266, %v2505
        %v2570 = vmul.f32 %v2268, %v2506
        %v2571 = vmul.f32 %v2270, %v2507
        %v2572 = vmul.f32 %v2272, %v2508
        %v2573 = vmul.f32 %v2274, %v2509
        %v2574 = vmul.f32 %v2276, %v2510
        %v2575 = vmul.f32 %v2278, %v2511
        %v2576 = vmul.f32 %v2280, %v2512
        %v2577 = vmul.f32 %v2282, %v2513
        %v2578 = vmul.f32 %v2284, %v2514
        %v2579 = vmul.f32 %v2286, %v2515
        %v2580 = vmul.f32 %v2288, %v2516
        %v2581 = vmul.f32 %v2290, %v2517
        %v2582 = vmul.f32 %v2292, %v2518
        %v2583 = vmul.f32 %v2294, %v2519
        %v2584 = vmul.f32 %v2296, %v2520
        %v2585 = vmul.f32 %v2298, %v2521
        %v2586 = vmul.f32 %v2300, %v2522
        %v2587 = vmul.f32 %v2302, %v2523
        %v2588 = vmul.f32 %v2304, %v2524
        %v2589 = vmul.f32 %v2306, %v2525
        %v2590 = vmul.f32 %v2308, %v2526
        %v2591 = vmul.f32 %v2310, %v2527
        %v2592 = vmul.f32 %v2312, %v2528
        %v2593 = vmul.f32 %v2314, %v2529
        %v2594 = vmul.f32 %v2316, %v2530
        %v2595 = vmul.f32 %v2318, %v2531
        %v2596 = vmul.f32 %v2320, %v2532
        %v2597 = vmul.f32 %v2322, %v2533
        %v2598 = vmul.f32 %v2324, %v2534
        %v2599 = vmul.f32 %v2326, %v2535
        %v2600 = vmul.f32 %v2328, %v2536
        %v2601 = vmul.f32 %v2330, %v2537
        %v2602 = vmul.f32 %v2332, %v2538
        %v2603 = vmul.f32 %v2334, %v2539
        %v2604 = vmul.f32 %v2336, %v2540
        %v2605 = vmul.f32 %v2338, %v2541
        %v2606 = vmul.f32 %v2340, %v2542
        %v2607 = vmul.f32 %v2342, %v2543
        %v2608 = vmul.f32 %v2344, %v2544
        %v2609 = vmul.f32 %v2346, %v2545
        %v2610 = vmul.f32 %v2348, %v2546
        %v2611 = vmul.f32 %v2350, %v2547
        %v2612 = vmul.f32 %v2352, %v2548
        %v2613 = vmul.f32 %v2354, %v2549
        %v2614 = vmul.f32 %v2356, %v2550
        %v2615 = vmul.f32 %v2358, %v2551
        %v2616 = vmul.f32 %v2360, %v2552
        %v2617 = vpack.c.bf16 %v2554, %v2553
        %v2618 = vpack.c.bf16 %v2556, %v2555
        %v2619 = vpack.c.bf16 %v2558, %v2557
        %v2620 = vpack.c.bf16 %v2560, %v2559
        %v2621 = vpack.c.bf16 %v2562, %v2561
        %v2622 = vpack.c.bf16 %v2564, %v2563
        %v2623 = vpack.c.bf16 %v2566, %v2565
        %v2624 = vpack.c.bf16 %v2568, %v2567
        %v2625 = vpack.c.bf16 %v2570, %v2569
        %v2626 = vpack.c.bf16 %v2572, %v2571
        %v2627 = vpack.c.bf16 %v2574, %v2573
        %v2628 = vpack.c.bf16 %v2576, %v2575
        %v2629 = vpack.c.bf16 %v2578, %v2577
        %v2630 = vpack.c.bf16 %v2580, %v2579
        %v2631 = vpack.c.bf16 %v2582, %v2581
        %v2632 = vpack.c.bf16 %v2584, %v2583
        %v2633 = vpack.c.bf16 %v2586, %v2585
        %v2634 = vpack.c.bf16 %v2588, %v2587
        %v2635 = vpack.c.bf16 %v2590, %v2589
        %v2636 = vpack.c.bf16 %v2592, %v2591
        %v2637 = vpack.c.bf16 %v2594, %v2593
        %v2638 = vpack.c.bf16 %v2596, %v2595
        %v2639 = vpack.c.bf16 %v2598, %v2597
        %v2640 = vpack.c.bf16 %v2600, %v2599
        %v2641 = vpack.c.bf16 %v2602, %v2601
        %v2642 = vpack.c.bf16 %v2604, %v2603
        %v2643 = vpack.c.bf16 %v2606, %v2605
        %v2644 = vpack.c.bf16 %v2608, %v2607
        %v2645 = vpack.c.bf16 %v2610, %v2609
        %v2646 = vpack.c.bf16 %v2612, %v2611
        %v2647 = vpack.c.bf16 %v2614, %v2613
        %v2648 = vpack.c.bf16 %v2616, %v2615
        %2649 = vmatprep.subr.bf16.mxu0 0
        %2650 = vmatpush1.bf16.msra.mxu0 %v1209
        %2651 = vmatprep.subr.bf16.mxu0 0
        %2652 = vmatpush1.bf16.msra.mxu0 %v1210
        %2653 = vmatprep.subr.bf16.mxu0 0
        %2654 = vmatpush1.bf16.msra.mxu0 %v1211
        %2655 = vmatprep.subr.bf16.mxu0 0
        %2656 = vmatpush1.bf16.msra.mxu0 %v1212
        %2657 = vmatprep.subr.bf16.mxu0 0
        %2658 = vmatpush1.bf16.msra.mxu0 %v1213
        %2659 = vmatprep.subr.bf16.mxu0 0
        %2660 = vmatpush1.bf16.msra.mxu0 %v1214
        %2661 = vmatprep.subr.bf16.mxu0 0
        %2662 = vmatpush1.bf16.msra.mxu0 %v1215
        %2663 = vmatprep.subr.bf16.mxu0 0
        %2664 = vmatpush1.bf16.msra.mxu0 %v1216
        %2665 = vmatprep.subr.bf16.mxu0 0
        %2666 = vmatpush1.bf16.msra.mxu0 0
        %2667 = vmatprep.subr.bf16.mxu0 0
        %2668 = vmatpush1.bf16.msra.mxu0 0
        %2669 = vmatprep.subr.bf16.mxu0 0
        %2670 = vmatpush1.bf16.msra.mxu0 0
        %2671 = vmatprep.subr.bf16.mxu0 0
        %2672 = vmatpush1.bf16.msra.mxu0 0
        %2673 = vmatprep.subr.bf16.mxu0 0
        %2674 = vmatpush1.bf16.msra.mxu0 0
        %2675 = vmatprep.subr.bf16.mxu0 0
        %2676 = vmatpush1.bf16.msra.mxu0 0
        %2677 = vmatprep.subr.bf16.mxu0 0
        %2678 = vmatpush1.bf16.msra.mxu0 0
        %2679 = vmatprep.subr.bf16.mxu0 0
        %2680 = vmatpush1.bf16.msra.mxu0 0
        %2681 = vmatprep.mubr.bf16.mxu0 0
        %2682 = vmatmul.mubr.bf16.gmra.mrb[0].mxu0 %v2617
        %v2683 = vpop.f32.mrb[0].mxu0
        %v2684 = vadd.f32 0.0, %v2683
        %v2685 = vpop.f32.mrb[0].mxu0
        %v2686 = vpop.f32.mrb[0].mxu0
        %v2687 = vadd.f32 0.0, %v2686
        %v2688 = vpop.f32.mrb[0].mxu0
        %2689 = vmatprep.mubr.bf16.mxu0 0
        %2690 = vmatmul.mubr.bf16.gmra.mrb[0].mxu0 %v2618
        %v2691 = vpop.f32.mrb[0].mxu0
        %v2692 = vadd.f32 0.0, %v2691
        %v2693 = vpop.f32.mrb[0].mxu0
        %v2694 = vpop.f32.mrb[0].mxu0
        %v2695 = vadd.f32 0.0, %v2694
        %v2696 = vpop.f32.mrb[0].mxu0
        %2697 = vmatprep.mubr.bf16.mxu0 0
        %2698 = vmatmul.mubr.bf16.gmra.mrb[0].mxu0 %v2619
        %v2699 = vpop.f32.mrb[0].mxu0
        %v2700 = vadd.f32 0.0, %v2699
        %v2701 = vpop.f32.mrb[0].mxu0
        %v2702 = vpop.f32.mrb[0].mxu0
        %v2703 = vadd.f32 0.0, %v2702
        %v2704 = vpop.f32.mrb[0].mxu0
        %2705 = vmatprep.mubr.bf16.mxu0 0
        %2706 = vmatmul.mubr.bf16.gmra.mrb[0].mxu0 %v2620
        %v2707 = vpop.f32.mrb[0].mxu0
        %v2708 = vadd.f32 0.0, %v2707
        %v2709 = vpop.f32.mrb[0].mxu0
        %v2710 = vpop.f32.mrb[0].mxu0
        %v2711 = vadd.f32 0.0, %v2710
        %v2712 = vpop.f32.mrb[0].mxu0
        %2713 = vmatprep.mubr.bf16.mxu0 0
        %2714 = vmatmul.mubr.bf16.gmra.mrb[0].mxu0 %v2621
        %v2715 = vpop.f32.mrb[0].mxu0
        %v2716 = vadd.f32 0.0, %v2715
        %v2717 = vpop.f32.mrb[0].mxu0
        %v2718 = vpop.f32.mrb[0].mxu0
        %v2719 = vadd.f32 0.0, %v2718
        %v2720 = vpop.f32.mrb[0].mxu0
        %2721 = vmatprep.mubr.bf16.mxu0 0
        %2722 = vmatmul.mubr.bf16.gmra.mrb[0].mxu0 %v2622
        %v2723 = vpop.f32.mrb[0].mxu0
        %v2724 = vadd.f32 0.0, %v2723
        %v2725 = vpop.f32.mrb[0].mxu0
        %v2726 = vpop.f32.mrb[0].mxu0
        %v2727 = vadd.f32 0.0, %v2726
        %v2728 = vpop.f32.mrb[0].mxu0
        %2729 = vmatprep.mubr.bf16.mxu0 0
        %2730 = vmatmul.mubr.bf16.gmra.mrb[0].mxu0 %v2623
        %v2731 = vpop.f32.mrb[0].mxu0
        %v2732 = vadd.f32 0.0, %v2731
        %v2733 = vpop.f32.mrb[0].mxu0
        %v2734 = vpop.f32.mrb[0].mxu0
        %v2735 = vadd.f32 0.0, %v2734
        %v2736 = vpop.f32.mrb[0].mxu0
        %2737 = vmatprep.mubr.bf16.mxu0 0
        %2738 = vmatmul.mubr.bf16.gmra.mrb[0].mxu0 %v2624
        %v2739 = vpop.f32.mrb[0].mxu0
        %v2740 = vadd.f32 0.0, %v2739
        %v2741 = vpop.f32.mrb[0].mxu0
        %v2742 = vpop.f32.mrb[0].mxu0
        %v2743 = vadd.f32 0.0, %v2742
        %v2744 = vpop.f32.mrb[0].mxu0
        %2745 = vdwg.mxu0
        %2746 = vmatprep.subr.bf16.mxu0 0
        %2747 = vmatpush1.bf16.msra.mxu0 %v1338
        %2748 = vmatprep.subr.bf16.mxu0 0
        %2749 = vmatpush1.bf16.msra.mxu0 %v1340
        %2750 = vmatprep.subr.bf16.mxu0 0
        %2751 = vmatpush1.bf16.msra.mxu0 %v1342
        %2752 = vmatprep.subr.bf16.mxu0 0
        %2753 = vmatpush1.bf16.msra.mxu0 %v1344
        %2754 = vmatprep.subr.bf16.mxu0 0
        %2755 = vmatpush1.bf16.msra.mxu0 %v1346
        %2756 = vmatprep.subr.bf16.mxu0 0
        %2757 = vmatpush1.bf16.msra.mxu0 %v1348
        %2758 = vmatprep.subr.bf16.mxu0 0
        %2759 = vmatpush1.bf16.msra.mxu0 %v1350
        %2760 = vmatprep.subr.bf16.mxu0 0
        %2761 = vmatpush1.bf16.msra.mxu0 %v1352
        %2762 = vmatprep.subr.bf16.mxu0 0
        %2763 = vmatpush1.bf16.msra.mxu0 0
        %2764 = vmatprep.subr.bf16.mxu0 0
        %2765 = vmatpush1.bf16.msra.mxu0 0
        %2766 = vmatprep.subr.bf16.mxu0 0
        %2767 = vmatpush1.bf16.msra.mxu0 0
        %2768 = vmatprep.subr.bf16.mxu0 0
        %2769 = vmatpush1.bf16.msra.mxu0 0
        %2770 = vmatprep.subr.bf16.mxu0 0
        %2771 = vmatpush1.bf16.msra.mxu0 0
        %2772 = vmatprep.subr.bf16.mxu0 0
        %2773 = vmatpush1.bf16.msra.mxu0 0
        %2774 = vmatprep.subr.bf16.mxu0 0
        %2775 = vmatpush1.bf16.msra.mxu0 0
        %2776 = vmatprep.subr.bf16.mxu0 0
        %2777 = vmatpush1.bf16.msra.mxu0 0
        %2778 = vmatprep.mubr.bf16.mxu0 0
        %2779 = vmatmul.mubr.bf16.gmra.mrb[0].mxu0 %v2625
        %v2780 = vpop.f32.mrb[0].mxu0
        %v2781 = vadd.f32 0.0, %v2780
        %v2782 = vpop.f32.mrb[0].mxu0
        %v2783 = vpop.f32.mrb[0].mxu0
        %v2784 = vadd.f32 0.0, %v2783
        %v2785 = vpop.f32.mrb[0].mxu0
        %2786 = vmatprep.mubr.bf16.mxu0 0
        %2787 = vmatmul.mubr.bf16.gmra.mrb[0].mxu0 %v2626
        %v2788 = vpop.f32.mrb[0].mxu0
        %v2789 = vadd.f32 0.0, %v2788
        %v2790 = vpop.f32.mrb[0].mxu0
        %v2791 = vpop.f32.mrb[0].mxu0
        %v2792 = vadd.f32 0.0, %v2791
        %v2793 = vpop.f32.mrb[0].mxu0
        %2794 = vmatprep.mubr.bf16.mxu0 0
        %2795 = vmatmul.mubr.bf16.gmra.mrb[0].mxu0 %v2627
        %v2796 = vpop.f32.mrb[0].mxu0
        %v2797 = vadd.f32 0.0, %v2796
        %v2798 = vpop.f32.mrb[0].mxu0
        %v2799 = vpop.f32.mrb[0].mxu0
        %v2800 = vadd.f32 0.0, %v2799
        %v2801 = vpop.f32.mrb[0].mxu0
        %2802 = vmatprep.mubr.bf16.mxu0 0
        %2803 = vmatmul.mubr.bf16.gmra.mrb[0].mxu0 %v2628
        %v2804 = vpop.f32.mrb[0].mxu0
        %v2805 = vadd.f32 0.0, %v2804
        %v2806 = vpop.f32.mrb[0].mxu0
        %v2807 = vpop.f32.mrb[0].mxu0
        %v2808 = vadd.f32 0.0, %v2807
        %v2809 = vpop.f32.mrb[0].mxu0
        %2810 = vmatprep.mubr.bf16.mxu0 0
        %2811 = vmatmul.mubr.bf16.gmra.mrb[0].mxu0 %v2629
        %v2812 = vpop.f32.mrb[0].mxu0
        %v2813 = vadd.f32 0.0, %v2812
        %v2814 = vpop.f32.mrb[0].mxu0
        %v2815 = vpop.f32.mrb[0].mxu0
        %v2816 = vadd.f32 0.0, %v2815
        %v2817 = vpop.f32.mrb[0].mxu0
        %2818 = vmatprep.mubr.bf16.mxu0 0
        %2819 = vmatmul.mubr.bf16.gmra.mrb[0].mxu0 %v2630
        %v2820 = vpop.f32.mrb[0].mxu0
        %v2821 = vadd.f32 0.0, %v2820
        %v2822 = vpop.f32.mrb[0].mxu0
        %v2823 = vpop.f32.mrb[0].mxu0
        %v2824 = vadd.f32 0.0, %v2823
        %v2825 = vpop.f32.mrb[0].mxu0
        %2826 = vmatprep.mubr.bf16.mxu0 0
        %2827 = vmatmul.mubr.bf16.gmra.mrb[0].mxu0 %v2631
        %v2828 = vpop.f32.mrb[0].mxu0
        %v2829 = vadd.f32 0.0, %v2828
        %v2830 = vpop.f32.mrb[0].mxu0
        %v2831 = vpop.f32.mrb[0].mxu0
        %v2832 = vadd.f32 0.0, %v2831
        %v2833 = vpop.f32.mrb[0].mxu0
        %2834 = vmatprep.mubr.bf16.mxu0 0
        %2835 = vmatmul.mubr.bf16.gmra.mrb[0].mxu0 %v2632
        %v2836 = vpop.f32.mrb[0].mxu0
        %v2837 = vadd.f32 0.0, %v2836
        %v2838 = vpop.f32.mrb[0].mxu0
        %v2839 = vpop.f32.mrb[0].mxu0
        %v2840 = vadd.f32 0.0, %v2839
        %v2841 = vpop.f32.mrb[0].mxu0
        %2842 = vdwg.mxu0
        %2843 = vmatprep.subr.bf16.mxu0 0
        %2844 = vmatpush1.bf16.msra.mxu0 %v1362
        %2845 = vmatprep.subr.bf16.mxu0 0
        %2846 = vmatpush1.bf16.msra.mxu0 %v1364
        %2847 = vmatprep.subr.bf16.mxu0 0
        %2848 = vmatpush1.bf16.msra.mxu0 %v1366
        %2849 = vmatprep.subr.bf16.mxu0 0
        %2850 = vmatpush1.bf16.msra.mxu0 %v1368
        %2851 = vmatprep.subr.bf16.mxu0 0
        %2852 = vmatpush1.bf16.msra.mxu0 %v1370
        %2853 = vmatprep.subr.bf16.mxu0 0
        %2854 = vmatpush1.bf16.msra.mxu0 %v1372
        %2855 = vmatprep.subr.bf16.mxu0 0
        %2856 = vmatpush1.bf16.msra.mxu0 %v1374
        %2857 = vmatprep.subr.bf16.mxu0 0
        %2858 = vmatpush1.bf16.msra.mxu0 %v1376
        %2859 = vmatprep.subr.bf16.mxu0 0
        %2860 = vmatpush1.bf16.msra.mxu0 0
        %2861 = vmatprep.subr.bf16.mxu0 0
        %2862 = vmatpush1.bf16.msra.mxu0 0
        %2863 = vmatprep.subr.bf16.mxu0 0
        %2864 = vmatpush1.bf16.msra.mxu0 0
        %2865 = vmatprep.subr.bf16.mxu0 0
        %2866 = vmatpush1.bf16.msra.mxu0 0
        %2867 = vmatprep.subr.bf16.mxu0 0
        %2868 = vmatpush1.bf16.msra.mxu0 0
        %2869 = vmatprep.subr.bf16.mxu0 0
        %2870 = vmatpush1.bf16.msra.mxu0 0
        %2871 = vmatprep.subr.bf16.mxu0 0
        %2872 = vmatpush1.bf16.msra.mxu0 0
        %2873 = vmatprep.subr.bf16.mxu0 0
        %2874 = vmatpush1.bf16.msra.mxu0 0
        %2875 = vmatprep.mubr.bf16.mxu0 0
        %2876 = vmatmul.mubr.bf16.gmra.mrb[0].mxu0 %v2633
        %v2877 = vpop.f32.mrb[0].mxu0
        %v2878 = vadd.f32 0.0, %v2877
        %v2879 = vpop.f32.mrb[0].mxu0
        %v2880 = vpop.f32.mrb[0].mxu0
        %v2881 = vadd.f32 0.0, %v2880
        %v2882 = vpop.f32.mrb[0].mxu0
        %2883 = vmatprep.mubr.bf16.mxu0 0
        %2884 = vmatmul.mubr.bf16.gmra.mrb[0].mxu0 %v2634
        %v2885 = vpop.f32.mrb[0].mxu0
        %v2886 = vadd.f32 0.0, %v2885
        %v2887 = vpop.f32.mrb[0].mxu0
        %v2888 = vpop.f32.mrb[0].mxu0
        %v2889 = vadd.f32 0.0, %v2888
        %v2890 = vpop.f32.mrb[0].mxu0
        %2891 = vmatprep.mubr.bf16.mxu0 0
        %2892 = vmatmul.mubr.bf16.gmra.mrb[0].mxu0 %v2635
        %v2893 = vpop.f32.mrb[0].mxu0
        %v2894 = vadd.f32 0.0, %v2893
        %v2895 = vpop.f32.mrb[0].mxu0
        %v2896 = vpop.f32.mrb[0].mxu0
        %v2897 = vadd.f32 0.0, %v2896
        %v2898 = vpop.f32.mrb[0].mxu0
        %2899 = vmatprep.mubr.bf16.mxu0 0
        %2900 = vmatmul.mubr.bf16.gmra.mrb[0].mxu0 %v2636
        %v2901 = vpop.f32.mrb[0].mxu0
        %v2902 = vadd.f32 0.0, %v2901
        %v2903 = vpop.f32.mrb[0].mxu0
        %v2904 = vpop.f32.mrb[0].mxu0
        %v2905 = vadd.f32 0.0, %v2904
        %v2906 = vpop.f32.mrb[0].mxu0
        %2907 = vmatprep.mubr.bf16.mxu0 0
        %2908 = vmatmul.mubr.bf16.gmra.mrb[0].mxu0 %v2637
        %v2909 = vpop.f32.mrb[0].mxu0
        %v2910 = vadd.f32 0.0, %v2909
        %v2911 = vpop.f32.mrb[0].mxu0
        %v2912 = vpop.f32.mrb[0].mxu0
        %v2913 = vadd.f32 0.0, %v2912
        %v2914 = vpop.f32.mrb[0].mxu0
        %2915 = vmatprep.mubr.bf16.mxu0 0
        %2916 = vmatmul.mubr.bf16.gmra.mrb[0].mxu0 %v2638
        %v2917 = vpop.f32.mrb[0].mxu0
        %v2918 = vadd.f32 0.0, %v2917
        %v2919 = vpop.f32.mrb[0].mxu0
        %v2920 = vpop.f32.mrb[0].mxu0
        %v2921 = vadd.f32 0.0, %v2920
        %v2922 = vpop.f32.mrb[0].mxu0
        %2923 = vmatprep.mubr.bf16.mxu0 0
        %2924 = vmatmul.mubr.bf16.gmra.mrb[0].mxu0 %v2639
        %v2925 = vpop.f32.mrb[0].mxu0
        %v2926 = vadd.f32 0.0, %v2925
        %v2927 = vpop.f32.mrb[0].mxu0
        %v2928 = vpop.f32.mrb[0].mxu0
        %v2929 = vadd.f32 0.0, %v2928
        %v2930 = vpop.f32.mrb[0].mxu0
        %2931 = vmatprep.mubr.bf16.mxu0 0
        %2932 = vmatmul.mubr.bf16.gmra.mrb[0].mxu0 %v2640
        %v2933 = vpop.f32.mrb[0].mxu0
        %v2934 = vadd.f32 0.0, %v2933
        %v2935 = vpop.f32.mrb[0].mxu0
        %v2936 = vpop.f32.mrb[0].mxu0
        %v2937 = vadd.f32 0.0, %v2936
        %v2938 = vpop.f32.mrb[0].mxu0
        %2939 = vdwg.mxu0
        %2940 = vmatprep.subr.bf16.mxu0 0
        %2941 = vmatpush1.bf16.msra.mxu0 %v1386
        %2942 = vmatprep.subr.bf16.mxu0 0
        %2943 = vmatpush1.bf16.msra.mxu0 %v1388
        %2944 = vmatprep.subr.bf16.mxu0 0
        %2945 = vmatpush1.bf16.msra.mxu0 %v1390
        %2946 = vmatprep.subr.bf16.mxu0 0
        %2947 = vmatpush1.bf16.msra.mxu0 %v1392
        %2948 = vmatprep.subr.bf16.mxu0 0
        %2949 = vmatpush1.bf16.msra.mxu0 %v1394
        %2950 = vmatprep.subr.bf16.mxu0 0
        %2951 = vmatpush1.bf16.msra.mxu0 %v1396
        %2952 = vmatprep.subr.bf16.mxu0 0
        %2953 = vmatpush1.bf16.msra.mxu0 %v1398
        %2954 = vmatprep.subr.bf16.mxu0 0
        %2955 = vmatpush1.bf16.msra.mxu0 %v1400
        %2956 = vmatprep.subr.bf16.mxu0 0
        %2957 = vmatpush1.bf16.msra.mxu0 0
        %2958 = vmatprep.subr.bf16.mxu0 0
        %2959 = vmatpush1.bf16.msra.mxu0 0
        %2960 = vmatprep.subr.bf16.mxu0 0
        %2961 = vmatpush1.bf16.msra.mxu0 0
        %2962 = vmatprep.subr.bf16.mxu0 0
        %2963 = vmatpush1.bf16.msra.mxu0 0
        %2964 = vmatprep.subr.bf16.mxu0 0
        %2965 = vmatpush1.bf16.msra.mxu0 0
        %2966 = vmatprep.subr.bf16.mxu0 0
        %2967 = vmatpush1.bf16.msra.mxu0 0
        %2968 = vmatprep.subr.bf16.mxu0 0
        %2969 = vmatpush1.bf16.msra.mxu0 0
        %2970 = vmatprep.subr.bf16.mxu0 0
        %2971 = vmatpush1.bf16.msra.mxu0 0
        %2972 = vmatprep.mubr.bf16.mxu0 0
        %2973 = vmatmul.mubr.bf16.gmra.mrb[0].mxu0 %v2641
        %v2974 = vpop.f32.mrb[0].mxu0
        %v2975 = vadd.f32 0.0, %v2974
        %v2976 = vpop.f32.mrb[0].mxu0
        %v2977 = vpop.f32.mrb[0].mxu0
        %v2978 = vadd.f32 0.0, %v2977
        %v2979 = vpop.f32.mrb[0].mxu0
        %2980 = vmatprep.mubr.bf16.mxu0 0
        %2981 = vmatmul.mubr.bf16.gmra.mrb[0].mxu0 %v2642
        %v2982 = vpop.f32.mrb[0].mxu0
        %v2983 = vadd.f32 0.0, %v2982
        %v2984 = vpop.f32.mrb[0].mxu0
        %v2985 = vpop.f32.mrb[0].mxu0
        %v2986 = vadd.f32 0.0, %v2985
        %v2987 = vpop.f32.mrb[0].mxu0
        %2988 = vmatprep.mubr.bf16.mxu0 0
        %2989 = vmatmul.mubr.bf16.gmra.mrb[0].mxu0 %v2643
        %v2990 = vpop.f32.mrb[0].mxu0
        %v2991 = vadd.f32 0.0, %v2990
        %v2992 = vpop.f32.mrb[0].mxu0
        %v2993 = vpop.f32.mrb[0].mxu0
        %v2994 = vadd.f32 0.0, %v2993
        %v2995 = vpop.f32.mrb[0].mxu0
        %2996 = vmatprep.mubr.bf16.mxu0 0
        %2997 = vmatmul.mubr.bf16.gmra.mrb[0].mxu0 %v2644
        %v2998 = vpop.f32.mrb[0].mxu0
        %v2999 = vadd.f32 0.0, %v2998
        %v3000 = vpop.f32.mrb[0].mxu0
        %v3001 = vpop.f32.mrb[0].mxu0
        %v3002 = vadd.f32 0.0, %v3001
        %v3003 = vpop.f32.mrb[0].mxu0
        %3004 = vmatprep.mubr.bf16.mxu0 0
        %3005 = vmatmul.mubr.bf16.gmra.mrb[0].mxu0 %v2645
        %v3006 = vpop.f32.mrb[0].mxu0
        %v3007 = vadd.f32 0.0, %v3006
        %v3008 = vpop.f32.mrb[0].mxu0
        %v3009 = vpop.f32.mrb[0].mxu0
        %v3010 = vadd.f32 0.0, %v3009
        %v3011 = vpop.f32.mrb[0].mxu0
        %3012 = vmatprep.mubr.bf16.mxu0 0
        %3013 = vmatmul.mubr.bf16.gmra.mrb[0].mxu0 %v2646
        %v3014 = vpop.f32.mrb[0].mxu0
        %v3015 = vadd.f32 0.0, %v3014
        %v3016 = vpop.f32.mrb[0].mxu0
        %v3017 = vpop.f32.mrb[0].mxu0
        %v3018 = vadd.f32 0.0, %v3017
        %v3019 = vpop.f32.mrb[0].mxu0
        %3020 = vmatprep.mubr.bf16.mxu0 0
        %3021 = vmatmul.mubr.bf16.gmra.mrb[0].mxu0 %v2647
        %v3022 = vpop.f32.mrb[0].mxu0
        %v3023 = vadd.f32 0.0, %v3022
        %v3024 = vpop.f32.mrb[0].mxu0
        %v3025 = vpop.f32.mrb[0].mxu0
        %v3026 = vadd.f32 0.0, %v3025
        %v3027 = vpop.f32.mrb[0].mxu0
        %3028 = vmatprep.mubr.bf16.mxu0 0
        %3029 = vmatmul.mubr.bf16.gmra.mrb[0].mxu0 %v2648
        %v3030 = vpop.f32.mrb[0].mxu0
        %v3031 = vadd.f32 0.0, %v3030
        %v3032 = vpop.f32.mrb[0].mxu0
        %v3033 = vpop.f32.mrb[0].mxu0
        %v3034 = vadd.f32 0.0, %v3033
        %v3035 = vpop.f32.mrb[0].mxu0
        %3036 = vdwg.mxu0
        %v3037 = vpack.c.bf16 %v2687, %v2684
        %v3038 = vpack.c.bf16 %v2695, %v2692
        %v3039 = vpack.c.bf16 %v2703, %v2700
        %v3040 = vpack.c.bf16 %v2711, %v2708
        %v3041 = vpack.c.bf16 %v2719, %v2716
        %v3042 = vpack.c.bf16 %v2727, %v2724
        %v3043 = vpack.c.bf16 %v2735, %v2732
        %v3044 = vpack.c.bf16 %v2743, %v2740
        %3045 = vst.msk [vmem:[#allocation2] sm:$0xff] %vm1460, %v3037
        %3046 = vst.msk [vmem:[#allocation2 + $0x8] sm:$0xff] %vm1460, %v3038
        %3047 = vst.msk [vmem:[#allocation2 + $0x10] sm:$0xff] %vm1460, %v3039
        %3048 = vst.msk [vmem:[#allocation2 + $0x18] sm:$0xff] %vm1460, %v3040
        %3049 = vst.msk [vmem:[#allocation2 + $0x20] sm:$0xff] %vm1460, %v3041
        %3050 = vst.msk [vmem:[#allocation2 + $0x28] sm:$0xff] %vm1460, %v3042
        %3051 = vst.msk [vmem:[#allocation2 + $0x30] sm:$0xff] %vm1460, %v3043
        %3052 = vst.msk [vmem:[#allocation2 + $0x38] sm:$0xff] %vm1460, %v3044
        %v3053 = vpack.c.bf16 %v2784, %v2781
        %v3054 = vpack.c.bf16 %v2792, %v2789
        %v3055 = vpack.c.bf16 %v2800, %v2797
        %v3056 = vpack.c.bf16 %v2808, %v2805
        %v3057 = vpack.c.bf16 %v2816, %v2813
        %v3058 = vpack.c.bf16 %v2824, %v2821
        %v3059 = vpack.c.bf16 %v2832, %v2829
        %v3060 = vpack.c.bf16 %v2840, %v2837
        %3069 = vrot.lane.b32.xlu0 %v3053, 32
        %v3070 = vpop.permute.xlu0 %3069
        %3071 = vrot.lane.b32.xlu0 %v3054, 32
        %v3072 = vpop.permute.xlu0 %3071
        %3073 = vrot.lane.b32.xlu0 %v3055, 32
        %v3074 = vpop.permute.xlu0 %3073
        %3075 = vrot.lane.b32.xlu0 %v3056, 32
        %v3076 = vpop.permute.xlu0 %3075
        %3077 = vrot.lane.b32.xlu0 %v3057, 32
        %v3078 = vpop.permute.xlu0 %3077
        %3079 = vrot.lane.b32.xlu0 %v3058, 32
        %v3080 = vpop.permute.xlu0 %3079
        %3081 = vrot.lane.b32.xlu0 %v3059, 32
        %v3082 = vpop.permute.xlu0 %3081
        %3083 = vrot.lane.b32.xlu0 %v3060, 32
        %v3084 = vpop.permute.xlu0 %3083
        %vm3093 = vcmask 523520
        %3094 = vst.msk [vmem:[#allocation2] sm:$0xff] %vm3093, %v3070
        %3095 = vst.msk [vmem:[#allocation2 + $0x8] sm:$0xff] %vm3093, %v3072
        %3096 = vst.msk [vmem:[#allocation2 + $0x10] sm:$0xff] %vm3093, %v3074
        %3097 = vst.msk [vmem:[#allocation2 + $0x18] sm:$0xff] %vm3093, %v3076
        %3098 = vst.msk [vmem:[#allocation2 + $0x20] sm:$0xff] %vm3093, %v3078
        %3099 = vst.msk [vmem:[#allocation2 + $0x28] sm:$0xff] %vm3093, %v3080
        %3100 = vst.msk [vmem:[#allocation2 + $0x30] sm:$0xff] %vm3093, %v3082
        %3101 = vst.msk [vmem:[#allocation2 + $0x38] sm:$0xff] %vm3093, %v3084
        %v3102 = vpack.c.bf16 %v2881, %v2878
        %v3103 = vpack.c.bf16 %v2889, %v2886
        %v3104 = vpack.c.bf16 %v2897, %v2894
        %v3105 = vpack.c.bf16 %v2905, %v2902
        %v3106 = vpack.c.bf16 %v2913, %v2910
        %v3107 = vpack.c.bf16 %v2921, %v2918
        %v3108 = vpack.c.bf16 %v2929, %v2926
        %v3109 = vpack.c.bf16 %v2937, %v2934
        %3118 = vrot.lane.b32.xlu0 %v3102, 64
        %v3119 = vpop.permute.xlu0 %3118
        %3120 = vrot.lane.b32.xlu0 %v3103, 64
        %v3121 = vpop.permute.xlu0 %3120
        %3122 = vrot.lane.b32.xlu0 %v3104, 64
        %v3123 = vpop.permute.xlu0 %3122
        %3124 = vrot.lane.b32.xlu0 %v3105, 64
        %v3125 = vpop.permute.xlu0 %3124
        %3126 = vrot.lane.b32.xlu0 %v3106, 64
        %v3127 = vpop.permute.xlu0 %3126
        %3128 = vrot.lane.b32.xlu0 %v3107, 64
        %v3129 = vpop.permute.xlu0 %3128
        %3130 = vrot.lane.b32.xlu0 %v3108, 64
        %v3131 = vpop.permute.xlu0 %3130
        %3132 = vrot.lane.b32.xlu0 %v3109, 64
        %v3133 = vpop.permute.xlu0 %3132
        %vm3142 = vcmask 785920
        %3143 = vst.msk [vmem:[#allocation2] sm:$0xff] %vm3142, %v3119
        %3144 = vst.msk [vmem:[#allocation2 + $0x8] sm:$0xff] %vm3142, %v3121
        %3145 = vst.msk [vmem:[#allocation2 + $0x10] sm:$0xff] %vm3142, %v3123
        %3146 = vst.msk [vmem:[#allocation2 + $0x18] sm:$0xff] %vm3142, %v3125
        %3147 = vst.msk [vmem:[#allocation2 + $0x20] sm:$0xff] %vm3142, %v3127
        %3148 = vst.msk [vmem:[#allocation2 + $0x28] sm:$0xff] %vm3142, %v3129
        %3149 = vst.msk [vmem:[#allocation2 + $0x30] sm:$0xff] %vm3142, %v3131
        %3150 = vst.msk [vmem:[#allocation2 + $0x38] sm:$0xff] %vm3142, %v3133
        %v3151 = vpack.c.bf16 %v2978, %v2975
        %v3152 = vpack.c.bf16 %v2986, %v2983
        %v3153 = vpack.c.bf16 %v2994, %v2991
        %v3154 = vpack.c.bf16 %v3002, %v2999
        %v3155 = vpack.c.bf16 %v3010, %v3007
        %v3156 = vpack.c.bf16 %v3018, %v3015
        %v3157 = vpack.c.bf16 %v3026, %v3023
        %v3158 = vpack.c.bf16 %v3034, %v3031
        %3167 = vrot.lane.b32.xlu0 %v3151, 96
        %v3168 = vpop.permute.xlu0 %3167
        %3169 = vrot.lane.b32.xlu0 %v3152, 96
        %v3170 = vpop.permute.xlu0 %3169
        %3171 = vrot.lane.b32.xlu0 %v3153, 96
        %v3172 = vpop.permute.xlu0 %3171
        %3173 = vrot.lane.b32.xlu0 %v3154, 96
        %v3174 = vpop.permute.xlu0 %3173
        %3175 = vrot.lane.b32.xlu0 %v3155, 96
        %v3176 = vpop.permute.xlu0 %3175
        %3177 = vrot.lane.b32.xlu0 %v3156, 96
        %v3178 = vpop.permute.xlu0 %3177
        %3179 = vrot.lane.b32.xlu0 %v3157, 96
        %v3180 = vpop.permute.xlu0 %3179
        %3181 = vrot.lane.b32.xlu0 %v3158, 96
        %v3182 = vpop.permute.xlu0 %3181
        %vm3191 = vcmask 1048320
        %3192 = vst.msk [vmem:[#allocation2] sm:$0xff] %vm3191, %v3168
        %3193 = vst.msk [vmem:[#allocation2 + $0x8] sm:$0xff] %vm3191, %v3170
        %3194 = vst.msk [vmem:[#allocation2 + $0x10] sm:$0xff] %vm3191, %v3172
        %3195 = vst.msk [vmem:[#allocation2 + $0x18] sm:$0xff] %vm3191, %v3174
        %3196 = vst.msk [vmem:[#allocation2 + $0x20] sm:$0xff] %vm3191, %v3176
        %3197 = vst.msk [vmem:[#allocation2 + $0x28] sm:$0xff] %vm3191, %v3178
        %3198 = vst.msk [vmem:[#allocation2 + $0x30] sm:$0xff] %vm3191, %v3180
        %3199 = vst.msk [vmem:[#allocation2 + $0x38] sm:$0xff] %vm3191, %v3182
        %v3200 = vld [vmem:[#allocation2] sm:$0xff]
        %v3201 = vld [vmem:[#allocation2 + $0x8] sm:$0xff]
        %v3202 = vld [vmem:[#allocation2 + $0x10] sm:$0xff]
        %v3203 = vld [vmem:[#allocation2 + $0x18] sm:$0xff]
        %v3204 = vld [vmem:[#allocation2 + $0x20] sm:$0xff]
        %v3205 = vld [vmem:[#allocation2 + $0x28] sm:$0xff]
        %v3206 = vld [vmem:[#allocation2 + $0x30] sm:$0xff]
        %v3207 = vld [vmem:[#allocation2 + $0x38] sm:$0xff]
        %v3208 = vld [vmem:[#allocation11] sm:$0xf]
        %v3209 = vld [vmem:[#allocation11 + $0x4] sm:$0xf]
        %v3210 = vld [vmem:[#allocation11 + $0x8] sm:$0xf]
        %v3211 = vld [vmem:[#allocation11 + $0xc] sm:$0xf]
        %v3212 = vld [vmem:[#allocation11 + $0x10] sm:$0xf]
        %v3213 = vld [vmem:[#allocation11 + $0x14] sm:$0xf]
        %v3214 = vld [vmem:[#allocation11 + $0x18] sm:$0xf]
        %v3215 = vld [vmem:[#allocation11 + $0x1c] sm:$0xf]
        %v3216 = vld [vmem:[#allocation11 + $0x20] sm:$0xf]
        %v3217 = vld [vmem:[#allocation11 + $0x24] sm:$0xf]
        %v3218 = vld [vmem:[#allocation11 + $0x28] sm:$0xf]
        %v3219 = vld [vmem:[#allocation11 + $0x2c] sm:$0xf]
        %v3220 = vld [vmem:[#allocation11 + $0x30] sm:$0xf]
        %v3221 = vld [vmem:[#allocation11 + $0x34] sm:$0xf]
        %v3222 = vld [vmem:[#allocation11 + $0x38] sm:$0xf]
        %v3223 = vld [vmem:[#allocation11 + $0x3c] sm:$0xf]
        %v3224 = vld [vmem:[%s6] sm:$0x1]
        %v3226 = vlaneseq
        %v3227 = vshrl.u32 %v3226, 7
        %v3228 = vsub.s32 0, %v3227
        %v3229 = vrot.slane %v3224, %v3228
        %v3247 = vunpack.c.l.b16 %v3208
        %v3248 = vunpack.c.l.b16 %v3209
        %v3249 = vunpack.c.l.b16 %v3210
        %v3250 = vunpack.c.l.b16 %v3211
        %v3251 = vunpack.c.l.b16 %v3212
        %v3252 = vunpack.c.l.b16 %v3213
        %v3253 = vunpack.c.l.b16 %v3214
        %v3254 = vunpack.c.l.b16 %v3215
        %v3255 = vunpack.c.l.b16 %v3216
        %v3256 = vunpack.c.l.b16 %v3217
        %v3257 = vunpack.c.l.b16 %v3218
        %v3258 = vunpack.c.l.b16 %v3219
        %v3259 = vunpack.c.l.b16 %v3220
        %v3260 = vunpack.c.l.b16 %v3221
        %v3261 = vunpack.c.l.b16 %v3222
        %v3262 = vunpack.c.l.b16 %v3223
        %v3263 = vpack.c.b16 %v3248, %v3247
        %v3264 = vpack.c.b16 %v3250, %v3249
        %v3265 = vpack.c.b16 %v3252, %v3251
        %v3266 = vpack.c.b16 %v3254, %v3253
        %v3267 = vpack.c.b16 %v3256, %v3255
        %v3268 = vpack.c.b16 %v3258, %v3257
        %v3269 = vpack.c.b16 %v3260, %v3259
        %v3270 = vpack.c.b16 %v3262, %v3261
        %3279 = vmatprep.subr.bf16.mxu0 0
        %3280 = vmatpush1.bf16.msra.mxu0 %v3263
        %3281 = vmatprep.subr.bf16.mxu0 0
        %3282 = vmatpush1.bf16.msra.mxu0 %v3264
        %3283 = vmatprep.subr.bf16.mxu0 0
        %3284 = vmatpush1.bf16.msra.mxu0 %v3265
        %3285 = vmatprep.subr.bf16.mxu0 0
        %3286 = vmatpush1.bf16.msra.mxu0 %v3266
        %3287 = vmatprep.subr.bf16.mxu0 0
        %3288 = vmatpush1.bf16.msra.mxu0 %v3267
        %3289 = vmatprep.subr.bf16.mxu0 0
        %3290 = vmatpush1.bf16.msra.mxu0 %v3268
        %3291 = vmatprep.subr.bf16.mxu0 0
        %3292 = vmatpush1.bf16.msra.mxu0 %v3269
        %3293 = vmatprep.subr.bf16.mxu0 0
        %3294 = vmatpush1.bf16.msra.mxu0 %v3270
        %3295 = vmatprep.subr.bf16.mxu0 0
        %3296 = vmatpush1.bf16.msra.mxu0 0
        %3297 = vmatprep.subr.bf16.mxu0 0
        %3298 = vmatpush1.bf16.msra.mxu0 0
        %3299 = vmatprep.subr.bf16.mxu0 0
        %3300 = vmatpush1.bf16.msra.mxu0 0
        %3301 = vmatprep.subr.bf16.mxu0 0
        %3302 = vmatpush1.bf16.msra.mxu0 0
        %3303 = vmatprep.subr.bf16.mxu0 0
        %3304 = vmatpush1.bf16.msra.mxu0 0
        %3305 = vmatprep.subr.bf16.mxu0 0
        %3306 = vmatpush1.bf16.msra.mxu0 0
        %3307 = vmatprep.subr.bf16.mxu0 0
        %3308 = vmatpush1.bf16.msra.mxu0 0
        %3309 = vmatprep.subr.bf16.mxu0 0
        %3310 = vmatpush1.bf16.msra.mxu0 0
        %3311 = vmatprep.mubr.bf16.mxu0 0
        %3312 = vmatmul.mubr.bf16.gmra.mrb[0].mxu0 %v3200
        %v3313 = vpop.f32.mrb[0].mxu0
        %v3314 = vadd.f32 %v3229, %v3313
        %v3315 = vpop.f32.mrb[0].mxu0
        %v3316 = vpop.f32.mrb[0].mxu0
        %v3317 = vadd.f32 %v3229, %v3316
        %v3318 = vpop.f32.mrb[0].mxu0
        %3319 = vmatprep.mubr.bf16.mxu0 0
        %3320 = vmatmul.mubr.bf16.gmra.mrb[0].mxu0 %v3201
        %v3321 = vpop.f32.mrb[0].mxu0
        %v3322 = vadd.f32 %v3229, %v3321
        %v3323 = vpop.f32.mrb[0].mxu0
        %v3324 = vpop.f32.mrb[0].mxu0
        %v3325 = vadd.f32 %v3229, %v3324
        %v3326 = vpop.f32.mrb[0].mxu0
        %3327 = vmatprep.mubr.bf16.mxu0 0
        %3328 = vmatmul.mubr.bf16.gmra.mrb[0].mxu0 %v3202
        %v3329 = vpop.f32.mrb[0].mxu0
        %v3330 = vadd.f32 %v3229, %v3329
        %v3331 = vpop.f32.mrb[0].mxu0
        %v3332 = vpop.f32.mrb[0].mxu0
        %v3333 = vadd.f32 %v3229, %v3332
        %v3334 = vpop.f32.mrb[0].mxu0
        %3335 = vmatprep.mubr.bf16.mxu0 0
        %3336 = vmatmul.mubr.bf16.gmra.mrb[0].mxu0 %v3203
        %v3337 = vpop.f32.mrb[0].mxu0
        %v3338 = vadd.f32 %v3229, %v3337
        %v3339 = vpop.f32.mrb[0].mxu0
        %v3340 = vpop.f32.mrb[0].mxu0
        %v3341 = vadd.f32 %v3229, %v3340
        %v3342 = vpop.f32.mrb[0].mxu0
        %3343 = vmatprep.mubr.bf16.mxu0 0
        %3344 = vmatmul.mubr.bf16.gmra.mrb[0].mxu0 %v3204
        %v3345 = vpop.f32.mrb[0].mxu0
        %v3346 = vadd.f32 %v3229, %v3345
        %v3347 = vpop.f32.mrb[0].mxu0
        %v3348 = vpop.f32.mrb[0].mxu0
        %v3349 = vadd.f32 %v3229, %v3348
        %v3350 = vpop.f32.mrb[0].mxu0
        %3351 = vmatprep.mubr.bf16.mxu0 0
        %3352 = vmatmul.mubr.bf16.gmra.mrb[0].mxu0 %v3205
        %v3353 = vpop.f32.mrb[0].mxu0
        %v3354 = vadd.f32 %v3229, %v3353
        %v3355 = vpop.f32.mrb[0].mxu0
        %v3356 = vpop.f32.mrb[0].mxu0
        %v3357 = vadd.f32 %v3229, %v3356
        %v3358 = vpop.f32.mrb[0].mxu0
        %3359 = vmatprep.mubr.bf16.mxu0 0
        %3360 = vmatmul.mubr.bf16.gmra.mrb[0].mxu0 %v3206
        %v3361 = vpop.f32.mrb[0].mxu0
        %v3362 = vadd.f32 %v3229, %v3361
        %v3363 = vpop.f32.mrb[0].mxu0
        %v3364 = vpop.f32.mrb[0].mxu0
        %v3365 = vadd.f32 %v3229, %v3364
        %v3366 = vpop.f32.mrb[0].mxu0
        %3367 = vmatprep.mubr.bf16.mxu0 0
        %3368 = vmatmul.mubr.bf16.gmra.mrb[0].mxu0 %v3207
        %v3369 = vpop.f32.mrb[0].mxu0
        %v3370 = vadd.f32 %v3229, %v3369
        %v3371 = vpop.f32.mrb[0].mxu0
        %v3372 = vpop.f32.mrb[0].mxu0
        %v3373 = vadd.f32 %v3229, %v3372
        %v3374 = vpop.f32.mrb[0].mxu0
        %3375 = vdwg.mxu0
        %v3376 = vadd.f32 %v3314, %v543
        %v3377 = vadd.f32 %v3317, %v544
        %v3378 = vadd.f32 %v3322, %v545
        %v3379 = vadd.f32 %v3325, %v546
        %v3380 = vadd.f32 %v3330, %v547
        %v3381 = vadd.f32 %v3333, %v548
        %v3382 = vadd.f32 %v3338, %v549
        %v3383 = vadd.f32 %v3341, %v550
        %v3384 = vadd.f32 %v3346, %v551
        %v3385 = vadd.f32 %v3349, %v552
        %v3386 = vadd.f32 %v3354, %v553
        %v3387 = vadd.f32 %v3357, %v554
        %v3388 = vadd.f32 %v3362, %v555
        %v3389 = vadd.f32 %v3365, %v556
        %v3390 = vadd.f32 %v3370, %v557
        %v3391 = vadd.f32 %v3373, %v558
        %v3392 = vld [vmem:[%s7] sm:$0x1]
        %v3393 = vld [vmem:[%s8] sm:$0x1]
        %3394 = vadd.xlane.f32.xlu0 %v3376
        %v3395 = vpop.xlane.xlu0 %3394
        %3396 = vadd.xlane.f32.xlu0 %v3377
        %v3397 = vpop.xlane.xlu0 %3396
        %3398 = vadd.xlane.f32.xlu0 %v3378
        %v3399 = vpop.xlane.xlu0 %3398
        %3400 = vadd.xlane.f32.xlu0 %v3379
        %v3401 = vpop.xlane.xlu0 %3400
        %3402 = vadd.xlane.f32.xlu0 %v3380
        %v3403 = vpop.xlane.xlu0 %3402
        %3404 = vadd.xlane.f32.xlu0 %v3381
        %v3405 = vpop.xlane.xlu0 %3404
        %3406 = vadd.xlane.f32.xlu0 %v3382
        %v3407 = vpop.xlane.xlu0 %3406
        %3408 = vadd.xlane.f32.xlu0 %v3383
        %v3409 = vpop.xlane.xlu0 %3408
        %3410 = vadd.xlane.f32.xlu0 %v3384
        %v3411 = vpop.xlane.xlu0 %3410
        %3412 = vadd.xlane.f32.xlu0 %v3385
        %v3413 = vpop.xlane.xlu0 %3412
        %3414 = vadd.xlane.f32.xlu0 %v3386
        %v3415 = vpop.xlane.xlu0 %3414
        %3416 = vadd.xlane.f32.xlu0 %v3387
        %v3417 = vpop.xlane.xlu0 %3416
        %3418 = vadd.xlane.f32.xlu0 %v3388
        %v3419 = vpop.xlane.xlu0 %3418
        %3420 = vadd.xlane.f32.xlu0 %v3389
        %v3421 = vpop.xlane.xlu0 %3420
        %3422 = vadd.xlane.f32.xlu0 %v3390
        %v3423 = vpop.xlane.xlu0 %3422
        %3424 = vadd.xlane.f32.xlu0 %v3391
        %v3425 = vpop.xlane.xlu0 %3424
        %v3426 = vmul.f32 %v3395, %v593
        %v3427 = vmul.f32 %v3397, %v593
        %v3428 = vmul.f32 %v3399, %v593
        %v3429 = vmul.f32 %v3401, %v593
        %v3430 = vmul.f32 %v3403, %v593
        %v3431 = vmul.f32 %v3405, %v593
        %v3432 = vmul.f32 %v3407, %v593
        %v3433 = vmul.f32 %v3409, %v593
        %v3434 = vmul.f32 %v3411, %v593
        %v3435 = vmul.f32 %v3413, %v593
        %v3436 = vmul.f32 %v3415, %v593
        %v3437 = vmul.f32 %v3417, %v593
        %v3438 = vmul.f32 %v3419, %v593
        %v3439 = vmul.f32 %v3421, %v593
        %v3440 = vmul.f32 %v3423, %v593
        %v3441 = vmul.f32 %v3425, %v593
        %v3442 = vsub.f32 %v3376, %v3426
        %v3443 = vsub.f32 %v3377, %v3427
        %v3444 = vsub.f32 %v3378, %v3428
        %v3445 = vsub.f32 %v3379, %v3429
        %v3446 = vsub.f32 %v3380, %v3430
        %v3447 = vsub.f32 %v3381, %v3431
        %v3448 = vsub.f32 %v3382, %v3432
        %v3449 = vsub.f32 %v3383, %v3433
        %v3450 = vsub.f32 %v3384, %v3434
        %v3451 = vsub.f32 %v3385, %v3435
        %v3452 = vsub.f32 %v3386, %v3436
        %v3453 = vsub.f32 %v3387, %v3437
        %v3454 = vsub.f32 %v3388, %v3438
        %v3455 = vsub.f32 %v3389, %v3439
        %v3456 = vsub.f32 %v3390, %v3440
        %v3457 = vsub.f32 %v3391, %v3441
        %v3458 = vmul.f32 %v3442, %v3442
        %v3459 = vmul.f32 %v3443, %v3443
        %v3460 = vmul.f32 %v3444, %v3444
        %v3461 = vmul.f32 %v3445, %v3445
        %v3462 = vmul.f32 %v3446, %v3446
        %v3463 = vmul.f32 %v3447, %v3447
        %v3464 = vmul.f32 %v3448, %v3448
        %v3465 = vmul.f32 %v3449, %v3449
        %v3466 = vmul.f32 %v3450, %v3450
        %v3467 = vmul.f32 %v3451, %v3451
        %v3468 = vmul.f32 %v3452, %v3452
        %v3469 = vmul.f32 %v3453, %v3453
        %v3470 = vmul.f32 %v3454, %v3454
        %v3471 = vmul.f32 %v3455, %v3455
        %v3472 = vmul.f32 %v3456, %v3456
        %v3473 = vmul.f32 %v3457, %v3457
        %3474 = vadd.xlane.f32.xlu0 %v3458
        %v3475 = vpop.xlane.xlu0 %3474
        %3476 = vadd.xlane.f32.xlu0 %v3459
        %v3477 = vpop.xlane.xlu0 %3476
        %3478 = vadd.xlane.f32.xlu0 %v3460
        %v3479 = vpop.xlane.xlu0 %3478
        %3480 = vadd.xlane.f32.xlu0 %v3461
        %v3481 = vpop.xlane.xlu0 %3480
        %3482 = vadd.xlane.f32.xlu0 %v3462
        %v3483 = vpop.xlane.xlu0 %3482
        %3484 = vadd.xlane.f32.xlu0 %v3463
        %v3485 = vpop.xlane.xlu0 %3484
        %3486 = vadd.xlane.f32.xlu0 %v3464
        %v3487 = vpop.xlane.xlu0 %3486
        %3488 = vadd.xlane.f32.xlu0 %v3465
        %v3489 = vpop.xlane.xlu0 %3488
        %3490 = vadd.xlane.f32.xlu0 %v3466
        %v3491 = vpop.xlane.xlu0 %3490
        %3492 = vadd.xlane.f32.xlu0 %v3467
        %v3493 = vpop.xlane.xlu0 %3492
        %3494 = vadd.xlane.f32.xlu0 %v3468
        %v3495 = vpop.xlane.xlu0 %3494
        %3496 = vadd.xlane.f32.xlu0 %v3469
        %v3497 = vpop.xlane.xlu0 %3496
        %3498 = vadd.xlane.f32.xlu0 %v3470
        %v3499 = vpop.xlane.xlu0 %3498
        %3500 = vadd.xlane.f32.xlu0 %v3471
        %v3501 = vpop.xlane.xlu0 %3500
        %3502 = vadd.xlane.f32.xlu0 %v3472
        %v3503 = vpop.xlane.xlu0 %3502
        %3504 = vadd.xlane.f32.xlu0 %v3473
        %v3505 = vpop.xlane.xlu0 %3504
        %v3506 = vmul.f32 %v3475, %v593
        %v3507 = vmul.f32 %v3477, %v593
        %v3508 = vmul.f32 %v3479, %v593
        %v3509 = vmul.f32 %v3481, %v593
        %v3510 = vmul.f32 %v3483, %v593
        %v3511 = vmul.f32 %v3485, %v593
        %v3512 = vmul.f32 %v3487, %v593
        %v3513 = vmul.f32 %v3489, %v593
        %v3514 = vmul.f32 %v3491, %v593
        %v3515 = vmul.f32 %v3493, %v593
        %v3516 = vmul.f32 %v3495, %v593
        %v3517 = vmul.f32 %v3497, %v593
        %v3518 = vmul.f32 %v3499, %v593
        %v3519 = vmul.f32 %v3501, %v593
        %v3520 = vmul.f32 %v3503, %v593
        %v3521 = vmul.f32 %v3505, %v593
        %v3522 = vadd.f32 %v3506, 1e-05
        %v3523 = vadd.f32 %v3507, 1e-05
        %v3524 = vadd.f32 %v3508, 1e-05
        %v3525 = vadd.f32 %v3509, 1e-05
        %v3526 = vadd.f32 %v3510, 1e-05
        %v3527 = vadd.f32 %v3511, 1e-05
        %v3528 = vadd.f32 %v3512, 1e-05
        %v3529 = vadd.f32 %v3513, 1e-05
        %v3530 = vadd.f32 %v3514, 1e-05
        %v3531 = vadd.f32 %v3515, 1e-05
        %v3532 = vadd.f32 %v3516, 1e-05
        %v3533 = vadd.f32 %v3517, 1e-05
        %v3534 = vadd.f32 %v3518, 1e-05
        %v3535 = vadd.f32 %v3519, 1e-05
        %v3536 = vadd.f32 %v3520, 1e-05
        %v3537 = vadd.f32 %v3521, 1e-05
        %v3538 = vrsqrt.pop %v3522
        %v3539 = vrsqrt.pop %v3523
        %v3540 = vrsqrt.pop %v3524
        %v3541 = vrsqrt.pop %v3525
        %v3542 = vrsqrt.pop %v3526
        %v3543 = vrsqrt.pop %v3527
        %v3544 = vrsqrt.pop %v3528
        %v3545 = vrsqrt.pop %v3529
        %v3546 = vrsqrt.pop %v3530
        %v3547 = vrsqrt.pop %v3531
        %v3548 = vrsqrt.pop %v3532
        %v3549 = vrsqrt.pop %v3533
        %v3550 = vrsqrt.pop %v3534
        %v3551 = vrsqrt.pop %v3535
        %v3552 = vrsqrt.pop %v3536
        %v3553 = vrsqrt.pop %v3537
        %v3554 = vmul.f32 %v3442, %v3538
        %v3555 = vmul.f32 %v3443, %v3539
        %v3556 = vmul.f32 %v3444, %v3540
        %v3557 = vmul.f32 %v3445, %v3541
        %v3558 = vmul.f32 %v3446, %v3542
        %v3559 = vmul.f32 %v3447, %v3543
        %v3560 = vmul.f32 %v3448, %v3544
        %v3561 = vmul.f32 %v3449, %v3545
        %v3562 = vmul.f32 %v3450, %v3546
        %v3563 = vmul.f32 %v3451, %v3547
        %v3564 = vmul.f32 %v3452, %v3548
        %v3565 = vmul.f32 %v3453, %v3549
        %v3566 = vmul.f32 %v3454, %v3550
        %v3567 = vmul.f32 %v3455, %v3551
        %v3568 = vmul.f32 %v3456, %v3552
        %v3569 = vmul.f32 %v3457, %v3553
        %v3571 = vlaneseq
        %v3572 = vshrl.u32 %v3571, 7
        %v3573 = vsub.s32 0, %v3572
        %v3574 = vrot.slane %v3392, %v3573
        %v3576 = vmul.f32 %v3554, %v3574
        %v3577 = vmul.f32 %v3555, %v3574
        %v3578 = vmul.f32 %v3556, %v3574
        %v3579 = vmul.f32 %v3557, %v3574
        %v3580 = vmul.f32 %v3558, %v3574
        %v3581 = vmul.f32 %v3559, %v3574
        %v3582 = vmul.f32 %v3560, %v3574
        %v3583 = vmul.f32 %v3561, %v3574
        %v3584 = vmul.f32 %v3562, %v3574
        %v3585 = vmul.f32 %v3563, %v3574
        %v3586 = vmul.f32 %v3564, %v3574
        %v3587 = vmul.f32 %v3565, %v3574
        %v3588 = vmul.f32 %v3566, %v3574
        %v3589 = vmul.f32 %v3567, %v3574
        %v3590 = vmul.f32 %v3568, %v3574
        %v3591 = vmul.f32 %v3569, %v3574
        %v3593 = vlaneseq
        %v3594 = vshrl.u32 %v3593, 7
        %v3595 = vsub.s32 0, %v3594
        %v3596 = vrot.slane %v3393, %v3595
        %v3598 = vadd.f32 %v3576, %v3596
        %v3599 = vadd.f32 %v3577, %v3596
        %v3600 = vadd.f32 %v3578, %v3596
        %v3601 = vadd.f32 %v3579, %v3596
        %v3602 = vadd.f32 %v3580, %v3596
        %v3603 = vadd.f32 %v3581, %v3596
        %v3604 = vadd.f32 %v3582, %v3596
        %v3605 = vadd.f32 %v3583, %v3596
        %v3606 = vadd.f32 %v3584, %v3596
        %v3607 = vadd.f32 %v3585, %v3596
        %v3608 = vadd.f32 %v3586, %v3596
        %v3609 = vadd.f32 %v3587, %v3596
        %v3610 = vadd.f32 %v3588, %v3596
        %v3611 = vadd.f32 %v3589, %v3596
        %v3612 = vadd.f32 %v3590, %v3596
        %v3613 = vadd.f32 %v3591, %v3596
        %v3614 = vpack.c.bf16 %v3599, %v3598
        %v3615 = vpack.c.bf16 %v3601, %v3600
        %v3616 = vpack.c.bf16 %v3603, %v3602
        %v3617 = vpack.c.bf16 %v3605, %v3604
        %v3618 = vpack.c.bf16 %v3607, %v3606
        %v3619 = vpack.c.bf16 %v3609, %v3608
        %v3620 = vpack.c.bf16 %v3611, %v3610
        %v3621 = vpack.c.bf16 %v3613, %v3612
        %v3622 = vld [vmem:[#allocation12] sm:$0xff]
        %v3623 = vld [vmem:[#allocation12 + $0x8] sm:$0xff]
        %v3624 = vld [vmem:[#allocation12 + $0x10] sm:$0xff]
        %v3625 = vld [vmem:[#allocation12 + $0x18] sm:$0xff]
        %v3626 = vld [vmem:[#allocation12 + $0x20] sm:$0xff]
        %v3627 = vld [vmem:[#allocation12 + $0x28] sm:$0xff]
        %v3628 = vld [vmem:[#allocation12 + $0x30] sm:$0xff]
        %v3629 = vld [vmem:[#allocation12 + $0x38] sm:$0xff]
        %v3630 = vld [vmem:[#allocation12 + $0x40] sm:$0xff]
        %v3631 = vld [vmem:[#allocation12 + $0x48] sm:$0xff]
        %v3632 = vld [vmem:[#allocation12 + $0x50] sm:$0xff]
        %v3633 = vld [vmem:[#allocation12 + $0x58] sm:$0xff]
        %v3634 = vld [vmem:[#allocation12 + $0x60] sm:$0xff]
        %v3635 = vld [vmem:[#allocation12 + $0x68] sm:$0xff]
        %v3636 = vld [vmem:[#allocation12 + $0x70] sm:$0xff]
        %v3637 = vld [vmem:[#allocation12 + $0x78] sm:$0xff]
        %v3638 = vld [vmem:[#allocation12 + $0x80] sm:$0xff]
        %v3639 = vld [vmem:[#allocation12 + $0x88] sm:$0xff]
        %v3640 = vld [vmem:[#allocation12 + $0x90] sm:$0xff]
        %v3641 = vld [vmem:[#allocation12 + $0x98] sm:$0xff]
        %v3642 = vld [vmem:[#allocation12 + $0xa0] sm:$0xff]
        %v3643 = vld [vmem:[#allocation12 + $0xa8] sm:$0xff]
        %v3644 = vld [vmem:[#allocation12 + $0xb0] sm:$0xff]
        %v3645 = vld [vmem:[#allocation12 + $0xb8] sm:$0xff]
        %v3646 = vld [vmem:[#allocation12 + $0xc0] sm:$0xff]
        %v3647 = vld [vmem:[#allocation12 + $0xc8] sm:$0xff]
        %v3648 = vld [vmem:[#allocation12 + $0xd0] sm:$0xff]
        %v3649 = vld [vmem:[#allocation12 + $0xd8] sm:$0xff]
        %v3650 = vld [vmem:[#allocation12 + $0xe0] sm:$0xff]
        %v3651 = vld [vmem:[#allocation12 + $0xe8] sm:$0xff]
        %v3652 = vld [vmem:[#allocation12 + $0xf0] sm:$0xff]
        %v3653 = vld [vmem:[#allocation12 + $0xf8] sm:$0xff]
        %v3654 = vld [vmem:[%s10] sm:$0xf]
        %v3656 = vlaneseq
        %v3657 = vshrl.u32 %v3656, 7
        %v3658 = vsub.s32 0, %v3657
        %v3659 = vrot.slane %v3654, %v3658
        %v3660 = vlaneseq
        %v3661 = vshrl.u32 %v3660, 7
        %v3662 = vsub.s32 1, %v3661
        %v3663 = vrot.slane %v3654, %v3662
        %v3664 = vlaneseq
        %v3665 = vshrl.u32 %v3664, 7
        %v3666 = vsub.s32 2, %v3665
        %v3667 = vrot.slane %v3654, %v3666
        %v3668 = vlaneseq
        %v3669 = vshrl.u32 %v3668, 7
        %v3670 = vsub.s32 3, %v3669
        %v3671 = vrot.slane %v3654, %v3670
        %v3708 = vunpack.c.l.b16 %v3622
        %v3709 = vunpack.c.h.b16 %v3622
        %v3710 = vunpack.c.l.b16 %v3623
        %v3711 = vunpack.c.h.b16 %v3623
        %v3712 = vunpack.c.l.b16 %v3624
        %v3713 = vunpack.c.h.b16 %v3624
        %v3714 = vunpack.c.l.b16 %v3625
        %v3715 = vunpack.c.h.b16 %v3625
        %v3716 = vunpack.c.l.b16 %v3626
        %v3717 = vunpack.c.h.b16 %v3626
        %v3718 = vunpack.c.l.b16 %v3627
        %v3719 = vunpack.c.h.b16 %v3627
        %v3720 = vunpack.c.l.b16 %v3628
        %v3721 = vunpack.c.h.b16 %v3628
        %v3722 = vunpack.c.l.b16 %v3629
        %v3723 = vunpack.c.h.b16 %v3629
        %v3724 = vunpack.c.l.b16 %v3630
        %v3725 = vunpack.c.h.b16 %v3630
        %v3726 = vunpack.c.l.b16 %v3631
        %v3727 = vunpack.c.h.b16 %v3631
        %v3728 = vunpack.c.l.b16 %v3632
        %v3729 = vunpack.c.h.b16 %v3632
        %v3730 = vunpack.c.l.b16 %v3633
        %v3731 = vunpack.c.h.b16 %v3633
        %v3732 = vunpack.c.l.b16 %v3634
        %v3733 = vunpack.c.h.b16 %v3634
        %v3734 = vunpack.c.l.b16 %v3635
        %v3735 = vunpack.c.h.b16 %v3635
        %v3736 = vunpack.c.l.b16 %v3636
        %v3737 = vunpack.c.h.b16 %v3636
        %v3738 = vunpack.c.l.b16 %v3637
        %v3739 = vunpack.c.h.b16 %v3637
        %v3740 = vunpack.c.l.b16 %v3638
        %v3741 = vunpack.c.h.b16 %v3638
        %v3742 = vunpack.c.l.b16 %v3639
        %v3743 = vunpack.c.h.b16 %v3639
        %v3744 = vunpack.c.l.b16 %v3640
        %v3745 = vunpack.c.h.b16 %v3640
        %v3746 = vunpack.c.l.b16 %v3641
        %v3747 = vunpack.c.h.b16 %v3641
        %v3748 = vunpack.c.l.b16 %v3642
        %v3749 = vunpack.c.h.b16 %v3642
        %v3750 = vunpack.c.l.b16 %v3643
        %v3751 = vunpack.c.h.b16 %v3643
        %v3752 = vunpack.c.l.b16 %v3644
        %v3753 = vunpack.c.h.b16 %v3644
        %v3754 = vunpack.c.l.b16 %v3645
        %v3755 = vunpack.c.h.b16 %v3645
        %v3756 = vunpack.c.l.b16 %v3646
        %v3757 = vunpack.c.h.b16 %v3646
        %v3758 = vunpack.c.l.b16 %v3647
        %v3759 = vunpack.c.h.b16 %v3647
        %v3760 = vunpack.c.l.b16 %v3648
        %v3761 = vunpack.c.h.b16 %v3648
        %v3762 = vunpack.c.l.b16 %v3649
        %v3763 = vunpack.c.h.b16 %v3649
        %v3764 = vunpack.c.l.b16 %v3650
        %v3765 = vunpack.c.h.b16 %v3650
        %v3766 = vunpack.c.l.b16 %v3651
        %v3767 = vunpack.c.h.b16 %v3651
        %v3768 = vunpack.c.l.b16 %v3652
        %v3769 = vunpack.c.h.b16 %v3652
        %v3770 = vunpack.c.l.b16 %v3653
        %v3771 = vunpack.c.h.b16 %v3653
        %v3772 = vpack.c.b16 %v3712, %v3708
        %v3773 = vpack.c.b16 %v3713, %v3709
        %v3774 = vpack.c.b16 %v3714, %v3710
        %v3775 = vpack.c.b16 %v3715, %v3711
        %v3776 = vpack.c.b16 %v3720, %v3716
        %v3777 = vpack.c.b16 %v3721, %v3717
        %v3778 = vpack.c.b16 %v3722, %v3718
        %v3779 = vpack.c.b16 %v3723, %v3719
        %v3780 = vpack.c.b16 %v3728, %v3724
        %v3781 = vpack.c.b16 %v3729, %v3725
        %v3782 = vpack.c.b16 %v3730, %v3726
        %v3783 = vpack.c.b16 %v3731, %v3727
        %v3784 = vpack.c.b16 %v3736, %v3732
        %v3785 = vpack.c.b16 %v3737, %v3733
        %v3786 = vpack.c.b16 %v3738, %v3734
        %v3787 = vpack.c.b16 %v3739, %v3735
        %v3788 = vpack.c.b16 %v3744, %v3740
        %v3789 = vpack.c.b16 %v3745, %v3741
        %v3790 = vpack.c.b16 %v3746, %v3742
        %v3791 = vpack.c.b16 %v3747, %v3743
        %v3792 = vpack.c.b16 %v3752, %v3748
        %v3793 = vpack.c.b16 %v3753, %v3749
        %v3794 = vpack.c.b16 %v3754, %v3750
        %v3795 = vpack.c.b16 %v3755, %v3751
        %v3796 = vpack.c.b16 %v3760, %v3756
        %v3797 = vpack.c.b16 %v3761, %v3757
        %v3798 = vpack.c.b16 %v3762, %v3758
        %v3799 = vpack.c.b16 %v3763, %v3759
        %v3800 = vpack.c.b16 %v3768, %v3764
        %v3801 = vpack.c.b16 %v3769, %v3765
        %v3802 = vpack.c.b16 %v3770, %v3766
        %v3803 = vpack.c.b16 %v3771, %v3767
        %3836 = vmatprep.subr.bf16.mxu0 %v3773
        %3837 = vmatpush1.bf16.msra.mxu0 %v3772
        %3838 = vmatprep.subr.bf16.mxu0 %v3777
        %3839 = vmatpush1.bf16.msra.mxu0 %v3776
        %3840 = vmatprep.subr.bf16.mxu0 %v3781
        %3841 = vmatpush1.bf16.msra.mxu0 %v3780
        %3842 = vmatprep.subr.bf16.mxu0 %v3785
        %3843 = vmatpush1.bf16.msra.mxu0 %v3784
        %3844 = vmatprep.subr.bf16.mxu0 %v3789
        %3845 = vmatpush1.bf16.msra.mxu0 %v3788
        %3846 = vmatprep.subr.bf16.mxu0 %v3793
        %3847 = vmatpush1.bf16.msra.mxu0 %v3792
        %3848 = vmatprep.subr.bf16.mxu0 %v3797
        %3849 = vmatpush1.bf16.msra.mxu0 %v3796
        %3850 = vmatprep.subr.bf16.mxu0 %v3801
        %3851 = vmatpush1.bf16.msra.mxu0 %v3800
        %3852 = vmatprep.subr.bf16.mxu0 0
        %3853 = vmatpush1.bf16.msra.mxu0 0
        %3854 = vmatprep.subr.bf16.mxu0 0
        %3855 = vmatpush1.bf16.msra.mxu0 0
        %3856 = vmatprep.subr.bf16.mxu0 0
        %3857 = vmatpush1.bf16.msra.mxu0 0
        %3858 = vmatprep.subr.bf16.mxu0 0
        %3859 = vmatpush1.bf16.msra.mxu0 0
        %3860 = vmatprep.subr.bf16.mxu0 0
        %3861 = vmatpush1.bf16.msra.mxu0 0
        %3862 = vmatprep.subr.bf16.mxu0 0
        %3863 = vmatpush1.bf16.msra.mxu0 0
        %3864 = vmatprep.subr.bf16.mxu0 0
        %3865 = vmatpush1.bf16.msra.mxu0 0
        %3866 = vmatprep.subr.bf16.mxu0 0
        %3867 = vmatpush1.bf16.msra.mxu0 0
        %3868 = vmatprep.mubr.bf16.mxu0 0
        %3869 = vmatmul.mubr.bf16.gmra.mrb[0].mxu0 %v3614
        %v3870 = vpop.f32.mrb[0].mxu0
        %v3871 = vadd.f32 %v3659, %v3870
        %v3872 = vpop.f32.mrb[0].mxu0
        %v3873 = vadd.f32 %v3663, %v3872
        %v3874 = vpop.f32.mrb[0].mxu0
        %v3875 = vadd.f32 %v3659, %v3874
        %v3876 = vpop.f32.mrb[0].mxu0
        %v3877 = vadd.f32 %v3663, %v3876
        %3878 = vmatprep.mubr.bf16.mxu0 0
        %3879 = vmatmul.mubr.bf16.gmra.mrb[0].mxu0 %v3615
        %v3880 = vpop.f32.mrb[0].mxu0
        %v3881 = vadd.f32 %v3659, %v3880
        %v3882 = vpop.f32.mrb[0].mxu0
        %v3883 = vadd.f32 %v3663, %v3882
        %v3884 = vpop.f32.mrb[0].mxu0
        %v3885 = vadd.f32 %v3659, %v3884
        %v3886 = vpop.f32.mrb[0].mxu0
        %v3887 = vadd.f32 %v3663, %v3886
        %3888 = vmatprep.mubr.bf16.mxu0 0
        %3889 = vmatmul.mubr.bf16.gmra.mrb[0].mxu0 %v3616
        %v3890 = vpop.f32.mrb[0].mxu0
        %v3891 = vadd.f32 %v3659, %v3890
        %v3892 = vpop.f32.mrb[0].mxu0
        %v3893 = vadd.f32 %v3663, %v3892
        %v3894 = vpop.f32.mrb[0].mxu0
        %v3895 = vadd.f32 %v3659, %v3894
        %v3896 = vpop.f32.mrb[0].mxu0
        %v3897 = vadd.f32 %v3663, %v3896
        %3898 = vmatprep.mubr.bf16.mxu0 0
        %3899 = vmatmul.mubr.bf16.gmra.mrb[0].mxu0 %v3617
        %v3900 = vpop.f32.mrb[0].mxu0
        %v3901 = vadd.f32 %v3659, %v3900
        %v3902 = vpop.f32.mrb[0].mxu0
        %v3903 = vadd.f32 %v3663, %v3902
        %v3904 = vpop.f32.mrb[0].mxu0
        %v3905 = vadd.f32 %v3659, %v3904
        %v3906 = vpop.f32.mrb[0].mxu0
        %v3907 = vadd.f32 %v3663, %v3906
        %3908 = vmatprep.mubr.bf16.mxu0 0
        %3909 = vmatmul.mubr.bf16.gmra.mrb[0].mxu0 %v3618
        %v3910 = vpop.f32.mrb[0].mxu0
        %v3911 = vadd.f32 %v3659, %v3910
        %v3912 = vpop.f32.mrb[0].mxu0
        %v3913 = vadd.f32 %v3663, %v3912
        %v3914 = vpop.f32.mrb[0].mxu0
        %v3915 = vadd.f32 %v3659, %v3914
        %v3916 = vpop.f32.mrb[0].mxu0
        %v3917 = vadd.f32 %v3663, %v3916
        %3918 = vmatprep.mubr.bf16.mxu0 0
        %3919 = vmatmul.mubr.bf16.gmra.mrb[0].mxu0 %v3619
        %v3920 = vpop.f32.mrb[0].mxu0
        %v3921 = vadd.f32 %v3659, %v3920
        %v3922 = vpop.f32.mrb[0].mxu0
        %v3923 = vadd.f32 %v3663, %v3922
        %v3924 = vpop.f32.mrb[0].mxu0
        %v3925 = vadd.f32 %v3659, %v3924
        %v3926 = vpop.f32.mrb[0].mxu0
        %v3927 = vadd.f32 %v3663, %v3926
        %3928 = vmatprep.mubr.bf16.mxu0 0
        %3929 = vmatmul.mubr.bf16.gmra.mrb[0].mxu0 %v3620
        %v3930 = vpop.f32.mrb[0].mxu0
        %v3931 = vadd.f32 %v3659, %v3930
        %v3932 = vpop.f32.mrb[0].mxu0
        %v3933 = vadd.f32 %v3663, %v3932
        %v3934 = vpop.f32.mrb[0].mxu0
        %v3935 = vadd.f32 %v3659, %v3934
        %v3936 = vpop.f32.mrb[0].mxu0
        %v3937 = vadd.f32 %v3663, %v3936
        %3938 = vmatprep.mubr.bf16.mxu0 0
        %3939 = vmatmul.mubr.bf16.gmra.mrb[0].mxu0 %v3621
        %v3940 = vpop.f32.mrb[0].mxu0
        %v3941 = vadd.f32 %v3659, %v3940
        %v3942 = vpop.f32.mrb[0].mxu0
        %v3943 = vadd.f32 %v3663, %v3942
        %v3944 = vpop.f32.mrb[0].mxu0
        %v3945 = vadd.f32 %v3659, %v3944
        %v3946 = vpop.f32.mrb[0].mxu0
        %v3947 = vadd.f32 %v3663, %v3946
        %3948 = vdwg.mxu0
        %3949 = vmatprep.subr.bf16.mxu0 %v3775
        %3950 = vmatpush1.bf16.msra.mxu0 %v3774
        %3951 = vmatprep.subr.bf16.mxu0 %v3779
        %3952 = vmatpush1.bf16.msra.mxu0 %v3778
        %3953 = vmatprep.subr.bf16.mxu0 %v3783
        %3954 = vmatpush1.bf16.msra.mxu0 %v3782
        %3955 = vmatprep.subr.bf16.mxu0 %v3787
        %3956 = vmatpush1.bf16.msra.mxu0 %v3786
        %3957 = vmatprep.subr.bf16.mxu0 %v3791
        %3958 = vmatpush1.bf16.msra.mxu0 %v3790
        %3959 = vmatprep.subr.bf16.mxu0 %v3795
        %3960 = vmatpush1.bf16.msra.mxu0 %v3794
        %3961 = vmatprep.subr.bf16.mxu0 %v3799
        %3962 = vmatpush1.bf16.msra.mxu0 %v3798
        %3963 = vmatprep.subr.bf16.mxu0 %v3803
        %3964 = vmatpush1.bf16.msra.mxu0 %v3802
        %3965 = vmatprep.subr.bf16.mxu0 0
        %3966 = vmatpush1.bf16.msra.mxu0 0
        %3967 = vmatprep.subr.bf16.mxu0 0
        %3968 = vmatpush1.bf16.msra.mxu0 0
        %3969 = vmatprep.subr.bf16.mxu0 0
        %3970 = vmatpush1.bf16.msra.mxu0 0
        %3971 = vmatprep.subr.bf16.mxu0 0
        %3972 = vmatpush1.bf16.msra.mxu0 0
        %3973 = vmatprep.subr.bf16.mxu0 0
        %3974 = vmatpush1.bf16.msra.mxu0 0
        %3975 = vmatprep.subr.bf16.mxu0 0
        %3976 = vmatpush1.bf16.msra.mxu0 0
        %3977 = vmatprep.subr.bf16.mxu0 0
        %3978 = vmatpush1.bf16.msra.mxu0 0
        %3979 = vmatprep.subr.bf16.mxu0 0
        %3980 = vmatpush1.bf16.msra.mxu0 0
        %3981 = vmatprep.mubr.bf16.mxu0 0
        %3982 = vmatmul.mubr.bf16.gmra.mrb[0].mxu0 %v3614
        %v3983 = vpop.f32.mrb[0].mxu0
        %v3984 = vadd.f32 %v3667, %v3983
        %v3985 = vpop.f32.mrb[0].mxu0
        %v3986 = vadd.f32 %v3671, %v3985
        %v3987 = vpop.f32.mrb[0].mxu0
        %v3988 = vadd.f32 %v3667, %v3987
        %v3989 = vpop.f32.mrb[0].mxu0
        %v3990 = vadd.f32 %v3671, %v3989
        %3991 = vmatprep.mubr.bf16.mxu0 0
        %3992 = vmatmul.mubr.bf16.gmra.mrb[0].mxu0 %v3615
        %v3993 = vpop.f32.mrb[0].mxu0
        %v3994 = vadd.f32 %v3667, %v3993
        %v3995 = vpop.f32.mrb[0].mxu0
        %v3996 = vadd.f32 %v3671, %v3995
        %v3997 = vpop.f32.mrb[0].mxu0
        %v3998 = vadd.f32 %v3667, %v3997
        %v3999 = vpop.f32.mrb[0].mxu0
        %v4000 = vadd.f32 %v3671, %v3999
        %4001 = vmatprep.mubr.bf16.mxu0 0
        %4002 = vmatmul.mubr.bf16.gmra.mrb[0].mxu0 %v3616
        %v4003 = vpop.f32.mrb[0].mxu0
        %v4004 = vadd.f32 %v3667, %v4003
        %v4005 = vpop.f32.mrb[0].mxu0
        %v4006 = vadd.f32 %v3671, %v4005
        %v4007 = vpop.f32.mrb[0].mxu0
        %v4008 = vadd.f32 %v3667, %v4007
        %v4009 = vpop.f32.mrb[0].mxu0
        %v4010 = vadd.f32 %v3671, %v4009
        %4011 = vmatprep.mubr.bf16.mxu0 0
        %4012 = vmatmul.mubr.bf16.gmra.mrb[0].mxu0 %v3617
        %v4013 = vpop.f32.mrb[0].mxu0
        %v4014 = vadd.f32 %v3667, %v4013
        %v4015 = vpop.f32.mrb[0].mxu0
        %v4016 = vadd.f32 %v3671, %v4015
        %v4017 = vpop.f32.mrb[0].mxu0
        %v4018 = vadd.f32 %v3667, %v4017
        %v4019 = vpop.f32.mrb[0].mxu0
        %v4020 = vadd.f32 %v3671, %v4019
        %4021 = vmatprep.mubr.bf16.mxu0 0
        %4022 = vmatmul.mubr.bf16.gmra.mrb[0].mxu0 %v3618
        %v4023 = vpop.f32.mrb[0].mxu0
        %v4024 = vadd.f32 %v3667, %v4023
        %v4025 = vpop.f32.mrb[0].mxu0
        %v4026 = vadd.f32 %v3671, %v4025
        %v4027 = vpop.f32.mrb[0].mxu0
        %v4028 = vadd.f32 %v3667, %v4027
        %v4029 = vpop.f32.mrb[0].mxu0
        %v4030 = vadd.f32 %v3671, %v4029
        %4031 = vmatprep.mubr.bf16.mxu0 0
        %4032 = vmatmul.mubr.bf16.gmra.mrb[0].mxu0 %v3619
        %v4033 = vpop.f32.mrb[0].mxu0
        %v4034 = vadd.f32 %v3667, %v4033
        %v4035 = vpop.f32.mrb[0].mxu0
        %v4036 = vadd.f32 %v3671, %v4035
        %v4037 = vpop.f32.mrb[0].mxu0
        %v4038 = vadd.f32 %v3667, %v4037
        %v4039 = vpop.f32.mrb[0].mxu0
        %v4040 = vadd.f32 %v3671, %v4039
        %4041 = vmatprep.mubr.bf16.mxu0 0
        %4042 = vmatmul.mubr.bf16.gmra.mrb[0].mxu0 %v3620
        %v4043 = vpop.f32.mrb[0].mxu0
        %v4044 = vadd.f32 %v3667, %v4043
        %v4045 = vpop.f32.mrb[0].mxu0
        %v4046 = vadd.f32 %v3671, %v4045
        %v4047 = vpop.f32.mrb[0].mxu0
        %v4048 = vadd.f32 %v3667, %v4047
        %v4049 = vpop.f32.mrb[0].mxu0
        %v4050 = vadd.f32 %v3671, %v4049
        %4051 = vmatprep.mubr.bf16.mxu0 0
        %4052 = vmatmul.mubr.bf16.gmra.mrb[0].mxu0 %v3621
        %v4053 = vpop.f32.mrb[0].mxu0
        %v4054 = vadd.f32 %v3667, %v4053
        %v4055 = vpop.f32.mrb[0].mxu0
        %v4056 = vadd.f32 %v3671, %v4055
        %v4057 = vpop.f32.mrb[0].mxu0
        %v4058 = vadd.f32 %v3667, %v4057
        %v4059 = vpop.f32.mrb[0].mxu0
        %v4060 = vadd.f32 %v3671, %v4059
        %4061 = vdwg.mxu0
        %v4062 = vmul.f32 %v3871, 1.702
        %v4063 = vmul.f32 %v3873, 1.702
        %v4064 = vmul.f32 %v3984, 1.702
        %v4065 = vmul.f32 %v3986, 1.702
        %v4066 = vmul.f32 %v3875, 1.702
        %v4067 = vmul.f32 %v3877, 1.702
        %v4068 = vmul.f32 %v3988, 1.702
        %v4069 = vmul.f32 %v3990, 1.702
        %v4070 = vmul.f32 %v3881, 1.702
        %v4071 = vmul.f32 %v3883, 1.702
        %v4072 = vmul.f32 %v3994, 1.702
        %v4073 = vmul.f32 %v3996, 1.702
        %v4074 = vmul.f32 %v3885, 1.702
        %v4075 = vmul.f32 %v3887, 1.702
        %v4076 = vmul.f32 %v3998, 1.702
        %v4077 = vmul.f32 %v4000, 1.702
        %v4078 = vmul.f32 %v3891, 1.702
        %v4079 = vmul.f32 %v3893, 1.702
        %v4080 = vmul.f32 %v4004, 1.702
        %v4081 = vmul.f32 %v4006, 1.702
        %v4082 = vmul.f32 %v3895, 1.702
        %v4083 = vmul.f32 %v3897, 1.702
        %v4084 = vmul.f32 %v4008, 1.702
        %v4085 = vmul.f32 %v4010, 1.702
        %v4086 = vmul.f32 %v3901, 1.702
        %v4087 = vmul.f32 %v3903, 1.702
        %v4088 = vmul.f32 %v4014, 1.702
        %v4089 = vmul.f32 %v4016, 1.702
        %v4090 = vmul.f32 %v3905, 1.702
        %v4091 = vmul.f32 %v3907, 1.702
        %v4092 = vmul.f32 %v4018, 1.702
        %v4093 = vmul.f32 %v4020, 1.702
        %v4094 = vmul.f32 %v3911, 1.702
        %v4095 = vmul.f32 %v3913, 1.702
        %v4096 = vmul.f32 %v4024, 1.702
        %v4097 = vmul.f32 %v4026, 1.702
        %v4098 = vmul.f32 %v3915, 1.702
        %v4099 = vmul.f32 %v3917, 1.702
        %v4100 = vmul.f32 %v4028, 1.702
        %v4101 = vmul.f32 %v4030, 1.702
        %v4102 = vmul.f32 %v3921, 1.702
        %v4103 = vmul.f32 %v3923, 1.702
        %v4104 = vmul.f32 %v4034, 1.702
        %v4105 = vmul.f32 %v4036, 1.702
        %v4106 = vmul.f32 %v3925, 1.702
        %v4107 = vmul.f32 %v3927, 1.702
        %v4108 = vmul.f32 %v4038, 1.702
        %v4109 = vmul.f32 %v4040, 1.702
        %v4110 = vmul.f32 %v3931, 1.702
        %v4111 = vmul.f32 %v3933, 1.702
        %v4112 = vmul.f32 %v4044, 1.702
        %v4113 = vmul.f32 %v4046, 1.702
        %v4114 = vmul.f32 %v3935, 1.702
        %v4115 = vmul.f32 %v3937, 1.702
        %v4116 = vmul.f32 %v4048, 1.702
        %v4117 = vmul.f32 %v4050, 1.702
        %v4118 = vmul.f32 %v3941, 1.702
        %v4119 = vmul.f32 %v3943, 1.702
        %v4120 = vmul.f32 %v4054, 1.702
        %v4121 = vmul.f32 %v4056, 1.702
        %v4122 = vmul.f32 %v3945, 1.702
        %v4123 = vmul.f32 %v3947, 1.702
        %v4124 = vmul.f32 %v4058, 1.702
        %v4125 = vmul.f32 %v4060, 1.702
        %v4126 = vxor.u32 %v4062, 2147483648
        %v4127 = vxor.u32 %v4063, 2147483648
        %v4128 = vxor.u32 %v4064, 2147483648
        %v4129 = vxor.u32 %v4065, 2147483648
        %v4130 = vxor.u32 %v4066, 2147483648
        %v4131 = vxor.u32 %v4067, 2147483648
        %v4132 = vxor.u32 %v4068, 2147483648
        %v4133 = vxor.u32 %v4069, 2147483648
        %v4134 = vxor.u32 %v4070, 2147483648
        %v4135 = vxor.u32 %v4071, 2147483648
        %v4136 = vxor.u32 %v4072, 2147483648
        %v4137 = vxor.u32 %v4073, 2147483648
        %v4138 = vxor.u32 %v4074, 2147483648
        %v4139 = vxor.u32 %v4075, 2147483648
        %v4140 = vxor.u32 %v4076, 2147483648
        %v4141 = vxor.u32 %v4077, 2147483648
        %v4142 = vxor.u32 %v4078, 2147483648
        %v4143 = vxor.u32 %v4079, 2147483648
        %v4144 = vxor.u32 %v4080, 2147483648
        %v4145 = vxor.u32 %v4081, 2147483648
        %v4146 = vxor.u32 %v4082, 2147483648
        %v4147 = vxor.u32 %v4083, 2147483648
        %v4148 = vxor.u32 %v4084, 2147483648
        %v4149 = vxor.u32 %v4085, 2147483648
        %v4150 = vxor.u32 %v4086, 2147483648
        %v4151 = vxor.u32 %v4087, 2147483648
        %v4152 = vxor.u32 %v4088, 2147483648
        %v4153 = vxor.u32 %v4089, 2147483648
        %v4154 = vxor.u32 %v4090, 2147483648
        %v4155 = vxor.u32 %v4091, 2147483648
        %v4156 = vxor.u32 %v4092, 2147483648
        %v4157 = vxor.u32 %v4093, 2147483648
        %v4158 = vxor.u32 %v4094, 2147483648
        %v4159 = vxor.u32 %v4095, 2147483648
        %v4160 = vxor.u32 %v4096, 2147483648
        %v4161 = vxor.u32 %v4097, 2147483648
        %v4162 = vxor.u32 %v4098, 2147483648
        %v4163 = vxor.u32 %v4099, 2147483648
        %v4164 = vxor.u32 %v4100, 2147483648
        %v4165 = vxor.u32 %v4101, 2147483648
        %v4166 = vxor.u32 %v4102, 2147483648
        %v4167 = vxor.u32 %v4103, 2147483648
        %v4168 = vxor.u32 %v4104, 2147483648
        %v4169 = vxor.u32 %v4105, 2147483648
        %v4170 = vxor.u32 %v4106, 2147483648
        %v4171 = vxor.u32 %v4107, 2147483648
        %v4172 = vxor.u32 %v4108, 2147483648
        %v4173 = vxor.u32 %v4109, 2147483648
        %v4174 = vxor.u32 %v4110, 2147483648
        %v4175 = vxor.u32 %v4111, 2147483648
        %v4176 = vxor.u32 %v4112, 2147483648
        %v4177 = vxor.u32 %v4113, 2147483648
        %v4178 = vxor.u32 %v4114, 2147483648
        %v4179 = vxor.u32 %v4115, 2147483648
        %v4180 = vxor.u32 %v4116, 2147483648
        %v4181 = vxor.u32 %v4117, 2147483648
        %v4182 = vxor.u32 %v4118, 2147483648
        %v4183 = vxor.u32 %v4119, 2147483648
        %v4184 = vxor.u32 %v4120, 2147483648
        %v4185 = vxor.u32 %v4121, 2147483648
        %v4186 = vxor.u32 %v4122, 2147483648
        %v4187 = vxor.u32 %v4123, 2147483648
        %v4188 = vxor.u32 %v4124, 2147483648
        %v4189 = vxor.u32 %v4125, 2147483648
        %v4190 = vmul.f32 %v4126, 1.442695
        %v4191 = vpow.pop %v4190
        %v4192 = vmul.f32 %v4127, 1.442695
        %v4193 = vpow.pop %v4192
        %v4194 = vmul.f32 %v4128, 1.442695
        %v4195 = vpow.pop %v4194
        %v4196 = vmul.f32 %v4129, 1.442695
        %v4197 = vpow.pop %v4196
        %v4198 = vmul.f32 %v4130, 1.442695
        %v4199 = vpow.pop %v4198
        %v4200 = vmul.f32 %v4131, 1.442695
        %v4201 = vpow.pop %v4200
        %v4202 = vmul.f32 %v4132, 1.442695
        %v4203 = vpow.pop %v4202
        %v4204 = vmul.f32 %v4133, 1.442695
        %v4205 = vpow.pop %v4204
        %v4206 = vmul.f32 %v4134, 1.442695
        %v4207 = vpow.pop %v4206
        %v4208 = vmul.f32 %v4135, 1.442695
        %v4209 = vpow.pop %v4208
        %v4210 = vmul.f32 %v4136, 1.442695
        %v4211 = vpow.pop %v4210
        %v4212 = vmul.f32 %v4137, 1.442695
        %v4213 = vpow.pop %v4212
        %v4214 = vmul.f32 %v4138, 1.442695
        %v4215 = vpow.pop %v4214
        %v4216 = vmul.f32 %v4139, 1.442695
        %v4217 = vpow.pop %v4216
        %v4218 = vmul.f32 %v4140, 1.442695
        %v4219 = vpow.pop %v4218
        %v4220 = vmul.f32 %v4141, 1.442695
        %v4221 = vpow.pop %v4220
        %v4222 = vmul.f32 %v4142, 1.442695
        %v4223 = vpow.pop %v4222
        %v4224 = vmul.f32 %v4143, 1.442695
        %v4225 = vpow.pop %v4224
        %v4226 = vmul.f32 %v4144, 1.442695
        %v4227 = vpow.pop %v4226
        %v4228 = vmul.f32 %v4145, 1.442695
        %v4229 = vpow.pop %v4228
        %v4230 = vmul.f32 %v4146, 1.442695
        %v4231 = vpow.pop %v4230
        %v4232 = vmul.f32 %v4147, 1.442695
        %v4233 = vpow.pop %v4232
        %v4234 = vmul.f32 %v4148, 1.442695
        %v4235 = vpow.pop %v4234
        %v4236 = vmul.f32 %v4149, 1.442695
        %v4237 = vpow.pop %v4236
        %v4238 = vmul.f32 %v4150, 1.442695
        %v4239 = vpow.pop %v4238
        %v4240 = vmul.f32 %v4151, 1.442695
        %v4241 = vpow.pop %v4240
        %v4242 = vmul.f32 %v4152, 1.442695
        %v4243 = vpow.pop %v4242
        %v4244 = vmul.f32 %v4153, 1.442695
        %v4245 = vpow.pop %v4244
        %v4246 = vmul.f32 %v4154, 1.442695
        %v4247 = vpow.pop %v4246
        %v4248 = vmul.f32 %v4155, 1.442695
        %v4249 = vpow.pop %v4248
        %v4250 = vmul.f32 %v4156, 1.442695
        %v4251 = vpow.pop %v4250
        %v4252 = vmul.f32 %v4157, 1.442695
        %v4253 = vpow.pop %v4252
        %v4254 = vmul.f32 %v4158, 1.442695
        %v4255 = vpow.pop %v4254
        %v4256 = vmul.f32 %v4159, 1.442695
        %v4257 = vpow.pop %v4256
        %v4258 = vmul.f32 %v4160, 1.442695
        %v4259 = vpow.pop %v4258
        %v4260 = vmul.f32 %v4161, 1.442695
        %v4261 = vpow.pop %v4260
        %v4262 = vmul.f32 %v4162, 1.442695
        %v4263 = vpow.pop %v4262
        %v4264 = vmul.f32 %v4163, 1.442695
        %v4265 = vpow.pop %v4264
        %v4266 = vmul.f32 %v4164, 1.442695
        %v4267 = vpow.pop %v4266
        %v4268 = vmul.f32 %v4165, 1.442695
        %v4269 = vpow.pop %v4268
        %v4270 = vmul.f32 %v4166, 1.442695
        %v4271 = vpow.pop %v4270
        %v4272 = vmul.f32 %v4167, 1.442695
        %v4273 = vpow.pop %v4272
        %v4274 = vmul.f32 %v4168, 1.442695
        %v4275 = vpow.pop %v4274
        %v4276 = vmul.f32 %v4169, 1.442695
        %v4277 = vpow.pop %v4276
        %v4278 = vmul.f32 %v4170, 1.442695
        %v4279 = vpow.pop %v4278
        %v4280 = vmul.f32 %v4171, 1.442695
        %v4281 = vpow.pop %v4280
        %v4282 = vmul.f32 %v4172, 1.442695
        %v4283 = vpow.pop %v4282
        %v4284 = vmul.f32 %v4173, 1.442695
        %v4285 = vpow.pop %v4284
        %v4286 = vmul.f32 %v4174, 1.442695
        %v4287 = vpow.pop %v4286
        %v4288 = vmul.f32 %v4175, 1.442695
        %v4289 = vpow.pop %v4288
        %v4290 = vmul.f32 %v4176, 1.442695
        %v4291 = vpow.pop %v4290
        %v4292 = vmul.f32 %v4177, 1.442695
        %v4293 = vpow.pop %v4292
        %v4294 = vmul.f32 %v4178, 1.442695
        %v4295 = vpow.pop %v4294
        %v4296 = vmul.f32 %v4179, 1.442695
        %v4297 = vpow.pop %v4296
        %v4298 = vmul.f32 %v4180, 1.442695
        %v4299 = vpow.pop %v4298
        %v4300 = vmul.f32 %v4181, 1.442695
        %v4301 = vpow.pop %v4300
        %v4302 = vmul.f32 %v4182, 1.442695
        %v4303 = vpow.pop %v4302
        %v4304 = vmul.f32 %v4183, 1.442695
        %v4305 = vpow.pop %v4304
        %v4306 = vmul.f32 %v4184, 1.442695
        %v4307 = vpow.pop %v4306
        %v4308 = vmul.f32 %v4185, 1.442695
        %v4309 = vpow.pop %v4308
        %v4310 = vmul.f32 %v4186, 1.442695
        %v4311 = vpow.pop %v4310
        %v4312 = vmul.f32 %v4187, 1.442695
        %v4313 = vpow.pop %v4312
        %v4314 = vmul.f32 %v4188, 1.442695
        %v4315 = vpow.pop %v4314
        %v4316 = vmul.f32 %v4189, 1.442695
        %v4317 = vpow.pop %v4316
        %v4318 = vadd.f32 %v4191, 1.0
        %v4319 = vadd.f32 %v4193, 1.0
        %v4320 = vadd.f32 %v4195, 1.0
        %v4321 = vadd.f32 %v4197, 1.0
        %v4322 = vadd.f32 %v4199, 1.0
        %v4323 = vadd.f32 %v4201, 1.0
        %v4324 = vadd.f32 %v4203, 1.0
        %v4325 = vadd.f32 %v4205, 1.0
        %v4326 = vadd.f32 %v4207, 1.0
        %v4327 = vadd.f32 %v4209, 1.0
        %v4328 = vadd.f32 %v4211, 1.0
        %v4329 = vadd.f32 %v4213, 1.0
        %v4330 = vadd.f32 %v4215, 1.0
        %v4331 = vadd.f32 %v4217, 1.0
        %v4332 = vadd.f32 %v4219, 1.0
        %v4333 = vadd.f32 %v4221, 1.0
        %v4334 = vadd.f32 %v4223, 1.0
        %v4335 = vadd.f32 %v4225, 1.0
        %v4336 = vadd.f32 %v4227, 1.0
        %v4337 = vadd.f32 %v4229, 1.0
        %v4338 = vadd.f32 %v4231, 1.0
        %v4339 = vadd.f32 %v4233, 1.0
        %v4340 = vadd.f32 %v4235, 1.0
        %v4341 = vadd.f32 %v4237, 1.0
        %v4342 = vadd.f32 %v4239, 1.0
        %v4343 = vadd.f32 %v4241, 1.0
        %v4344 = vadd.f32 %v4243, 1.0
        %v4345 = vadd.f32 %v4245, 1.0
        %v4346 = vadd.f32 %v4247, 1.0
        %v4347 = vadd.f32 %v4249, 1.0
        %v4348 = vadd.f32 %v4251, 1.0
        %v4349 = vadd.f32 %v4253, 1.0
        %v4350 = vadd.f32 %v4255, 1.0
        %v4351 = vadd.f32 %v4257, 1.0
        %v4352 = vadd.f32 %v4259, 1.0
        %v4353 = vadd.f32 %v4261, 1.0
        %v4354 = vadd.f32 %v4263, 1.0
        %v4355 = vadd.f32 %v4265, 1.0
        %v4356 = vadd.f32 %v4267, 1.0
        %v4357 = vadd.f32 %v4269, 1.0
        %v4358 = vadd.f32 %v4271, 1.0
        %v4359 = vadd.f32 %v4273, 1.0
        %v4360 = vadd.f32 %v4275, 1.0
        %v4361 = vadd.f32 %v4277, 1.0
        %v4362 = vadd.f32 %v4279, 1.0
        %v4363 = vadd.f32 %v4281, 1.0
        %v4364 = vadd.f32 %v4283, 1.0
        %v4365 = vadd.f32 %v4285, 1.0
        %v4366 = vadd.f32 %v4287, 1.0
        %v4367 = vadd.f32 %v4289, 1.0
        %v4368 = vadd.f32 %v4291, 1.0
        %v4369 = vadd.f32 %v4293, 1.0
        %v4370 = vadd.f32 %v4295, 1.0
        %v4371 = vadd.f32 %v4297, 1.0
        %v4372 = vadd.f32 %v4299, 1.0
        %v4373 = vadd.f32 %v4301, 1.0
        %v4374 = vadd.f32 %v4303, 1.0
        %v4375 = vadd.f32 %v4305, 1.0
        %v4376 = vadd.f32 %v4307, 1.0
        %v4377 = vadd.f32 %v4309, 1.0
        %v4378 = vadd.f32 %v4311, 1.0
        %v4379 = vadd.f32 %v4313, 1.0
        %v4380 = vadd.f32 %v4315, 1.0
        %v4381 = vadd.f32 %v4317, 1.0
        %v4382 = vrcp.pop %v4318
        %v4383 = vmul.f32 1.0, %v4382
        %v4384 = vrcp.pop %v4319
        %v4385 = vmul.f32 1.0, %v4384
        %v4386 = vrcp.pop %v4320
        %v4387 = vmul.f32 1.0, %v4386
        %v4388 = vrcp.pop %v4321
        %v4389 = vmul.f32 1.0, %v4388
        %v4390 = vrcp.pop %v4322
        %v4391 = vmul.f32 1.0, %v4390
        %v4392 = vrcp.pop %v4323
        %v4393 = vmul.f32 1.0, %v4392
        %v4394 = vrcp.pop %v4324
        %v4395 = vmul.f32 1.0, %v4394
        %v4396 = vrcp.pop %v4325
        %v4397 = vmul.f32 1.0, %v4396
        %v4398 = vrcp.pop %v4326
        %v4399 = vmul.f32 1.0, %v4398
        %v4400 = vrcp.pop %v4327
        %v4401 = vmul.f32 1.0, %v4400
        %v4402 = vrcp.pop %v4328
        %v4403 = vmul.f32 1.0, %v4402
        %v4404 = vrcp.pop %v4329
        %v4405 = vmul.f32 1.0, %v4404
        %v4406 = vrcp.pop %v4330
        %v4407 = vmul.f32 1.0, %v4406
        %v4408 = vrcp.pop %v4331
        %v4409 = vmul.f32 1.0, %v4408
        %v4410 = vrcp.pop %v4332
        %v4411 = vmul.f32 1.0, %v4410
        %v4412 = vrcp.pop %v4333
        %v4413 = vmul.f32 1.0, %v4412
        %v4414 = vrcp.pop %v4334
        %v4415 = vmul.f32 1.0, %v4414
        %v4416 = vrcp.pop %v4335
        %v4417 = vmul.f32 1.0, %v4416
        %v4418 = vrcp.pop %v4336
        %v4419 = vmul.f32 1.0, %v4418
        %v4420 = vrcp.pop %v4337
        %v4421 = vmul.f32 1.0, %v4420
        %v4422 = vrcp.pop %v4338
        %v4423 = vmul.f32 1.0, %v4422
        %v4424 = vrcp.pop %v4339
        %v4425 = vmul.f32 1.0, %v4424
        %v4426 = vrcp.pop %v4340
        %v4427 = vmul.f32 1.0, %v4426
        %v4428 = vrcp.pop %v4341
        %v4429 = vmul.f32 1.0, %v4428
        %v4430 = vrcp.pop %v4342
        %v4431 = vmul.f32 1.0, %v4430
        %v4432 = vrcp.pop %v4343
        %v4433 = vmul.f32 1.0, %v4432
        %v4434 = vrcp.pop %v4344
        %v4435 = vmul.f32 1.0, %v4434
        %v4436 = vrcp.pop %v4345
        %v4437 = vmul.f32 1.0, %v4436
        %v4438 = vrcp.pop %v4346
        %v4439 = vmul.f32 1.0, %v4438
        %v4440 = vrcp.pop %v4347
        %v4441 = vmul.f32 1.0, %v4440
        %v4442 = vrcp.pop %v4348
        %v4443 = vmul.f32 1.0, %v4442
        %v4444 = vrcp.pop %v4349
        %v4445 = vmul.f32 1.0, %v4444
        %v4446 = vrcp.pop %v4350
        %v4447 = vmul.f32 1.0, %v4446
        %v4448 = vrcp.pop %v4351
        %v4449 = vmul.f32 1.0, %v4448
        %v4450 = vrcp.pop %v4352
        %v4451 = vmul.f32 1.0, %v4450
        %v4452 = vrcp.pop %v4353
        %v4453 = vmul.f32 1.0, %v4452
        %v4454 = vrcp.pop %v4354
        %v4455 = vmul.f32 1.0, %v4454
        %v4456 = vrcp.pop %v4355
        %v4457 = vmul.f32 1.0, %v4456
        %v4458 = vrcp.pop %v4356
        %v4459 = vmul.f32 1.0, %v4458
        %v4460 = vrcp.pop %v4357
        %v4461 = vmul.f32 1.0, %v4460
        %v4462 = vrcp.pop %v4358
        %v4463 = vmul.f32 1.0, %v4462
        %v4464 = vrcp.pop %v4359
        %v4465 = vmul.f32 1.0, %v4464
        %v4466 = vrcp.pop %v4360
        %v4467 = vmul.f32 1.0, %v4466
        %v4468 = vrcp.pop %v4361
        %v4469 = vmul.f32 1.0, %v4468
        %v4470 = vrcp.pop %v4362
        %v4471 = vmul.f32 1.0, %v4470
        %v4472 = vrcp.pop %v4363
        %v4473 = vmul.f32 1.0, %v4472
        %v4474 = vrcp.pop %v4364
        %v4475 = vmul.f32 1.0, %v4474
        %v4476 = vrcp.pop %v4365
        %v4477 = vmul.f32 1.0, %v4476
        %v4478 = vrcp.pop %v4366
        %v4479 = vmul.f32 1.0, %v4478
        %v4480 = vrcp.pop %v4367
        %v4481 = vmul.f32 1.0, %v4480
        %v4482 = vrcp.pop %v4368
        %v4483 = vmul.f32 1.0, %v4482
        %v4484 = vrcp.pop %v4369
        %v4485 = vmul.f32 1.0, %v4484
        %v4486 = vrcp.pop %v4370
        %v4487 = vmul.f32 1.0, %v4486
        %v4488 = vrcp.pop %v4371
        %v4489 = vmul.f32 1.0, %v4488
        %v4490 = vrcp.pop %v4372
        %v4491 = vmul.f32 1.0, %v4490
        %v4492 = vrcp.pop %v4373
        %v4493 = vmul.f32 1.0, %v4492
        %v4494 = vrcp.pop %v4374
        %v4495 = vmul.f32 1.0, %v4494
        %v4496 = vrcp.pop %v4375
        %v4497 = vmul.f32 1.0, %v4496
        %v4498 = vrcp.pop %v4376
        %v4499 = vmul.f32 1.0, %v4498
        %v4500 = vrcp.pop %v4377
        %v4501 = vmul.f32 1.0, %v4500
        %v4502 = vrcp.pop %v4378
        %v4503 = vmul.f32 1.0, %v4502
        %v4504 = vrcp.pop %v4379
        %v4505 = vmul.f32 1.0, %v4504
        %v4506 = vrcp.pop %v4380
        %v4507 = vmul.f32 1.0, %v4506
        %v4508 = vrcp.pop %v4381
        %v4509 = vmul.f32 1.0, %v4508
        %v4510 = vmul.f32 %v3871, %v4383
        %v4511 = vmul.f32 %v3873, %v4385
        %v4512 = vmul.f32 %v3984, %v4387
        %v4513 = vmul.f32 %v3986, %v4389
        %v4514 = vmul.f32 %v3875, %v4391
        %v4515 = vmul.f32 %v3877, %v4393
        %v4516 = vmul.f32 %v3988, %v4395
        %v4517 = vmul.f32 %v3990, %v4397
        %v4518 = vmul.f32 %v3881, %v4399
        %v4519 = vmul.f32 %v3883, %v4401
        %v4520 = vmul.f32 %v3994, %v4403
        %v4521 = vmul.f32 %v3996, %v4405
        %v4522 = vmul.f32 %v3885, %v4407
        %v4523 = vmul.f32 %v3887, %v4409
        %v4524 = vmul.f32 %v3998, %v4411
        %v4525 = vmul.f32 %v4000, %v4413
        %v4526 = vmul.f32 %v3891, %v4415
        %v4527 = vmul.f32 %v3893, %v4417
        %v4528 = vmul.f32 %v4004, %v4419
        %v4529 = vmul.f32 %v4006, %v4421
        %v4530 = vmul.f32 %v3895, %v4423
        %v4531 = vmul.f32 %v3897, %v4425
        %v4532 = vmul.f32 %v4008, %v4427
        %v4533 = vmul.f32 %v4010, %v4429
        %v4534 = vmul.f32 %v3901, %v4431
        %v4535 = vmul.f32 %v3903, %v4433
        %v4536 = vmul.f32 %v4014, %v4435
        %v4537 = vmul.f32 %v4016, %v4437
        %v4538 = vmul.f32 %v3905, %v4439
        %v4539 = vmul.f32 %v3907, %v4441
        %v4540 = vmul.f32 %v4018, %v4443
        %v4541 = vmul.f32 %v4020, %v4445
        %v4542 = vmul.f32 %v3911, %v4447
        %v4543 = vmul.f32 %v3913, %v4449
        %v4544 = vmul.f32 %v4024, %v4451
        %v4545 = vmul.f32 %v4026, %v4453
        %v4546 = vmul.f32 %v3915, %v4455
        %v4547 = vmul.f32 %v3917, %v4457
        %v4548 = vmul.f32 %v4028, %v4459
        %v4549 = vmul.f32 %v4030, %v4461
        %v4550 = vmul.f32 %v3921, %v4463
        %v4551 = vmul.f32 %v3923, %v4465
        %v4552 = vmul.f32 %v4034, %v4467
        %v4553 = vmul.f32 %v4036, %v4469
        %v4554 = vmul.f32 %v3925, %v4471
        %v4555 = vmul.f32 %v3927, %v4473
        %v4556 = vmul.f32 %v4038, %v4475
        %v4557 = vmul.f32 %v4040, %v4477
        %v4558 = vmul.f32 %v3931, %v4479
        %v4559 = vmul.f32 %v3933, %v4481
        %v4560 = vmul.f32 %v4044, %v4483
        %v4561 = vmul.f32 %v4046, %v4485
        %v4562 = vmul.f32 %v3935, %v4487
        %v4563 = vmul.f32 %v3937, %v4489
        %v4564 = vmul.f32 %v4048, %v4491
        %v4565 = vmul.f32 %v4050, %v4493
        %v4566 = vmul.f32 %v3941, %v4495
        %v4567 = vmul.f32 %v3943, %v4497
        %v4568 = vmul.f32 %v4054, %v4499
        %v4569 = vmul.f32 %v4056, %v4501
        %v4570 = vmul.f32 %v3945, %v4503
        %v4571 = vmul.f32 %v3947, %v4505
        %v4572 = vmul.f32 %v4058, %v4507
        %v4573 = vmul.f32 %v4060, %v4509
        %v4574 = vpack.c.bf16 %v4514, %v4510
        %v4575 = vpack.c.bf16 %v4515, %v4511
        %v4576 = vpack.c.bf16 %v4516, %v4512
        %v4577 = vpack.c.bf16 %v4517, %v4513
        %v4578 = vpack.c.bf16 %v4522, %v4518
        %v4579 = vpack.c.bf16 %v4523, %v4519
        %v4580 = vpack.c.bf16 %v4524, %v4520
        %v4581 = vpack.c.bf16 %v4525, %v4521
        %v4582 = vpack.c.bf16 %v4530, %v4526
        %v4583 = vpack.c.bf16 %v4531, %v4527
        %v4584 = vpack.c.bf16 %v4532, %v4528
        %v4585 = vpack.c.bf16 %v4533, %v4529
        %v4586 = vpack.c.bf16 %v4538, %v4534
        %v4587 = vpack.c.bf16 %v4539, %v4535
        %v4588 = vpack.c.bf16 %v4540, %v4536
        %v4589 = vpack.c.bf16 %v4541, %v4537
        %v4590 = vpack.c.bf16 %v4546, %v4542
        %v4591 = vpack.c.bf16 %v4547, %v4543
        %v4592 = vpack.c.bf16 %v4548, %v4544
        %v4593 = vpack.c.bf16 %v4549, %v4545
        %v4594 = vpack.c.bf16 %v4554, %v4550
        %v4595 = vpack.c.bf16 %v4555, %v4551
        %v4596 = vpack.c.bf16 %v4556, %v4552
        %v4597 = vpack.c.bf16 %v4557, %v4553
        %v4598 = vpack.c.bf16 %v4562, %v4558
        %v4599 = vpack.c.bf16 %v4563, %v4559
        %v4600 = vpack.c.bf16 %v4564, %v4560
        %v4601 = vpack.c.bf16 %v4565, %v4561
        %v4602 = vpack.c.bf16 %v4570, %v4566
        %v4603 = vpack.c.bf16 %v4571, %v4567
        %v4604 = vpack.c.bf16 %v4572, %v4568
        %v4605 = vpack.c.bf16 %v4573, %v4569
        %v4606 = vld [vmem:[#allocation14] sm:$0xf]
        %v4607 = vld [vmem:[#allocation14 + $0x4] sm:$0xf]
        %v4608 = vld [vmem:[#allocation14 + $0x8] sm:$0xf]
        %v4609 = vld [vmem:[#allocation14 + $0xc] sm:$0xf]
        %v4610 = vld [vmem:[#allocation14 + $0x10] sm:$0xf]
        %v4611 = vld [vmem:[#allocation14 + $0x14] sm:$0xf]
        %v4612 = vld [vmem:[#allocation14 + $0x18] sm:$0xf]
        %v4613 = vld [vmem:[#allocation14 + $0x1c] sm:$0xf]
        %v4614 = vld [vmem:[#allocation14 + $0x20] sm:$0xf]
        %v4615 = vld [vmem:[#allocation14 + $0x24] sm:$0xf]
        %v4616 = vld [vmem:[#allocation14 + $0x28] sm:$0xf]
        %v4617 = vld [vmem:[#allocation14 + $0x2c] sm:$0xf]
        %v4618 = vld [vmem:[#allocation14 + $0x30] sm:$0xf]
        %v4619 = vld [vmem:[#allocation14 + $0x34] sm:$0xf]
        %v4620 = vld [vmem:[#allocation14 + $0x38] sm:$0xf]
        %v4621 = vld [vmem:[#allocation14 + $0x3c] sm:$0xf]
        %v4622 = vld [vmem:[#allocation14 + $0x40] sm:$0xf]
        %v4623 = vld [vmem:[#allocation14 + $0x44] sm:$0xf]
        %v4624 = vld [vmem:[#allocation14 + $0x48] sm:$0xf]
        %v4625 = vld [vmem:[#allocation14 + $0x4c] sm:$0xf]
        %v4626 = vld [vmem:[#allocation14 + $0x50] sm:$0xf]
        %v4627 = vld [vmem:[#allocation14 + $0x54] sm:$0xf]
        %v4628 = vld [vmem:[#allocation14 + $0x58] sm:$0xf]
        %v4629 = vld [vmem:[#allocation14 + $0x5c] sm:$0xf]
        %v4630 = vld [vmem:[#allocation14 + $0x60] sm:$0xf]
        %v4631 = vld [vmem:[#allocation14 + $0x64] sm:$0xf]
        %v4632 = vld [vmem:[#allocation14 + $0x68] sm:$0xf]
        %v4633 = vld [vmem:[#allocation14 + $0x6c] sm:$0xf]
        %v4634 = vld [vmem:[#allocation14 + $0x70] sm:$0xf]
        %v4635 = vld [vmem:[#allocation14 + $0x74] sm:$0xf]
        %v4636 = vld [vmem:[#allocation14 + $0x78] sm:$0xf]
        %v4637 = vld [vmem:[#allocation14 + $0x7c] sm:$0xf]
        %v4638 = vld [vmem:[#allocation14 + $0x80] sm:$0xf]
        %v4639 = vld [vmem:[#allocation14 + $0x84] sm:$0xf]
        %v4640 = vld [vmem:[#allocation14 + $0x88] sm:$0xf]
        %v4641 = vld [vmem:[#allocation14 + $0x8c] sm:$0xf]
        %v4642 = vld [vmem:[#allocation14 + $0x90] sm:$0xf]
        %v4643 = vld [vmem:[#allocation14 + $0x94] sm:$0xf]
        %v4644 = vld [vmem:[#allocation14 + $0x98] sm:$0xf]
        %v4645 = vld [vmem:[#allocation14 + $0x9c] sm:$0xf]
        %v4646 = vld [vmem:[#allocation14 + $0xa0] sm:$0xf]
        %v4647 = vld [vmem:[#allocation14 + $0xa4] sm:$0xf]
        %v4648 = vld [vmem:[#allocation14 + $0xa8] sm:$0xf]
        %v4649 = vld [vmem:[#allocation14 + $0xac] sm:$0xf]
        %v4650 = vld [vmem:[#allocation14 + $0xb0] sm:$0xf]
        %v4651 = vld [vmem:[#allocation14 + $0xb4] sm:$0xf]
        %v4652 = vld [vmem:[#allocation14 + $0xb8] sm:$0xf]
        %v4653 = vld [vmem:[#allocation14 + $0xbc] sm:$0xf]
        %v4654 = vld [vmem:[#allocation14 + $0xc0] sm:$0xf]
        %v4655 = vld [vmem:[#allocation14 + $0xc4] sm:$0xf]
        %v4656 = vld [vmem:[#allocation14 + $0xc8] sm:$0xf]
        %v4657 = vld [vmem:[#allocation14 + $0xcc] sm:$0xf]
        %v4658 = vld [vmem:[#allocation14 + $0xd0] sm:$0xf]
        %v4659 = vld [vmem:[#allocation14 + $0xd4] sm:$0xf]
        %v4660 = vld [vmem:[#allocation14 + $0xd8] sm:$0xf]
        %v4661 = vld [vmem:[#allocation14 + $0xdc] sm:$0xf]
        %v4662 = vld [vmem:[#allocation14 + $0xe0] sm:$0xf]
        %v4663 = vld [vmem:[#allocation14 + $0xe4] sm:$0xf]
        %v4664 = vld [vmem:[#allocation14 + $0xe8] sm:$0xf]
        %v4665 = vld [vmem:[#allocation14 + $0xec] sm:$0xf]
        %v4666 = vld [vmem:[#allocation14 + $0xf0] sm:$0xf]
        %v4667 = vld [vmem:[#allocation14 + $0xf4] sm:$0xf]
        %v4668 = vld [vmem:[#allocation14 + $0xf8] sm:$0xf]
        %v4669 = vld [vmem:[#allocation14 + $0xfc] sm:$0xf]
        %v4670 = vld [vmem:[%s12] sm:$0x1]
        %v4672 = vlaneseq
        %v4673 = vshrl.u32 %v4672, 7
        %v4674 = vsub.s32 0, %v4673
        %v4675 = vrot.slane %v4670, %v4674
        %v4741 = vunpack.c.l.b16 %v4606
        %v4742 = vunpack.c.l.b16 %v4607
        %v4743 = vunpack.c.l.b16 %v4608
        %v4744 = vunpack.c.l.b16 %v4609
        %v4745 = vunpack.c.l.b16 %v4610
        %v4746 = vunpack.c.l.b16 %v4611
        %v4747 = vunpack.c.l.b16 %v4612
        %v4748 = vunpack.c.l.b16 %v4613
        %v4749 = vunpack.c.l.b16 %v4614
        %v4750 = vunpack.c.l.b16 %v4615
        %v4751 = vunpack.c.l.b16 %v4616
        %v4752 = vunpack.c.l.b16 %v4617
        %v4753 = vunpack.c.l.b16 %v4618
        %v4754 = vunpack.c.l.b16 %v4619
        %v4755 = vunpack.c.l.b16 %v4620
        %v4756 = vunpack.c.l.b16 %v4621
        %v4757 = vunpack.c.l.b16 %v4622
        %v4758 = vunpack.c.l.b16 %v4623
        %v4759 = vunpack.c.l.b16 %v4624
        %v4760 = vunpack.c.l.b16 %v4625
        %v4761 = vunpack.c.l.b16 %v4626
        %v4762 = vunpack.c.l.b16 %v4627
        %v4763 = vunpack.c.l.b16 %v4628
        %v4764 = vunpack.c.l.b16 %v4629
        %v4765 = vunpack.c.l.b16 %v4630
        %v4766 = vunpack.c.l.b16 %v4631
        %v4767 = vunpack.c.l.b16 %v4632
        %v4768 = vunpack.c.l.b16 %v4633
        %v4769 = vunpack.c.l.b16 %v4634
        %v4770 = vunpack.c.l.b16 %v4635
        %v4771 = vunpack.c.l.b16 %v4636
        %v4772 = vunpack.c.l.b16 %v4637
        %v4773 = vunpack.c.l.b16 %v4638
        %v4774 = vunpack.c.l.b16 %v4639
        %v4775 = vunpack.c.l.b16 %v4640
        %v4776 = vunpack.c.l.b16 %v4641
        %v4777 = vunpack.c.l.b16 %v4642
        %v4778 = vunpack.c.l.b16 %v4643
        %v4779 = vunpack.c.l.b16 %v4644
        %v4780 = vunpack.c.l.b16 %v4645
        %v4781 = vunpack.c.l.b16 %v4646
        %v4782 = vunpack.c.l.b16 %v4647
        %v4783 = vunpack.c.l.b16 %v4648
        %v4784 = vunpack.c.l.b16 %v4649
        %v4785 = vunpack.c.l.b16 %v4650
        %v4786 = vunpack.c.l.b16 %v4651
        %v4787 = vunpack.c.l.b16 %v4652
        %v4788 = vunpack.c.l.b16 %v4653
        %v4789 = vunpack.c.l.b16 %v4654
        %v4790 = vunpack.c.l.b16 %v4655
        %v4791 = vunpack.c.l.b16 %v4656
        %v4792 = vunpack.c.l.b16 %v4657
        %v4793 = vunpack.c.l.b16 %v4658
        %v4794 = vunpack.c.l.b16 %v4659
        %v4795 = vunpack.c.l.b16 %v4660
        %v4796 = vunpack.c.l.b16 %v4661
        %v4797 = vunpack.c.l.b16 %v4662
        %v4798 = vunpack.c.l.b16 %v4663
        %v4799 = vunpack.c.l.b16 %v4664
        %v4800 = vunpack.c.l.b16 %v4665
        %v4801 = vunpack.c.l.b16 %v4666
        %v4802 = vunpack.c.l.b16 %v4667
        %v4803 = vunpack.c.l.b16 %v4668
        %v4804 = vunpack.c.l.b16 %v4669
        %v4805 = vpack.c.b16 %v4742, %v4741
        %v4806 = vpack.c.b16 %v4744, %v4743
        %v4807 = vpack.c.b16 %v4746, %v4745
        %v4808 = vpack.c.b16 %v4748, %v4747
        %v4809 = vpack.c.b16 %v4750, %v4749
        %v4810 = vpack.c.b16 %v4752, %v4751
        %v4811 = vpack.c.b16 %v4754, %v4753
        %v4812 = vpack.c.b16 %v4756, %v4755
        %v4813 = vpack.c.b16 %v4758, %v4757
        %v4814 = vpack.c.b16 %v4760, %v4759
        %v4815 = vpack.c.b16 %v4762, %v4761
        %v4816 = vpack.c.b16 %v4764, %v4763
        %v4817 = vpack.c.b16 %v4766, %v4765
        %v4818 = vpack.c.b16 %v4768, %v4767
        %v4819 = vpack.c.b16 %v4770, %v4769
        %v4820 = vpack.c.b16 %v4772, %v4771
        %v4821 = vpack.c.b16 %v4774, %v4773
        %v4822 = vpack.c.b16 %v4776, %v4775
        %v4823 = vpack.c.b16 %v4778, %v4777
        %v4824 = vpack.c.b16 %v4780, %v4779
        %v4825 = vpack.c.b16 %v4782, %v4781
        %v4826 = vpack.c.b16 %v4784, %v4783
        %v4827 = vpack.c.b16 %v4786, %v4785
        %v4828 = vpack.c.b16 %v4788, %v4787
        %v4829 = vpack.c.b16 %v4790, %v4789
        %v4830 = vpack.c.b16 %v4792, %v4791
        %v4831 = vpack.c.b16 %v4794, %v4793
        %v4832 = vpack.c.b16 %v4796, %v4795
        %v4833 = vpack.c.b16 %v4798, %v4797
        %v4834 = vpack.c.b16 %v4800, %v4799
        %v4835 = vpack.c.b16 %v4802, %v4801
        %v4836 = vpack.c.b16 %v4804, %v4803
        %4869 = vmatprep.subr.bf16.mxu0 0
        %4870 = vmatpush1.bf16.msra.mxu0 %v4805
        %4871 = vmatprep.subr.bf16.mxu0 0
        %4872 = vmatpush1.bf16.msra.mxu0 %v4806
        %4873 = vmatprep.subr.bf16.mxu0 0
        %4874 = vmatpush1.bf16.msra.mxu0 %v4807
        %4875 = vmatprep.subr.bf16.mxu0 0
        %4876 = vmatpush1.bf16.msra.mxu0 %v4808
        %4877 = vmatprep.subr.bf16.mxu0 0
        %4878 = vmatpush1.bf16.msra.mxu0 %v4809
        %4879 = vmatprep.subr.bf16.mxu0 0
        %4880 = vmatpush1.bf16.msra.mxu0 %v4810
        %4881 = vmatprep.subr.bf16.mxu0 0
        %4882 = vmatpush1.bf16.msra.mxu0 %v4811
        %4883 = vmatprep.subr.bf16.mxu0 0
        %4884 = vmatpush1.bf16.msra.mxu0 %v4812
        %4885 = vmatprep.subr.bf16.mxu0 0
        %4886 = vmatpush1.bf16.msra.mxu0 %v4813
        %4887 = vmatprep.subr.bf16.mxu0 0
        %4888 = vmatpush1.bf16.msra.mxu0 %v4814
        %4889 = vmatprep.subr.bf16.mxu0 0
        %4890 = vmatpush1.bf16.msra.mxu0 %v4815
        %4891 = vmatprep.subr.bf16.mxu0 0
        %4892 = vmatpush1.bf16.msra.mxu0 %v4816
        %4893 = vmatprep.subr.bf16.mxu0 0
        %4894 = vmatpush1.bf16.msra.mxu0 %v4817
        %4895 = vmatprep.subr.bf16.mxu0 0
        %4896 = vmatpush1.bf16.msra.mxu0 %v4818
        %4897 = vmatprep.subr.bf16.mxu0 0
        %4898 = vmatpush1.bf16.msra.mxu0 %v4819
        %4899 = vmatprep.subr.bf16.mxu0 0
        %4900 = vmatpush1.bf16.msra.mxu0 %v4820
        %4901 = vmatprep.mubr.bf16.mxu0 %v4575
        %4902 = vmatmul.mubr.bf16.gmra.mrb[0].mxu0 %v4574
        %v4903 = vpop.f32.mrb[0].mxu0
        %v4904 = vadd.f32 %v4675, %v4903
        %v4905 = vpop.f32.mrb[0].mxu0
        %v4906 = vpop.f32.mrb[0].mxu0
        %v4907 = vadd.f32 %v4675, %v4906
        %v4908 = vpop.f32.mrb[0].mxu0
        %4909 = vmatprep.mubr.bf16.mxu0 %v4579
        %4910 = vmatmul.mubr.bf16.gmra.mrb[0].mxu0 %v4578
        %v4911 = vpop.f32.mrb[0].mxu0
        %v4912 = vadd.f32 %v4675, %v4911
        %v4913 = vpop.f32.mrb[0].mxu0
        %v4914 = vpop.f32.mrb[0].mxu0
        %v4915 = vadd.f32 %v4675, %v4914
        %v4916 = vpop.f32.mrb[0].mxu0
        %4917 = vmatprep.mubr.bf16.mxu0 %v4583
        %4918 = vmatmul.mubr.bf16.gmra.mrb[0].mxu0 %v4582
        %v4919 = vpop.f32.mrb[0].mxu0
        %v4920 = vadd.f32 %v4675, %v4919
        %v4921 = vpop.f32.mrb[0].mxu0
        %v4922 = vpop.f32.mrb[0].mxu0
        %v4923 = vadd.f32 %v4675, %v4922
        %v4924 = vpop.f32.mrb[0].mxu0
        %4925 = vmatprep.mubr.bf16.mxu0 %v4587
        %4926 = vmatmul.mubr.bf16.gmra.mrb[0].mxu0 %v4586
        %v4927 = vpop.f32.mrb[0].mxu0
        %v4928 = vadd.f32 %v4675, %v4927
        %v4929 = vpop.f32.mrb[0].mxu0
        %v4930 = vpop.f32.mrb[0].mxu0
        %v4931 = vadd.f32 %v4675, %v4930
        %v4932 = vpop.f32.mrb[0].mxu0
        %4933 = vmatprep.mubr.bf16.mxu0 %v4591
        %4934 = vmatmul.mubr.bf16.gmra.mrb[0].mxu0 %v4590
        %v4935 = vpop.f32.mrb[0].mxu0
        %v4936 = vadd.f32 %v4675, %v4935
        %v4937 = vpop.f32.mrb[0].mxu0
        %v4938 = vpop.f32.mrb[0].mxu0
        %v4939 = vadd.f32 %v4675, %v4938
        %v4940 = vpop.f32.mrb[0].mxu0
        %4941 = vmatprep.mubr.bf16.mxu0 %v4595
        %4942 = vmatmul.mubr.bf16.gmra.mrb[0].mxu0 %v4594
        %v4943 = vpop.f32.mrb[0].mxu0
        %v4944 = vadd.f32 %v4675, %v4943
        %v4945 = vpop.f32.mrb[0].mxu0
        %v4946 = vpop.f32.mrb[0].mxu0
        %v4947 = vadd.f32 %v4675, %v4946
        %v4948 = vpop.f32.mrb[0].mxu0
        %4949 = vmatprep.mubr.bf16.mxu0 %v4599
        %4950 = vmatmul.mubr.bf16.gmra.mrb[0].mxu0 %v4598
        %v4951 = vpop.f32.mrb[0].mxu0
        %v4952 = vadd.f32 %v4675, %v4951
        %v4953 = vpop.f32.mrb[0].mxu0
        %v4954 = vpop.f32.mrb[0].mxu0
        %v4955 = vadd.f32 %v4675, %v4954
        %v4956 = vpop.f32.mrb[0].mxu0
        %4957 = vmatprep.mubr.bf16.mxu0 %v4603
        %4958 = vmatmul.mubr.bf16.gmra.mrb[0].mxu0 %v4602
        %v4959 = vpop.f32.mrb[0].mxu0
        %v4960 = vadd.f32 %v4675, %v4959
        %v4961 = vpop.f32.mrb[0].mxu0
        %v4962 = vpop.f32.mrb[0].mxu0
        %v4963 = vadd.f32 %v4675, %v4962
        %v4964 = vpop.f32.mrb[0].mxu0
        %4965 = vdwg.mxu0
        %4966 = vmatprep.subr.bf16.mxu0 0
        %4967 = vmatpush1.bf16.msra.mxu0 %v4821
        %4968 = vmatprep.subr.bf16.mxu0 0
        %4969 = vmatpush1.bf16.msra.mxu0 %v4822
        %4970 = vmatprep.subr.bf16.mxu0 0
        %4971 = vmatpush1.bf16.msra.mxu0 %v4823
        %4972 = vmatprep.subr.bf16.mxu0 0
        %4973 = vmatpush1.bf16.msra.mxu0 %v4824
        %4974 = vmatprep.subr.bf16.mxu0 0
        %4975 = vmatpush1.bf16.msra.mxu0 %v4825
        %4976 = vmatprep.subr.bf16.mxu0 0
        %4977 = vmatpush1.bf16.msra.mxu0 %v4826
        %4978 = vmatprep.subr.bf16.mxu0 0
        %4979 = vmatpush1.bf16.msra.mxu0 %v4827
        %4980 = vmatprep.subr.bf16.mxu0 0
        %4981 = vmatpush1.bf16.msra.mxu0 %v4828
        %4982 = vmatprep.subr.bf16.mxu0 0
        %4983 = vmatpush1.bf16.msra.mxu0 %v4829
        %4984 = vmatprep.subr.bf16.mxu0 0
        %4985 = vmatpush1.bf16.msra.mxu0 %v4830
        %4986 = vmatprep.subr.bf16.mxu0 0
        %4987 = vmatpush1.bf16.msra.mxu0 %v4831
        %4988 = vmatprep.subr.bf16.mxu0 0
        %4989 = vmatpush1.bf16.msra.mxu0 %v4832
        %4990 = vmatprep.subr.bf16.mxu0 0
        %4991 = vmatpush1.bf16.msra.mxu0 %v4833
        %4992 = vmatprep.subr.bf16.mxu0 0
        %4993 = vmatpush1.bf16.msra.mxu0 %v4834
        %4994 = vmatprep.subr.bf16.mxu0 0
        %4995 = vmatpush1.bf16.msra.mxu0 %v4835
        %4996 = vmatprep.subr.bf16.mxu0 0
        %4997 = vmatpush1.bf16.msra.mxu0 %v4836
        %4998 = vmatprep.mubr.bf16.mxu0 %v4577
        %4999 = vmatmul.mubr.bf16.gmra.mrb[0].mxu0 %v4576
        %v5000 = vpop.f32.mrb[0].mxu0
        %v5001 = vadd.f32 %v4904, %v5000
        %v5002 = vpop.f32.mrb[0].mxu0
        %v5003 = vpop.f32.mrb[0].mxu0
        %v5004 = vadd.f32 %v4907, %v5003
        %v5005 = vpop.f32.mrb[0].mxu0
        %5006 = vmatprep.mubr.bf16.mxu0 %v4581
        %5007 = vmatmul.mubr.bf16.gmra.mrb[0].mxu0 %v4580
        %v5008 = vpop.f32.mrb[0].mxu0
        %v5009 = vadd.f32 %v4912, %v5008
        %v5010 = vpop.f32.mrb[0].mxu0
        %v5011 = vpop.f32.mrb[0].mxu0
        %v5012 = vadd.f32 %v4915, %v5011
        %v5013 = vpop.f32.mrb[0].mxu0
        %5014 = vmatprep.mubr.bf16.mxu0 %v4585
        %5015 = vmatmul.mubr.bf16.gmra.mrb[0].mxu0 %v4584
        %v5016 = vpop.f32.mrb[0].mxu0
        %v5017 = vadd.f32 %v4920, %v5016
        %v5018 = vpop.f32.mrb[0].mxu0
        %v5019 = vpop.f32.mrb[0].mxu0
        %v5020 = vadd.f32 %v4923, %v5019
        %v5021 = vpop.f32.mrb[0].mxu0
        %5022 = vmatprep.mubr.bf16.mxu0 %v4589
        %5023 = vmatmul.mubr.bf16.gmra.mrb[0].mxu0 %v4588
        %v5024 = vpop.f32.mrb[0].mxu0
        %v5025 = vadd.f32 %v4928, %v5024
        %v5026 = vpop.f32.mrb[0].mxu0
        %v5027 = vpop.f32.mrb[0].mxu0
        %v5028 = vadd.f32 %v4931, %v5027
        %v5029 = vpop.f32.mrb[0].mxu0
        %5030 = vmatprep.mubr.bf16.mxu0 %v4593
        %5031 = vmatmul.mubr.bf16.gmra.mrb[0].mxu0 %v4592
        %v5032 = vpop.f32.mrb[0].mxu0
        %v5033 = vadd.f32 %v4936, %v5032
        %v5034 = vpop.f32.mrb[0].mxu0
        %v5035 = vpop.f32.mrb[0].mxu0
        %v5036 = vadd.f32 %v4939, %v5035
        %v5037 = vpop.f32.mrb[0].mxu0
        %5038 = vmatprep.mubr.bf16.mxu0 %v4597
        %5039 = vmatmul.mubr.bf16.gmra.mrb[0].mxu0 %v4596
        %v5040 = vpop.f32.mrb[0].mxu0
        %v5041 = vadd.f32 %v4944, %v5040
        %v5042 = vpop.f32.mrb[0].mxu0
        %v5043 = vpop.f32.mrb[0].mxu0
        %v5044 = vadd.f32 %v4947, %v5043
        %v5045 = vpop.f32.mrb[0].mxu0
        %5046 = vmatprep.mubr.bf16.mxu0 %v4601
        %5047 = vmatmul.mubr.bf16.gmra.mrb[0].mxu0 %v4600
        %v5048 = vpop.f32.mrb[0].mxu0
        %v5049 = vadd.f32 %v4952, %v5048
        %v5050 = vpop.f32.mrb[0].mxu0
        %v5051 = vpop.f32.mrb[0].mxu0
        %v5052 = vadd.f32 %v4955, %v5051
        %v5053 = vpop.f32.mrb[0].mxu0
        %5054 = vmatprep.mubr.bf16.mxu0 %v4605
        %5055 = vmatmul.mubr.bf16.gmra.mrb[0].mxu0 %v4604
        %v5056 = vpop.f32.mrb[0].mxu0
        %v5057 = vadd.f32 %v4960, %v5056
        %v5058 = vpop.f32.mrb[0].mxu0
        %v5059 = vpop.f32.mrb[0].mxu0
        %v5060 = vadd.f32 %v4963, %v5059
        %v5061 = vpop.f32.mrb[0].mxu0
        %5062 = vdwg.mxu0
        %v5063 = vadd.f32 %v5001, %v3376
        %v5064 = vadd.f32 %v5004, %v3377
        %v5065 = vadd.f32 %v5009, %v3378
        %v5066 = vadd.f32 %v5012, %v3379
        %v5067 = vadd.f32 %v5017, %v3380
        %v5068 = vadd.f32 %v5020, %v3381
        %v5069 = vadd.f32 %v5025, %v3382
        %v5070 = vadd.f32 %v5028, %v3383
        %v5071 = vadd.f32 %v5033, %v3384
        %v5072 = vadd.f32 %v5036, %v3385
        %v5073 = vadd.f32 %v5041, %v3386
        %v5074 = vadd.f32 %v5044, %v3387
        %v5075 = vadd.f32 %v5049, %v3388
        %v5076 = vadd.f32 %v5052, %v3389
        %v5077 = vadd.f32 %v5057, %v3390
        %v5078 = vadd.f32 %v5060, %v3391
        %5079 = vst [vmem:[%s541] sm:$0xff] %v5063
        %5080 = vst [vmem:[%s541 + $0x8] sm:$0xff] %v5064
        %5081 = vst [vmem:[%s541 + $0x10] sm:$0xff] %v5065
        %5082 = vst [vmem:[%s541 + $0x18] sm:$0xff] %v5066
        %5083 = vst [vmem:[%s541 + $0x20] sm:$0xff] %v5067
        %5084 = vst [vmem:[%s541 + $0x28] sm:$0xff] %v5068
        %5085 = vst [vmem:[%s541 + $0x30] sm:$0xff] %v5069
        %5086 = vst [vmem:[%s541 + $0x38] sm:$0xff] %v5070
        %5087 = vst [vmem:[%s541 + $0x40] sm:$0xff] %v5071
        %5088 = vst [vmem:[%s541 + $0x48] sm:$0xff] %v5072
        %5089 = vst [vmem:[%s541 + $0x50] sm:$0xff] %v5073
        %5090 = vst [vmem:[%s541 + $0x58] sm:$0xff] %v5074
        %5091 = vst [vmem:[%s541 + $0x60] sm:$0xff] %v5075
        %5092 = vst [vmem:[%s541 + $0x68] sm:$0xff] %v5076
        %5093 = vst [vmem:[%s541 + $0x70] sm:$0xff] %v5077
        %5094 = vst [vmem:[%s541 + $0x78] sm:$0xff] %v5078
        %s5095 = sand.u32 %s319, 1
        %s5096 = scalar_lea.sflag [#allocation5], %s5095
        %s5097 = sand.u32 %s319, 1
        %s5098 = smul.addr %s5097, 128
        %s5099 = scalar_lea.vmem [#allocation15], %s5098
        // Predicated region
        $region101: #{tpu_custom_call.1} parent=71 // pred_check
          %p5100 = pneg %p329
        $region102: #{tpu_custom_call.1} parent=71 // pred_check_branch
          %5102 = sbr.rel (%p5100) target = $region104
        $region103: #{tpu_custom_call.1} parent=71 // pred_region
          %s5104 = ssub.s32 2048, 2048
          %5105 = vsyncadd %s5096, %s5104
          %s5106 = smul.addr %s33, 16
          %s5107 = smul.addr %s5106, 128
          %s5108 = scalar_lea.hbm %s13, %s5107
          %s5109 = sshll.u32 %s5099, 4
          %s5110 = int_to_ptr.vmem [resolvable:$true] %s5109
          %5115 = dma.vmem_to_hbm [thread:$0]  %s5110, 2048, %s5108, %s5096, 128, 128, 8
        $region104: #{tpu_custom_call.1} parent=71 // pred_fallthru
          _
      $region72: #{tpu_custom_call.1} parent=5 // pred_fallthru
        _
      %p5116 = scmp.le.s32.totalorder 2, %s28
      // Predicated region
      $region105: #{tpu_custom_call.1} parent=5 // pred_check
        %p5117 = pneg %p5116
      $region106: #{tpu_custom_call.1} parent=5 // pred_check_branch
        %5119 = sbr.rel (%p5117) target = $region108
      $region107: #{tpu_custom_call.1} parent=5 // pred_region
        %s5120 = ssub.s32 %s28, 2
        // Predicated region
        $region109: #{tpu_custom_call.1} parent=107 // pred_check
          %p5121 = pneg %p335
        $region110: #{tpu_custom_call.1} parent=107 // pred_check_branch
          %5123 = sbr.rel (%p5121) target = $region112
        $region111: #{tpu_custom_call.1} parent=107 // pred_region
          %s5124 = sand.u32 %s320, 1
          %s5125 = scalar_lea.sflag [#allocation5], %s5124
          %s5126 = sand.u32 %s320, 1
          %s5127 = smul.addr %s5126, 128
          %s5128 = scalar_lea.vmem [#allocation15], %s5127
          %5129 = dma.done %s5125, 2048
        $region112: #{tpu_custom_call.1} parent=107 // pred_fallthru
          _
      $region108: #{tpu_custom_call.1} parent=5 // pred_fallthru
        _
    $region6: #{tpu_custom_call.1} parent=1 // loop_footer
      %s32 = sadd.s32 1, %s28
    $region7: #{tpu_custom_call.1} parent=1 // loop_footer_branch
      %27 = sbr.rel target = $region3
    $region8: #{tpu_custom_call.1} parent=1 // loop_exit
      _
    %5130 = vsyncpa [#allocation4], 1
    %s5131 = scalar_lea.sflag [#allocation4], 1
    %5132 = vsyncpa %s5131, 1
    %5133 = vsyncpa [#allocation7], 1
    %5134 = vsyncpa [#allocation10], 1
    %5135 = vsyncpa [#allocation13], 1
    %5136 = vsyncpa [#allocation5], 1
    %s5137 = scalar_lea.sflag [#allocation5], 1
    %5138 = vsyncpa %s5137, 1

</llo_original>
